<compile_context>
chip_gen: v6e
topology: v6e:2x2x1
jax: 0.10.0
libtpu: 0.0.40
codegen_flags: <defaults>
</compile_context>

<pallas_src>
import jax
import jax.numpy as jnp
from jax import lax
from jax.experimental import pallas as pl
from jax.experimental.pallas import tpu as pltpu


# ---------------------------------------------------------------------------
# Fused RDB Pallas kernel (one grid step == one image)
# ---------------------------------------------------------------------------
def _make_rdb_kernel(H, W, C, G):
    M = H * W

    def _im2col_input(xpad_ref):
        # xpad_ref block: (1, H+2, W+2, C) -> (M, 9*C), columns in (dy,dx,c) order
        cols = []
        for dy in range(3):
            for dx in range(3):
                cols.append(xpad_ref[0, dy:dy + H, dx:dx + W, :].reshape(M, C))
        return jnp.concatenate(cols, axis=-1)

    def _im2col_scratch(ref):
        # ref: (H+2, W+2, G) zero-haloed scratch -> (M, 9*G)
        cols = []
        for dy in range(3):
            for dx in range(3):
                cols.append(ref[dy:dy + H, dx:dx + W, :].reshape(M, G))
        return jnp.concatenate(cols, axis=-1)

    def kernel(xpad_ref,
               w1, w2, w3, w4, w5,
               b1, b2, b3, b4, b5,
               out_ref,
               x1p, x2p, x3p, x4p):
        scratches = (x1p, x2p, x3p, x4p)
        # Zero halos (interiors are always overwritten below).
        for s in scratches:
            s[...] = jnp.zeros_like(s)

        ws = (w1, w2, w3, w4, w5)
        bs = (b1, b2, b3, b4, b5)

        # Patch matrix for the original input x, reused by all 5 convs.
        patches = _im2col_input(xpad_ref)                      # (M, 9*C)

        y = None
        for j in range(5):
            # Single MXU matmul per conv: K = 9*(C + j*G).
            y = jnp.dot(patches, ws[j][...],
                        preferred_element_type=jnp.float32)
            y = y + bs[j][...].astype(jnp.float32)             # (M, Cout) f32
            if j < 4:
                a = jnp.where(y > 0.0, y, 0.2 * y)             # LeakyReLU(0.2), f32
                # Stash x_{j+1} into its zero-haloed VMEM buffer...
                scratches[j][1:H + 1, 1:W + 1, :] = (
                    a.reshape(H, W, G).astype(scratches[j].dtype))
                # ...and append its im2col columns (dense-block concat along K).
                patches = jnp.concatenate(
                    [patches, _im2col_scratch(scratches[j])], axis=-1)

        # Fused residual: x5 * 0.2 + x  (f32 epilogue).
        x_res = xpad_ref[0, 1:H + 1, 1:W + 1, :].reshape(M, C).astype(jnp.float32)
        out = y * 0.2 + x_res
        out_ref[0] = out.reshape(H, W, C).astype(out_ref.dtype)

    return kernel


# ---------------------------------------------------------------------------
# Wrapper: NCHW in/out, weight flattening for the im2col column order
# ---------------------------------------------------------------------------
def rdb_forward(x_nchw, params, *, compute_dtype=jnp.float32):
    x = jnp.transpose(x_nchw, (0, 2, 3, 1))                    # NCHW -> NHWC
    N, H, W, C = x.shape
    G = params[0][0].shape[-1]

    # Flatten each HWIO weight to (9*Cin, Cout) with rows ordered
    # (source, dy, dx, c) to match the progressively-concatenated patch matrix.
    src_channels = [[C], [C, G], [C, G, G], [C, G, G, G], [C, G, G, G, G]]
    ws, bs = [], []
    for (w, b), srcs in zip(params, src_channels):
        chunks, off = [], 0
        for c in srcs:
            chunks.append(w[:, :, off:off + c, :].reshape(9 * c, w.shape[-1]))
            off += c
        ws.append(jnp.concatenate(chunks, axis=0).astype(compute_dtype))
        bs.append(b.reshape(1, -1).astype(jnp.float32))         # bias stays f32

    xpad = jnp.pad(x, ((0, 0), (1, 1), (1, 1), (0, 0))).astype(compute_dtype)

    kernel = _make_rdb_kernel(H, W, C, G)

    in_specs = (
        [pl.BlockSpec((1, H + 2, W + 2, C), lambda n: (n, 0, 0, 0))]
        + [pl.BlockSpec(w.shape, lambda n: (0, 0)) for w in ws]
        + [pl.BlockSpec(b.shape, lambda n: (0, 0)) for b in bs]
    )

    out = pl.pallas_call(
        kernel,
        out_shape=jax.ShapeDtypeStruct((N, H, W, C), jnp.float32),
        grid=(N,),
        in_specs=in_specs,
        out_specs=pl.BlockSpec((1, H, W, C), lambda n: (n, 0, 0, 0)),
        scratch_shapes=[pltpu.VMEM((H + 2, W + 2, G), compute_dtype)
                        for _ in range(4)],
        compiler_params=pltpu.CompilerParams(
            dimension_semantics=("parallel",)),
    )(xpad, *ws, *bs)

    return jnp.transpose(out, (0, 3, 1, 2)).astype(x_nchw.dtype)  # NHWC -> NCHW


# ---------------------------------------------------------------------------
# Pure-JAX reference (matches the PyTorch module semantics)
# ---------------------------------------------------------------------------
def _conv_ref(x, w, b):
    y = lax.conv_general_dilated(x, w, (1, 1), "SAME",
                                 dimension_numbers=("NHWC", "HWIO", "NHWC"))
    return y + b


def rdb_reference(x_nchw, params):
    lrelu = lambda v: jnp.where(v > 0, v, 0.2 * v)
    x = jnp.transpose(x_nchw, (0, 2, 3, 1))
    (w1, b1), (w2, b2), (w3, b3), (w4, b4), (w5, b5) = params
    x1 = lrelu(_conv_ref(x, w1, b1))
    x2 = lrelu(_conv_ref(jnp.concatenate([x, x1], -1), w2, b2))
    x3 = lrelu(_conv_ref(jnp.concatenate([x, x1, x2], -1), w3, b3))
    x4 = lrelu(_conv_ref(jnp.concatenate([x, x1, x2, x3], -1), w4, b4))
    x5 = _conv_ref(jnp.concatenate([x, x1, x2, x3, x4], -1), w5, b5)
    return jnp.transpose(x5 * 0.2 + x, (0, 3, 1, 2))


# ---------------------------------------------------------------------------
# Deterministic synthetic parameters (HWIO layout, nn.Conv2d-consistent sizes)
# ---------------------------------------------------------------------------
def init_params(key, channels, growth):
    cins = [channels, channels + growth, channels + 2 * growth,
            channels + 3 * growth, channels + 4 * growth]
    couts = [growth, growth, growth, growth, channels]
    keys = jax.random.split(key, 2 * len(cins))
    params = []
    for i, (cin, cout) in enumerate(zip(cins, couts)):
        w = jax.random.normal(keys[2 * i], (3, 3, cin, cout),
                              jnp.float32) * (1.0 / jnp.sqrt(9.0 * cin))
        b = jax.random.normal(keys[2 * i + 1], (cout,), jnp.float32) * 0.01
        params.append((w, b))
    return tuple(params)


# ---------------------------------------------------------------------------
if __name__ == "__main__":
    channels, growth = 8, 4
    N, H, W = 2, 16, 16

    key = jax.random.PRNGKey(0)
    kx, kp = jax.random.split(key)
    x_nchw = jax.random.normal(kx, (N, channels, H, W), jnp.float32)
    params = init_params(kp, channels, growth)

    ref = rdb_reference(x_nchw, params)

    # f32 compute path (tight check).
    out = jax.block_until_ready(rdb_forward(x_nchw, params))
    assert out.shape == (N, channels, H, W), out.shape
    assert jnp.allclose(out, ref, atol=1e-3, rtol=1e-3), "f32 mismatch vs reference"

    # bf16 MXU path (f32 accumulate/epilogue), looser tolerance per review note.
    out_bf16 = jax.block_until_ready(
        rdb_forward(x_nchw, params, compute_dtype=jnp.bfloat16))
    assert jnp.allclose(out_bf16, ref, atol=2e-1, rtol=1e-1), "bf16 mismatch vs reference"

    print("KERNEL_OK")
</pallas_src>

<mosaic_0001>
module attributes {stable_mosaic.version = 11 : i64} {
  func.func @kernel(%arg0: i32, %arg1: memref<1x18x18x8xf32, #tpu.memory_space<vmem>>, %arg2: memref<72x4xf32, #tpu.memory_space<vmem>>, %arg3: memref<108x4xf32, #tpu.memory_space<vmem>>, %arg4: memref<144x4xf32, #tpu.memory_space<vmem>>, %arg5: memref<180x4xf32, #tpu.memory_space<vmem>>, %arg6: memref<216x8xf32, #tpu.memory_space<vmem>>, %arg7: memref<1x4xf32, #tpu.memory_space<vmem>>, %arg8: memref<1x4xf32, #tpu.memory_space<vmem>>, %arg9: memref<1x4xf32, #tpu.memory_space<vmem>>, %arg10: memref<1x4xf32, #tpu.memory_space<vmem>>, %arg11: memref<1x8xf32, #tpu.memory_space<vmem>>, %arg12: memref<1x16x16x8xf32, #tpu.memory_space<vmem>>, %arg13: memref<18x18x4xf32, #tpu.memory_space<vmem>>, %arg14: memref<18x18x4xf32, #tpu.memory_space<vmem>>, %arg15: memref<18x18x4xf32, #tpu.memory_space<vmem>>, %arg16: memref<18x18x4xf32, #tpu.memory_space<vmem>>) attributes {dimension_semantics = [#tpu.dimension_semantics<parallel>], iteration_bounds = array<i64: 2>, scalar_prefetch = 0 : i64, scratch_operands = 4 : i64, tpu.core_type = #tpu.core_type<tc>, window_params = [{transform_indices = @transform_0, window_bounds = array<i64: 1, 18, 18, 8>}, {pipeline_mode = #tpu.pipeline_mode<synchronous>, transform_indices = @transform_1, window_bounds = array<i64: 72, 4>}, {pipeline_mode = #tpu.pipeline_mode<synchronous>, transform_indices = @transform_2, window_bounds = array<i64: 108, 4>}, {pipeline_mode = #tpu.pipeline_mode<synchronous>, transform_indices = @transform_3, window_bounds = array<i64: 144, 4>}, {pipeline_mode = #tpu.pipeline_mode<synchronous>, transform_indices = @transform_4, window_bounds = array<i64: 180, 4>}, {pipeline_mode = #tpu.pipeline_mode<synchronous>, transform_indices = @transform_5, window_bounds = array<i64: 216, 8>}, {pipeline_mode = #tpu.pipeline_mode<synchronous>, transform_indices = @transform_6, window_bounds = array<i64: 1, 4>}, {pipeline_mode = #tpu.pipeline_mode<synchronous>, transform_indices = @transform_7, window_bounds = array<i64: 1, 4>}, {pipeline_mode = #tpu.pipeline_mode<synchronous>, transform_indices = @transform_8, window_bounds = array<i64: 1, 4>}, {pipeline_mode = #tpu.pipeline_mode<synchronous>, transform_indices = @transform_9, window_bounds = array<i64: 1, 4>}, {pipeline_mode = #tpu.pipeline_mode<synchronous>, transform_indices = @transform_10, window_bounds = array<i64: 1, 8>}, {transform_indices = @transform_11, window_bounds = array<i64: 1, 16, 16, 8>}]} {
    %cst = arith.constant 0.000000e+00 : f32
    %0 = vector.broadcast %cst : f32 to vector<18x18x4xf32>
    %c0 = arith.constant 0 : index
    %c0_0 = arith.constant 0 : index
    %c0_1 = arith.constant 0 : index
    %1 = vector.load %arg13[%c0, %c0_0, %c0_1] : memref<18x18x4xf32, #tpu.memory_space<vmem>>, vector<18x18x4xf32>
    tpu.vector_store %arg13[%c0, %c0_0, %c0_1], %0 {strides = array<i32>} : memref<18x18x4xf32, #tpu.memory_space<vmem>>, vector<18x18x4xf32>,
    %cst_2 = arith.constant 0.000000e+00 : f32
    %2 = vector.broadcast %cst_2 : f32 to vector<18x18x4xf32>
    %c0_3 = arith.constant 0 : index
    %c0_4 = arith.constant 0 : index
    %c0_5 = arith.constant 0 : index
    %3 = vector.load %arg14[%c0_3, %c0_4, %c0_5] : memref<18x18x4xf32, #tpu.memory_space<vmem>>, vector<18x18x4xf32>
    tpu.vector_store %arg14[%c0_3, %c0_4, %c0_5], %2 {strides = array<i32>} : memref<18x18x4xf32, #tpu.memory_space<vmem>>, vector<18x18x4xf32>,
    %cst_6 = arith.constant 0.000000e+00 : f32
    %4 = vector.broadcast %cst_6 : f32 to vector<18x18x4xf32>
    %c0_7 = arith.constant 0 : index
    %c0_8 = arith.constant 0 : index
    %c0_9 = arith.constant 0 : index
    %5 = vector.load %arg15[%c0_7, %c0_8, %c0_9] : memref<18x18x4xf32, #tpu.memory_space<vmem>>, vector<18x18x4xf32>
    tpu.vector_store %arg15[%c0_7, %c0_8, %c0_9], %4 {strides = array<i32>} : memref<18x18x4xf32, #tpu.memory_space<vmem>>, vector<18x18x4xf32>,
    %cst_10 = arith.constant 0.000000e+00 : f32
    %6 = vector.broadcast %cst_10 : f32 to vector<18x18x4xf32>
    %c0_11 = arith.constant 0 : index
    %c0_12 = arith.constant 0 : index
    %c0_13 = arith.constant 0 : index
    %7 = vector.load %arg16[%c0_11, %c0_12, %c0_13] : memref<18x18x4xf32, #tpu.memory_space<vmem>>, vector<18x18x4xf32>
    tpu.vector_store %arg16[%c0_11, %c0_12, %c0_13], %6 {strides = array<i32>} : memref<18x18x4xf32, #tpu.memory_space<vmem>>, vector<18x18x4xf32>,
    %c0_14 = arith.constant 0 : index
    %c0_15 = arith.constant 0 : index
    %c0_16 = arith.constant 0 : index
    %c0_17 = arith.constant 0 : index
    %8 = vector.load %arg1[%c0_14, %c0_15, %c0_16, %c0_17] : memref<1x18x18x8xf32, #tpu.memory_space<vmem>>, vector<1x16x16x8xf32>
    %9 = vector.shape_cast %8 : vector<1x16x16x8xf32> to vector<16x16x8xf32>
    %10 = vector.shape_cast %9 : vector<16x16x8xf32> to vector<256x8xf32>
    %c0_18 = arith.constant 0 : index
    %c0_19 = arith.constant 0 : index
    %c1 = arith.constant 1 : index
    %c0_20 = arith.constant 0 : index
    %11 = vector.load %arg1[%c0_18, %c0_19, %c1, %c0_20] : memref<1x18x18x8xf32, #tpu.memory_space<vmem>>, vector<1x16x16x8xf32>
    %12 = vector.shape_cast %11 : vector<1x16x16x8xf32> to vector<16x16x8xf32>
    %13 = vector.shape_cast %12 : vector<16x16x8xf32> to vector<256x8xf32>
    %c0_21 = arith.constant 0 : index
    %c0_22 = arith.constant 0 : index
    %c2 = arith.constant 2 : index
    %c0_23 = arith.constant 0 : index
    %14 = vector.load %arg1[%c0_21, %c0_22, %c2, %c0_23] : memref<1x18x18x8xf32, #tpu.memory_space<vmem>>, vector<1x16x16x8xf32>
    %15 = vector.shape_cast %14 : vector<1x16x16x8xf32> to vector<16x16x8xf32>
    %16 = vector.shape_cast %15 : vector<16x16x8xf32> to vector<256x8xf32>
    %c0_24 = arith.constant 0 : index
    %c1_25 = arith.constant 1 : index
    %c0_26 = arith.constant 0 : index
    %c0_27 = arith.constant 0 : index
    %17 = vector.load %arg1[%c0_24, %c1_25, %c0_26, %c0_27] : memref<1x18x18x8xf32, #tpu.memory_space<vmem>>, vector<1x16x16x8xf32>
    %18 = vector.shape_cast %17 : vector<1x16x16x8xf32> to vector<16x16x8xf32>
    %19 = vector.shape_cast %18 : vector<16x16x8xf32> to vector<256x8xf32>
    %c0_28 = arith.constant 0 : index
    %c1_29 = arith.constant 1 : index
    %c1_30 = arith.constant 1 : index
    %c0_31 = arith.constant 0 : index
    %20 = vector.load %arg1[%c0_28, %c1_29, %c1_30, %c0_31] : memref<1x18x18x8xf32, #tpu.memory_space<vmem>>, vector<1x16x16x8xf32>
    %21 = vector.shape_cast %20 : vector<1x16x16x8xf32> to vector<16x16x8xf32>
    %22 = vector.shape_cast %21 : vector<16x16x8xf32> to vector<256x8xf32>
    %c0_32 = arith.constant 0 : index
    %c1_33 = arith.constant 1 : index
    %c2_34 = arith.constant 2 : index
    %c0_35 = arith.constant 0 : index
    %23 = vector.load %arg1[%c0_32, %c1_33, %c2_34, %c0_35] : memref<1x18x18x8xf32, #tpu.memory_space<vmem>>, vector<1x16x16x8xf32>
    %24 = vector.shape_cast %23 : vector<1x16x16x8xf32> to vector<16x16x8xf32>
    %25 = vector.shape_cast %24 : vector<16x16x8xf32> to vector<256x8xf32>
    %c0_36 = arith.constant 0 : index
    %c2_37 = arith.constant 2 : index
    %c0_38 = arith.constant 0 : index
    %c0_39 = arith.constant 0 : index
    %26 = vector.load %arg1[%c0_36, %c2_37, %c0_38, %c0_39] : memref<1x18x18x8xf32, #tpu.memory_space<vmem>>, vector<1x16x16x8xf32>
    %27 = vector.shape_cast %26 : vector<1x16x16x8xf32> to vector<16x16x8xf32>
    %28 = vector.shape_cast %27 : vector<16x16x8xf32> to vector<256x8xf32>
    %c0_40 = arith.constant 0 : index
    %c2_41 = arith.constant 2 : index
    %c1_42 = arith.constant 1 : index
    %c0_43 = arith.constant 0 : index
    %29 = vector.load %arg1[%c0_40, %c2_41, %c1_42, %c0_43] : memref<1x18x18x8xf32, #tpu.memory_space<vmem>>, vector<1x16x16x8xf32>
    %30 = vector.shape_cast %29 : vector<1x16x16x8xf32> to vector<16x16x8xf32>
    %31 = vector.shape_cast %30 : vector<16x16x8xf32> to vector<256x8xf32>
    %c0_44 = arith.constant 0 : index
    %c2_45 = arith.constant 2 : index
    %c2_46 = arith.constant 2 : index
    %c0_47 = arith.constant 0 : index
    %32 = vector.load %arg1[%c0_44, %c2_45, %c2_46, %c0_47] : memref<1x18x18x8xf32, #tpu.memory_space<vmem>>, vector<1x16x16x8xf32>
    %33 = vector.shape_cast %32 : vector<1x16x16x8xf32> to vector<16x16x8xf32>
    %34 = vector.shape_cast %33 : vector<16x16x8xf32> to vector<256x8xf32>
    %35 = tpu.concatenate %10, %13, %16, %19, %22, %25, %28, %31, %34 in 1 : vector<256x8xf32>, vector<256x8xf32>, vector<256x8xf32>, vector<256x8xf32>, vector<256x8xf32>, vector<256x8xf32>, vector<256x8xf32>, vector<256x8xf32>, vector<256x8xf32> -> vector<256x72xf32>
    %c0_48 = arith.constant 0 : index
    %c0_49 = arith.constant 0 : index
    %36 = vector.load %arg2[%c0_48, %c0_49] : memref<72x4xf32, #tpu.memory_space<vmem>>, vector<72x4xf32>
    %cst_50 = arith.constant dense<0.000000e+00> : vector<256x4xf32>
    %37 = tpu.matmul %35, %36, %cst_50 {dimension_numbers = #tpu.dot_dimension_numbers<[1], [0], [0], [1], [0, 0, 1, 1], [], []>} : vector<256x72xf32>, vector<72x4xf32>, vector<256x4xf32> -> vector<256x4xf32>
    %c0_51 = arith.constant 0 : index
    %c0_52 = arith.constant 0 : index
    %38 = vector.load %arg7[%c0_51, %c0_52] : memref<1x4xf32, #tpu.memory_space<vmem>>, vector<1x4xf32>
    %39 = vector.broadcast %38 : vector<1x4xf32> to vector<256x4xf32>
    %40 = arith.addf %37, %39 : vector<256x4xf32>
    %cst_53 = arith.constant 0.000000e+00 : f32
    %41 = vector.broadcast %cst_53 : f32 to vector<256x4xf32>
    %42 = arith.cmpf ogt, %40, %41 : vector<256x4xf32>
    %cst_54 = arith.constant 2.000000e-01 : f32
    %43 = vector.broadcast %cst_54 : f32 to vector<256x4xf32>
    %44 = arith.mulf %43, %40 : vector<256x4xf32>
    %45 = arith.select %42, %40, %44 : vector<256x4xi1>, vector<256x4xf32>
    %46 = vector.shape_cast %45 : vector<256x4xf32> to vector<16x16x4xf32>
    %c1_55 = arith.constant 1 : index
    %c1_56 = arith.constant 1 : index
    %c0_57 = arith.constant 0 : index
    %47 = vector.load %arg13[%c1_55, %c1_56, %c0_57] : memref<18x18x4xf32, #tpu.memory_space<vmem>>, vector<16x16x4xf32>
    tpu.vector_store %arg13[%c1_55, %c1_56, %c0_57], %46 {strides = array<i32>} : memref<18x18x4xf32, #tpu.memory_space<vmem>>, vector<16x16x4xf32>,
    %c0_58 = arith.constant 0 : index
    %c0_59 = arith.constant 0 : index
    %c0_60 = arith.constant 0 : index
    %48 = vector.load %arg13[%c0_58, %c0_59, %c0_60] : memref<18x18x4xf32, #tpu.memory_space<vmem>>, vector<16x16x4xf32>
    %49 = vector.shape_cast %48 : vector<16x16x4xf32> to vector<256x4xf32>
    %c0_61 = arith.constant 0 : index
    %c1_62 = arith.constant 1 : index
    %c0_63 = arith.constant 0 : index
    %50 = vector.load %arg13[%c0_61, %c1_62, %c0_63] : memref<18x18x4xf32, #tpu.memory_space<vmem>>, vector<16x16x4xf32>
    %51 = vector.shape_cast %50 : vector<16x16x4xf32> to vector<256x4xf32>
    %c0_64 = arith.constant 0 : index
    %c2_65 = arith.constant 2 : index
    %c0_66 = arith.constant 0 : index
    %52 = vector.load %arg13[%c0_64, %c2_65, %c0_66] : memref<18x18x4xf32, #tpu.memory_space<vmem>>, vector<16x16x4xf32>
    %53 = vector.shape_cast %52 : vector<16x16x4xf32> to vector<256x4xf32>
    %c1_67 = arith.constant 1 : index
    %c0_68 = arith.constant 0 : index
    %c0_69 = arith.constant 0 : index
    %54 = vector.load %arg13[%c1_67, %c0_68, %c0_69] : memref<18x18x4xf32, #tpu.memory_space<vmem>>, vector<16x16x4xf32>
    %55 = vector.shape_cast %54 : vector<16x16x4xf32> to vector<256x4xf32>
    %c1_70 = arith.constant 1 : index
    %c1_71 = arith.constant 1 : index
    %c0_72 = arith.constant 0 : index
    %56 = vector.load %arg13[%c1_70, %c1_71, %c0_72] : memref<18x18x4xf32, #tpu.memory_space<vmem>>, vector<16x16x4xf32>
    %57 = vector.shape_cast %56 : vector<16x16x4xf32> to vector<256x4xf32>
    %c1_73 = arith.constant 1 : index
    %c2_74 = arith.constant 2 : index
    %c0_75 = arith.constant 0 : index
    %58 = vector.load %arg13[%c1_73, %c2_74, %c0_75] : memref<18x18x4xf32, #tpu.memory_space<vmem>>, vector<16x16x4xf32>
    %59 = vector.shape_cast %58 : vector<16x16x4xf32> to vector<256x4xf32>
    %c2_76 = arith.constant 2 : index
    %c0_77 = arith.constant 0 : index
    %c0_78 = arith.constant 0 : index
    %60 = vector.load %arg13[%c2_76, %c0_77, %c0_78] : memref<18x18x4xf32, #tpu.memory_space<vmem>>, vector<16x16x4xf32>
    %61 = vector.shape_cast %60 : vector<16x16x4xf32> to vector<256x4xf32>
    %c2_79 = arith.constant 2 : index
    %c1_80 = arith.constant 1 : index
    %c0_81 = arith.constant 0 : index
    %62 = vector.load %arg13[%c2_79, %c1_80, %c0_81] : memref<18x18x4xf32, #tpu.memory_space<vmem>>, vector<16x16x4xf32>
    %63 = vector.shape_cast %62 : vector<16x16x4xf32> to vector<256x4xf32>
    %c2_82 = arith.constant 2 : index
    %c2_83 = arith.constant 2 : index
    %c0_84 = arith.constant 0 : index
    %64 = vector.load %arg13[%c2_82, %c2_83, %c0_84] : memref<18x18x4xf32, #tpu.memory_space<vmem>>, vector<16x16x4xf32>
    %65 = vector.shape_cast %64 : vector<16x16x4xf32> to vector<256x4xf32>
    %66 = tpu.concatenate %49, %51, %53, %55, %57, %59, %61, %63, %65 in 1 : vector<256x4xf32>, vector<256x4xf32>, vector<256x4xf32>, vector<256x4xf32>, vector<256x4xf32>, vector<256x4xf32>, vector<256x4xf32>, vector<256x4xf32>, vector<256x4xf32> -> vector<256x36xf32>
    %67 = tpu.concatenate %35, %66 in 1 : vector<256x72xf32>, vector<256x36xf32> -> vector<256x108xf32>
    %c0_85 = arith.constant 0 : index
    %c0_86 = arith.constant 0 : index
    %68 = vector.load %arg3[%c0_85, %c0_86] : memref<108x4xf32, #tpu.memory_space<vmem>>, vector<108x4xf32>
    %cst_87 = arith.constant dense<0.000000e+00> : vector<256x4xf32>
    %69 = tpu.matmul %67, %68, %cst_87 {dimension_numbers = #tpu.dot_dimension_numbers<[1], [0], [0], [1], [0, 0, 1, 1], [], []>} : vector<256x108xf32>, vector<108x4xf32>, vector<256x4xf32> -> vector<256x4xf32>
    %c0_88 = arith.constant 0 : index
    %c0_89 = arith.constant 0 : index
    %70 = vector.load %arg8[%c0_88, %c0_89] : memref<1x4xf32, #tpu.memory_space<vmem>>, vector<1x4xf32>
    %71 = vector.broadcast %70 : vector<1x4xf32> to vector<256x4xf32>
    %72 = arith.addf %69, %71 : vector<256x4xf32>
    %cst_90 = arith.constant 0.000000e+00 : f32
    %73 = vector.broadcast %cst_90 : f32 to vector<256x4xf32>
    %74 = arith.cmpf ogt, %72, %73 : vector<256x4xf32>
    %cst_91 = arith.constant 2.000000e-01 : f32
    %75 = vector.broadcast %cst_91 : f32 to vector<256x4xf32>
    %76 = arith.mulf %75, %72 : vector<256x4xf32>
    %77 = arith.select %74, %72, %76 : vector<256x4xi1>, vector<256x4xf32>
    %78 = vector.shape_cast %77 : vector<256x4xf32> to vector<16x16x4xf32>
    %c1_92 = arith.constant 1 : index
    %c1_93 = arith.constant 1 : index
    %c0_94 = arith.constant 0 : index
    %79 = vector.load %arg14[%c1_92, %c1_93, %c0_94] : memref<18x18x4xf32, #tpu.memory_space<vmem>>, vector<16x16x4xf32>
    tpu.vector_store %arg14[%c1_92, %c1_93, %c0_94], %78 {strides = array<i32>} : memref<18x18x4xf32, #tpu.memory_space<vmem>>, vector<16x16x4xf32>,
    %c0_95 = arith.constant 0 : index
    %c0_96 = arith.constant 0 : index
    %c0_97 = arith.constant 0 : index
    %80 = vector.load %arg14[%c0_95, %c0_96, %c0_97] : memref<18x18x4xf32, #tpu.memory_space<vmem>>, vector<16x16x4xf32>
    %81 = vector.shape_cast %80 : vector<16x16x4xf32> to vector<256x4xf32>
    %c0_98 = arith.constant 0 : index
    %c1_99 = arith.constant 1 : index
    %c0_100 = arith.constant 0 : index
    %82 = vector.load %arg14[%c0_98, %c1_99, %c0_100] : memref<18x18x4xf32, #tpu.memory_space<vmem>>, vector<16x16x4xf32>
    %83 = vector.shape_cast %82 : vector<16x16x4xf32> to vector<256x4xf32>
    %c0_101 = arith.constant 0 : index
    %c2_102 = arith.constant 2 : index
    %c0_103 = arith.constant 0 : index
    %84 = vector.load %arg14[%c0_101, %c2_102, %c0_103] : memref<18x18x4xf32, #tpu.memory_space<vmem>>, vector<16x16x4xf32>
    %85 = vector.shape_cast %84 : vector<16x16x4xf32> to vector<256x4xf32>
    %c1_104 = arith.constant 1 : index
    %c0_105 = arith.constant 0 : index
    %c0_106 = arith.constant 0 : index
    %86 = vector.load %arg14[%c1_104, %c0_105, %c0_106] : memref<18x18x4xf32, #tpu.memory_space<vmem>>, vector<16x16x4xf32>
    %87 = vector.shape_cast %86 : vector<16x16x4xf32> to vector<256x4xf32>
    %c1_107 = arith.constant 1 : index
    %c1_108 = arith.constant 1 : index
    %c0_109 = arith.constant 0 : index
    %88 = vector.load %arg14[%c1_107, %c1_108, %c0_109] : memref<18x18x4xf32, #tpu.memory_space<vmem>>, vector<16x16x4xf32>
    %89 = vector.shape_cast %88 : vector<16x16x4xf32> to vector<256x4xf32>
    %c1_110 = arith.constant 1 : index
    %c2_111 = arith.constant 2 : index
    %c0_112 = arith.constant 0 : index
    %90 = vector.load %arg14[%c1_110, %c2_111, %c0_112] : memref<18x18x4xf32, #tpu.memory_space<vmem>>, vector<16x16x4xf32>
    %91 = vector.shape_cast %90 : vector<16x16x4xf32> to vector<256x4xf32>
    %c2_113 = arith.constant 2 : index
    %c0_114 = arith.constant 0 : index
    %c0_115 = arith.constant 0 : index
    %92 = vector.load %arg14[%c2_113, %c0_114, %c0_115] : memref<18x18x4xf32, #tpu.memory_space<vmem>>, vector<16x16x4xf32>
    %93 = vector.shape_cast %92 : vector<16x16x4xf32> to vector<256x4xf32>
    %c2_116 = arith.constant 2 : index
    %c1_117 = arith.constant 1 : index
    %c0_118 = arith.constant 0 : index
    %94 = vector.load %arg14[%c2_116, %c1_117, %c0_118] : memref<18x18x4xf32, #tpu.memory_space<vmem>>, vector<16x16x4xf32>
    %95 = vector.shape_cast %94 : vector<16x16x4xf32> to vector<256x4xf32>
    %c2_119 = arith.constant 2 : index
    %c2_120 = arith.constant 2 : index
    %c0_121 = arith.constant 0 : index
    %96 = vector.load %arg14[%c2_119, %c2_120, %c0_121] : memref<18x18x4xf32, #tpu.memory_space<vmem>>, vector<16x16x4xf32>
    %97 = vector.shape_cast %96 : vector<16x16x4xf32> to vector<256x4xf32>
    %98 = tpu.concatenate %81, %83, %85, %87, %89, %91, %93, %95, %97 in 1 : vector<256x4xf32>, vector<256x4xf32>, vector<256x4xf32>, vector<256x4xf32>, vector<256x4xf32>, vector<256x4xf32>, vector<256x4xf32>, vector<256x4xf32>, vector<256x4xf32> -> vector<256x36xf32>
    %99 = tpu.concatenate %67, %98 in 1 : vector<256x108xf32>, vector<256x36xf32> -> vector<256x144xf32>
    %c0_122 = arith.constant 0 : index
    %c0_123 = arith.constant 0 : index
    %100 = vector.load %arg4[%c0_122, %c0_123] : memref<144x4xf32, #tpu.memory_space<vmem>>, vector<144x4xf32>
    %cst_124 = arith.constant dense<0.000000e+00> : vector<256x4xf32>
    %101 = tpu.matmul %99, %100, %cst_124 {dimension_numbers = #tpu.dot_dimension_numbers<[1], [0], [0], [1], [0, 0, 1, 1], [], []>} : vector<256x144xf32>, vector<144x4xf32>, vector<256x4xf32> -> vector<256x4xf32>
    %c0_125 = arith.constant 0 : index
    %c0_126 = arith.constant 0 : index
    %102 = vector.load %arg9[%c0_125, %c0_126] : memref<1x4xf32, #tpu.memory_space<vmem>>, vector<1x4xf32>
    %103 = vector.broadcast %102 : vector<1x4xf32> to vector<256x4xf32>
    %104 = arith.addf %101, %103 : vector<256x4xf32>
    %cst_127 = arith.constant 0.000000e+00 : f32
    %105 = vector.broadcast %cst_127 : f32 to vector<256x4xf32>
    %106 = arith.cmpf ogt, %104, %105 : vector<256x4xf32>
    %cst_128 = arith.constant 2.000000e-01 : f32
    %107 = vector.broadcast %cst_128 : f32 to vector<256x4xf32>
    %108 = arith.mulf %107, %104 : vector<256x4xf32>
    %109 = arith.select %106, %104, %108 : vector<256x4xi1>, vector<256x4xf32>
    %110 = vector.shape_cast %109 : vector<256x4xf32> to vector<16x16x4xf32>
    %c1_129 = arith.constant 1 : index
    %c1_130 = arith.constant 1 : index
    %c0_131 = arith.constant 0 : index
    %111 = vector.load %arg15[%c1_129, %c1_130, %c0_131] : memref<18x18x4xf32, #tpu.memory_space<vmem>>, vector<16x16x4xf32>
    tpu.vector_store %arg15[%c1_129, %c1_130, %c0_131], %110 {strides = array<i32>} : memref<18x18x4xf32, #tpu.memory_space<vmem>>, vector<16x16x4xf32>,
    %c0_132 = arith.constant 0 : index
    %c0_133 = arith.constant 0 : index
    %c0_134 = arith.constant 0 : index
    %112 = vector.load %arg15[%c0_132, %c0_133, %c0_134] : memref<18x18x4xf32, #tpu.memory_space<vmem>>, vector<16x16x4xf32>
    %113 = vector.shape_cast %112 : vector<16x16x4xf32> to vector<256x4xf32>
    %c0_135 = arith.constant 0 : index
    %c1_136 = arith.constant 1 : index
    %c0_137 = arith.constant 0 : index
    %114 = vector.load %arg15[%c0_135, %c1_136, %c0_137] : memref<18x18x4xf32, #tpu.memory_space<vmem>>, vector<16x16x4xf32>
    %115 = vector.shape_cast %114 : vector<16x16x4xf32> to vector<256x4xf32>
    %c0_138 = arith.constant 0 : index
    %c2_139 = arith.constant 2 : index
    %c0_140 = arith.constant 0 : index
    %116 = vector.load %arg15[%c0_138, %c2_139, %c0_140] : memref<18x18x4xf32, #tpu.memory_space<vmem>>, vector<16x16x4xf32>
    %117 = vector.shape_cast %116 : vector<16x16x4xf32> to vector<256x4xf32>
    %c1_141 = arith.constant 1 : index
    %c0_142 = arith.constant 0 : index
    %c0_143 = arith.constant 0 : index
    %118 = vector.load %arg15[%c1_141, %c0_142, %c0_143] : memref<18x18x4xf32, #tpu.memory_space<vmem>>, vector<16x16x4xf32>
    %119 = vector.shape_cast %118 : vector<16x16x4xf32> to vector<256x4xf32>
    %c1_144 = arith.constant 1 : index
    %c1_145 = arith.constant 1 : index
    %c0_146 = arith.constant 0 : index
    %120 = vector.load %arg15[%c1_144, %c1_145, %c0_146] : memref<18x18x4xf32, #tpu.memory_space<vmem>>, vector<16x16x4xf32>
    %121 = vector.shape_cast %120 : vector<16x16x4xf32> to vector<256x4xf32>
    %c1_147 = arith.constant 1 : index
    %c2_148 = arith.constant 2 : index
    %c0_149 = arith.constant 0 : index
    %122 = vector.load %arg15[%c1_147, %c2_148, %c0_149] : memref<18x18x4xf32, #tpu.memory_space<vmem>>, vector<16x16x4xf32>
    %123 = vector.shape_cast %122 : vector<16x16x4xf32> to vector<256x4xf32>
    %c2_150 = arith.constant 2 : index
    %c0_151 = arith.constant 0 : index
    %c0_152 = arith.constant 0 : index
    %124 = vector.load %arg15[%c2_150, %c0_151, %c0_152] : memref<18x18x4xf32, #tpu.memory_space<vmem>>, vector<16x16x4xf32>
    %125 = vector.shape_cast %124 : vector<16x16x4xf32> to vector<256x4xf32>
    %c2_153 = arith.constant 2 : index
    %c1_154 = arith.constant 1 : index
    %c0_155 = arith.constant 0 : index
    %126 = vector.load %arg15[%c2_153, %c1_154, %c0_155] : memref<18x18x4xf32, #tpu.memory_space<vmem>>, vector<16x16x4xf32>
    %127 = vector.shape_cast %126 : vector<16x16x4xf32> to vector<256x4xf32>
    %c2_156 = arith.constant 2 : index
    %c2_157 = arith.constant 2 : index
    %c0_158 = arith.constant 0 : index
    %128 = vector.load %arg15[%c2_156, %c2_157, %c0_158] : memref<18x18x4xf32, #tpu.memory_space<vmem>>, vector<16x16x4xf32>
    %129 = vector.shape_cast %128 : vector<16x16x4xf32> to vector<256x4xf32>
    %130 = tpu.concatenate %113, %115, %117, %119, %121, %123, %125, %127, %129 in 1 : vector<256x4xf32>, vector<256x4xf32>, vector<256x4xf32>, vector<256x4xf32>, vector<256x4xf32>, vector<256x4xf32>, vector<256x4xf32>, vector<256x4xf32>, vector<256x4xf32> -> vector<256x36xf32>
    %131 = tpu.concatenate %99, %130 in 1 : vector<256x144xf32>, vector<256x36xf32> -> vector<256x180xf32>
    %c0_159 = arith.constant 0 : index
    %c0_160 = arith.constant 0 : index
    %132 = vector.load %arg5[%c0_159, %c0_160] : memref<180x4xf32, #tpu.memory_space<vmem>>, vector<180x4xf32>
    %cst_161 = arith.constant dense<0.000000e+00> : vector<256x4xf32>
    %133 = tpu.matmul %131, %132, %cst_161 {dimension_numbers = #tpu.dot_dimension_numbers<[1], [0], [0], [1], [0, 0, 1, 1], [], []>} : vector<256x180xf32>, vector<180x4xf32>, vector<256x4xf32> -> vector<256x4xf32>
    %c0_162 = arith.constant 0 : index
    %c0_163 = arith.constant 0 : index
    %134 = vector.load %arg10[%c0_162, %c0_163] : memref<1x4xf32, #tpu.memory_space<vmem>>, vector<1x4xf32>
    %135 = vector.broadcast %134 : vector<1x4xf32> to vector<256x4xf32>
    %136 = arith.addf %133, %135 : vector<256x4xf32>
    %cst_164 = arith.constant 0.000000e+00 : f32
    %137 = vector.broadcast %cst_164 : f32 to vector<256x4xf32>
    %138 = arith.cmpf ogt, %136, %137 : vector<256x4xf32>
    %cst_165 = arith.constant 2.000000e-01 : f32
    %139 = vector.broadcast %cst_165 : f32 to vector<256x4xf32>
    %140 = arith.mulf %139, %136 : vector<256x4xf32>
    %141 = arith.select %138, %136, %140 : vector<256x4xi1>, vector<256x4xf32>
    %142 = vector.shape_cast %141 : vector<256x4xf32> to vector<16x16x4xf32>
    %c1_166 = arith.constant 1 : index
    %c1_167 = arith.constant 1 : index
    %c0_168 = arith.constant 0 : index
    %143 = vector.load %arg16[%c1_166, %c1_167, %c0_168] : memref<18x18x4xf32, #tpu.memory_space<vmem>>, vector<16x16x4xf32>
    tpu.vector_store %arg16[%c1_166, %c1_167, %c0_168], %142 {strides = array<i32>} : memref<18x18x4xf32, #tpu.memory_space<vmem>>, vector<16x16x4xf32>,
    %c0_169 = arith.constant 0 : index
    %c0_170 = arith.constant 0 : index
    %c0_171 = arith.constant 0 : index
    %144 = vector.load %arg16[%c0_169, %c0_170, %c0_171] : memref<18x18x4xf32, #tpu.memory_space<vmem>>, vector<16x16x4xf32>
    %145 = vector.shape_cast %144 : vector<16x16x4xf32> to vector<256x4xf32>
    %c0_172 = arith.constant 0 : index
    %c1_173 = arith.constant 1 : index
    %c0_174 = arith.constant 0 : index
    %146 = vector.load %arg16[%c0_172, %c1_173, %c0_174] : memref<18x18x4xf32, #tpu.memory_space<vmem>>, vector<16x16x4xf32>
    %147 = vector.shape_cast %146 : vector<16x16x4xf32> to vector<256x4xf32>
    %c0_175 = arith.constant 0 : index
    %c2_176 = arith.constant 2 : index
    %c0_177 = arith.constant 0 : index
    %148 = vector.load %arg16[%c0_175, %c2_176, %c0_177] : memref<18x18x4xf32, #tpu.memory_space<vmem>>, vector<16x16x4xf32>
    %149 = vector.shape_cast %148 : vector<16x16x4xf32> to vector<256x4xf32>
    %c1_178 = arith.constant 1 : index
    %c0_179 = arith.constant 0 : index
    %c0_180 = arith.constant 0 : index
    %150 = vector.load %arg16[%c1_178, %c0_179, %c0_180] : memref<18x18x4xf32, #tpu.memory_space<vmem>>, vector<16x16x4xf32>
    %151 = vector.shape_cast %150 : vector<16x16x4xf32> to vector<256x4xf32>
    %c1_181 = arith.constant 1 : index
    %c1_182 = arith.constant 1 : index
    %c0_183 = arith.constant 0 : index
    %152 = vector.load %arg16[%c1_181, %c1_182, %c0_183] : memref<18x18x4xf32, #tpu.memory_space<vmem>>, vector<16x16x4xf32>
    %153 = vector.shape_cast %152 : vector<16x16x4xf32> to vector<256x4xf32>
    %c1_184 = arith.constant 1 : index
    %c2_185 = arith.constant 2 : index
    %c0_186 = arith.constant 0 : index
    %154 = vector.load %arg16[%c1_184, %c2_185, %c0_186] : memref<18x18x4xf32, #tpu.memory_space<vmem>>, vector<16x16x4xf32>
    %155 = vector.shape_cast %154 : vector<16x16x4xf32> to vector<256x4xf32>
    %c2_187 = arith.constant 2 : index
    %c0_188 = arith.constant 0 : index
    %c0_189 = arith.constant 0 : index
    %156 = vector.load %arg16[%c2_187, %c0_188, %c0_189] : memref<18x18x4xf32, #tpu.memory_space<vmem>>, vector<16x16x4xf32>
    %157 = vector.shape_cast %156 : vector<16x16x4xf32> to vector<256x4xf32>
    %c2_190 = arith.constant 2 : index
    %c1_191 = arith.constant 1 : index
    %c0_192 = arith.constant 0 : index
    %158 = vector.load %arg16[%c2_190, %c1_191, %c0_192] : memref<18x18x4xf32, #tpu.memory_space<vmem>>, vector<16x16x4xf32>
    %159 = vector.shape_cast %158 : vector<16x16x4xf32> to vector<256x4xf32>
    %c2_193 = arith.constant 2 : index
    %c2_194 = arith.constant 2 : index
    %c0_195 = arith.constant 0 : index
    %160 = vector.load %arg16[%c2_193, %c2_194, %c0_195] : memref<18x18x4xf32, #tpu.memory_space<vmem>>, vector<16x16x4xf32>
    %161 = vector.shape_cast %160 : vector<16x16x4xf32> to vector<256x4xf32>
    %162 = tpu.concatenate %145, %147, %149, %151, %153, %155, %157, %159, %161 in 1 : vector<256x4xf32>, vector<256x4xf32>, vector<256x4xf32>, vector<256x4xf32>, vector<256x4xf32>, vector<256x4xf32>, vector<256x4xf32>, vector<256x4xf32>, vector<256x4xf32> -> vector<256x36xf32>
    %163 = tpu.concatenate %131, %162 in 1 : vector<256x180xf32>, vector<256x36xf32> -> vector<256x216xf32>
    %c0_196 = arith.constant 0 : index
    %c0_197 = arith.constant 0 : index
    %164 = vector.load %arg6[%c0_196, %c0_197] : memref<216x8xf32, #tpu.memory_space<vmem>>, vector<216x8xf32>
    %cst_198 = arith.constant dense<0.000000e+00> : vector<256x8xf32>
    %165 = tpu.matmul %163, %164, %cst_198 {dimension_numbers = #tpu.dot_dimension_numbers<[1], [0], [0], [1], [0, 0, 1, 1], [], []>} : vector<256x216xf32>, vector<216x8xf32>, vector<256x8xf32> -> vector<256x8xf32>
    %c0_199 = arith.constant 0 : index
    %c0_200 = arith.constant 0 : index
    %166 = vector.load %arg11[%c0_199, %c0_200] : memref<1x8xf32, #tpu.memory_space<vmem>>, vector<1x8xf32>
    %167 = vector.broadcast %166 : vector<1x8xf32> to vector<256x8xf32>
    %168 = arith.addf %165, %167 : vector<256x8xf32>
    %c0_201 = arith.constant 0 : index
    %c1_202 = arith.constant 1 : index
    %c1_203 = arith.constant 1 : index
    %c0_204 = arith.constant 0 : index
    %169 = vector.load %arg1[%c0_201, %c1_202, %c1_203, %c0_204] : memref<1x18x18x8xf32, #tpu.memory_space<vmem>>, vector<1x16x16x8xf32>
    %170 = vector.shape_cast %169 : vector<1x16x16x8xf32> to vector<16x16x8xf32>
    %171 = vector.shape_cast %170 : vector<16x16x8xf32> to vector<256x8xf32>
    %cst_205 = arith.constant 2.000000e-01 : f32
    %172 = vector.broadcast %cst_205 : f32 to vector<256x8xf32>
    %173 = arith.mulf %168, %172 : vector<256x8xf32>
    %174 = arith.addf %173, %171 : vector<256x8xf32>
    %175 = vector.shape_cast %174 : vector<256x8xf32> to vector<16x16x8xf32>
    %c0_206 = arith.constant 0 : index
    %c0_207 = arith.constant 0 : index
    %c0_208 = arith.constant 0 : index
    %c0_209 = arith.constant 0 : index
    %176 = vector.load %arg12[%c0_206, %c0_207, %c0_208, %c0_209] : memref<1x16x16x8xf32, #tpu.memory_space<vmem>>, vector<1x16x16x8xf32>
    %177 = vector.shape_cast %176 : vector<1x16x16x8xf32> to vector<16x16x8xf32>
    %178 = vector.shape_cast %175 : vector<16x16x8xf32> to vector<1x16x16x8xf32>
    tpu.vector_store %arg12[%c0_206, %c0_207, %c0_208, %c0_209], %178 {strides = array<i32>} : memref<1x16x16x8xf32, #tpu.memory_space<vmem>>, vector<1x16x16x8xf32>,
    return
  }
  func.func @transform_0(%arg0: i32) -> (i32, i32, i32, i32) {
    %c0_i32 = arith.constant 0 : i32
    %c0_i32_0 = arith.constant 0 : i32
    %c0_i32_1 = arith.constant 0 : i32
    %c0_i32_2 = arith.constant 0 : i32
    return %arg0, %c0_i32, %c0_i32_0, %c0_i32_1 : i32, i32, i32, i32
  }
  func.func @transform_1(%arg0: i32) -> (i32, i32) {
    %c0_i32 = arith.constant 0 : i32
    %c0_i32_0 = arith.constant 0 : i32
    %c0_i32_1 = arith.constant 0 : i32
    return %c0_i32, %c0_i32_0 : i32, i32
  }
  func.func @transform_2(%arg0: i32) -> (i32, i32) {
    %c0_i32 = arith.constant 0 : i32
    %c0_i32_0 = arith.constant 0 : i32
    %c0_i32_1 = arith.constant 0 : i32
    return %c0_i32, %c0_i32_0 : i32, i32
  }
  func.func @transform_3(%arg0: i32) -> (i32, i32) {
    %c0_i32 = arith.constant 0 : i32
    %c0_i32_0 = arith.constant 0 : i32
    %c0_i32_1 = arith.constant 0 : i32
    return %c0_i32, %c0_i32_0 : i32, i32
  }
  func.func @transform_4(%arg0: i32) -> (i32, i32) {
    %c0_i32 = arith.constant 0 : i32
    %c0_i32_0 = arith.constant 0 : i32
    %c0_i32_1 = arith.constant 0 : i32
    return %c0_i32, %c0_i32_0 : i32, i32
  }
  func.func @transform_5(%arg0: i32) -> (i32, i32) {
    %c0_i32 = arith.constant 0 : i32
    %c0_i32_0 = arith.constant 0 : i32
    %c0_i32_1 = arith.constant 0 : i32
    return %c0_i32, %c0_i32_0 : i32, i32
  }
  func.func @transform_6(%arg0: i32) -> (i32, i32) {
    %c0_i32 = arith.constant 0 : i32
    %c0_i32_0 = arith.constant 0 : i32
    %c0_i32_1 = arith.constant 0 : i32
    return %c0_i32, %c0_i32_0 : i32, i32
  }
  func.func @transform_7(%arg0: i32) -> (i32, i32) {
    %c0_i32 = arith.constant 0 : i32
    %c0_i32_0 = arith.constant 0 : i32
    %c0_i32_1 = arith.constant 0 : i32
    return %c0_i32, %c0_i32_0 : i32, i32
  }
  func.func @transform_8(%arg0: i32) -> (i32, i32) {
    %c0_i32 = arith.constant 0 : i32
    %c0_i32_0 = arith.constant 0 : i32
    %c0_i32_1 = arith.constant 0 : i32
    return %c0_i32, %c0_i32_0 : i32, i32
  }
  func.func @transform_9(%arg0: i32) -> (i32, i32) {
    %c0_i32 = arith.constant 0 : i32
    %c0_i32_0 = arith.constant 0 : i32
    %c0_i32_1 = arith.constant 0 : i32
    return %c0_i32, %c0_i32_0 : i32, i32
  }
  func.func @transform_10(%arg0: i32) -> (i32, i32) {
    %c0_i32 = arith.constant 0 : i32
    %c0_i32_0 = arith.constant 0 : i32
    %c0_i32_1 = arith.constant 0 : i32
    return %c0_i32, %c0_i32_0 : i32, i32
  }
  func.func @transform_11(%arg0: i32) -> (i32, i32, i32, i32) {
    %c0_i32 = arith.constant 0 : i32
    %c0_i32_0 = arith.constant 0 : i32
    %c0_i32_1 = arith.constant 0 : i32
    %c0_i32_2 = arith.constant 0 : i32
    return %arg0, %c0_i32, %c0_i32_0, %c0_i32_1 : i32, i32, i32, i32
  }
}

</mosaic_0001>

<llo_original>
// kernel: tpu_custom_call.1
$region0: #{tpu_custom_call.1}
  #allocation0 [shape = 'u32[]', space=smem, size = 0x4, offset = 0x4, fixed_abs, tag = 'smem constant byte address 0x4 - core index']
  #allocation1 [shape = 'u32[144,128]{1,0:T(1,128)}', space=vmem, size = 0x12000, scoped, tag = 'internal scratch']
  #allocation2 [shape = 'f32[18,18,4]{2,1,0:T(8,128)}', space=vmem, size = 0x36000, scoped, tag = 'scratch operand']
  #allocation3 [shape = 'f32[18,18,4]{2,1,0:T(8,128)}', space=vmem, size = 0x36000, scoped, tag = 'scratch operand']
  #allocation4 [shape = 'f32[18,18,4]{2,1,0:T(8,128)}', space=vmem, size = 0x36000, scoped, tag = 'scratch operand']
  #allocation5 [shape = 'f32[18,18,4]{2,1,0:T(8,128)}', space=vmem, size = 0x36000, scoped, tag = 'scratch operand']
  %s0 = inlined_call_operand.vmem [shape: f32[2,18,18,8], index: 0, kind: input, shape index: {}]
  %s1 = inlined_call_operand.vmem [shape: f32[72,4], index: 1, kind: input, shape index: {}]
  %s2 = inlined_call_operand.vmem [shape: f32[108,4], index: 2, kind: input, shape index: {}]
  %s3 = inlined_call_operand.vmem [shape: f32[144,4], index: 3, kind: input, shape index: {}]
  %s4 = inlined_call_operand.vmem [shape: f32[180,4], index: 4, kind: input, shape index: {}]
  %s5 = inlined_call_operand.vmem [shape: f32[216,8], index: 5, kind: input, shape index: {}]
  %s6 = inlined_call_operand.vmem [shape: f32[1,4], index: 6, kind: input, shape index: {}]
  %s7 = inlined_call_operand.vmem [shape: f32[1,4], index: 7, kind: input, shape index: {}]
  %s8 = inlined_call_operand.vmem [shape: f32[1,4], index: 8, kind: input, shape index: {}]
  %s9 = inlined_call_operand.vmem [shape: f32[1,4], index: 9, kind: input, shape index: {}]
  %s10 = inlined_call_operand.vmem [shape: f32[1,8], index: 10, kind: input, shape index: {}]
  %s11 = inlined_call_operand.vmem [shape: f32[2,16,16,8], index: 11, kind: output, shape index: {}]
  %s12 = sld [smem:[#allocation0]]
  $region77: #{tpu_custom_call.1} parent=0
    _
  %s14 = ssub.s32 1, %s12
  %s15 = scalar_select 0, %s14, %s12
  loop: start=0, step=1, limit=4
  $region2: #{tpu_custom_call.1} parent=0 // loop_pre_header
    _
  $region3: #{tpu_custom_call.1} parent=0 // loop_header
    %s17 = sphi 0, %s21
    %p18 = scmp.ge.s32.totalorder %s17, 4
    %s27 = sphi 0, %s29
    %s30 = sphi 0, %s27
    %s31 = sphi 0, %s30
    %s47 = sphi 0, %s31
    %s51 = sphi 0, %s51
    %s53 = sphi 0, %s51
    %s54 = sphi 0, %s53
    %s68 = sphi 0, %s54
    %s72 = sphi 0, %s72
    %s74 = sphi 0, %s72
    %s75 = sphi 0, %s74
    %s89 = sphi 0, %s75
    %s93 = sphi 0, %s93
    %s95 = sphi 0, %s93
    %s96 = sphi 0, %s95
    %s110 = sphi 0, %s96
    %s114 = sphi 0, %s114
    %s116 = sphi 0, %s114
    %s117 = sphi 0, %s116
    %s131 = sphi 0, %s117
    %s135 = sphi 0, %s135
    %s137 = sphi 0, %s135
    %s138 = sphi 0, %s137
    %s152 = sphi 0, %s138
    %s156 = sphi 0, %s156
    %s158 = sphi 0, %s156
    %s159 = sphi 0, %s158
    %s173 = sphi 0, %s159
    %s177 = sphi 0, %s177
    %s179 = sphi 0, %s177
    %s180 = sphi 0, %s179
    %s194 = sphi 0, %s180
    %s198 = sphi 0, %s198
    %s200 = sphi 0, %s198
    %s201 = sphi 0, %s200
    %s215 = sphi 0, %s201
    %s219 = sphi 0, %s219
    %s221 = sphi 0, %s219
    %s222 = sphi 0, %s221
    %s236 = sphi 0, %s222
    %s240 = sphi 0, %s240
    %s242 = sphi 0, %s240
    %s243 = sphi 0, %s242
    %s257 = sphi 0, %s243
    %s263 = sphi 0, %s265
    %s266 = sphi 0, %s263
    %s267 = sphi 0, %s266
    %s283 = sphi 0, %s267
  $region4: #{tpu_custom_call.1} parent=0 // loop_header_branch
    %20 = sbr.rel (%p18) target = $region8
  $region5: #{tpu_custom_call.1} parent=0 // loop_body
    %s22 = ssub.s32 %s17, 1
    %s23 = ssub.s32 %s17, 2
    %s24 = sadd.s32 %s17, 1
    %s25 = ssub.s32 %s17, %s24
    %p26 = scmp.eq.s32.totalorder %s25, 0
    %s28 = sadd.s32 %s27, 1
    %s29 = scalar_select %p26, %s27, %s28
    %p32 = pneg %p26
    %p33 = scmp.eq.s32.totalorder %s17, 1
    %p34 = por %p32, %p33
    %p35 = scmp.ne.s32.totalorder %s27, %s30
    %p36 = scmp.eq.s32.totalorder %s17, 0
    %p37 = por %p35, %p36
    %p38 = scmp.ne.s32.totalorder %s27, %s30
    %p39 = scmp.eq.s32.totalorder %s22, 1
    %p40 = por %p38, %p39
    %p41 = scmp.ne.s32.totalorder %s30, %s31
    %p42 = scmp.eq.s32.totalorder %s22, 0
    %p43 = por %p41, %p42
    %p44 = scmp.ne.s32.totalorder %s30, %s31
    %p45 = scmp.eq.s32.totalorder %s23, 1
    %p46 = por %p44, %p45
    %p48 = scmp.ne.s32.totalorder %s31, %s47
    %p49 = scmp.eq.s32.totalorder %s23, 0
    %p50 = por %p48, %p49
    %s52 = sadd.s32 %s51, 1
    %p55 = scmp.eq.s32.totalorder %s17, 1
    %p56 = scmp.ne.s32.totalorder %s51, %s53
    %p57 = scmp.eq.s32.totalorder %s17, 0
    %p58 = por %p56, %p57
    %p59 = scmp.ne.s32.totalorder %s51, %s53
    %p60 = scmp.eq.s32.totalorder %s22, 1
    %p61 = por %p59, %p60
    %p62 = scmp.ne.s32.totalorder %s53, %s54
    %p63 = scmp.eq.s32.totalorder %s22, 0
    %p64 = por %p62, %p63
    %p65 = scmp.ne.s32.totalorder %s53, %s54
    %p66 = scmp.eq.s32.totalorder %s23, 1
    %p67 = por %p65, %p66
    %p69 = scmp.ne.s32.totalorder %s54, %s68
    %p70 = scmp.eq.s32.totalorder %s23, 0
    %p71 = por %p69, %p70
    %s73 = sadd.s32 %s72, 1
    %p76 = scmp.eq.s32.totalorder %s17, 1
    %p77 = scmp.ne.s32.totalorder %s72, %s74
    %p78 = scmp.eq.s32.totalorder %s17, 0
    %p79 = por %p77, %p78
    %p80 = scmp.ne.s32.totalorder %s72, %s74
    %p81 = scmp.eq.s32.totalorder %s22, 1
    %p82 = por %p80, %p81
    %p83 = scmp.ne.s32.totalorder %s74, %s75
    %p84 = scmp.eq.s32.totalorder %s22, 0
    %p85 = por %p83, %p84
    %p86 = scmp.ne.s32.totalorder %s74, %s75
    %p87 = scmp.eq.s32.totalorder %s23, 1
    %p88 = por %p86, %p87
    %p90 = scmp.ne.s32.totalorder %s75, %s89
    %p91 = scmp.eq.s32.totalorder %s23, 0
    %p92 = por %p90, %p91
    %s94 = sadd.s32 %s93, 1
    %p97 = scmp.eq.s32.totalorder %s17, 1
    %p98 = scmp.ne.s32.totalorder %s93, %s95
    %p99 = scmp.eq.s32.totalorder %s17, 0
    %p100 = por %p98, %p99
    %p101 = scmp.ne.s32.totalorder %s93, %s95
    %p102 = scmp.eq.s32.totalorder %s22, 1
    %p103 = por %p101, %p102
    %p104 = scmp.ne.s32.totalorder %s95, %s96
    %p105 = scmp.eq.s32.totalorder %s22, 0
    %p106 = por %p104, %p105
    %p107 = scmp.ne.s32.totalorder %s95, %s96
    %p108 = scmp.eq.s32.totalorder %s23, 1
    %p109 = por %p107, %p108
    %p111 = scmp.ne.s32.totalorder %s96, %s110
    %p112 = scmp.eq.s32.totalorder %s23, 0
    %p113 = por %p111, %p112
    %s115 = sadd.s32 %s114, 1
    %p118 = scmp.eq.s32.totalorder %s17, 1
    %p119 = scmp.ne.s32.totalorder %s114, %s116
    %p120 = scmp.eq.s32.totalorder %s17, 0
    %p121 = por %p119, %p120
    %p122 = scmp.ne.s32.totalorder %s114, %s116
    %p123 = scmp.eq.s32.totalorder %s22, 1
    %p124 = por %p122, %p123
    %p125 = scmp.ne.s32.totalorder %s116, %s117
    %p126 = scmp.eq.s32.totalorder %s22, 0
    %p127 = por %p125, %p126
    %p128 = scmp.ne.s32.totalorder %s116, %s117
    %p129 = scmp.eq.s32.totalorder %s23, 1
    %p130 = por %p128, %p129
    %p132 = scmp.ne.s32.totalorder %s117, %s131
    %p133 = scmp.eq.s32.totalorder %s23, 0
    %p134 = por %p132, %p133
    %s136 = sadd.s32 %s135, 1
    %p139 = scmp.eq.s32.totalorder %s17, 1
    %p140 = scmp.ne.s32.totalorder %s135, %s137
    %p141 = scmp.eq.s32.totalorder %s17, 0
    %p142 = por %p140, %p141
    %p143 = scmp.ne.s32.totalorder %s135, %s137
    %p144 = scmp.eq.s32.totalorder %s22, 1
    %p145 = por %p143, %p144
    %p146 = scmp.ne.s32.totalorder %s137, %s138
    %p147 = scmp.eq.s32.totalorder %s22, 0
    %p148 = por %p146, %p147
    %p149 = scmp.ne.s32.totalorder %s137, %s138
    %p150 = scmp.eq.s32.totalorder %s23, 1
    %p151 = por %p149, %p150
    %p153 = scmp.ne.s32.totalorder %s138, %s152
    %p154 = scmp.eq.s32.totalorder %s23, 0
    %p155 = por %p153, %p154
    %s157 = sadd.s32 %s156, 1
    %p160 = scmp.eq.s32.totalorder %s17, 1
    %p161 = scmp.ne.s32.totalorder %s156, %s158
    %p162 = scmp.eq.s32.totalorder %s17, 0
    %p163 = por %p161, %p162
    %p164 = scmp.ne.s32.totalorder %s156, %s158
    %p165 = scmp.eq.s32.totalorder %s22, 1
    %p166 = por %p164, %p165
    %p167 = scmp.ne.s32.totalorder %s158, %s159
    %p168 = scmp.eq.s32.totalorder %s22, 0
    %p169 = por %p167, %p168
    %p170 = scmp.ne.s32.totalorder %s158, %s159
    %p171 = scmp.eq.s32.totalorder %s23, 1
    %p172 = por %p170, %p171
    %p174 = scmp.ne.s32.totalorder %s159, %s173
    %p175 = scmp.eq.s32.totalorder %s23, 0
    %p176 = por %p174, %p175
    %s178 = sadd.s32 %s177, 1
    %p181 = scmp.eq.s32.totalorder %s17, 1
    %p182 = scmp.ne.s32.totalorder %s177, %s179
    %p183 = scmp.eq.s32.totalorder %s17, 0
    %p184 = por %p182, %p183
    %p185 = scmp.ne.s32.totalorder %s177, %s179
    %p186 = scmp.eq.s32.totalorder %s22, 1
    %p187 = por %p185, %p186
    %p188 = scmp.ne.s32.totalorder %s179, %s180
    %p189 = scmp.eq.s32.totalorder %s22, 0
    %p190 = por %p188, %p189
    %p191 = scmp.ne.s32.totalorder %s179, %s180
    %p192 = scmp.eq.s32.totalorder %s23, 1
    %p193 = por %p191, %p192
    %p195 = scmp.ne.s32.totalorder %s180, %s194
    %p196 = scmp.eq.s32.totalorder %s23, 0
    %p197 = por %p195, %p196
    %s199 = sadd.s32 %s198, 1
    %p202 = scmp.eq.s32.totalorder %s17, 1
    %p203 = scmp.ne.s32.totalorder %s198, %s200
    %p204 = scmp.eq.s32.totalorder %s17, 0
    %p205 = por %p203, %p204
    %p206 = scmp.ne.s32.totalorder %s198, %s200
    %p207 = scmp.eq.s32.totalorder %s22, 1
    %p208 = por %p206, %p207
    %p209 = scmp.ne.s32.totalorder %s200, %s201
    %p210 = scmp.eq.s32.totalorder %s22, 0
    %p211 = por %p209, %p210
    %p212 = scmp.ne.s32.totalorder %s200, %s201
    %p213 = scmp.eq.s32.totalorder %s23, 1
    %p214 = por %p212, %p213
    %p216 = scmp.ne.s32.totalorder %s201, %s215
    %p217 = scmp.eq.s32.totalorder %s23, 0
    %p218 = por %p216, %p217
    %s220 = sadd.s32 %s219, 1
    %p223 = scmp.eq.s32.totalorder %s17, 1
    %p224 = scmp.ne.s32.totalorder %s219, %s221
    %p225 = scmp.eq.s32.totalorder %s17, 0
    %p226 = por %p224, %p225
    %p227 = scmp.ne.s32.totalorder %s219, %s221
    %p228 = scmp.eq.s32.totalorder %s22, 1
    %p229 = por %p227, %p228
    %p230 = scmp.ne.s32.totalorder %s221, %s222
    %p231 = scmp.eq.s32.totalorder %s22, 0
    %p232 = por %p230, %p231
    %p233 = scmp.ne.s32.totalorder %s221, %s222
    %p234 = scmp.eq.s32.totalorder %s23, 1
    %p235 = por %p233, %p234
    %p237 = scmp.ne.s32.totalorder %s222, %s236
    %p238 = scmp.eq.s32.totalorder %s23, 0
    %p239 = por %p237, %p238
    %s241 = sadd.s32 %s240, 1
    %p244 = scmp.eq.s32.totalorder %s17, 1
    %p245 = scmp.ne.s32.totalorder %s240, %s242
    %p246 = scmp.eq.s32.totalorder %s17, 0
    %p247 = por %p245, %p246
    %p248 = scmp.ne.s32.totalorder %s240, %s242
    %p249 = scmp.eq.s32.totalorder %s22, 1
    %p250 = por %p248, %p249
    %p251 = scmp.ne.s32.totalorder %s242, %s243
    %p252 = scmp.eq.s32.totalorder %s22, 0
    %p253 = por %p251, %p252
    %p254 = scmp.ne.s32.totalorder %s242, %s243
    %p255 = scmp.eq.s32.totalorder %s23, 1
    %p256 = por %p254, %p255
    %p258 = scmp.ne.s32.totalorder %s243, %s257
    %p259 = scmp.eq.s32.totalorder %s23, 0
    %p260 = por %p258, %p259
    %s261 = ssub.s32 %s17, %s24
    %p262 = scmp.eq.s32.totalorder %s261, 0
    %s264 = sadd.s32 %s263, 1
    %s265 = scalar_select %p262, %s263, %s264
    %p268 = pneg %p262
    %p269 = scmp.eq.s32.totalorder %s17, 1
    %p270 = por %p268, %p269
    %p271 = scmp.ne.s32.totalorder %s263, %s266
    %p272 = scmp.eq.s32.totalorder %s17, 0
    %p273 = por %p271, %p272
    %p274 = scmp.ne.s32.totalorder %s263, %s266
    %p275 = scmp.eq.s32.totalorder %s22, 1
    %p276 = por %p274, %p275
    %p277 = scmp.ne.s32.totalorder %s266, %s267
    %p278 = scmp.eq.s32.totalorder %s22, 0
    %p279 = por %p277, %p278
    %p280 = scmp.ne.s32.totalorder %s266, %s267
    %p281 = scmp.eq.s32.totalorder %s23, 1
    %p282 = por %p280, %p281
    %p284 = scmp.ne.s32.totalorder %s267, %s283
    %p285 = scmp.eq.s32.totalorder %s23, 0
    %p286 = por %p284, %p285
    %p287 = scmp.le.s32.totalorder 1, %s17
    %p288 = scmp.lt.s32.totalorder %s17, 3
    %p289 = pnand %p287, %p288
    %p290 = pneg %p289
    // Predicated region
    $region9: #{tpu_custom_call.1} parent=5 // pred_check
      _
    $region10: #{tpu_custom_call.1} parent=5 // pred_check_branch
      %292 = sbr.rel (%p289) target = $region12
    $region11: #{tpu_custom_call.1} parent=5 // pred_region
      %s293 = ssub.s32 %s17, 1
      // Predicated region
      $region13: #{tpu_custom_call.1} parent=11 // pred_check
        %p294 = pneg %p64
      $region14: #{tpu_custom_call.1} parent=11 // pred_check_branch
        %296 = sbr.rel (%p294) target = $region16
      $region15: #{tpu_custom_call.1} parent=11 // pred_region
        _
      $region16: #{tpu_custom_call.1} parent=11 // pred_fallthru
        _
      // Predicated region
      $region17: #{tpu_custom_call.1} parent=11 // pred_check
        %p297 = pneg %p85
      $region18: #{tpu_custom_call.1} parent=11 // pred_check_branch
        %299 = sbr.rel (%p297) target = $region20
      $region19: #{tpu_custom_call.1} parent=11 // pred_region
        _
      $region20: #{tpu_custom_call.1} parent=11 // pred_fallthru
        _
      // Predicated region
      $region21: #{tpu_custom_call.1} parent=11 // pred_check
        %p300 = pneg %p106
      $region22: #{tpu_custom_call.1} parent=11 // pred_check_branch
        %302 = sbr.rel (%p300) target = $region24
      $region23: #{tpu_custom_call.1} parent=11 // pred_region
        _
      $region24: #{tpu_custom_call.1} parent=11 // pred_fallthru
        _
      // Predicated region
      $region25: #{tpu_custom_call.1} parent=11 // pred_check
        %p303 = pneg %p127
      $region26: #{tpu_custom_call.1} parent=11 // pred_check_branch
        %305 = sbr.rel (%p303) target = $region28
      $region27: #{tpu_custom_call.1} parent=11 // pred_region
        _
      $region28: #{tpu_custom_call.1} parent=11 // pred_fallthru
        _
      // Predicated region
      $region29: #{tpu_custom_call.1} parent=11 // pred_check
        %p306 = pneg %p148
      $region30: #{tpu_custom_call.1} parent=11 // pred_check_branch
        %308 = sbr.rel (%p306) target = $region32
      $region31: #{tpu_custom_call.1} parent=11 // pred_region
        _
      $region32: #{tpu_custom_call.1} parent=11 // pred_fallthru
        _
      // Predicated region
      $region33: #{tpu_custom_call.1} parent=11 // pred_check
        %p309 = pneg %p169
      $region34: #{tpu_custom_call.1} parent=11 // pred_check_branch
        %311 = sbr.rel (%p309) target = $region36
      $region35: #{tpu_custom_call.1} parent=11 // pred_region
        _
      $region36: #{tpu_custom_call.1} parent=11 // pred_fallthru
        _
      // Predicated region
      $region37: #{tpu_custom_call.1} parent=11 // pred_check
        %p312 = pneg %p190
      $region38: #{tpu_custom_call.1} parent=11 // pred_check_branch
        %314 = sbr.rel (%p312) target = $region40
      $region39: #{tpu_custom_call.1} parent=11 // pred_region
        _
      $region40: #{tpu_custom_call.1} parent=11 // pred_fallthru
        _
      // Predicated region
      $region41: #{tpu_custom_call.1} parent=11 // pred_check
        %p315 = pneg %p211
      $region42: #{tpu_custom_call.1} parent=11 // pred_check_branch
        %317 = sbr.rel (%p315) target = $region44
      $region43: #{tpu_custom_call.1} parent=11 // pred_region
        _
      $region44: #{tpu_custom_call.1} parent=11 // pred_fallthru
        _
      // Predicated region
      $region45: #{tpu_custom_call.1} parent=11 // pred_check
        %p318 = pneg %p232
      $region46: #{tpu_custom_call.1} parent=11 // pred_check_branch
        %320 = sbr.rel (%p318) target = $region48
      $region47: #{tpu_custom_call.1} parent=11 // pred_region
        _
      $region48: #{tpu_custom_call.1} parent=11 // pred_fallthru
        _
      // Predicated region
      $region49: #{tpu_custom_call.1} parent=11 // pred_check
        %p321 = pneg %p253
      $region50: #{tpu_custom_call.1} parent=11 // pred_check_branch
        %323 = sbr.rel (%p321) target = $region52
      $region51: #{tpu_custom_call.1} parent=11 // pred_region
        _
      $region52: #{tpu_custom_call.1} parent=11 // pred_fallthru
        _
    $region12: #{tpu_custom_call.1} parent=5 // pred_fallthru
      _
    %p324 = scmp.lt.s32.totalorder %s17, 2
    // Predicated region
    $region53: #{tpu_custom_call.1} parent=5 // pred_check
      %p325 = pneg %p324
    $region54: #{tpu_custom_call.1} parent=5 // pred_check_branch
      %327 = sbr.rel (%p325) target = $region56
    $region55: #{tpu_custom_call.1} parent=5 // pred_region
      // Predicated region
      $region57: #{tpu_custom_call.1} parent=55 // pred_check
        %p328 = pneg %p37
      $region58: #{tpu_custom_call.1} parent=55 // pred_check_branch
        %330 = sbr.rel (%p328) target = $region60
      $region59: #{tpu_custom_call.1} parent=55 // pred_region
        %p331 = scmp.lt.s32.totalorder %s17, 1
        %s332 = scalar_select %p331, %s17, 1
        %s333 = smul.addr %s332, 54
        %s334 = smul.addr %s333, 8
        %s335 = scalar_lea.vmem %s0, %s334
      $region60: #{tpu_custom_call.1} parent=55 // pred_fallthru
        _
    $region56: #{tpu_custom_call.1} parent=5 // pred_fallthru
      _
    %p336 = scmp.le.s32.totalorder 1, %s17
    %p337 = scmp.lt.s32.totalorder %s17, 3
    %p338 = pnand %p336, %p337
    %p339 = pneg %p338
    // Predicated region
    $region61: #{tpu_custom_call.1} parent=5 // pred_check
      _
    $region62: #{tpu_custom_call.1} parent=5 // pred_check_branch
      %341 = sbr.rel (%p338) target = $region64
    $region63: #{tpu_custom_call.1} parent=5 // pred_region
      %s342 = ssub.s32 %s17, 1
      %p343 = scmp.lt.s32.totalorder %s22, 1
      %s344 = scalar_select %p343, %s22, 1
      %s345 = smul.addr %s344, 54
      %s346 = smul.addr %s345, 8
      %s347 = scalar_lea.vmem %s0, %s346
      %p348 = pneg %p43
      %p349 = pneg %p40
      %p350 = pneg %p64
      %p351 = pneg %p61
      %p352 = pneg %p85
      %p353 = pneg %p82
      %p354 = pneg %p106
      %p355 = pneg %p103
      %p356 = pneg %p127
      %p357 = pneg %p124
      %p358 = pneg %p148
      %p359 = pneg %p145
      %p360 = pneg %p169
      %p361 = pneg %p166
      %p362 = pneg %p190
      %p363 = pneg %p187
      %p364 = pneg %p211
      %p365 = pneg %p208
      %p366 = pneg %p232
      %p367 = pneg %p229
      %p368 = pneg %p253
      %p369 = pneg %p250
      %p370 = pneg %p279
      %p371 = pneg %p276
      %p372 = scmp.lt.s32.totalorder %s22, 1
      %s373 = scalar_select %p372, %s22, 1
      %s374 = smul.addr %s373, 32
      %s375 = smul.addr %s374, 8
      %s376 = scalar_lea.vmem %s11, %s375
      %p377 = scmp.lt.s32.totalorder %s22, 1
      %s378 = scalar_select %p377, %s22, 1
      %s379 = smul.addr %s378, 54
      %s380 = smul.addr %s379, 8
      %s381 = scalar_lea.vmem %s0, %s380
      %p382 = scmp.lt.s32.totalorder %s22, 1
      %s383 = scalar_select %p382, %s22, 1
      %s384 = smul.addr %s383, 32
      %s385 = smul.addr %s384, 8
      %s386 = scalar_lea.vmem %s11, %s385
      %vm387 = vcmask 31744
      %388 = vst.msk [vmem:[#allocation2] sm:$0xff] %vm387, 0.0
      %389 = vst.msk [vmem:[#allocation2 + $0x8] sm:$0xff] %vm387, 0.0
      %vm390 = vcmask 25600
      %391 = vst.msk [vmem:[#allocation2 + $0x10] sm:$0x3] %vm390, 0.0
      %392 = vst.msk [vmem:[#allocation2 + $0x18] sm:$0xff] %vm387, 0.0
      %393 = vst.msk [vmem:[#allocation2 + $0x20] sm:$0xff] %vm387, 0.0
      %394 = vst.msk [vmem:[#allocation2 + $0x28] sm:$0x3] %vm390, 0.0
      %395 = vst.msk [vmem:[#allocation2 + $0x30] sm:$0xff] %vm387, 0.0
      %396 = vst.msk [vmem:[#allocation2 + $0x38] sm:$0xff] %vm387, 0.0
      %397 = vst.msk [vmem:[#allocation2 + $0x40] sm:$0x3] %vm390, 0.0
      %398 = vst.msk [vmem:[#allocation2 + $0x48] sm:$0xff] %vm387, 0.0
      %399 = vst.msk [vmem:[#allocation2 + $0x50] sm:$0xff] %vm387, 0.0
      %400 = vst.msk [vmem:[#allocation2 + $0x58] sm:$0x3] %vm390, 0.0
      %401 = vst.msk [vmem:[#allocation2 + $0x60] sm:$0xff] %vm387, 0.0
      %402 = vst.msk [vmem:[#allocation2 + $0x68] sm:$0xff] %vm387, 0.0
      %403 = vst.msk [vmem:[#allocation2 + $0x70] sm:$0x3] %vm390, 0.0
      %404 = vst.msk [vmem:[#allocation2 + $0x78] sm:$0xff] %vm387, 0.0
      %405 = vst.msk [vmem:[#allocation2 + $0x80] sm:$0xff] %vm387, 0.0
      %406 = vst.msk [vmem:[#allocation2 + $0x88] sm:$0x3] %vm390, 0.0
      %407 = vst.msk [vmem:[#allocation2 + $0x90] sm:$0xff] %vm387, 0.0
      %408 = vst.msk [vmem:[#allocation2 + $0x98] sm:$0xff] %vm387, 0.0
      %409 = vst.msk [vmem:[#allocation2 + $0xa0] sm:$0x3] %vm390, 0.0
      %410 = vst.msk [vmem:[#allocation2 + $0xa8] sm:$0xff] %vm387, 0.0
      %411 = vst.msk [vmem:[#allocation2 + $0xb0] sm:$0xff] %vm387, 0.0
      %412 = vst.msk [vmem:[#allocation2 + $0xb8] sm:$0x3] %vm390, 0.0
      %413 = vst.msk [vmem:[#allocation2 + $0xc0] sm:$0xff] %vm387, 0.0
      %414 = vst.msk [vmem:[#allocation2 + $0xc8] sm:$0xff] %vm387, 0.0
      %415 = vst.msk [vmem:[#allocation2 + $0xd0] sm:$0x3] %vm390, 0.0
      %416 = vst.msk [vmem:[#allocation2 + $0xd8] sm:$0xff] %vm387, 0.0
      %417 = vst.msk [vmem:[#allocation2 + $0xe0] sm:$0xff] %vm387, 0.0
      %418 = vst.msk [vmem:[#allocation2 + $0xe8] sm:$0x3] %vm390, 0.0
      %419 = vst.msk [vmem:[#allocation2 + $0xf0] sm:$0xff] %vm387, 0.0
      %420 = vst.msk [vmem:[#allocation2 + $0xf8] sm:$0xff] %vm387, 0.0
      %421 = vst.msk [vmem:[#allocation2 + $0x100] sm:$0x3] %vm390, 0.0
      %422 = vst.msk [vmem:[#allocation2 + $0x108] sm:$0xff] %vm387, 0.0
      %423 = vst.msk [vmem:[#allocation2 + $0x110] sm:$0xff] %vm387, 0.0
      %424 = vst.msk [vmem:[#allocation2 + $0x118] sm:$0x3] %vm390, 0.0
      %425 = vst.msk [vmem:[#allocation2 + $0x120] sm:$0xff] %vm387, 0.0
      %426 = vst.msk [vmem:[#allocation2 + $0x128] sm:$0xff] %vm387, 0.0
      %427 = vst.msk [vmem:[#allocation2 + $0x130] sm:$0x3] %vm390, 0.0
      %428 = vst.msk [vmem:[#allocation2 + $0x138] sm:$0xff] %vm387, 0.0
      %429 = vst.msk [vmem:[#allocation2 + $0x140] sm:$0xff] %vm387, 0.0
      %430 = vst.msk [vmem:[#allocation2 + $0x148] sm:$0x3] %vm390, 0.0
      %431 = vst.msk [vmem:[#allocation2 + $0x150] sm:$0xff] %vm387, 0.0
      %432 = vst.msk [vmem:[#allocation2 + $0x158] sm:$0xff] %vm387, 0.0
      %433 = vst.msk [vmem:[#allocation2 + $0x160] sm:$0x3] %vm390, 0.0
      %434 = vst.msk [vmem:[#allocation2 + $0x168] sm:$0xff] %vm387, 0.0
      %435 = vst.msk [vmem:[#allocation2 + $0x170] sm:$0xff] %vm387, 0.0
      %436 = vst.msk [vmem:[#allocation2 + $0x178] sm:$0x3] %vm390, 0.0
      %437 = vst.msk [vmem:[#allocation2 + $0x180] sm:$0xff] %vm387, 0.0
      %438 = vst.msk [vmem:[#allocation2 + $0x188] sm:$0xff] %vm387, 0.0
      %439 = vst.msk [vmem:[#allocation2 + $0x190] sm:$0x3] %vm390, 0.0
      %440 = vst.msk [vmem:[#allocation2 + $0x198] sm:$0xff] %vm387, 0.0
      %441 = vst.msk [vmem:[#allocation2 + $0x1a0] sm:$0xff] %vm387, 0.0
      %442 = vst.msk [vmem:[#allocation2 + $0x1a8] sm:$0x3] %vm390, 0.0
      %443 = vst.msk [vmem:[#allocation3] sm:$0xff] %vm387, 0.0
      %444 = vst.msk [vmem:[#allocation3 + $0x8] sm:$0xff] %vm387, 0.0
      %445 = vst.msk [vmem:[#allocation3 + $0x10] sm:$0x3] %vm390, 0.0
      %446 = vst.msk [vmem:[#allocation3 + $0x18] sm:$0xff] %vm387, 0.0
      %447 = vst.msk [vmem:[#allocation3 + $0x20] sm:$0xff] %vm387, 0.0
      %448 = vst.msk [vmem:[#allocation3 + $0x28] sm:$0x3] %vm390, 0.0
      %449 = vst.msk [vmem:[#allocation3 + $0x30] sm:$0xff] %vm387, 0.0
      %450 = vst.msk [vmem:[#allocation3 + $0x38] sm:$0xff] %vm387, 0.0
      %451 = vst.msk [vmem:[#allocation3 + $0x40] sm:$0x3] %vm390, 0.0
      %452 = vst.msk [vmem:[#allocation3 + $0x48] sm:$0xff] %vm387, 0.0
      %453 = vst.msk [vmem:[#allocation3 + $0x50] sm:$0xff] %vm387, 0.0
      %454 = vst.msk [vmem:[#allocation3 + $0x58] sm:$0x3] %vm390, 0.0
      %455 = vst.msk [vmem:[#allocation3 + $0x60] sm:$0xff] %vm387, 0.0
      %456 = vst.msk [vmem:[#allocation3 + $0x68] sm:$0xff] %vm387, 0.0
      %457 = vst.msk [vmem:[#allocation3 + $0x70] sm:$0x3] %vm390, 0.0
      %458 = vst.msk [vmem:[#allocation3 + $0x78] sm:$0xff] %vm387, 0.0
      %459 = vst.msk [vmem:[#allocation3 + $0x80] sm:$0xff] %vm387, 0.0
      %460 = vst.msk [vmem:[#allocation3 + $0x88] sm:$0x3] %vm390, 0.0
      %461 = vst.msk [vmem:[#allocation3 + $0x90] sm:$0xff] %vm387, 0.0
      %462 = vst.msk [vmem:[#allocation3 + $0x98] sm:$0xff] %vm387, 0.0
      %463 = vst.msk [vmem:[#allocation3 + $0xa0] sm:$0x3] %vm390, 0.0
      %464 = vst.msk [vmem:[#allocation3 + $0xa8] sm:$0xff] %vm387, 0.0
      %465 = vst.msk [vmem:[#allocation3 + $0xb0] sm:$0xff] %vm387, 0.0
      %466 = vst.msk [vmem:[#allocation3 + $0xb8] sm:$0x3] %vm390, 0.0
      %467 = vst.msk [vmem:[#allocation3 + $0xc0] sm:$0xff] %vm387, 0.0
      %468 = vst.msk [vmem:[#allocation3 + $0xc8] sm:$0xff] %vm387, 0.0
      %469 = vst.msk [vmem:[#allocation3 + $0xd0] sm:$0x3] %vm390, 0.0
      %470 = vst.msk [vmem:[#allocation3 + $0xd8] sm:$0xff] %vm387, 0.0
      %471 = vst.msk [vmem:[#allocation3 + $0xe0] sm:$0xff] %vm387, 0.0
      %472 = vst.msk [vmem:[#allocation3 + $0xe8] sm:$0x3] %vm390, 0.0
      %473 = vst.msk [vmem:[#allocation3 + $0xf0] sm:$0xff] %vm387, 0.0
      %474 = vst.msk [vmem:[#allocation3 + $0xf8] sm:$0xff] %vm387, 0.0
      %475 = vst.msk [vmem:[#allocation3 + $0x100] sm:$0x3] %vm390, 0.0
      %476 = vst.msk [vmem:[#allocation3 + $0x108] sm:$0xff] %vm387, 0.0
      %477 = vst.msk [vmem:[#allocation3 + $0x110] sm:$0xff] %vm387, 0.0
      %478 = vst.msk [vmem:[#allocation3 + $0x118] sm:$0x3] %vm390, 0.0
      %479 = vst.msk [vmem:[#allocation3 + $0x120] sm:$0xff] %vm387, 0.0
      %480 = vst.msk [vmem:[#allocation3 + $0x128] sm:$0xff] %vm387, 0.0
      %481 = vst.msk [vmem:[#allocation3 + $0x130] sm:$0x3] %vm390, 0.0
      %482 = vst.msk [vmem:[#allocation3 + $0x138] sm:$0xff] %vm387, 0.0
      %483 = vst.msk [vmem:[#allocation3 + $0x140] sm:$0xff] %vm387, 0.0
      %484 = vst.msk [vmem:[#allocation3 + $0x148] sm:$0x3] %vm390, 0.0
      %485 = vst.msk [vmem:[#allocation3 + $0x150] sm:$0xff] %vm387, 0.0
      %486 = vst.msk [vmem:[#allocation3 + $0x158] sm:$0xff] %vm387, 0.0
      %487 = vst.msk [vmem:[#allocation3 + $0x160] sm:$0x3] %vm390, 0.0
      %488 = vst.msk [vmem:[#allocation3 + $0x168] sm:$0xff] %vm387, 0.0
      %489 = vst.msk [vmem:[#allocation3 + $0x170] sm:$0xff] %vm387, 0.0
      %490 = vst.msk [vmem:[#allocation3 + $0x178] sm:$0x3] %vm390, 0.0
      %491 = vst.msk [vmem:[#allocation3 + $0x180] sm:$0xff] %vm387, 0.0
      %492 = vst.msk [vmem:[#allocation3 + $0x188] sm:$0xff] %vm387, 0.0
      %493 = vst.msk [vmem:[#allocation3 + $0x190] sm:$0x3] %vm390, 0.0
      %494 = vst.msk [vmem:[#allocation3 + $0x198] sm:$0xff] %vm387, 0.0
      %495 = vst.msk [vmem:[#allocation3 + $0x1a0] sm:$0xff] %vm387, 0.0
      %496 = vst.msk [vmem:[#allocation3 + $0x1a8] sm:$0x3] %vm390, 0.0
      %497 = vst.msk [vmem:[#allocation4] sm:$0xff] %vm387, 0.0
      %498 = vst.msk [vmem:[#allocation4 + $0x8] sm:$0xff] %vm387, 0.0
      %499 = vst.msk [vmem:[#allocation4 + $0x10] sm:$0x3] %vm390, 0.0
      %500 = vst.msk [vmem:[#allocation4 + $0x18] sm:$0xff] %vm387, 0.0
      %501 = vst.msk [vmem:[#allocation4 + $0x20] sm:$0xff] %vm387, 0.0
      %502 = vst.msk [vmem:[#allocation4 + $0x28] sm:$0x3] %vm390, 0.0
      %503 = vst.msk [vmem:[#allocation4 + $0x30] sm:$0xff] %vm387, 0.0
      %504 = vst.msk [vmem:[#allocation4 + $0x38] sm:$0xff] %vm387, 0.0
      %505 = vst.msk [vmem:[#allocation4 + $0x40] sm:$0x3] %vm390, 0.0
      %506 = vst.msk [vmem:[#allocation4 + $0x48] sm:$0xff] %vm387, 0.0
      %507 = vst.msk [vmem:[#allocation4 + $0x50] sm:$0xff] %vm387, 0.0
      %508 = vst.msk [vmem:[#allocation4 + $0x58] sm:$0x3] %vm390, 0.0
      %509 = vst.msk [vmem:[#allocation4 + $0x60] sm:$0xff] %vm387, 0.0
      %510 = vst.msk [vmem:[#allocation4 + $0x68] sm:$0xff] %vm387, 0.0
      %511 = vst.msk [vmem:[#allocation4 + $0x70] sm:$0x3] %vm390, 0.0
      %512 = vst.msk [vmem:[#allocation4 + $0x78] sm:$0xff] %vm387, 0.0
      %513 = vst.msk [vmem:[#allocation4 + $0x80] sm:$0xff] %vm387, 0.0
      %514 = vst.msk [vmem:[#allocation4 + $0x88] sm:$0x3] %vm390, 0.0
      %515 = vst.msk [vmem:[#allocation4 + $0x90] sm:$0xff] %vm387, 0.0
      %516 = vst.msk [vmem:[#allocation4 + $0x98] sm:$0xff] %vm387, 0.0
      %517 = vst.msk [vmem:[#allocation4 + $0xa0] sm:$0x3] %vm390, 0.0
      %518 = vst.msk [vmem:[#allocation4 + $0xa8] sm:$0xff] %vm387, 0.0
      %519 = vst.msk [vmem:[#allocation4 + $0xb0] sm:$0xff] %vm387, 0.0
      %520 = vst.msk [vmem:[#allocation4 + $0xb8] sm:$0x3] %vm390, 0.0
      %521 = vst.msk [vmem:[#allocation4 + $0xc0] sm:$0xff] %vm387, 0.0
      %522 = vst.msk [vmem:[#allocation4 + $0xc8] sm:$0xff] %vm387, 0.0
      %523 = vst.msk [vmem:[#allocation4 + $0xd0] sm:$0x3] %vm390, 0.0
      %524 = vst.msk [vmem:[#allocation4 + $0xd8] sm:$0xff] %vm387, 0.0
      %525 = vst.msk [vmem:[#allocation4 + $0xe0] sm:$0xff] %vm387, 0.0
      %526 = vst.msk [vmem:[#allocation4 + $0xe8] sm:$0x3] %vm390, 0.0
      %527 = vst.msk [vmem:[#allocation4 + $0xf0] sm:$0xff] %vm387, 0.0
      %528 = vst.msk [vmem:[#allocation4 + $0xf8] sm:$0xff] %vm387, 0.0
      %529 = vst.msk [vmem:[#allocation4 + $0x100] sm:$0x3] %vm390, 0.0
      %530 = vst.msk [vmem:[#allocation4 + $0x108] sm:$0xff] %vm387, 0.0
      %531 = vst.msk [vmem:[#allocation4 + $0x110] sm:$0xff] %vm387, 0.0
      %532 = vst.msk [vmem:[#allocation4 + $0x118] sm:$0x3] %vm390, 0.0
      %533 = vst.msk [vmem:[#allocation4 + $0x120] sm:$0xff] %vm387, 0.0
      %534 = vst.msk [vmem:[#allocation4 + $0x128] sm:$0xff] %vm387, 0.0
      %535 = vst.msk [vmem:[#allocation4 + $0x130] sm:$0x3] %vm390, 0.0
      %536 = vst.msk [vmem:[#allocation4 + $0x138] sm:$0xff] %vm387, 0.0
      %537 = vst.msk [vmem:[#allocation4 + $0x140] sm:$0xff] %vm387, 0.0
      %538 = vst.msk [vmem:[#allocation4 + $0x148] sm:$0x3] %vm390, 0.0
      %539 = vst.msk [vmem:[#allocation4 + $0x150] sm:$0xff] %vm387, 0.0
      %540 = vst.msk [vmem:[#allocation4 + $0x158] sm:$0xff] %vm387, 0.0
      %541 = vst.msk [vmem:[#allocation4 + $0x160] sm:$0x3] %vm390, 0.0
      %542 = vst.msk [vmem:[#allocation4 + $0x168] sm:$0xff] %vm387, 0.0
      %543 = vst.msk [vmem:[#allocation4 + $0x170] sm:$0xff] %vm387, 0.0
      %544 = vst.msk [vmem:[#allocation4 + $0x178] sm:$0x3] %vm390, 0.0
      %545 = vst.msk [vmem:[#allocation4 + $0x180] sm:$0xff] %vm387, 0.0
      %546 = vst.msk [vmem:[#allocation4 + $0x188] sm:$0xff] %vm387, 0.0
      %547 = vst.msk [vmem:[#allocation4 + $0x190] sm:$0x3] %vm390, 0.0
      %548 = vst.msk [vmem:[#allocation4 + $0x198] sm:$0xff] %vm387, 0.0
      %549 = vst.msk [vmem:[#allocation4 + $0x1a0] sm:$0xff] %vm387, 0.0
      %550 = vst.msk [vmem:[#allocation4 + $0x1a8] sm:$0x3] %vm390, 0.0
      %551 = vst.msk [vmem:[#allocation5] sm:$0xff] %vm387, 0.0
      %552 = vst.msk [vmem:[#allocation5 + $0x8] sm:$0xff] %vm387, 0.0
      %553 = vst.msk [vmem:[#allocation5 + $0x10] sm:$0x3] %vm390, 0.0
      %554 = vst.msk [vmem:[#allocation5 + $0x18] sm:$0xff] %vm387, 0.0
      %555 = vst.msk [vmem:[#allocation5 + $0x20] sm:$0xff] %vm387, 0.0
      %556 = vst.msk [vmem:[#allocation5 + $0x28] sm:$0x3] %vm390, 0.0
      %557 = vst.msk [vmem:[#allocation5 + $0x30] sm:$0xff] %vm387, 0.0
      %558 = vst.msk [vmem:[#allocation5 + $0x38] sm:$0xff] %vm387, 0.0
      %559 = vst.msk [vmem:[#allocation5 + $0x40] sm:$0x3] %vm390, 0.0
      %560 = vst.msk [vmem:[#allocation5 + $0x48] sm:$0xff] %vm387, 0.0
      %561 = vst.msk [vmem:[#allocation5 + $0x50] sm:$0xff] %vm387, 0.0
      %562 = vst.msk [vmem:[#allocation5 + $0x58] sm:$0x3] %vm390, 0.0
      %563 = vst.msk [vmem:[#allocation5 + $0x60] sm:$0xff] %vm387, 0.0
      %564 = vst.msk [vmem:[#allocation5 + $0x68] sm:$0xff] %vm387, 0.0
      %565 = vst.msk [vmem:[#allocation5 + $0x70] sm:$0x3] %vm390, 0.0
      %566 = vst.msk [vmem:[#allocation5 + $0x78] sm:$0xff] %vm387, 0.0
      %567 = vst.msk [vmem:[#allocation5 + $0x80] sm:$0xff] %vm387, 0.0
      %568 = vst.msk [vmem:[#allocation5 + $0x88] sm:$0x3] %vm390, 0.0
      %569 = vst.msk [vmem:[#allocation5 + $0x90] sm:$0xff] %vm387, 0.0
      %570 = vst.msk [vmem:[#allocation5 + $0x98] sm:$0xff] %vm387, 0.0
      %571 = vst.msk [vmem:[#allocation5 + $0xa0] sm:$0x3] %vm390, 0.0
      %572 = vst.msk [vmem:[#allocation5 + $0xa8] sm:$0xff] %vm387, 0.0
      %573 = vst.msk [vmem:[#allocation5 + $0xb0] sm:$0xff] %vm387, 0.0
      %574 = vst.msk [vmem:[#allocation5 + $0xb8] sm:$0x3] %vm390, 0.0
      %575 = vst.msk [vmem:[#allocation5 + $0xc0] sm:$0xff] %vm387, 0.0
      %576 = vst.msk [vmem:[#allocation5 + $0xc8] sm:$0xff] %vm387, 0.0
      %577 = vst.msk [vmem:[#allocation5 + $0xd0] sm:$0x3] %vm390, 0.0
      %578 = vst.msk [vmem:[#allocation5 + $0xd8] sm:$0xff] %vm387, 0.0
      %579 = vst.msk [vmem:[#allocation5 + $0xe0] sm:$0xff] %vm387, 0.0
      %580 = vst.msk [vmem:[#allocation5 + $0xe8] sm:$0x3] %vm390, 0.0
      %581 = vst.msk [vmem:[#allocation5 + $0xf0] sm:$0xff] %vm387, 0.0
      %582 = vst.msk [vmem:[#allocation5 + $0xf8] sm:$0xff] %vm387, 0.0
      %583 = vst.msk [vmem:[#allocation5 + $0x100] sm:$0x3] %vm390, 0.0
      %584 = vst.msk [vmem:[#allocation5 + $0x108] sm:$0xff] %vm387, 0.0
      %585 = vst.msk [vmem:[#allocation5 + $0x110] sm:$0xff] %vm387, 0.0
      %586 = vst.msk [vmem:[#allocation5 + $0x118] sm:$0x3] %vm390, 0.0
      %587 = vst.msk [vmem:[#allocation5 + $0x120] sm:$0xff] %vm387, 0.0
      %588 = vst.msk [vmem:[#allocation5 + $0x128] sm:$0xff] %vm387, 0.0
      %589 = vst.msk [vmem:[#allocation5 + $0x130] sm:$0x3] %vm390, 0.0
      %590 = vst.msk [vmem:[#allocation5 + $0x138] sm:$0xff] %vm387, 0.0
      %591 = vst.msk [vmem:[#allocation5 + $0x140] sm:$0xff] %vm387, 0.0
      %592 = vst.msk [vmem:[#allocation5 + $0x148] sm:$0x3] %vm390, 0.0
      %593 = vst.msk [vmem:[#allocation5 + $0x150] sm:$0xff] %vm387, 0.0
      %594 = vst.msk [vmem:[#allocation5 + $0x158] sm:$0xff] %vm387, 0.0
      %595 = vst.msk [vmem:[#allocation5 + $0x160] sm:$0x3] %vm390, 0.0
      %596 = vst.msk [vmem:[#allocation5 + $0x168] sm:$0xff] %vm387, 0.0
      %597 = vst.msk [vmem:[#allocation5 + $0x170] sm:$0xff] %vm387, 0.0
      %598 = vst.msk [vmem:[#allocation5 + $0x178] sm:$0x3] %vm390, 0.0
      %599 = vst.msk [vmem:[#allocation5 + $0x180] sm:$0xff] %vm387, 0.0
      %600 = vst.msk [vmem:[#allocation5 + $0x188] sm:$0xff] %vm387, 0.0
      %601 = vst.msk [vmem:[#allocation5 + $0x190] sm:$0x3] %vm390, 0.0
      %602 = vst.msk [vmem:[#allocation5 + $0x198] sm:$0xff] %vm387, 0.0
      %603 = vst.msk [vmem:[#allocation5 + $0x1a0] sm:$0xff] %vm387, 0.0
      %604 = vst.msk [vmem:[#allocation5 + $0x1a8] sm:$0x3] %vm390, 0.0
      %v605 = vld [vmem:[%s381] sm:$0xff]
      %v606 = vld [vmem:[%s381 + $0x8] sm:$0xff]
      %v607 = vld [vmem:[%s381 + $0x18] sm:$0xff]
      %v608 = vld [vmem:[%s381 + $0x20] sm:$0xff]
      %v609 = vld [vmem:[%s381 + $0x30] sm:$0xff]
      %v610 = vld [vmem:[%s381 + $0x38] sm:$0xff]
      %v611 = vld [vmem:[%s381 + $0x48] sm:$0xff]
      %v612 = vld [vmem:[%s381 + $0x50] sm:$0xff]
      %v613 = vld [vmem:[%s381 + $0x60] sm:$0xff]
      %v614 = vld [vmem:[%s381 + $0x68] sm:$0xff]
      %v615 = vld [vmem:[%s381 + $0x78] sm:$0xff]
      %v616 = vld [vmem:[%s381 + $0x80] sm:$0xff]
      %v617 = vld [vmem:[%s381 + $0x90] sm:$0xff]
      %v618 = vld [vmem:[%s381 + $0x98] sm:$0xff]
      %v619 = vld [vmem:[%s381 + $0xa8] sm:$0xff]
      %v620 = vld [vmem:[%s381 + $0xb0] sm:$0xff]
      %v621 = vld [vmem:[%s381 + $0xc0] sm:$0xff]
      %v622 = vld [vmem:[%s381 + $0xc8] sm:$0xff]
      %v623 = vld [vmem:[%s381 + $0xd8] sm:$0xff]
      %v624 = vld [vmem:[%s381 + $0xe0] sm:$0xff]
      %v625 = vld [vmem:[%s381 + $0xf0] sm:$0xff]
      %v626 = vld [vmem:[%s381 + $0xf8] sm:$0xff]
      %v627 = vld [vmem:[%s381 + $0x108] sm:$0xff]
      %v628 = vld [vmem:[%s381 + $0x110] sm:$0xff]
      %v629 = vld [vmem:[%s381 + $0x120] sm:$0xff]
      %v630 = vld [vmem:[%s381 + $0x128] sm:$0xff]
      %v631 = vld [vmem:[%s381 + $0x138] sm:$0xff]
      %v632 = vld [vmem:[%s381 + $0x140] sm:$0xff]
      %v633 = vld [vmem:[%s381 + $0x150] sm:$0xff]
      %v634 = vld [vmem:[%s381 + $0x158] sm:$0xff]
      %v635 = vld [vmem:[%s381 + $0x168] sm:$0xff]
      %v636 = vld [vmem:[%s381 + $0x170] sm:$0xff]
      %v637 = vld [vmem:[%s381 + $0x1] sm:$0xff]
      %v638 = vld [vmem:[%s381 + $0x9] sm:$0xff]
      %v639 = vld [vmem:[%s381 + $0x19] sm:$0xff]
      %v640 = vld [vmem:[%s381 + $0x21] sm:$0xff]
      %v641 = vld [vmem:[%s381 + $0x31] sm:$0xff]
      %v642 = vld [vmem:[%s381 + $0x39] sm:$0xff]
      %v643 = vld [vmem:[%s381 + $0x49] sm:$0xff]
      %v644 = vld [vmem:[%s381 + $0x51] sm:$0xff]
      %v645 = vld [vmem:[%s381 + $0x61] sm:$0xff]
      %v646 = vld [vmem:[%s381 + $0x69] sm:$0xff]
      %v647 = vld [vmem:[%s381 + $0x79] sm:$0xff]
      %v648 = vld [vmem:[%s381 + $0x81] sm:$0xff]
      %v649 = vld [vmem:[%s381 + $0x91] sm:$0xff]
      %v650 = vld [vmem:[%s381 + $0x99] sm:$0xff]
      %v651 = vld [vmem:[%s381 + $0xa9] sm:$0xff]
      %v652 = vld [vmem:[%s381 + $0xb1] sm:$0xff]
      %v653 = vld [vmem:[%s381 + $0xc1] sm:$0xff]
      %v654 = vld [vmem:[%s381 + $0xc9] sm:$0xff]
      %v655 = vld [vmem:[%s381 + $0xd9] sm:$0xff]
      %v656 = vld [vmem:[%s381 + $0xe1] sm:$0xff]
      %v657 = vld [vmem:[%s381 + $0xf1] sm:$0xff]
      %v658 = vld [vmem:[%s381 + $0xf9] sm:$0xff]
      %v659 = vld [vmem:[%s381 + $0x109] sm:$0xff]
      %v660 = vld [vmem:[%s381 + $0x111] sm:$0xff]
      %v661 = vld [vmem:[%s381 + $0x121] sm:$0xff]
      %v662 = vld [vmem:[%s381 + $0x129] sm:$0xff]
      %v663 = vld [vmem:[%s381 + $0x139] sm:$0xff]
      %v664 = vld [vmem:[%s381 + $0x141] sm:$0xff]
      %v665 = vld [vmem:[%s381 + $0x151] sm:$0xff]
      %v666 = vld [vmem:[%s381 + $0x159] sm:$0xff]
      %v667 = vld [vmem:[%s381 + $0x169] sm:$0xff]
      %v668 = vld [vmem:[%s381 + $0x171] sm:$0xff]
      %v669 = vld [vmem:[%s381 + $0x2] sm:$0xff]
      %v670 = vld [vmem:[%s381 + $0xa] sm:$0xff]
      %v671 = vld [vmem:[%s381 + $0x1a] sm:$0xff]
      %v672 = vld [vmem:[%s381 + $0x22] sm:$0xff]
      %v673 = vld [vmem:[%s381 + $0x32] sm:$0xff]
      %v674 = vld [vmem:[%s381 + $0x3a] sm:$0xff]
      %v675 = vld [vmem:[%s381 + $0x4a] sm:$0xff]
      %v676 = vld [vmem:[%s381 + $0x52] sm:$0xff]
      %v677 = vld [vmem:[%s381 + $0x62] sm:$0xff]
      %v678 = vld [vmem:[%s381 + $0x6a] sm:$0xff]
      %v679 = vld [vmem:[%s381 + $0x7a] sm:$0xff]
      %v680 = vld [vmem:[%s381 + $0x82] sm:$0xff]
      %v681 = vld [vmem:[%s381 + $0x92] sm:$0xff]
      %v682 = vld [vmem:[%s381 + $0x9a] sm:$0xff]
      %v683 = vld [vmem:[%s381 + $0xaa] sm:$0xff]
      %v684 = vld [vmem:[%s381 + $0xb2] sm:$0xff]
      %v685 = vld [vmem:[%s381 + $0xc2] sm:$0xff]
      %v686 = vld [vmem:[%s381 + $0xca] sm:$0xff]
      %v687 = vld [vmem:[%s381 + $0xda] sm:$0xff]
      %v688 = vld [vmem:[%s381 + $0xe2] sm:$0xff]
      %v689 = vld [vmem:[%s381 + $0xf2] sm:$0xff]
      %v690 = vld [vmem:[%s381 + $0xfa] sm:$0xff]
      %v691 = vld [vmem:[%s381 + $0x10a] sm:$0xff]
      %v692 = vld [vmem:[%s381 + $0x112] sm:$0xff]
      %v693 = vld [vmem:[%s381 + $0x122] sm:$0xff]
      %v694 = vld [vmem:[%s381 + $0x12a] sm:$0xff]
      %v695 = vld [vmem:[%s381 + $0x13a] sm:$0xff]
      %v696 = vld [vmem:[%s381 + $0x142] sm:$0xff]
      %v697 = vld [vmem:[%s381 + $0x152] sm:$0xff]
      %v698 = vld [vmem:[%s381 + $0x15a] sm:$0xff]
      %v699 = vld [vmem:[%s381 + $0x16a] sm:$0xff]
      %v700 = vld [vmem:[%s381 + $0x172] sm:$0xff]
      %s701 = scalar_lea.vmem %s381, 24
      %v702 = vld [vmem:[%s701] sm:$0xff]
      %v703 = vld [vmem:[%s701 + $0x8] sm:$0xff]
      %v704 = vld [vmem:[%s701 + $0x18] sm:$0xff]
      %v705 = vld [vmem:[%s701 + $0x20] sm:$0xff]
      %v706 = vld [vmem:[%s701 + $0x30] sm:$0xff]
      %v707 = vld [vmem:[%s701 + $0x38] sm:$0xff]
      %v708 = vld [vmem:[%s701 + $0x48] sm:$0xff]
      %v709 = vld [vmem:[%s701 + $0x50] sm:$0xff]
      %v710 = vld [vmem:[%s701 + $0x60] sm:$0xff]
      %v711 = vld [vmem:[%s701 + $0x68] sm:$0xff]
      %v712 = vld [vmem:[%s701 + $0x78] sm:$0xff]
      %v713 = vld [vmem:[%s701 + $0x80] sm:$0xff]
      %v714 = vld [vmem:[%s701 + $0x90] sm:$0xff]
      %v715 = vld [vmem:[%s701 + $0x98] sm:$0xff]
      %v716 = vld [vmem:[%s701 + $0xa8] sm:$0xff]
      %v717 = vld [vmem:[%s701 + $0xb0] sm:$0xff]
      %v718 = vld [vmem:[%s701 + $0xc0] sm:$0xff]
      %v719 = vld [vmem:[%s701 + $0xc8] sm:$0xff]
      %v720 = vld [vmem:[%s701 + $0xd8] sm:$0xff]
      %v721 = vld [vmem:[%s701 + $0xe0] sm:$0xff]
      %v722 = vld [vmem:[%s701 + $0xf0] sm:$0xff]
      %v723 = vld [vmem:[%s701 + $0xf8] sm:$0xff]
      %v724 = vld [vmem:[%s701 + $0x108] sm:$0xff]
      %v725 = vld [vmem:[%s701 + $0x110] sm:$0xff]
      %v726 = vld [vmem:[%s701 + $0x120] sm:$0xff]
      %v727 = vld [vmem:[%s701 + $0x128] sm:$0xff]
      %v728 = vld [vmem:[%s701 + $0x138] sm:$0xff]
      %v729 = vld [vmem:[%s701 + $0x140] sm:$0xff]
      %v730 = vld [vmem:[%s701 + $0x150] sm:$0xff]
      %v731 = vld [vmem:[%s701 + $0x158] sm:$0xff]
      %v732 = vld [vmem:[%s701 + $0x168] sm:$0xff]
      %v733 = vld [vmem:[%s701 + $0x170] sm:$0xff]
      %v734 = vld [vmem:[%s701 + $0x1] sm:$0xff]
      %v735 = vld [vmem:[%s701 + $0x9] sm:$0xff]
      %v736 = vld [vmem:[%s701 + $0x19] sm:$0xff]
      %v737 = vld [vmem:[%s701 + $0x21] sm:$0xff]
      %v738 = vld [vmem:[%s701 + $0x31] sm:$0xff]
      %v739 = vld [vmem:[%s701 + $0x39] sm:$0xff]
      %v740 = vld [vmem:[%s701 + $0x49] sm:$0xff]
      %v741 = vld [vmem:[%s701 + $0x51] sm:$0xff]
      %v742 = vld [vmem:[%s701 + $0x61] sm:$0xff]
      %v743 = vld [vmem:[%s701 + $0x69] sm:$0xff]
      %v744 = vld [vmem:[%s701 + $0x79] sm:$0xff]
      %v745 = vld [vmem:[%s701 + $0x81] sm:$0xff]
      %v746 = vld [vmem:[%s701 + $0x91] sm:$0xff]
      %v747 = vld [vmem:[%s701 + $0x99] sm:$0xff]
      %v748 = vld [vmem:[%s701 + $0xa9] sm:$0xff]
      %v749 = vld [vmem:[%s701 + $0xb1] sm:$0xff]
      %v750 = vld [vmem:[%s701 + $0xc1] sm:$0xff]
      %v751 = vld [vmem:[%s701 + $0xc9] sm:$0xff]
      %v752 = vld [vmem:[%s701 + $0xd9] sm:$0xff]
      %v753 = vld [vmem:[%s701 + $0xe1] sm:$0xff]
      %v754 = vld [vmem:[%s701 + $0xf1] sm:$0xff]
      %v755 = vld [vmem:[%s701 + $0xf9] sm:$0xff]
      %v756 = vld [vmem:[%s701 + $0x109] sm:$0xff]
      %v757 = vld [vmem:[%s701 + $0x111] sm:$0xff]
      %v758 = vld [vmem:[%s701 + $0x121] sm:$0xff]
      %v759 = vld [vmem:[%s701 + $0x129] sm:$0xff]
      %v760 = vld [vmem:[%s701 + $0x139] sm:$0xff]
      %v761 = vld [vmem:[%s701 + $0x141] sm:$0xff]
      %v762 = vld [vmem:[%s701 + $0x151] sm:$0xff]
      %v763 = vld [vmem:[%s701 + $0x159] sm:$0xff]
      %v764 = vld [vmem:[%s701 + $0x169] sm:$0xff]
      %v765 = vld [vmem:[%s701 + $0x171] sm:$0xff]
      %v766 = vld [vmem:[%s701 + $0x2] sm:$0xff]
      %v767 = vld [vmem:[%s701 + $0xa] sm:$0xff]
      %v768 = vld [vmem:[%s701 + $0x1a] sm:$0xff]
      %v769 = vld [vmem:[%s701 + $0x22] sm:$0xff]
      %v770 = vld [vmem:[%s701 + $0x32] sm:$0xff]
      %v771 = vld [vmem:[%s701 + $0x3a] sm:$0xff]
      %v772 = vld [vmem:[%s701 + $0x4a] sm:$0xff]
      %v773 = vld [vmem:[%s701 + $0x52] sm:$0xff]
      %v774 = vld [vmem:[%s701 + $0x62] sm:$0xff]
      %v775 = vld [vmem:[%s701 + $0x6a] sm:$0xff]
      %v776 = vld [vmem:[%s701 + $0x7a] sm:$0xff]
      %v777 = vld [vmem:[%s701 + $0x82] sm:$0xff]
      %v778 = vld [vmem:[%s701 + $0x92] sm:$0xff]
      %v779 = vld [vmem:[%s701 + $0x9a] sm:$0xff]
      %v780 = vld [vmem:[%s701 + $0xaa] sm:$0xff]
      %v781 = vld [vmem:[%s701 + $0xb2] sm:$0xff]
      %v782 = vld [vmem:[%s701 + $0xc2] sm:$0xff]
      %v783 = vld [vmem:[%s701 + $0xca] sm:$0xff]
      %v784 = vld [vmem:[%s701 + $0xda] sm:$0xff]
      %v785 = vld [vmem:[%s701 + $0xe2] sm:$0xff]
      %v786 = vld [vmem:[%s701 + $0xf2] sm:$0xff]
      %v787 = vld [vmem:[%s701 + $0xfa] sm:$0xff]
      %v788 = vld [vmem:[%s701 + $0x10a] sm:$0xff]
      %v789 = vld [vmem:[%s701 + $0x112] sm:$0xff]
      %v790 = vld [vmem:[%s701 + $0x122] sm:$0xff]
      %v791 = vld [vmem:[%s701 + $0x12a] sm:$0xff]
      %v792 = vld [vmem:[%s701 + $0x13a] sm:$0xff]
      %v793 = vld [vmem:[%s701 + $0x142] sm:$0xff]
      %v794 = vld [vmem:[%s701 + $0x152] sm:$0xff]
      %v795 = vld [vmem:[%s701 + $0x15a] sm:$0xff]
      %v796 = vld [vmem:[%s701 + $0x16a] sm:$0xff]
      %v797 = vld [vmem:[%s701 + $0x172] sm:$0xff]
      %s798 = scalar_lea.vmem %s381, 48
      %v799 = vld [vmem:[%s798] sm:$0xff]
      %v800 = vld [vmem:[%s798 + $0x8] sm:$0xff]
      %v801 = vld [vmem:[%s798 + $0x18] sm:$0xff]
      %v802 = vld [vmem:[%s798 + $0x20] sm:$0xff]
      %v803 = vld [vmem:[%s798 + $0x30] sm:$0xff]
      %v804 = vld [vmem:[%s798 + $0x38] sm:$0xff]
      %v805 = vld [vmem:[%s798 + $0x48] sm:$0xff]
      %v806 = vld [vmem:[%s798 + $0x50] sm:$0xff]
      %v807 = vld [vmem:[%s798 + $0x60] sm:$0xff]
      %v808 = vld [vmem:[%s798 + $0x68] sm:$0xff]
      %v809 = vld [vmem:[%s798 + $0x78] sm:$0xff]
      %v810 = vld [vmem:[%s798 + $0x80] sm:$0xff]
      %v811 = vld [vmem:[%s798 + $0x90] sm:$0xff]
      %v812 = vld [vmem:[%s798 + $0x98] sm:$0xff]
      %v813 = vld [vmem:[%s798 + $0xa8] sm:$0xff]
      %v814 = vld [vmem:[%s798 + $0xb0] sm:$0xff]
      %v815 = vld [vmem:[%s798 + $0xc0] sm:$0xff]
      %v816 = vld [vmem:[%s798 + $0xc8] sm:$0xff]
      %v817 = vld [vmem:[%s798 + $0xd8] sm:$0xff]
      %v818 = vld [vmem:[%s798 + $0xe0] sm:$0xff]
      %v819 = vld [vmem:[%s798 + $0xf0] sm:$0xff]
      %v820 = vld [vmem:[%s798 + $0xf8] sm:$0xff]
      %v821 = vld [vmem:[%s798 + $0x108] sm:$0xff]
      %v822 = vld [vmem:[%s798 + $0x110] sm:$0xff]
      %v823 = vld [vmem:[%s798 + $0x120] sm:$0xff]
      %v824 = vld [vmem:[%s798 + $0x128] sm:$0xff]
      %v825 = vld [vmem:[%s798 + $0x138] sm:$0xff]
      %v826 = vld [vmem:[%s798 + $0x140] sm:$0xff]
      %v827 = vld [vmem:[%s798 + $0x150] sm:$0xff]
      %v828 = vld [vmem:[%s798 + $0x158] sm:$0xff]
      %v829 = vld [vmem:[%s798 + $0x168] sm:$0xff]
      %v830 = vld [vmem:[%s798 + $0x170] sm:$0xff]
      %v831 = vld [vmem:[%s798 + $0x1] sm:$0xff]
      %v832 = vld [vmem:[%s798 + $0x9] sm:$0xff]
      %v833 = vld [vmem:[%s798 + $0x19] sm:$0xff]
      %v834 = vld [vmem:[%s798 + $0x21] sm:$0xff]
      %v835 = vld [vmem:[%s798 + $0x31] sm:$0xff]
      %v836 = vld [vmem:[%s798 + $0x39] sm:$0xff]
      %v837 = vld [vmem:[%s798 + $0x49] sm:$0xff]
      %v838 = vld [vmem:[%s798 + $0x51] sm:$0xff]
      %v839 = vld [vmem:[%s798 + $0x61] sm:$0xff]
      %v840 = vld [vmem:[%s798 + $0x69] sm:$0xff]
      %v841 = vld [vmem:[%s798 + $0x79] sm:$0xff]
      %v842 = vld [vmem:[%s798 + $0x81] sm:$0xff]
      %v843 = vld [vmem:[%s798 + $0x91] sm:$0xff]
      %v844 = vld [vmem:[%s798 + $0x99] sm:$0xff]
      %v845 = vld [vmem:[%s798 + $0xa9] sm:$0xff]
      %v846 = vld [vmem:[%s798 + $0xb1] sm:$0xff]
      %v847 = vld [vmem:[%s798 + $0xc1] sm:$0xff]
      %v848 = vld [vmem:[%s798 + $0xc9] sm:$0xff]
      %v849 = vld [vmem:[%s798 + $0xd9] sm:$0xff]
      %v850 = vld [vmem:[%s798 + $0xe1] sm:$0xff]
      %v851 = vld [vmem:[%s798 + $0xf1] sm:$0xff]
      %v852 = vld [vmem:[%s798 + $0xf9] sm:$0xff]
      %v853 = vld [vmem:[%s798 + $0x109] sm:$0xff]
      %v854 = vld [vmem:[%s798 + $0x111] sm:$0xff]
      %v855 = vld [vmem:[%s798 + $0x121] sm:$0xff]
      %v856 = vld [vmem:[%s798 + $0x129] sm:$0xff]
      %v857 = vld [vmem:[%s798 + $0x139] sm:$0xff]
      %v858 = vld [vmem:[%s798 + $0x141] sm:$0xff]
      %v859 = vld [vmem:[%s798 + $0x151] sm:$0xff]
      %v860 = vld [vmem:[%s798 + $0x159] sm:$0xff]
      %v861 = vld [vmem:[%s798 + $0x169] sm:$0xff]
      %v862 = vld [vmem:[%s798 + $0x171] sm:$0xff]
      %v863 = vld [vmem:[%s798 + $0x2] sm:$0xff]
      %v864 = vld [vmem:[%s798 + $0xa] sm:$0xff]
      %v865 = vld [vmem:[%s798 + $0x1a] sm:$0xff]
      %v866 = vld [vmem:[%s798 + $0x22] sm:$0xff]
      %v867 = vld [vmem:[%s798 + $0x32] sm:$0xff]
      %v868 = vld [vmem:[%s798 + $0x3a] sm:$0xff]
      %v869 = vld [vmem:[%s798 + $0x4a] sm:$0xff]
      %v870 = vld [vmem:[%s798 + $0x52] sm:$0xff]
      %v871 = vld [vmem:[%s798 + $0x62] sm:$0xff]
      %v872 = vld [vmem:[%s798 + $0x6a] sm:$0xff]
      %v873 = vld [vmem:[%s798 + $0x7a] sm:$0xff]
      %v874 = vld [vmem:[%s798 + $0x82] sm:$0xff]
      %v875 = vld [vmem:[%s798 + $0x92] sm:$0xff]
      %v876 = vld [vmem:[%s798 + $0x9a] sm:$0xff]
      %v877 = vld [vmem:[%s798 + $0xaa] sm:$0xff]
      %v878 = vld [vmem:[%s798 + $0xb2] sm:$0xff]
      %v879 = vld [vmem:[%s798 + $0xc2] sm:$0xff]
      %v880 = vld [vmem:[%s798 + $0xca] sm:$0xff]
      %v881 = vld [vmem:[%s798 + $0xda] sm:$0xff]
      %v882 = vld [vmem:[%s798 + $0xe2] sm:$0xff]
      %v883 = vld [vmem:[%s798 + $0xf2] sm:$0xff]
      %v884 = vld [vmem:[%s798 + $0xfa] sm:$0xff]
      %v885 = vld [vmem:[%s798 + $0x10a] sm:$0xff]
      %v886 = vld [vmem:[%s798 + $0x112] sm:$0xff]
      %v887 = vld [vmem:[%s798 + $0x122] sm:$0xff]
      %v888 = vld [vmem:[%s798 + $0x12a] sm:$0xff]
      %v889 = vld [vmem:[%s798 + $0x13a] sm:$0xff]
      %v890 = vld [vmem:[%s798 + $0x142] sm:$0xff]
      %v891 = vld [vmem:[%s798 + $0x152] sm:$0xff]
      %v892 = vld [vmem:[%s798 + $0x15a] sm:$0xff]
      %v893 = vld [vmem:[%s798 + $0x16a] sm:$0xff]
      %v894 = vld [vmem:[%s798 + $0x172] sm:$0xff]
      %927 = vrot.lane.b32.xlu0 %v637, 8
      %v928 = vpop.permute.xlu0 %927
      %929 = vrot.lane.b32.xlu0 %v638, 8
      %v930 = vpop.permute.xlu0 %929
      %931 = vrot.lane.b32.xlu0 %v639, 8
      %v932 = vpop.permute.xlu0 %931
      %933 = vrot.lane.b32.xlu0 %v640, 8
      %v934 = vpop.permute.xlu0 %933
      %935 = vrot.lane.b32.xlu0 %v641, 8
      %v936 = vpop.permute.xlu0 %935
      %937 = vrot.lane.b32.xlu0 %v642, 8
      %v938 = vpop.permute.xlu0 %937
      %939 = vrot.lane.b32.xlu0 %v643, 8
      %v940 = vpop.permute.xlu0 %939
      %941 = vrot.lane.b32.xlu0 %v644, 8
      %v942 = vpop.permute.xlu0 %941
      %943 = vrot.lane.b32.xlu0 %v645, 8
      %v944 = vpop.permute.xlu0 %943
      %945 = vrot.lane.b32.xlu0 %v646, 8
      %v946 = vpop.permute.xlu0 %945
      %947 = vrot.lane.b32.xlu0 %v647, 8
      %v948 = vpop.permute.xlu0 %947
      %949 = vrot.lane.b32.xlu0 %v648, 8
      %v950 = vpop.permute.xlu0 %949
      %951 = vrot.lane.b32.xlu0 %v649, 8
      %v952 = vpop.permute.xlu0 %951
      %953 = vrot.lane.b32.xlu0 %v650, 8
      %v954 = vpop.permute.xlu0 %953
      %955 = vrot.lane.b32.xlu0 %v651, 8
      %v956 = vpop.permute.xlu0 %955
      %957 = vrot.lane.b32.xlu0 %v652, 8
      %v958 = vpop.permute.xlu0 %957
      %959 = vrot.lane.b32.xlu0 %v653, 8
      %v960 = vpop.permute.xlu0 %959
      %961 = vrot.lane.b32.xlu0 %v654, 8
      %v962 = vpop.permute.xlu0 %961
      %963 = vrot.lane.b32.xlu0 %v655, 8
      %v964 = vpop.permute.xlu0 %963
      %965 = vrot.lane.b32.xlu0 %v656, 8
      %v966 = vpop.permute.xlu0 %965
      %967 = vrot.lane.b32.xlu0 %v657, 8
      %v968 = vpop.permute.xlu0 %967
      %969 = vrot.lane.b32.xlu0 %v658, 8
      %v970 = vpop.permute.xlu0 %969
      %971 = vrot.lane.b32.xlu0 %v659, 8
      %v972 = vpop.permute.xlu0 %971
      %973 = vrot.lane.b32.xlu0 %v660, 8
      %v974 = vpop.permute.xlu0 %973
      %975 = vrot.lane.b32.xlu0 %v661, 8
      %v976 = vpop.permute.xlu0 %975
      %977 = vrot.lane.b32.xlu0 %v662, 8
      %v978 = vpop.permute.xlu0 %977
      %979 = vrot.lane.b32.xlu0 %v663, 8
      %v980 = vpop.permute.xlu0 %979
      %981 = vrot.lane.b32.xlu0 %v664, 8
      %v982 = vpop.permute.xlu0 %981
      %983 = vrot.lane.b32.xlu0 %v665, 8
      %v984 = vpop.permute.xlu0 %983
      %985 = vrot.lane.b32.xlu0 %v666, 8
      %v986 = vpop.permute.xlu0 %985
      %987 = vrot.lane.b32.xlu0 %v667, 8
      %v988 = vpop.permute.xlu0 %987
      %989 = vrot.lane.b32.xlu0 %v668, 8
      %v990 = vpop.permute.xlu0 %989
      %1055 = vrot.lane.b32.xlu0 %v669, 16
      %v1056 = vpop.permute.xlu0 %1055
      %1057 = vrot.lane.b32.xlu0 %v670, 16
      %v1058 = vpop.permute.xlu0 %1057
      %1059 = vrot.lane.b32.xlu0 %v671, 16
      %v1060 = vpop.permute.xlu0 %1059
      %1061 = vrot.lane.b32.xlu0 %v672, 16
      %v1062 = vpop.permute.xlu0 %1061
      %1063 = vrot.lane.b32.xlu0 %v673, 16
      %v1064 = vpop.permute.xlu0 %1063
      %1065 = vrot.lane.b32.xlu0 %v674, 16
      %v1066 = vpop.permute.xlu0 %1065
      %1067 = vrot.lane.b32.xlu0 %v675, 16
      %v1068 = vpop.permute.xlu0 %1067
      %1069 = vrot.lane.b32.xlu0 %v676, 16
      %v1070 = vpop.permute.xlu0 %1069
      %1071 = vrot.lane.b32.xlu0 %v677, 16
      %v1072 = vpop.permute.xlu0 %1071
      %1073 = vrot.lane.b32.xlu0 %v678, 16
      %v1074 = vpop.permute.xlu0 %1073
      %1075 = vrot.lane.b32.xlu0 %v679, 16
      %v1076 = vpop.permute.xlu0 %1075
      %1077 = vrot.lane.b32.xlu0 %v680, 16
      %v1078 = vpop.permute.xlu0 %1077
      %1079 = vrot.lane.b32.xlu0 %v681, 16
      %v1080 = vpop.permute.xlu0 %1079
      %1081 = vrot.lane.b32.xlu0 %v682, 16
      %v1082 = vpop.permute.xlu0 %1081
      %1083 = vrot.lane.b32.xlu0 %v683, 16
      %v1084 = vpop.permute.xlu0 %1083
      %1085 = vrot.lane.b32.xlu0 %v684, 16
      %v1086 = vpop.permute.xlu0 %1085
      %1087 = vrot.lane.b32.xlu0 %v685, 16
      %v1088 = vpop.permute.xlu0 %1087
      %1089 = vrot.lane.b32.xlu0 %v686, 16
      %v1090 = vpop.permute.xlu0 %1089
      %1091 = vrot.lane.b32.xlu0 %v687, 16
      %v1092 = vpop.permute.xlu0 %1091
      %1093 = vrot.lane.b32.xlu0 %v688, 16
      %v1094 = vpop.permute.xlu0 %1093
      %1095 = vrot.lane.b32.xlu0 %v689, 16
      %v1096 = vpop.permute.xlu0 %1095
      %1097 = vrot.lane.b32.xlu0 %v690, 16
      %v1098 = vpop.permute.xlu0 %1097
      %1099 = vrot.lane.b32.xlu0 %v691, 16
      %v1100 = vpop.permute.xlu0 %1099
      %1101 = vrot.lane.b32.xlu0 %v692, 16
      %v1102 = vpop.permute.xlu0 %1101
      %1103 = vrot.lane.b32.xlu0 %v693, 16
      %v1104 = vpop.permute.xlu0 %1103
      %1105 = vrot.lane.b32.xlu0 %v694, 16
      %v1106 = vpop.permute.xlu0 %1105
      %1107 = vrot.lane.b32.xlu0 %v695, 16
      %v1108 = vpop.permute.xlu0 %1107
      %1109 = vrot.lane.b32.xlu0 %v696, 16
      %v1110 = vpop.permute.xlu0 %1109
      %1111 = vrot.lane.b32.xlu0 %v697, 16
      %v1112 = vpop.permute.xlu0 %1111
      %1113 = vrot.lane.b32.xlu0 %v698, 16
      %v1114 = vpop.permute.xlu0 %1113
      %1115 = vrot.lane.b32.xlu0 %v699, 16
      %v1116 = vpop.permute.xlu0 %1115
      %1117 = vrot.lane.b32.xlu0 %v700, 16
      %v1118 = vpop.permute.xlu0 %1117
      %1183 = vrot.lane.b32.xlu0 %v702, 24
      %v1184 = vpop.permute.xlu0 %1183
      %1185 = vrot.lane.b32.xlu0 %v703, 24
      %v1186 = vpop.permute.xlu0 %1185
      %1187 = vrot.lane.b32.xlu0 %v704, 24
      %v1188 = vpop.permute.xlu0 %1187
      %1189 = vrot.lane.b32.xlu0 %v705, 24
      %v1190 = vpop.permute.xlu0 %1189
      %1191 = vrot.lane.b32.xlu0 %v706, 24
      %v1192 = vpop.permute.xlu0 %1191
      %1193 = vrot.lane.b32.xlu0 %v707, 24
      %v1194 = vpop.permute.xlu0 %1193
      %1195 = vrot.lane.b32.xlu0 %v708, 24
      %v1196 = vpop.permute.xlu0 %1195
      %1197 = vrot.lane.b32.xlu0 %v709, 24
      %v1198 = vpop.permute.xlu0 %1197
      %1199 = vrot.lane.b32.xlu0 %v710, 24
      %v1200 = vpop.permute.xlu0 %1199
      %1201 = vrot.lane.b32.xlu0 %v711, 24
      %v1202 = vpop.permute.xlu0 %1201
      %1203 = vrot.lane.b32.xlu0 %v712, 24
      %v1204 = vpop.permute.xlu0 %1203
      %1205 = vrot.lane.b32.xlu0 %v713, 24
      %v1206 = vpop.permute.xlu0 %1205
      %1207 = vrot.lane.b32.xlu0 %v714, 24
      %v1208 = vpop.permute.xlu0 %1207
      %1209 = vrot.lane.b32.xlu0 %v715, 24
      %v1210 = vpop.permute.xlu0 %1209
      %1211 = vrot.lane.b32.xlu0 %v716, 24
      %v1212 = vpop.permute.xlu0 %1211
      %1213 = vrot.lane.b32.xlu0 %v717, 24
      %v1214 = vpop.permute.xlu0 %1213
      %1215 = vrot.lane.b32.xlu0 %v718, 24
      %v1216 = vpop.permute.xlu0 %1215
      %1217 = vrot.lane.b32.xlu0 %v719, 24
      %v1218 = vpop.permute.xlu0 %1217
      %1219 = vrot.lane.b32.xlu0 %v720, 24
      %v1220 = vpop.permute.xlu0 %1219
      %1221 = vrot.lane.b32.xlu0 %v721, 24
      %v1222 = vpop.permute.xlu0 %1221
      %1223 = vrot.lane.b32.xlu0 %v722, 24
      %v1224 = vpop.permute.xlu0 %1223
      %1225 = vrot.lane.b32.xlu0 %v723, 24
      %v1226 = vpop.permute.xlu0 %1225
      %1227 = vrot.lane.b32.xlu0 %v724, 24
      %v1228 = vpop.permute.xlu0 %1227
      %1229 = vrot.lane.b32.xlu0 %v725, 24
      %v1230 = vpop.permute.xlu0 %1229
      %1231 = vrot.lane.b32.xlu0 %v726, 24
      %v1232 = vpop.permute.xlu0 %1231
      %1233 = vrot.lane.b32.xlu0 %v727, 24
      %v1234 = vpop.permute.xlu0 %1233
      %1235 = vrot.lane.b32.xlu0 %v728, 24
      %v1236 = vpop.permute.xlu0 %1235
      %1237 = vrot.lane.b32.xlu0 %v729, 24
      %v1238 = vpop.permute.xlu0 %1237
      %1239 = vrot.lane.b32.xlu0 %v730, 24
      %v1240 = vpop.permute.xlu0 %1239
      %1241 = vrot.lane.b32.xlu0 %v731, 24
      %v1242 = vpop.permute.xlu0 %1241
      %1243 = vrot.lane.b32.xlu0 %v732, 24
      %v1244 = vpop.permute.xlu0 %1243
      %1245 = vrot.lane.b32.xlu0 %v733, 24
      %v1246 = vpop.permute.xlu0 %1245
      %1311 = vrot.lane.b32.xlu0 %v734, 32
      %v1312 = vpop.permute.xlu0 %1311
      %1313 = vrot.lane.b32.xlu0 %v735, 32
      %v1314 = vpop.permute.xlu0 %1313
      %1315 = vrot.lane.b32.xlu0 %v736, 32
      %v1316 = vpop.permute.xlu0 %1315
      %1317 = vrot.lane.b32.xlu0 %v737, 32
      %v1318 = vpop.permute.xlu0 %1317
      %1319 = vrot.lane.b32.xlu0 %v738, 32
      %v1320 = vpop.permute.xlu0 %1319
      %1321 = vrot.lane.b32.xlu0 %v739, 32
      %v1322 = vpop.permute.xlu0 %1321
      %1323 = vrot.lane.b32.xlu0 %v740, 32
      %v1324 = vpop.permute.xlu0 %1323
      %1325 = vrot.lane.b32.xlu0 %v741, 32
      %v1326 = vpop.permute.xlu0 %1325
      %1327 = vrot.lane.b32.xlu0 %v742, 32
      %v1328 = vpop.permute.xlu0 %1327
      %1329 = vrot.lane.b32.xlu0 %v743, 32
      %v1330 = vpop.permute.xlu0 %1329
      %1331 = vrot.lane.b32.xlu0 %v744, 32
      %v1332 = vpop.permute.xlu0 %1331
      %1333 = vrot.lane.b32.xlu0 %v745, 32
      %v1334 = vpop.permute.xlu0 %1333
      %1335 = vrot.lane.b32.xlu0 %v746, 32
      %v1336 = vpop.permute.xlu0 %1335
      %1337 = vrot.lane.b32.xlu0 %v747, 32
      %v1338 = vpop.permute.xlu0 %1337
      %1339 = vrot.lane.b32.xlu0 %v748, 32
      %v1340 = vpop.permute.xlu0 %1339
      %1341 = vrot.lane.b32.xlu0 %v749, 32
      %v1342 = vpop.permute.xlu0 %1341
      %1343 = vrot.lane.b32.xlu0 %v750, 32
      %v1344 = vpop.permute.xlu0 %1343
      %1345 = vrot.lane.b32.xlu0 %v751, 32
      %v1346 = vpop.permute.xlu0 %1345
      %1347 = vrot.lane.b32.xlu0 %v752, 32
      %v1348 = vpop.permute.xlu0 %1347
      %1349 = vrot.lane.b32.xlu0 %v753, 32
      %v1350 = vpop.permute.xlu0 %1349
      %1351 = vrot.lane.b32.xlu0 %v754, 32
      %v1352 = vpop.permute.xlu0 %1351
      %1353 = vrot.lane.b32.xlu0 %v755, 32
      %v1354 = vpop.permute.xlu0 %1353
      %1355 = vrot.lane.b32.xlu0 %v756, 32
      %v1356 = vpop.permute.xlu0 %1355
      %1357 = vrot.lane.b32.xlu0 %v757, 32
      %v1358 = vpop.permute.xlu0 %1357
      %1359 = vrot.lane.b32.xlu0 %v758, 32
      %v1360 = vpop.permute.xlu0 %1359
      %1361 = vrot.lane.b32.xlu0 %v759, 32
      %v1362 = vpop.permute.xlu0 %1361
      %1363 = vrot.lane.b32.xlu0 %v760, 32
      %v1364 = vpop.permute.xlu0 %1363
      %1365 = vrot.lane.b32.xlu0 %v761, 32
      %v1366 = vpop.permute.xlu0 %1365
      %1367 = vrot.lane.b32.xlu0 %v762, 32
      %v1368 = vpop.permute.xlu0 %1367
      %1369 = vrot.lane.b32.xlu0 %v763, 32
      %v1370 = vpop.permute.xlu0 %1369
      %1371 = vrot.lane.b32.xlu0 %v764, 32
      %v1372 = vpop.permute.xlu0 %1371
      %1373 = vrot.lane.b32.xlu0 %v765, 32
      %v1374 = vpop.permute.xlu0 %1373
      %1439 = vrot.lane.b32.xlu0 %v766, 40
      %v1440 = vpop.permute.xlu0 %1439
      %1441 = vrot.lane.b32.xlu0 %v767, 40
      %v1442 = vpop.permute.xlu0 %1441
      %1443 = vrot.lane.b32.xlu0 %v768, 40
      %v1444 = vpop.permute.xlu0 %1443
      %1445 = vrot.lane.b32.xlu0 %v769, 40
      %v1446 = vpop.permute.xlu0 %1445
      %1447 = vrot.lane.b32.xlu0 %v770, 40
      %v1448 = vpop.permute.xlu0 %1447
      %1449 = vrot.lane.b32.xlu0 %v771, 40
      %v1450 = vpop.permute.xlu0 %1449
      %1451 = vrot.lane.b32.xlu0 %v772, 40
      %v1452 = vpop.permute.xlu0 %1451
      %1453 = vrot.lane.b32.xlu0 %v773, 40
      %v1454 = vpop.permute.xlu0 %1453
      %1455 = vrot.lane.b32.xlu0 %v774, 40
      %v1456 = vpop.permute.xlu0 %1455
      %1457 = vrot.lane.b32.xlu0 %v775, 40
      %v1458 = vpop.permute.xlu0 %1457
      %1459 = vrot.lane.b32.xlu0 %v776, 40
      %v1460 = vpop.permute.xlu0 %1459
      %1461 = vrot.lane.b32.xlu0 %v777, 40
      %v1462 = vpop.permute.xlu0 %1461
      %1463 = vrot.lane.b32.xlu0 %v778, 40
      %v1464 = vpop.permute.xlu0 %1463
      %1465 = vrot.lane.b32.xlu0 %v779, 40
      %v1466 = vpop.permute.xlu0 %1465
      %1467 = vrot.lane.b32.xlu0 %v780, 40
      %v1468 = vpop.permute.xlu0 %1467
      %1469 = vrot.lane.b32.xlu0 %v781, 40
      %v1470 = vpop.permute.xlu0 %1469
      %1471 = vrot.lane.b32.xlu0 %v782, 40
      %v1472 = vpop.permute.xlu0 %1471
      %1473 = vrot.lane.b32.xlu0 %v783, 40
      %v1474 = vpop.permute.xlu0 %1473
      %1475 = vrot.lane.b32.xlu0 %v784, 40
      %v1476 = vpop.permute.xlu0 %1475
      %1477 = vrot.lane.b32.xlu0 %v785, 40
      %v1478 = vpop.permute.xlu0 %1477
      %1479 = vrot.lane.b32.xlu0 %v786, 40
      %v1480 = vpop.permute.xlu0 %1479
      %1481 = vrot.lane.b32.xlu0 %v787, 40
      %v1482 = vpop.permute.xlu0 %1481
      %1483 = vrot.lane.b32.xlu0 %v788, 40
      %v1484 = vpop.permute.xlu0 %1483
      %1485 = vrot.lane.b32.xlu0 %v789, 40
      %v1486 = vpop.permute.xlu0 %1485
      %1487 = vrot.lane.b32.xlu0 %v790, 40
      %v1488 = vpop.permute.xlu0 %1487
      %1489 = vrot.lane.b32.xlu0 %v791, 40
      %v1490 = vpop.permute.xlu0 %1489
      %1491 = vrot.lane.b32.xlu0 %v792, 40
      %v1492 = vpop.permute.xlu0 %1491
      %1493 = vrot.lane.b32.xlu0 %v793, 40
      %v1494 = vpop.permute.xlu0 %1493
      %1495 = vrot.lane.b32.xlu0 %v794, 40
      %v1496 = vpop.permute.xlu0 %1495
      %1497 = vrot.lane.b32.xlu0 %v795, 40
      %v1498 = vpop.permute.xlu0 %1497
      %1499 = vrot.lane.b32.xlu0 %v796, 40
      %v1500 = vpop.permute.xlu0 %1499
      %1501 = vrot.lane.b32.xlu0 %v797, 40
      %v1502 = vpop.permute.xlu0 %1501
      %1567 = vrot.lane.b32.xlu0 %v799, 48
      %v1568 = vpop.permute.xlu0 %1567
      %1569 = vrot.lane.b32.xlu0 %v800, 48
      %v1570 = vpop.permute.xlu0 %1569
      %1571 = vrot.lane.b32.xlu0 %v801, 48
      %v1572 = vpop.permute.xlu0 %1571
      %1573 = vrot.lane.b32.xlu0 %v802, 48
      %v1574 = vpop.permute.xlu0 %1573
      %1575 = vrot.lane.b32.xlu0 %v803, 48
      %v1576 = vpop.permute.xlu0 %1575
      %1577 = vrot.lane.b32.xlu0 %v804, 48
      %v1578 = vpop.permute.xlu0 %1577
      %1579 = vrot.lane.b32.xlu0 %v805, 48
      %v1580 = vpop.permute.xlu0 %1579
      %1581 = vrot.lane.b32.xlu0 %v806, 48
      %v1582 = vpop.permute.xlu0 %1581
      %1583 = vrot.lane.b32.xlu0 %v807, 48
      %v1584 = vpop.permute.xlu0 %1583
      %1585 = vrot.lane.b32.xlu0 %v808, 48
      %v1586 = vpop.permute.xlu0 %1585
      %1587 = vrot.lane.b32.xlu0 %v809, 48
      %v1588 = vpop.permute.xlu0 %1587
      %1589 = vrot.lane.b32.xlu0 %v810, 48
      %v1590 = vpop.permute.xlu0 %1589
      %1591 = vrot.lane.b32.xlu0 %v811, 48
      %v1592 = vpop.permute.xlu0 %1591
      %1593 = vrot.lane.b32.xlu0 %v812, 48
      %v1594 = vpop.permute.xlu0 %1593
      %1595 = vrot.lane.b32.xlu0 %v813, 48
      %v1596 = vpop.permute.xlu0 %1595
      %1597 = vrot.lane.b32.xlu0 %v814, 48
      %v1598 = vpop.permute.xlu0 %1597
      %1599 = vrot.lane.b32.xlu0 %v815, 48
      %v1600 = vpop.permute.xlu0 %1599
      %1601 = vrot.lane.b32.xlu0 %v816, 48
      %v1602 = vpop.permute.xlu0 %1601
      %1603 = vrot.lane.b32.xlu0 %v817, 48
      %v1604 = vpop.permute.xlu0 %1603
      %1605 = vrot.lane.b32.xlu0 %v818, 48
      %v1606 = vpop.permute.xlu0 %1605
      %1607 = vrot.lane.b32.xlu0 %v819, 48
      %v1608 = vpop.permute.xlu0 %1607
      %1609 = vrot.lane.b32.xlu0 %v820, 48
      %v1610 = vpop.permute.xlu0 %1609
      %1611 = vrot.lane.b32.xlu0 %v821, 48
      %v1612 = vpop.permute.xlu0 %1611
      %1613 = vrot.lane.b32.xlu0 %v822, 48
      %v1614 = vpop.permute.xlu0 %1613
      %1615 = vrot.lane.b32.xlu0 %v823, 48
      %v1616 = vpop.permute.xlu0 %1615
      %1617 = vrot.lane.b32.xlu0 %v824, 48
      %v1618 = vpop.permute.xlu0 %1617
      %1619 = vrot.lane.b32.xlu0 %v825, 48
      %v1620 = vpop.permute.xlu0 %1619
      %1621 = vrot.lane.b32.xlu0 %v826, 48
      %v1622 = vpop.permute.xlu0 %1621
      %1623 = vrot.lane.b32.xlu0 %v827, 48
      %v1624 = vpop.permute.xlu0 %1623
      %1625 = vrot.lane.b32.xlu0 %v828, 48
      %v1626 = vpop.permute.xlu0 %1625
      %1627 = vrot.lane.b32.xlu0 %v829, 48
      %v1628 = vpop.permute.xlu0 %1627
      %1629 = vrot.lane.b32.xlu0 %v830, 48
      %v1630 = vpop.permute.xlu0 %1629
      %1695 = vrot.lane.b32.xlu0 %v831, 56
      %v1696 = vpop.permute.xlu0 %1695
      %1697 = vrot.lane.b32.xlu0 %v832, 56
      %v1698 = vpop.permute.xlu0 %1697
      %1699 = vrot.lane.b32.xlu0 %v833, 56
      %v1700 = vpop.permute.xlu0 %1699
      %1701 = vrot.lane.b32.xlu0 %v834, 56
      %v1702 = vpop.permute.xlu0 %1701
      %1703 = vrot.lane.b32.xlu0 %v835, 56
      %v1704 = vpop.permute.xlu0 %1703
      %1705 = vrot.lane.b32.xlu0 %v836, 56
      %v1706 = vpop.permute.xlu0 %1705
      %1707 = vrot.lane.b32.xlu0 %v837, 56
      %v1708 = vpop.permute.xlu0 %1707
      %1709 = vrot.lane.b32.xlu0 %v838, 56
      %v1710 = vpop.permute.xlu0 %1709
      %1711 = vrot.lane.b32.xlu0 %v839, 56
      %v1712 = vpop.permute.xlu0 %1711
      %1713 = vrot.lane.b32.xlu0 %v840, 56
      %v1714 = vpop.permute.xlu0 %1713
      %1715 = vrot.lane.b32.xlu0 %v841, 56
      %v1716 = vpop.permute.xlu0 %1715
      %1717 = vrot.lane.b32.xlu0 %v842, 56
      %v1718 = vpop.permute.xlu0 %1717
      %1719 = vrot.lane.b32.xlu0 %v843, 56
      %v1720 = vpop.permute.xlu0 %1719
      %1721 = vrot.lane.b32.xlu0 %v844, 56
      %v1722 = vpop.permute.xlu0 %1721
      %1723 = vrot.lane.b32.xlu0 %v845, 56
      %v1724 = vpop.permute.xlu0 %1723
      %1725 = vrot.lane.b32.xlu0 %v846, 56
      %v1726 = vpop.permute.xlu0 %1725
      %1727 = vrot.lane.b32.xlu0 %v847, 56
      %v1728 = vpop.permute.xlu0 %1727
      %1729 = vrot.lane.b32.xlu0 %v848, 56
      %v1730 = vpop.permute.xlu0 %1729
      %1731 = vrot.lane.b32.xlu0 %v849, 56
      %v1732 = vpop.permute.xlu0 %1731
      %1733 = vrot.lane.b32.xlu0 %v850, 56
      %v1734 = vpop.permute.xlu0 %1733
      %1735 = vrot.lane.b32.xlu0 %v851, 56
      %v1736 = vpop.permute.xlu0 %1735
      %1737 = vrot.lane.b32.xlu0 %v852, 56
      %v1738 = vpop.permute.xlu0 %1737
      %1739 = vrot.lane.b32.xlu0 %v853, 56
      %v1740 = vpop.permute.xlu0 %1739
      %1741 = vrot.lane.b32.xlu0 %v854, 56
      %v1742 = vpop.permute.xlu0 %1741
      %1743 = vrot.lane.b32.xlu0 %v855, 56
      %v1744 = vpop.permute.xlu0 %1743
      %1745 = vrot.lane.b32.xlu0 %v856, 56
      %v1746 = vpop.permute.xlu0 %1745
      %1747 = vrot.lane.b32.xlu0 %v857, 56
      %v1748 = vpop.permute.xlu0 %1747
      %1749 = vrot.lane.b32.xlu0 %v858, 56
      %v1750 = vpop.permute.xlu0 %1749
      %1751 = vrot.lane.b32.xlu0 %v859, 56
      %v1752 = vpop.permute.xlu0 %1751
      %1753 = vrot.lane.b32.xlu0 %v860, 56
      %v1754 = vpop.permute.xlu0 %1753
      %1755 = vrot.lane.b32.xlu0 %v861, 56
      %v1756 = vpop.permute.xlu0 %1755
      %1757 = vrot.lane.b32.xlu0 %v862, 56
      %v1758 = vpop.permute.xlu0 %1757
      %1823 = vrot.lane.b32.xlu0 %v863, 64
      %v1824 = vpop.permute.xlu0 %1823
      %1825 = vrot.lane.b32.xlu0 %v864, 64
      %v1826 = vpop.permute.xlu0 %1825
      %1827 = vrot.lane.b32.xlu0 %v865, 64
      %v1828 = vpop.permute.xlu0 %1827
      %1829 = vrot.lane.b32.xlu0 %v866, 64
      %v1830 = vpop.permute.xlu0 %1829
      %1831 = vrot.lane.b32.xlu0 %v867, 64
      %v1832 = vpop.permute.xlu0 %1831
      %1833 = vrot.lane.b32.xlu0 %v868, 64
      %v1834 = vpop.permute.xlu0 %1833
      %1835 = vrot.lane.b32.xlu0 %v869, 64
      %v1836 = vpop.permute.xlu0 %1835
      %1837 = vrot.lane.b32.xlu0 %v870, 64
      %v1838 = vpop.permute.xlu0 %1837
      %1839 = vrot.lane.b32.xlu0 %v871, 64
      %v1840 = vpop.permute.xlu0 %1839
      %1841 = vrot.lane.b32.xlu0 %v872, 64
      %v1842 = vpop.permute.xlu0 %1841
      %1843 = vrot.lane.b32.xlu0 %v873, 64
      %v1844 = vpop.permute.xlu0 %1843
      %1845 = vrot.lane.b32.xlu0 %v874, 64
      %v1846 = vpop.permute.xlu0 %1845
      %1847 = vrot.lane.b32.xlu0 %v875, 64
      %v1848 = vpop.permute.xlu0 %1847
      %1849 = vrot.lane.b32.xlu0 %v876, 64
      %v1850 = vpop.permute.xlu0 %1849
      %1851 = vrot.lane.b32.xlu0 %v877, 64
      %v1852 = vpop.permute.xlu0 %1851
      %1853 = vrot.lane.b32.xlu0 %v878, 64
      %v1854 = vpop.permute.xlu0 %1853
      %1855 = vrot.lane.b32.xlu0 %v879, 64
      %v1856 = vpop.permute.xlu0 %1855
      %1857 = vrot.lane.b32.xlu0 %v880, 64
      %v1858 = vpop.permute.xlu0 %1857
      %1859 = vrot.lane.b32.xlu0 %v881, 64
      %v1860 = vpop.permute.xlu0 %1859
      %1861 = vrot.lane.b32.xlu0 %v882, 64
      %v1862 = vpop.permute.xlu0 %1861
      %1863 = vrot.lane.b32.xlu0 %v883, 64
      %v1864 = vpop.permute.xlu0 %1863
      %1865 = vrot.lane.b32.xlu0 %v884, 64
      %v1866 = vpop.permute.xlu0 %1865
      %1867 = vrot.lane.b32.xlu0 %v885, 64
      %v1868 = vpop.permute.xlu0 %1867
      %1869 = vrot.lane.b32.xlu0 %v886, 64
      %v1870 = vpop.permute.xlu0 %1869
      %1871 = vrot.lane.b32.xlu0 %v887, 64
      %v1872 = vpop.permute.xlu0 %1871
      %1873 = vrot.lane.b32.xlu0 %v888, 64
      %v1874 = vpop.permute.xlu0 %1873
      %1875 = vrot.lane.b32.xlu0 %v889, 64
      %v1876 = vpop.permute.xlu0 %1875
      %1877 = vrot.lane.b32.xlu0 %v890, 64
      %v1878 = vpop.permute.xlu0 %1877
      %1879 = vrot.lane.b32.xlu0 %v891, 64
      %v1880 = vpop.permute.xlu0 %1879
      %1881 = vrot.lane.b32.xlu0 %v892, 64
      %v1882 = vpop.permute.xlu0 %1881
      %1883 = vrot.lane.b32.xlu0 %v893, 64
      %v1884 = vpop.permute.xlu0 %1883
      %1885 = vrot.lane.b32.xlu0 %v894, 64
      %v1886 = vpop.permute.xlu0 %1885
      %vm1919 = vcmask 64512
      %v1920 = vsel %vm1919, %v605, %v928
      %v1921 = vsel %vm1919, %v606, %v930
      %v1922 = vsel %vm1919, %v607, %v932
      %v1923 = vsel %vm1919, %v608, %v934
      %v1924 = vsel %vm1919, %v609, %v936
      %v1925 = vsel %vm1919, %v610, %v938
      %v1926 = vsel %vm1919, %v611, %v940
      %v1927 = vsel %vm1919, %v612, %v942
      %v1928 = vsel %vm1919, %v613, %v944
      %v1929 = vsel %vm1919, %v614, %v946
      %v1930 = vsel %vm1919, %v615, %v948
      %v1931 = vsel %vm1919, %v616, %v950
      %v1932 = vsel %vm1919, %v617, %v952
      %v1933 = vsel %vm1919, %v618, %v954
      %v1934 = vsel %vm1919, %v619, %v956
      %v1935 = vsel %vm1919, %v620, %v958
      %v1936 = vsel %vm1919, %v621, %v960
      %v1937 = vsel %vm1919, %v622, %v962
      %v1938 = vsel %vm1919, %v623, %v964
      %v1939 = vsel %vm1919, %v624, %v966
      %v1940 = vsel %vm1919, %v625, %v968
      %v1941 = vsel %vm1919, %v626, %v970
      %v1942 = vsel %vm1919, %v627, %v972
      %v1943 = vsel %vm1919, %v628, %v974
      %v1944 = vsel %vm1919, %v629, %v976
      %v1945 = vsel %vm1919, %v630, %v978
      %v1946 = vsel %vm1919, %v631, %v980
      %v1947 = vsel %vm1919, %v632, %v982
      %v1948 = vsel %vm1919, %v633, %v984
      %v1949 = vsel %vm1919, %v634, %v986
      %v1950 = vsel %vm1919, %v635, %v988
      %v1951 = vsel %vm1919, %v636, %v990
      %vm1952 = vcmask 130048
      %v1953 = vsel %vm1952, %v1920, %v1056
      %v1954 = vsel %vm1952, %v1921, %v1058
      %v1955 = vsel %vm1952, %v1922, %v1060
      %v1956 = vsel %vm1952, %v1923, %v1062
      %v1957 = vsel %vm1952, %v1924, %v1064
      %v1958 = vsel %vm1952, %v1925, %v1066
      %v1959 = vsel %vm1952, %v1926, %v1068
      %v1960 = vsel %vm1952, %v1927, %v1070
      %v1961 = vsel %vm1952, %v1928, %v1072
      %v1962 = vsel %vm1952, %v1929, %v1074
      %v1963 = vsel %vm1952, %v1930, %v1076
      %v1964 = vsel %vm1952, %v1931, %v1078
      %v1965 = vsel %vm1952, %v1932, %v1080
      %v1966 = vsel %vm1952, %v1933, %v1082
      %v1967 = vsel %vm1952, %v1934, %v1084
      %v1968 = vsel %vm1952, %v1935, %v1086
      %v1969 = vsel %vm1952, %v1936, %v1088
      %v1970 = vsel %vm1952, %v1937, %v1090
      %v1971 = vsel %vm1952, %v1938, %v1092
      %v1972 = vsel %vm1952, %v1939, %v1094
      %v1973 = vsel %vm1952, %v1940, %v1096
      %v1974 = vsel %vm1952, %v1941, %v1098
      %v1975 = vsel %vm1952, %v1942, %v1100
      %v1976 = vsel %vm1952, %v1943, %v1102
      %v1977 = vsel %vm1952, %v1944, %v1104
      %v1978 = vsel %vm1952, %v1945, %v1106
      %v1979 = vsel %vm1952, %v1946, %v1108
      %v1980 = vsel %vm1952, %v1947, %v1110
      %v1981 = vsel %vm1952, %v1948, %v1112
      %v1982 = vsel %vm1952, %v1949, %v1114
      %v1983 = vsel %vm1952, %v1950, %v1116
      %v1984 = vsel %vm1952, %v1951, %v1118
      %vm1985 = vcmask 195584
      %v1986 = vsel %vm1985, %v1953, %v1184
      %v1987 = vsel %vm1985, %v1954, %v1186
      %v1988 = vsel %vm1985, %v1955, %v1188
      %v1989 = vsel %vm1985, %v1956, %v1190
      %v1990 = vsel %vm1985, %v1957, %v1192
      %v1991 = vsel %vm1985, %v1958, %v1194
      %v1992 = vsel %vm1985, %v1959, %v1196
      %v1993 = vsel %vm1985, %v1960, %v1198
      %v1994 = vsel %vm1985, %v1961, %v1200
      %v1995 = vsel %vm1985, %v1962, %v1202
      %v1996 = vsel %vm1985, %v1963, %v1204
      %v1997 = vsel %vm1985, %v1964, %v1206
      %v1998 = vsel %vm1985, %v1965, %v1208
      %v1999 = vsel %vm1985, %v1966, %v1210
      %v2000 = vsel %vm1985, %v1967, %v1212
      %v2001 = vsel %vm1985, %v1968, %v1214
      %v2002 = vsel %vm1985, %v1969, %v1216
      %v2003 = vsel %vm1985, %v1970, %v1218
      %v2004 = vsel %vm1985, %v1971, %v1220
      %v2005 = vsel %vm1985, %v1972, %v1222
      %v2006 = vsel %vm1985, %v1973, %v1224
      %v2007 = vsel %vm1985, %v1974, %v1226
      %v2008 = vsel %vm1985, %v1975, %v1228
      %v2009 = vsel %vm1985, %v1976, %v1230
      %v2010 = vsel %vm1985, %v1977, %v1232
      %v2011 = vsel %vm1985, %v1978, %v1234
      %v2012 = vsel %vm1985, %v1979, %v1236
      %v2013 = vsel %vm1985, %v1980, %v1238
      %v2014 = vsel %vm1985, %v1981, %v1240
      %v2015 = vsel %vm1985, %v1982, %v1242
      %v2016 = vsel %vm1985, %v1983, %v1244
      %v2017 = vsel %vm1985, %v1984, %v1246
      %vm2018 = vcmask 261120
      %v2019 = vsel %vm2018, %v1986, %v1312
      %v2020 = vsel %vm2018, %v1987, %v1314
      %v2021 = vsel %vm2018, %v1988, %v1316
      %v2022 = vsel %vm2018, %v1989, %v1318
      %v2023 = vsel %vm2018, %v1990, %v1320
      %v2024 = vsel %vm2018, %v1991, %v1322
      %v2025 = vsel %vm2018, %v1992, %v1324
      %v2026 = vsel %vm2018, %v1993, %v1326
      %v2027 = vsel %vm2018, %v1994, %v1328
      %v2028 = vsel %vm2018, %v1995, %v1330
      %v2029 = vsel %vm2018, %v1996, %v1332
      %v2030 = vsel %vm2018, %v1997, %v1334
      %v2031 = vsel %vm2018, %v1998, %v1336
      %v2032 = vsel %vm2018, %v1999, %v1338
      %v2033 = vsel %vm2018, %v2000, %v1340
      %v2034 = vsel %vm2018, %v2001, %v1342
      %v2035 = vsel %vm2018, %v2002, %v1344
      %v2036 = vsel %vm2018, %v2003, %v1346
      %v2037 = vsel %vm2018, %v2004, %v1348
      %v2038 = vsel %vm2018, %v2005, %v1350
      %v2039 = vsel %vm2018, %v2006, %v1352
      %v2040 = vsel %vm2018, %v2007, %v1354
      %v2041 = vsel %vm2018, %v2008, %v1356
      %v2042 = vsel %vm2018, %v2009, %v1358
      %v2043 = vsel %vm2018, %v2010, %v1360
      %v2044 = vsel %vm2018, %v2011, %v1362
      %v2045 = vsel %vm2018, %v2012, %v1364
      %v2046 = vsel %vm2018, %v2013, %v1366
      %v2047 = vsel %vm2018, %v2014, %v1368
      %v2048 = vsel %vm2018, %v2015, %v1370
      %v2049 = vsel %vm2018, %v2016, %v1372
      %v2050 = vsel %vm2018, %v2017, %v1374
      %vm2051 = vcmask 326656
      %v2052 = vsel %vm2051, %v2019, %v1440
      %v2053 = vsel %vm2051, %v2020, %v1442
      %v2054 = vsel %vm2051, %v2021, %v1444
      %v2055 = vsel %vm2051, %v2022, %v1446
      %v2056 = vsel %vm2051, %v2023, %v1448
      %v2057 = vsel %vm2051, %v2024, %v1450
      %v2058 = vsel %vm2051, %v2025, %v1452
      %v2059 = vsel %vm2051, %v2026, %v1454
      %v2060 = vsel %vm2051, %v2027, %v1456
      %v2061 = vsel %vm2051, %v2028, %v1458
      %v2062 = vsel %vm2051, %v2029, %v1460
      %v2063 = vsel %vm2051, %v2030, %v1462
      %v2064 = vsel %vm2051, %v2031, %v1464
      %v2065 = vsel %vm2051, %v2032, %v1466
      %v2066 = vsel %vm2051, %v2033, %v1468
      %v2067 = vsel %vm2051, %v2034, %v1470
      %v2068 = vsel %vm2051, %v2035, %v1472
      %v2069 = vsel %vm2051, %v2036, %v1474
      %v2070 = vsel %vm2051, %v2037, %v1476
      %v2071 = vsel %vm2051, %v2038, %v1478
      %v2072 = vsel %vm2051, %v2039, %v1480
      %v2073 = vsel %vm2051, %v2040, %v1482
      %v2074 = vsel %vm2051, %v2041, %v1484
      %v2075 = vsel %vm2051, %v2042, %v1486
      %v2076 = vsel %vm2051, %v2043, %v1488
      %v2077 = vsel %vm2051, %v2044, %v1490
      %v2078 = vsel %vm2051, %v2045, %v1492
      %v2079 = vsel %vm2051, %v2046, %v1494
      %v2080 = vsel %vm2051, %v2047, %v1496
      %v2081 = vsel %vm2051, %v2048, %v1498
      %v2082 = vsel %vm2051, %v2049, %v1500
      %v2083 = vsel %vm2051, %v2050, %v1502
      %vm2084 = vcmask 392192
      %v2085 = vsel %vm2084, %v2052, %v1568
      %v2086 = vsel %vm2084, %v2053, %v1570
      %v2087 = vsel %vm2084, %v2054, %v1572
      %v2088 = vsel %vm2084, %v2055, %v1574
      %v2089 = vsel %vm2084, %v2056, %v1576
      %v2090 = vsel %vm2084, %v2057, %v1578
      %v2091 = vsel %vm2084, %v2058, %v1580
      %v2092 = vsel %vm2084, %v2059, %v1582
      %v2093 = vsel %vm2084, %v2060, %v1584
      %v2094 = vsel %vm2084, %v2061, %v1586
      %v2095 = vsel %vm2084, %v2062, %v1588
      %v2096 = vsel %vm2084, %v2063, %v1590
      %v2097 = vsel %vm2084, %v2064, %v1592
      %v2098 = vsel %vm2084, %v2065, %v1594
      %v2099 = vsel %vm2084, %v2066, %v1596
      %v2100 = vsel %vm2084, %v2067, %v1598
      %v2101 = vsel %vm2084, %v2068, %v1600
      %v2102 = vsel %vm2084, %v2069, %v1602
      %v2103 = vsel %vm2084, %v2070, %v1604
      %v2104 = vsel %vm2084, %v2071, %v1606
      %v2105 = vsel %vm2084, %v2072, %v1608
      %v2106 = vsel %vm2084, %v2073, %v1610
      %v2107 = vsel %vm2084, %v2074, %v1612
      %v2108 = vsel %vm2084, %v2075, %v1614
      %v2109 = vsel %vm2084, %v2076, %v1616
      %v2110 = vsel %vm2084, %v2077, %v1618
      %v2111 = vsel %vm2084, %v2078, %v1620
      %v2112 = vsel %vm2084, %v2079, %v1622
      %v2113 = vsel %vm2084, %v2080, %v1624
      %v2114 = vsel %vm2084, %v2081, %v1626
      %v2115 = vsel %vm2084, %v2082, %v1628
      %v2116 = vsel %vm2084, %v2083, %v1630
      %vm2117 = vcmask 457728
      %v2118 = vsel %vm2117, %v2085, %v1696
      %v2119 = vsel %vm2117, %v2086, %v1698
      %v2120 = vsel %vm2117, %v2087, %v1700
      %v2121 = vsel %vm2117, %v2088, %v1702
      %v2122 = vsel %vm2117, %v2089, %v1704
      %v2123 = vsel %vm2117, %v2090, %v1706
      %v2124 = vsel %vm2117, %v2091, %v1708
      %v2125 = vsel %vm2117, %v2092, %v1710
      %v2126 = vsel %vm2117, %v2093, %v1712
      %v2127 = vsel %vm2117, %v2094, %v1714
      %v2128 = vsel %vm2117, %v2095, %v1716
      %v2129 = vsel %vm2117, %v2096, %v1718
      %v2130 = vsel %vm2117, %v2097, %v1720
      %v2131 = vsel %vm2117, %v2098, %v1722
      %v2132 = vsel %vm2117, %v2099, %v1724
      %v2133 = vsel %vm2117, %v2100, %v1726
      %v2134 = vsel %vm2117, %v2101, %v1728
      %v2135 = vsel %vm2117, %v2102, %v1730
      %v2136 = vsel %vm2117, %v2103, %v1732
      %v2137 = vsel %vm2117, %v2104, %v1734
      %v2138 = vsel %vm2117, %v2105, %v1736
      %v2139 = vsel %vm2117, %v2106, %v1738
      %v2140 = vsel %vm2117, %v2107, %v1740
      %v2141 = vsel %vm2117, %v2108, %v1742
      %v2142 = vsel %vm2117, %v2109, %v1744
      %v2143 = vsel %vm2117, %v2110, %v1746
      %v2144 = vsel %vm2117, %v2111, %v1748
      %v2145 = vsel %vm2117, %v2112, %v1750
      %v2146 = vsel %vm2117, %v2113, %v1752
      %v2147 = vsel %vm2117, %v2114, %v1754
      %v2148 = vsel %vm2117, %v2115, %v1756
      %v2149 = vsel %vm2117, %v2116, %v1758
      %vm2150 = vcmask 523264
      %v2151 = vsel %vm2150, %v2118, %v1824
      %v2152 = vsel %vm2150, %v2119, %v1826
      %v2153 = vsel %vm2150, %v2120, %v1828
      %v2154 = vsel %vm2150, %v2121, %v1830
      %v2155 = vsel %vm2150, %v2122, %v1832
      %v2156 = vsel %vm2150, %v2123, %v1834
      %v2157 = vsel %vm2150, %v2124, %v1836
      %v2158 = vsel %vm2150, %v2125, %v1838
      %v2159 = vsel %vm2150, %v2126, %v1840
      %v2160 = vsel %vm2150, %v2127, %v1842
      %v2161 = vsel %vm2150, %v2128, %v1844
      %v2162 = vsel %vm2150, %v2129, %v1846
      %v2163 = vsel %vm2150, %v2130, %v1848
      %v2164 = vsel %vm2150, %v2131, %v1850
      %v2165 = vsel %vm2150, %v2132, %v1852
      %v2166 = vsel %vm2150, %v2133, %v1854
      %v2167 = vsel %vm2150, %v2134, %v1856
      %v2168 = vsel %vm2150, %v2135, %v1858
      %v2169 = vsel %vm2150, %v2136, %v1860
      %v2170 = vsel %vm2150, %v2137, %v1862
      %v2171 = vsel %vm2150, %v2138, %v1864
      %v2172 = vsel %vm2150, %v2139, %v1866
      %v2173 = vsel %vm2150, %v2140, %v1868
      %v2174 = vsel %vm2150, %v2141, %v1870
      %v2175 = vsel %vm2150, %v2142, %v1872
      %v2176 = vsel %vm2150, %v2143, %v1874
      %v2177 = vsel %vm2150, %v2144, %v1876
      %v2178 = vsel %vm2150, %v2145, %v1878
      %v2179 = vsel %vm2150, %v2146, %v1880
      %v2180 = vsel %vm2150, %v2147, %v1882
      %v2181 = vsel %vm2150, %v2148, %v1884
      %v2182 = vsel %vm2150, %v2149, %v1886
      %v2183 = vld [vmem:[%s1] sm:$0xff]
      %v2184 = vld [vmem:[%s1 + $0x8] sm:$0xff]
      %v2185 = vld [vmem:[%s1 + $0x10] sm:$0xff]
      %v2186 = vld [vmem:[%s1 + $0x18] sm:$0xff]
      %v2187 = vld [vmem:[%s1 + $0x20] sm:$0xff]
      %v2188 = vld [vmem:[%s1 + $0x28] sm:$0xff]
      %v2189 = vld [vmem:[%s1 + $0x30] sm:$0xff]
      %v2190 = vld [vmem:[%s1 + $0x38] sm:$0xff]
      %v2191 = vld [vmem:[%s1 + $0x40] sm:$0xff]
      %v2192 = vld [vmem:[%s6] sm:$0x1]
      %v2194 = vlaneseq
      %v2195 = vshrl.u32 %v2194, 7
      %v2196 = vsub.s32 0, %v2195
      %v2197 = vrot.slane %v2192, %v2196
      %vm2199 = vcmask 588800
      %v2201 = vsel %vm2199, %v2151, 0
      %v2204 = vsel %vm2199, %v2152, 0
      %v2207 = vsel %vm2199, %v2153, 0
      %v2210 = vsel %vm2199, %v2154, 0
      %v2213 = vsel %vm2199, %v2155, 0
      %v2216 = vsel %vm2199, %v2156, 0
      %v2219 = vsel %vm2199, %v2157, 0
      %v2222 = vsel %vm2199, %v2158, 0
      %v2225 = vsel %vm2199, %v2159, 0
      %v2228 = vsel %vm2199, %v2160, 0
      %v2231 = vsel %vm2199, %v2161, 0
      %v2234 = vsel %vm2199, %v2162, 0
      %v2237 = vsel %vm2199, %v2163, 0
      %v2240 = vsel %vm2199, %v2164, 0
      %v2243 = vsel %vm2199, %v2165, 0
      %v2246 = vsel %vm2199, %v2166, 0
      %v2249 = vsel %vm2199, %v2167, 0
      %v2252 = vsel %vm2199, %v2168, 0
      %v2255 = vsel %vm2199, %v2169, 0
      %v2258 = vsel %vm2199, %v2170, 0
      %v2261 = vsel %vm2199, %v2171, 0
      %v2264 = vsel %vm2199, %v2172, 0
      %v2267 = vsel %vm2199, %v2173, 0
      %v2270 = vsel %vm2199, %v2174, 0
      %v2273 = vsel %vm2199, %v2175, 0
      %v2276 = vsel %vm2199, %v2176, 0
      %v2279 = vsel %vm2199, %v2177, 0
      %v2282 = vsel %vm2199, %v2178, 0
      %v2285 = vsel %vm2199, %v2179, 0
      %v2288 = vsel %vm2199, %v2180, 0
      %v2291 = vsel %vm2199, %v2181, 0
      %v2294 = vsel %vm2199, %v2182, 0
      %2296 = vmatprep.subr.mxu0 0.0
      %2297 = vmatpush1.msra.mxu0 0.0
      %2298 = vmatprep.subr.mxu0 0.0
      %2299 = vmatpush1.msra.mxu0 0.0
      %2300 = vmatprep.subr.mxu0 0.0
      %2301 = vmatpush1.msra.mxu0 0.0
      %2302 = vmatprep.subr.mxu0 0.0
      %2303 = vmatpush1.msra.mxu0 0.0
      %2304 = vmatprep.subr.mxu0 0.0
      %2305 = vmatpush1.msra.mxu0 0.0
      %2306 = vmatprep.subr.mxu0 0.0
      %2307 = vmatpush1.msra.mxu0 0.0
      %2308 = vmatprep.subr.mxu0 0.0
      %2309 = vmatpush1.msra.mxu0 0.0
      %2310 = vmatprep.subr.mxu0 0.0
      %2311 = vmatpush1.msra.mxu0 %v2191
      %2312 = vmatprep.subr.mxu0 0.0
      %2313 = vmatpush1.msra.mxu0 %v2190
      %2314 = vmatprep.subr.mxu0 0.0
      %2315 = vmatpush1.msra.mxu0 %v2189
      %2316 = vmatprep.subr.mxu0 0.0
      %2317 = vmatpush1.msra.mxu0 %v2188
      %2318 = vmatprep.subr.mxu0 0.0
      %2319 = vmatpush1.msra.mxu0 %v2187
      %2320 = vmatprep.subr.mxu0 0.0
      %2321 = vmatpush1.msra.mxu0 %v2186
      %2322 = vmatprep.subr.mxu0 0.0
      %2323 = vmatpush1.msra.mxu0 %v2185
      %2324 = vmatprep.subr.mxu0 0.0
      %2325 = vmatpush1.msra.mxu0 %v2184
      %2326 = vmatprep.subr.mxu0 0.0
      %2327 = vmatpush1.msra.mxu0 %v2183
      %2328 = vmatprep.subr.mxu0 0.0
      %2329 = vmatpush2.msra.mxu0 0.0
      %2330 = vmatprep.subr.mxu0 0.0
      %2331 = vmatpush2.msra.mxu0 0.0
      %2332 = vmatprep.subr.mxu0 0.0
      %2333 = vmatpush2.msra.mxu0 0.0
      %2334 = vmatprep.subr.mxu0 0.0
      %2335 = vmatpush2.msra.mxu0 0.0
      %2336 = vmatprep.subr.mxu0 0.0
      %2337 = vmatpush2.msra.mxu0 0.0
      %2338 = vmatprep.subr.mxu0 0.0
      %2339 = vmatpush2.msra.mxu0 0.0
      %2340 = vmatprep.subr.mxu0 0.0
      %2341 = vmatpush2.msra.mxu0 0.0
      %2342 = vmatprep.subr.mxu0 0.0
      %2343 = vmatpush2.msra.mxu0 0.0
      %2344 = vmatprep.subr.mxu0 0.0
      %2345 = vmatpush2.msra.mxu0 0.0
      %2346 = vmatprep.subr.mxu0 0.0
      %2347 = vmatpush2.msra.mxu0 0.0
      %2348 = vmatprep.subr.mxu0 0.0
      %2349 = vmatpush2.msra.mxu0 0.0
      %2350 = vmatprep.subr.mxu0 0.0
      %2351 = vmatpush2.msra.mxu0 0.0
      %2352 = vmatprep.subr.mxu0 0.0
      %2353 = vmatpush2.msra.mxu0 0.0
      %2354 = vmatprep.subr.mxu0 0.0
      %2355 = vmatpush2.msra.mxu0 0.0
      %2356 = vmatprep.subr.mxu0 0.0
      %2357 = vmatpush2.msra.mxu0 0.0
      %2358 = vmatprep.subr.mxu0 0.0
      %2359 = vmatpush2.msra.mxu0 0.0
      %2360 = vmatprep.mubr.f32.mxu0 0.0
      %2361 = vmatmul.mubr.f32.gmra.mxu0 %v2201
      %v2362 = vpop.f32.mrf.mxu0
      %v2363 = vadd.f32 %v2197, %v2362
      %v2364 = vpop.f32.mrf.mxu0
      %2365 = vmatprep.mubr.f32.mxu0 0.0
      %2366 = vmatmul.mubr.f32.gmra.mxu0 %v2204
      %v2367 = vpop.f32.mrf.mxu0
      %v2368 = vadd.f32 %v2197, %v2367
      %v2369 = vpop.f32.mrf.mxu0
      %2370 = vmatprep.mubr.f32.mxu0 0.0
      %2371 = vmatmul.mubr.f32.gmra.mxu0 %v2207
      %v2372 = vpop.f32.mrf.mxu0
      %v2373 = vadd.f32 %v2197, %v2372
      %v2374 = vpop.f32.mrf.mxu0
      %2375 = vmatprep.mubr.f32.mxu0 0.0
      %2376 = vmatmul.mubr.f32.gmra.mxu0 %v2210
      %v2377 = vpop.f32.mrf.mxu0
      %v2378 = vadd.f32 %v2197, %v2377
      %v2379 = vpop.f32.mrf.mxu0
      %2380 = vmatprep.mubr.f32.mxu0 0.0
      %2381 = vmatmul.mubr.f32.gmra.mxu0 %v2213
      %v2382 = vpop.f32.mrf.mxu0
      %v2383 = vadd.f32 %v2197, %v2382
      %v2384 = vpop.f32.mrf.mxu0
      %2385 = vmatprep.mubr.f32.mxu0 0.0
      %2386 = vmatmul.mubr.f32.gmra.mxu0 %v2216
      %v2387 = vpop.f32.mrf.mxu0
      %v2388 = vadd.f32 %v2197, %v2387
      %v2389 = vpop.f32.mrf.mxu0
      %2390 = vmatprep.mubr.f32.mxu0 0.0
      %2391 = vmatmul.mubr.f32.gmra.mxu0 %v2219
      %v2392 = vpop.f32.mrf.mxu0
      %v2393 = vadd.f32 %v2197, %v2392
      %v2394 = vpop.f32.mrf.mxu0
      %2395 = vmatprep.mubr.f32.mxu0 0.0
      %2396 = vmatmul.mubr.f32.gmra.mxu0 %v2222
      %v2397 = vpop.f32.mrf.mxu0
      %v2398 = vadd.f32 %v2197, %v2397
      %v2399 = vpop.f32.mrf.mxu0
      %2400 = vmatprep.mubr.f32.mxu0 0.0
      %2401 = vmatmul.mubr.f32.gmra.mxu0 %v2225
      %v2402 = vpop.f32.mrf.mxu0
      %v2403 = vadd.f32 %v2197, %v2402
      %v2404 = vpop.f32.mrf.mxu0
      %2405 = vmatprep.mubr.f32.mxu0 0.0
      %2406 = vmatmul.mubr.f32.gmra.mxu0 %v2228
      %v2407 = vpop.f32.mrf.mxu0
      %v2408 = vadd.f32 %v2197, %v2407
      %v2409 = vpop.f32.mrf.mxu0
      %2410 = vmatprep.mubr.f32.mxu0 0.0
      %2411 = vmatmul.mubr.f32.gmra.mxu0 %v2231
      %v2412 = vpop.f32.mrf.mxu0
      %v2413 = vadd.f32 %v2197, %v2412
      %v2414 = vpop.f32.mrf.mxu0
      %2415 = vmatprep.mubr.f32.mxu0 0.0
      %2416 = vmatmul.mubr.f32.gmra.mxu0 %v2234
      %v2417 = vpop.f32.mrf.mxu0
      %v2418 = vadd.f32 %v2197, %v2417
      %v2419 = vpop.f32.mrf.mxu0
      %2420 = vmatprep.mubr.f32.mxu0 0.0
      %2421 = vmatmul.mubr.f32.gmra.mxu0 %v2237
      %v2422 = vpop.f32.mrf.mxu0
      %v2423 = vadd.f32 %v2197, %v2422
      %v2424 = vpop.f32.mrf.mxu0
      %2425 = vmatprep.mubr.f32.mxu0 0.0
      %2426 = vmatmul.mubr.f32.gmra.mxu0 %v2240
      %v2427 = vpop.f32.mrf.mxu0
      %v2428 = vadd.f32 %v2197, %v2427
      %v2429 = vpop.f32.mrf.mxu0
      %2430 = vmatprep.mubr.f32.mxu0 0.0
      %2431 = vmatmul.mubr.f32.gmra.mxu0 %v2243
      %v2432 = vpop.f32.mrf.mxu0
      %v2433 = vadd.f32 %v2197, %v2432
      %v2434 = vpop.f32.mrf.mxu0
      %2435 = vmatprep.mubr.f32.mxu0 0.0
      %2436 = vmatmul.mubr.f32.gmra.mxu0 %v2246
      %v2437 = vpop.f32.mrf.mxu0
      %v2438 = vadd.f32 %v2197, %v2437
      %v2439 = vpop.f32.mrf.mxu0
      %2440 = vmatprep.mubr.f32.mxu0 0.0
      %2441 = vmatmul.mubr.f32.gmra.mxu0 %v2249
      %v2442 = vpop.f32.mrf.mxu0
      %v2443 = vadd.f32 %v2197, %v2442
      %v2444 = vpop.f32.mrf.mxu0
      %2445 = vmatprep.mubr.f32.mxu0 0.0
      %2446 = vmatmul.mubr.f32.gmra.mxu0 %v2252
      %v2447 = vpop.f32.mrf.mxu0
      %v2448 = vadd.f32 %v2197, %v2447
      %v2449 = vpop.f32.mrf.mxu0
      %2450 = vmatprep.mubr.f32.mxu0 0.0
      %2451 = vmatmul.mubr.f32.gmra.mxu0 %v2255
      %v2452 = vpop.f32.mrf.mxu0
      %v2453 = vadd.f32 %v2197, %v2452
      %v2454 = vpop.f32.mrf.mxu0
      %2455 = vmatprep.mubr.f32.mxu0 0.0
      %2456 = vmatmul.mubr.f32.gmra.mxu0 %v2258
      %v2457 = vpop.f32.mrf.mxu0
      %v2458 = vadd.f32 %v2197, %v2457
      %v2459 = vpop.f32.mrf.mxu0
      %2460 = vmatprep.mubr.f32.mxu0 0.0
      %2461 = vmatmul.mubr.f32.gmra.mxu0 %v2261
      %v2462 = vpop.f32.mrf.mxu0
      %v2463 = vadd.f32 %v2197, %v2462
      %v2464 = vpop.f32.mrf.mxu0
      %2465 = vmatprep.mubr.f32.mxu0 0.0
      %2466 = vmatmul.mubr.f32.gmra.mxu0 %v2264
      %v2467 = vpop.f32.mrf.mxu0
      %v2468 = vadd.f32 %v2197, %v2467
      %v2469 = vpop.f32.mrf.mxu0
      %2470 = vmatprep.mubr.f32.mxu0 0.0
      %2471 = vmatmul.mubr.f32.gmra.mxu0 %v2267
      %v2472 = vpop.f32.mrf.mxu0
      %v2473 = vadd.f32 %v2197, %v2472
      %v2474 = vpop.f32.mrf.mxu0
      %2475 = vmatprep.mubr.f32.mxu0 0.0
      %2476 = vmatmul.mubr.f32.gmra.mxu0 %v2270
      %v2477 = vpop.f32.mrf.mxu0
      %v2478 = vadd.f32 %v2197, %v2477
      %v2479 = vpop.f32.mrf.mxu0
      %2480 = vmatprep.mubr.f32.mxu0 0.0
      %2481 = vmatmul.mubr.f32.gmra.mxu0 %v2273
      %v2482 = vpop.f32.mrf.mxu0
      %v2483 = vadd.f32 %v2197, %v2482
      %v2484 = vpop.f32.mrf.mxu0
      %2485 = vmatprep.mubr.f32.mxu0 0.0
      %2486 = vmatmul.mubr.f32.gmra.mxu0 %v2276
      %v2487 = vpop.f32.mrf.mxu0
      %v2488 = vadd.f32 %v2197, %v2487
      %v2489 = vpop.f32.mrf.mxu0
      %2490 = vmatprep.mubr.f32.mxu0 0.0
      %2491 = vmatmul.mubr.f32.gmra.mxu0 %v2279
      %v2492 = vpop.f32.mrf.mxu0
      %v2493 = vadd.f32 %v2197, %v2492
      %v2494 = vpop.f32.mrf.mxu0
      %2495 = vmatprep.mubr.f32.mxu0 0.0
      %2496 = vmatmul.mubr.f32.gmra.mxu0 %v2282
      %v2497 = vpop.f32.mrf.mxu0
      %v2498 = vadd.f32 %v2197, %v2497
      %v2499 = vpop.f32.mrf.mxu0
      %2500 = vmatprep.mubr.f32.mxu0 0.0
      %2501 = vmatmul.mubr.f32.gmra.mxu0 %v2285
      %v2502 = vpop.f32.mrf.mxu0
      %v2503 = vadd.f32 %v2197, %v2502
      %v2504 = vpop.f32.mrf.mxu0
      %2505 = vmatprep.mubr.f32.mxu0 0.0
      %2506 = vmatmul.mubr.f32.gmra.mxu0 %v2288
      %v2507 = vpop.f32.mrf.mxu0
      %v2508 = vadd.f32 %v2197, %v2507
      %v2509 = vpop.f32.mrf.mxu0
      %2510 = vmatprep.mubr.f32.mxu0 0.0
      %2511 = vmatmul.mubr.f32.gmra.mxu0 %v2291
      %v2512 = vpop.f32.mrf.mxu0
      %v2513 = vadd.f32 %v2197, %v2512
      %v2514 = vpop.f32.mrf.mxu0
      %2515 = vmatprep.mubr.f32.mxu0 0.0
      %2516 = vmatmul.mubr.f32.gmra.mxu0 %v2294
      %v2517 = vpop.f32.mrf.mxu0
      %v2518 = vadd.f32 %v2197, %v2517
      %v2519 = vpop.f32.mrf.mxu0
      %2520 = vdwg.mxu0
      %vm2521 = vcmp.gt.f32.partialorder %v2363, 0.0
      %vm2522 = vcmp.gt.f32.partialorder %v2368, 0.0
      %vm2523 = vcmp.gt.f32.partialorder %v2373, 0.0
      %vm2524 = vcmp.gt.f32.partialorder %v2378, 0.0
      %vm2525 = vcmp.gt.f32.partialorder %v2383, 0.0
      %vm2526 = vcmp.gt.f32.partialorder %v2388, 0.0
      %vm2527 = vcmp.gt.f32.partialorder %v2393, 0.0
      %vm2528 = vcmp.gt.f32.partialorder %v2398, 0.0
      %vm2529 = vcmp.gt.f32.partialorder %v2403, 0.0
      %vm2530 = vcmp.gt.f32.partialorder %v2408, 0.0
      %vm2531 = vcmp.gt.f32.partialorder %v2413, 0.0
      %vm2532 = vcmp.gt.f32.partialorder %v2418, 0.0
      %vm2533 = vcmp.gt.f32.partialorder %v2423, 0.0
      %vm2534 = vcmp.gt.f32.partialorder %v2428, 0.0
      %vm2535 = vcmp.gt.f32.partialorder %v2433, 0.0
      %vm2536 = vcmp.gt.f32.partialorder %v2438, 0.0
      %vm2537 = vcmp.gt.f32.partialorder %v2443, 0.0
      %vm2538 = vcmp.gt.f32.partialorder %v2448, 0.0
      %vm2539 = vcmp.gt.f32.partialorder %v2453, 0.0
      %vm2540 = vcmp.gt.f32.partialorder %v2458, 0.0
      %vm2541 = vcmp.gt.f32.partialorder %v2463, 0.0
      %vm2542 = vcmp.gt.f32.partialorder %v2468, 0.0
      %vm2543 = vcmp.gt.f32.partialorder %v2473, 0.0
      %vm2544 = vcmp.gt.f32.partialorder %v2478, 0.0
      %vm2545 = vcmp.gt.f32.partialorder %v2483, 0.0
      %vm2546 = vcmp.gt.f32.partialorder %v2488, 0.0
      %vm2547 = vcmp.gt.f32.partialorder %v2493, 0.0
      %vm2548 = vcmp.gt.f32.partialorder %v2498, 0.0
      %vm2549 = vcmp.gt.f32.partialorder %v2503, 0.0
      %vm2550 = vcmp.gt.f32.partialorder %v2508, 0.0
      %vm2551 = vcmp.gt.f32.partialorder %v2513, 0.0
      %vm2552 = vcmp.gt.f32.partialorder %v2518, 0.0
      %v2553 = vmul.f32 %v2363, 0.2
      %v2554 = vmul.f32 %v2368, 0.2
      %v2555 = vmul.f32 %v2373, 0.2
      %v2556 = vmul.f32 %v2378, 0.2
      %v2557 = vmul.f32 %v2383, 0.2
      %v2558 = vmul.f32 %v2388, 0.2
      %v2559 = vmul.f32 %v2393, 0.2
      %v2560 = vmul.f32 %v2398, 0.2
      %v2561 = vmul.f32 %v2403, 0.2
      %v2562 = vmul.f32 %v2408, 0.2
      %v2563 = vmul.f32 %v2413, 0.2
      %v2564 = vmul.f32 %v2418, 0.2
      %v2565 = vmul.f32 %v2423, 0.2
      %v2566 = vmul.f32 %v2428, 0.2
      %v2567 = vmul.f32 %v2433, 0.2
      %v2568 = vmul.f32 %v2438, 0.2
      %v2569 = vmul.f32 %v2443, 0.2
      %v2570 = vmul.f32 %v2448, 0.2
      %v2571 = vmul.f32 %v2453, 0.2
      %v2572 = vmul.f32 %v2458, 0.2
      %v2573 = vmul.f32 %v2463, 0.2
      %v2574 = vmul.f32 %v2468, 0.2
      %v2575 = vmul.f32 %v2473, 0.2
      %v2576 = vmul.f32 %v2478, 0.2
      %v2577 = vmul.f32 %v2483, 0.2
      %v2578 = vmul.f32 %v2488, 0.2
      %v2579 = vmul.f32 %v2493, 0.2
      %v2580 = vmul.f32 %v2498, 0.2
      %v2581 = vmul.f32 %v2503, 0.2
      %v2582 = vmul.f32 %v2508, 0.2
      %v2583 = vmul.f32 %v2513, 0.2
      %v2584 = vmul.f32 %v2518, 0.2
      %v2585 = vsel %vm2521, %v2363, %v2553
      %v2586 = vsel %vm2522, %v2368, %v2554
      %v2587 = vsel %vm2523, %v2373, %v2555
      %v2588 = vsel %vm2524, %v2378, %v2556
      %v2589 = vsel %vm2525, %v2383, %v2557
      %v2590 = vsel %vm2526, %v2388, %v2558
      %v2591 = vsel %vm2527, %v2393, %v2559
      %v2592 = vsel %vm2528, %v2398, %v2560
      %v2593 = vsel %vm2529, %v2403, %v2561
      %v2594 = vsel %vm2530, %v2408, %v2562
      %v2595 = vsel %vm2531, %v2413, %v2563
      %v2596 = vsel %vm2532, %v2418, %v2564
      %v2597 = vsel %vm2533, %v2423, %v2565
      %v2598 = vsel %vm2534, %v2428, %v2566
      %v2599 = vsel %vm2535, %v2433, %v2567
      %v2600 = vsel %vm2536, %v2438, %v2568
      %v2601 = vsel %vm2537, %v2443, %v2569
      %v2602 = vsel %vm2538, %v2448, %v2570
      %v2603 = vsel %vm2539, %v2453, %v2571
      %v2604 = vsel %vm2540, %v2458, %v2572
      %v2605 = vsel %vm2541, %v2463, %v2573
      %v2606 = vsel %vm2542, %v2468, %v2574
      %v2607 = vsel %vm2543, %v2473, %v2575
      %v2608 = vsel %vm2544, %v2478, %v2576
      %v2609 = vsel %vm2545, %v2483, %v2577
      %v2610 = vsel %vm2546, %v2488, %v2578
      %v2611 = vsel %vm2547, %v2493, %v2579
      %v2612 = vsel %vm2548, %v2498, %v2580
      %v2613 = vsel %vm2549, %v2503, %v2581
      %v2614 = vsel %vm2550, %v2508, %v2582
      %v2615 = vsel %vm2551, %v2513, %v2583
      %v2616 = vsel %vm2552, %v2518, %v2584
      %s2617 = scalar_lea.vmem [#allocation2], 24
      %2618 = vst.msk [vmem:[%s2617 + $0x1] sm:$0xff] %vm387, %v2585
      %2619 = vst.msk [vmem:[%s2617 + $0x9] sm:$0xff] %vm387, %v2586
      %2620 = vst.msk [vmem:[%s2617 + $0x19] sm:$0xff] %vm387, %v2587
      %2621 = vst.msk [vmem:[%s2617 + $0x21] sm:$0xff] %vm387, %v2588
      %2622 = vst.msk [vmem:[%s2617 + $0x31] sm:$0xff] %vm387, %v2589
      %2623 = vst.msk [vmem:[%s2617 + $0x39] sm:$0xff] %vm387, %v2590
      %2624 = vst.msk [vmem:[%s2617 + $0x49] sm:$0xff] %vm387, %v2591
      %2625 = vst.msk [vmem:[%s2617 + $0x51] sm:$0xff] %vm387, %v2592
      %2626 = vst.msk [vmem:[%s2617 + $0x61] sm:$0xff] %vm387, %v2593
      %2627 = vst.msk [vmem:[%s2617 + $0x69] sm:$0xff] %vm387, %v2594
      %2628 = vst.msk [vmem:[%s2617 + $0x79] sm:$0xff] %vm387, %v2595
      %2629 = vst.msk [vmem:[%s2617 + $0x81] sm:$0xff] %vm387, %v2596
      %2630 = vst.msk [vmem:[%s2617 + $0x91] sm:$0xff] %vm387, %v2597
      %2631 = vst.msk [vmem:[%s2617 + $0x99] sm:$0xff] %vm387, %v2598
      %2632 = vst.msk [vmem:[%s2617 + $0xa9] sm:$0xff] %vm387, %v2599
      %2633 = vst.msk [vmem:[%s2617 + $0xb1] sm:$0xff] %vm387, %v2600
      %2634 = vst.msk [vmem:[%s2617 + $0xc1] sm:$0xff] %vm387, %v2601
      %2635 = vst.msk [vmem:[%s2617 + $0xc9] sm:$0xff] %vm387, %v2602
      %2636 = vst.msk [vmem:[%s2617 + $0xd9] sm:$0xff] %vm387, %v2603
      %2637 = vst.msk [vmem:[%s2617 + $0xe1] sm:$0xff] %vm387, %v2604
      %2638 = vst.msk [vmem:[%s2617 + $0xf1] sm:$0xff] %vm387, %v2605
      %2639 = vst.msk [vmem:[%s2617 + $0xf9] sm:$0xff] %vm387, %v2606
      %2640 = vst.msk [vmem:[%s2617 + $0x109] sm:$0xff] %vm387, %v2607
      %2641 = vst.msk [vmem:[%s2617 + $0x111] sm:$0xff] %vm387, %v2608
      %2642 = vst.msk [vmem:[%s2617 + $0x121] sm:$0xff] %vm387, %v2609
      %2643 = vst.msk [vmem:[%s2617 + $0x129] sm:$0xff] %vm387, %v2610
      %2644 = vst.msk [vmem:[%s2617 + $0x139] sm:$0xff] %vm387, %v2611
      %2645 = vst.msk [vmem:[%s2617 + $0x141] sm:$0xff] %vm387, %v2612
      %2646 = vst.msk [vmem:[%s2617 + $0x151] sm:$0xff] %vm387, %v2613
      %2647 = vst.msk [vmem:[%s2617 + $0x159] sm:$0xff] %vm387, %v2614
      %2648 = vst.msk [vmem:[%s2617 + $0x169] sm:$0xff] %vm387, %v2615
      %2649 = vst.msk [vmem:[%s2617 + $0x171] sm:$0xff] %vm387, %v2616
      %v2650 = vld [vmem:[#allocation2] sm:$0xff]
      %v2651 = vld [vmem:[#allocation2 + $0x8] sm:$0xff]
      %v2652 = vld [vmem:[#allocation2 + $0x18] sm:$0xff]
      %v2653 = vld [vmem:[#allocation2 + $0x20] sm:$0xff]
      %v2654 = vld [vmem:[#allocation2 + $0x30] sm:$0xff]
      %v2655 = vld [vmem:[#allocation2 + $0x38] sm:$0xff]
      %v2656 = vld [vmem:[#allocation2 + $0x48] sm:$0xff]
      %v2657 = vld [vmem:[#allocation2 + $0x50] sm:$0xff]
      %v2658 = vld [vmem:[#allocation2 + $0x60] sm:$0xff]
      %v2659 = vld [vmem:[#allocation2 + $0x68] sm:$0xff]
      %v2660 = vld [vmem:[#allocation2 + $0x78] sm:$0xff]
      %v2661 = vld [vmem:[#allocation2 + $0x80] sm:$0xff]
      %v2662 = vld [vmem:[#allocation2 + $0x90] sm:$0xff]
      %v2663 = vld [vmem:[#allocation2 + $0x98] sm:$0xff]
      %v2664 = vld [vmem:[#allocation2 + $0xa8] sm:$0xff]
      %v2665 = vld [vmem:[#allocation2 + $0xb0] sm:$0xff]
      %v2666 = vld [vmem:[#allocation2 + $0xc0] sm:$0xff]
      %v2667 = vld [vmem:[#allocation2 + $0xc8] sm:$0xff]
      %v2668 = vld [vmem:[#allocation2 + $0xd8] sm:$0xff]
      %v2669 = vld [vmem:[#allocation2 + $0xe0] sm:$0xff]
      %v2670 = vld [vmem:[#allocation2 + $0xf0] sm:$0xff]
      %v2671 = vld [vmem:[#allocation2 + $0xf8] sm:$0xff]
      %v2672 = vld [vmem:[#allocation2 + $0x108] sm:$0xff]
      %v2673 = vld [vmem:[#allocation2 + $0x110] sm:$0xff]
      %v2674 = vld [vmem:[#allocation2 + $0x120] sm:$0xff]
      %v2675 = vld [vmem:[#allocation2 + $0x128] sm:$0xff]
      %v2676 = vld [vmem:[#allocation2 + $0x138] sm:$0xff]
      %v2677 = vld [vmem:[#allocation2 + $0x140] sm:$0xff]
      %v2678 = vld [vmem:[#allocation2 + $0x150] sm:$0xff]
      %v2679 = vld [vmem:[#allocation2 + $0x158] sm:$0xff]
      %v2680 = vld [vmem:[#allocation2 + $0x168] sm:$0xff]
      %v2681 = vld [vmem:[#allocation2 + $0x170] sm:$0xff]
      %v2682 = vld [vmem:[#allocation2 + $0x1] sm:$0xff]
      %v2683 = vld [vmem:[#allocation2 + $0x9] sm:$0xff]
      %v2684 = vld [vmem:[#allocation2 + $0x19] sm:$0xff]
      %v2685 = vld [vmem:[#allocation2 + $0x21] sm:$0xff]
      %v2686 = vld [vmem:[#allocation2 + $0x31] sm:$0xff]
      %v2687 = vld [vmem:[#allocation2 + $0x39] sm:$0xff]
      %v2688 = vld [vmem:[#allocation2 + $0x49] sm:$0xff]
      %v2689 = vld [vmem:[#allocation2 + $0x51] sm:$0xff]
      %v2690 = vld [vmem:[#allocation2 + $0x61] sm:$0xff]
      %v2691 = vld [vmem:[#allocation2 + $0x69] sm:$0xff]
      %v2692 = vld [vmem:[#allocation2 + $0x79] sm:$0xff]
      %v2693 = vld [vmem:[#allocation2 + $0x81] sm:$0xff]
      %v2694 = vld [vmem:[#allocation2 + $0x91] sm:$0xff]
      %v2695 = vld [vmem:[#allocation2 + $0x99] sm:$0xff]
      %v2696 = vld [vmem:[#allocation2 + $0xa9] sm:$0xff]
      %v2697 = vld [vmem:[#allocation2 + $0xb1] sm:$0xff]
      %v2698 = vld [vmem:[#allocation2 + $0xc1] sm:$0xff]
      %v2699 = vld [vmem:[#allocation2 + $0xc9] sm:$0xff]
      %v2700 = vld [vmem:[#allocation2 + $0xd9] sm:$0xff]
      %v2701 = vld [vmem:[#allocation2 + $0xe1] sm:$0xff]
      %v2702 = vld [vmem:[#allocation2 + $0xf1] sm:$0xff]
      %v2703 = vld [vmem:[#allocation2 + $0xf9] sm:$0xff]
      %v2704 = vld [vmem:[#allocation2 + $0x109] sm:$0xff]
      %v2705 = vld [vmem:[#allocation2 + $0x111] sm:$0xff]
      %v2706 = vld [vmem:[#allocation2 + $0x121] sm:$0xff]
      %v2707 = vld [vmem:[#allocation2 + $0x129] sm:$0xff]
      %v2708 = vld [vmem:[#allocation2 + $0x139] sm:$0xff]
      %v2709 = vld [vmem:[#allocation2 + $0x141] sm:$0xff]
      %v2710 = vld [vmem:[#allocation2 + $0x151] sm:$0xff]
      %v2711 = vld [vmem:[#allocation2 + $0x159] sm:$0xff]
      %v2712 = vld [vmem:[#allocation2 + $0x169] sm:$0xff]
      %v2713 = vld [vmem:[#allocation2 + $0x171] sm:$0xff]
      %v2714 = vld [vmem:[#allocation2 + $0x2] sm:$0xff]
      %v2715 = vld [vmem:[#allocation2 + $0xa] sm:$0xff]
      %v2716 = vld [vmem:[#allocation2 + $0x1a] sm:$0xff]
      %v2717 = vld [vmem:[#allocation2 + $0x22] sm:$0xff]
      %v2718 = vld [vmem:[#allocation2 + $0x32] sm:$0xff]
      %v2719 = vld [vmem:[#allocation2 + $0x3a] sm:$0xff]
      %v2720 = vld [vmem:[#allocation2 + $0x4a] sm:$0xff]
      %v2721 = vld [vmem:[#allocation2 + $0x52] sm:$0xff]
      %v2722 = vld [vmem:[#allocation2 + $0x62] sm:$0xff]
      %v2723 = vld [vmem:[#allocation2 + $0x6a] sm:$0xff]
      %v2724 = vld [vmem:[#allocation2 + $0x7a] sm:$0xff]
      %v2725 = vld [vmem:[#allocation2 + $0x82] sm:$0xff]
      %v2726 = vld [vmem:[#allocation2 + $0x92] sm:$0xff]
      %v2727 = vld [vmem:[#allocation2 + $0x9a] sm:$0xff]
      %v2728 = vld [vmem:[#allocation2 + $0xaa] sm:$0xff]
      %v2729 = vld [vmem:[#allocation2 + $0xb2] sm:$0xff]
      %v2730 = vld [vmem:[#allocation2 + $0xc2] sm:$0xff]
      %v2731 = vld [vmem:[#allocation2 + $0xca] sm:$0xff]
      %v2732 = vld [vmem:[#allocation2 + $0xda] sm:$0xff]
      %v2733 = vld [vmem:[#allocation2 + $0xe2] sm:$0xff]
      %v2734 = vld [vmem:[#allocation2 + $0xf2] sm:$0xff]
      %v2735 = vld [vmem:[#allocation2 + $0xfa] sm:$0xff]
      %v2736 = vld [vmem:[#allocation2 + $0x10a] sm:$0xff]
      %v2737 = vld [vmem:[#allocation2 + $0x112] sm:$0xff]
      %v2738 = vld [vmem:[#allocation2 + $0x122] sm:$0xff]
      %v2739 = vld [vmem:[#allocation2 + $0x12a] sm:$0xff]
      %v2740 = vld [vmem:[#allocation2 + $0x13a] sm:$0xff]
      %v2741 = vld [vmem:[#allocation2 + $0x142] sm:$0xff]
      %v2742 = vld [vmem:[#allocation2 + $0x152] sm:$0xff]
      %v2743 = vld [vmem:[#allocation2 + $0x15a] sm:$0xff]
      %v2744 = vld [vmem:[#allocation2 + $0x16a] sm:$0xff]
      %v2745 = vld [vmem:[#allocation2 + $0x172] sm:$0xff]
      %v2746 = vld [vmem:[%s2617] sm:$0xff]
      %v2747 = vld [vmem:[%s2617 + $0x8] sm:$0xff]
      %v2748 = vld [vmem:[%s2617 + $0x18] sm:$0xff]
      %v2749 = vld [vmem:[%s2617 + $0x20] sm:$0xff]
      %v2750 = vld [vmem:[%s2617 + $0x30] sm:$0xff]
      %v2751 = vld [vmem:[%s2617 + $0x38] sm:$0xff]
      %v2752 = vld [vmem:[%s2617 + $0x48] sm:$0xff]
      %v2753 = vld [vmem:[%s2617 + $0x50] sm:$0xff]
      %v2754 = vld [vmem:[%s2617 + $0x60] sm:$0xff]
      %v2755 = vld [vmem:[%s2617 + $0x68] sm:$0xff]
      %v2756 = vld [vmem:[%s2617 + $0x78] sm:$0xff]
      %v2757 = vld [vmem:[%s2617 + $0x80] sm:$0xff]
      %v2758 = vld [vmem:[%s2617 + $0x90] sm:$0xff]
      %v2759 = vld [vmem:[%s2617 + $0x98] sm:$0xff]
      %v2760 = vld [vmem:[%s2617 + $0xa8] sm:$0xff]
      %v2761 = vld [vmem:[%s2617 + $0xb0] sm:$0xff]
      %v2762 = vld [vmem:[%s2617 + $0xc0] sm:$0xff]
      %v2763 = vld [vmem:[%s2617 + $0xc8] sm:$0xff]
      %v2764 = vld [vmem:[%s2617 + $0xd8] sm:$0xff]
      %v2765 = vld [vmem:[%s2617 + $0xe0] sm:$0xff]
      %v2766 = vld [vmem:[%s2617 + $0xf0] sm:$0xff]
      %v2767 = vld [vmem:[%s2617 + $0xf8] sm:$0xff]
      %v2768 = vld [vmem:[%s2617 + $0x108] sm:$0xff]
      %v2769 = vld [vmem:[%s2617 + $0x110] sm:$0xff]
      %v2770 = vld [vmem:[%s2617 + $0x120] sm:$0xff]
      %v2771 = vld [vmem:[%s2617 + $0x128] sm:$0xff]
      %v2772 = vld [vmem:[%s2617 + $0x138] sm:$0xff]
      %v2773 = vld [vmem:[%s2617 + $0x140] sm:$0xff]
      %v2774 = vld [vmem:[%s2617 + $0x150] sm:$0xff]
      %v2775 = vld [vmem:[%s2617 + $0x158] sm:$0xff]
      %v2776 = vld [vmem:[%s2617 + $0x168] sm:$0xff]
      %v2777 = vld [vmem:[%s2617 + $0x170] sm:$0xff]
      %v2778 = vld [vmem:[%s2617 + $0x1] sm:$0xff]
      %v2779 = vld [vmem:[%s2617 + $0x9] sm:$0xff]
      %v2780 = vld [vmem:[%s2617 + $0x19] sm:$0xff]
      %v2781 = vld [vmem:[%s2617 + $0x21] sm:$0xff]
      %v2782 = vld [vmem:[%s2617 + $0x31] sm:$0xff]
      %v2783 = vld [vmem:[%s2617 + $0x39] sm:$0xff]
      %v2784 = vld [vmem:[%s2617 + $0x49] sm:$0xff]
      %v2785 = vld [vmem:[%s2617 + $0x51] sm:$0xff]
      %v2786 = vld [vmem:[%s2617 + $0x61] sm:$0xff]
      %v2787 = vld [vmem:[%s2617 + $0x69] sm:$0xff]
      %v2788 = vld [vmem:[%s2617 + $0x79] sm:$0xff]
      %v2789 = vld [vmem:[%s2617 + $0x81] sm:$0xff]
      %v2790 = vld [vmem:[%s2617 + $0x91] sm:$0xff]
      %v2791 = vld [vmem:[%s2617 + $0x99] sm:$0xff]
      %v2792 = vld [vmem:[%s2617 + $0xa9] sm:$0xff]
      %v2793 = vld [vmem:[%s2617 + $0xb1] sm:$0xff]
      %v2794 = vld [vmem:[%s2617 + $0xc1] sm:$0xff]
      %v2795 = vld [vmem:[%s2617 + $0xc9] sm:$0xff]
      %v2796 = vld [vmem:[%s2617 + $0xd9] sm:$0xff]
      %v2797 = vld [vmem:[%s2617 + $0xe1] sm:$0xff]
      %v2798 = vld [vmem:[%s2617 + $0xf1] sm:$0xff]
      %v2799 = vld [vmem:[%s2617 + $0xf9] sm:$0xff]
      %v2800 = vld [vmem:[%s2617 + $0x109] sm:$0xff]
      %v2801 = vld [vmem:[%s2617 + $0x111] sm:$0xff]
      %v2802 = vld [vmem:[%s2617 + $0x121] sm:$0xff]
      %v2803 = vld [vmem:[%s2617 + $0x129] sm:$0xff]
      %v2804 = vld [vmem:[%s2617 + $0x139] sm:$0xff]
      %v2805 = vld [vmem:[%s2617 + $0x141] sm:$0xff]
      %v2806 = vld [vmem:[%s2617 + $0x151] sm:$0xff]
      %v2807 = vld [vmem:[%s2617 + $0x159] sm:$0xff]
      %v2808 = vld [vmem:[%s2617 + $0x169] sm:$0xff]
      %v2809 = vld [vmem:[%s2617 + $0x171] sm:$0xff]
      %v2810 = vld [vmem:[%s2617 + $0x2] sm:$0xff]
      %v2811 = vld [vmem:[%s2617 + $0xa] sm:$0xff]
      %v2812 = vld [vmem:[%s2617 + $0x1a] sm:$0xff]
      %v2813 = vld [vmem:[%s2617 + $0x22] sm:$0xff]
      %v2814 = vld [vmem:[%s2617 + $0x32] sm:$0xff]
      %v2815 = vld [vmem:[%s2617 + $0x3a] sm:$0xff]
      %v2816 = vld [vmem:[%s2617 + $0x4a] sm:$0xff]
      %v2817 = vld [vmem:[%s2617 + $0x52] sm:$0xff]
      %v2818 = vld [vmem:[%s2617 + $0x62] sm:$0xff]
      %v2819 = vld [vmem:[%s2617 + $0x6a] sm:$0xff]
      %v2820 = vld [vmem:[%s2617 + $0x7a] sm:$0xff]
      %v2821 = vld [vmem:[%s2617 + $0x82] sm:$0xff]
      %v2822 = vld [vmem:[%s2617 + $0x92] sm:$0xff]
      %v2823 = vld [vmem:[%s2617 + $0x9a] sm:$0xff]
      %v2824 = vld [vmem:[%s2617 + $0xaa] sm:$0xff]
      %v2825 = vld [vmem:[%s2617 + $0xb2] sm:$0xff]
      %v2826 = vld [vmem:[%s2617 + $0xc2] sm:$0xff]
      %v2827 = vld [vmem:[%s2617 + $0xca] sm:$0xff]
      %v2828 = vld [vmem:[%s2617 + $0xda] sm:$0xff]
      %v2829 = vld [vmem:[%s2617 + $0xe2] sm:$0xff]
      %v2830 = vld [vmem:[%s2617 + $0xf2] sm:$0xff]
      %v2831 = vld [vmem:[%s2617 + $0xfa] sm:$0xff]
      %v2832 = vld [vmem:[%s2617 + $0x10a] sm:$0xff]
      %v2833 = vld [vmem:[%s2617 + $0x112] sm:$0xff]
      %v2834 = vld [vmem:[%s2617 + $0x122] sm:$0xff]
      %v2835 = vld [vmem:[%s2617 + $0x12a] sm:$0xff]
      %v2836 = vld [vmem:[%s2617 + $0x13a] sm:$0xff]
      %v2837 = vld [vmem:[%s2617 + $0x142] sm:$0xff]
      %v2838 = vld [vmem:[%s2617 + $0x152] sm:$0xff]
      %v2839 = vld [vmem:[%s2617 + $0x15a] sm:$0xff]
      %v2840 = vld [vmem:[%s2617 + $0x16a] sm:$0xff]
      %v2841 = vld [vmem:[%s2617 + $0x172] sm:$0xff]
      %s2842 = scalar_lea.vmem [#allocation2], 48
      %v2843 = vld [vmem:[%s2842] sm:$0xff]
      %v2844 = vld [vmem:[%s2842 + $0x8] sm:$0xff]
      %v2845 = vld [vmem:[%s2842 + $0x18] sm:$0xff]
      %v2846 = vld [vmem:[%s2842 + $0x20] sm:$0xff]
      %v2847 = vld [vmem:[%s2842 + $0x30] sm:$0xff]
      %v2848 = vld [vmem:[%s2842 + $0x38] sm:$0xff]
      %v2849 = vld [vmem:[%s2842 + $0x48] sm:$0xff]
      %v2850 = vld [vmem:[%s2842 + $0x50] sm:$0xff]
      %v2851 = vld [vmem:[%s2842 + $0x60] sm:$0xff]
      %v2852 = vld [vmem:[%s2842 + $0x68] sm:$0xff]
      %v2853 = vld [vmem:[%s2842 + $0x78] sm:$0xff]
      %v2854 = vld [vmem:[%s2842 + $0x80] sm:$0xff]
      %v2855 = vld [vmem:[%s2842 + $0x90] sm:$0xff]
      %v2856 = vld [vmem:[%s2842 + $0x98] sm:$0xff]
      %v2857 = vld [vmem:[%s2842 + $0xa8] sm:$0xff]
      %v2858 = vld [vmem:[%s2842 + $0xb0] sm:$0xff]
      %v2859 = vld [vmem:[%s2842 + $0xc0] sm:$0xff]
      %v2860 = vld [vmem:[%s2842 + $0xc8] sm:$0xff]
      %v2861 = vld [vmem:[%s2842 + $0xd8] sm:$0xff]
      %v2862 = vld [vmem:[%s2842 + $0xe0] sm:$0xff]
      %v2863 = vld [vmem:[%s2842 + $0xf0] sm:$0xff]
      %v2864 = vld [vmem:[%s2842 + $0xf8] sm:$0xff]
      %v2865 = vld [vmem:[%s2842 + $0x108] sm:$0xff]
      %v2866 = vld [vmem:[%s2842 + $0x110] sm:$0xff]
      %v2867 = vld [vmem:[%s2842 + $0x120] sm:$0xff]
      %v2868 = vld [vmem:[%s2842 + $0x128] sm:$0xff]
      %v2869 = vld [vmem:[%s2842 + $0x138] sm:$0xff]
      %v2870 = vld [vmem:[%s2842 + $0x140] sm:$0xff]
      %v2871 = vld [vmem:[%s2842 + $0x150] sm:$0xff]
      %v2872 = vld [vmem:[%s2842 + $0x158] sm:$0xff]
      %v2873 = vld [vmem:[%s2842 + $0x168] sm:$0xff]
      %v2874 = vld [vmem:[%s2842 + $0x170] sm:$0xff]
      %v2875 = vld [vmem:[%s2842 + $0x1] sm:$0xff]
      %v2876 = vld [vmem:[%s2842 + $0x9] sm:$0xff]
      %v2877 = vld [vmem:[%s2842 + $0x19] sm:$0xff]
      %v2878 = vld [vmem:[%s2842 + $0x21] sm:$0xff]
      %v2879 = vld [vmem:[%s2842 + $0x31] sm:$0xff]
      %v2880 = vld [vmem:[%s2842 + $0x39] sm:$0xff]
      %v2881 = vld [vmem:[%s2842 + $0x49] sm:$0xff]
      %v2882 = vld [vmem:[%s2842 + $0x51] sm:$0xff]
      %v2883 = vld [vmem:[%s2842 + $0x61] sm:$0xff]
      %v2884 = vld [vmem:[%s2842 + $0x69] sm:$0xff]
      %v2885 = vld [vmem:[%s2842 + $0x79] sm:$0xff]
      %v2886 = vld [vmem:[%s2842 + $0x81] sm:$0xff]
      %v2887 = vld [vmem:[%s2842 + $0x91] sm:$0xff]
      %v2888 = vld [vmem:[%s2842 + $0x99] sm:$0xff]
      %v2889 = vld [vmem:[%s2842 + $0xa9] sm:$0xff]
      %v2890 = vld [vmem:[%s2842 + $0xb1] sm:$0xff]
      %v2891 = vld [vmem:[%s2842 + $0xc1] sm:$0xff]
      %v2892 = vld [vmem:[%s2842 + $0xc9] sm:$0xff]
      %v2893 = vld [vmem:[%s2842 + $0xd9] sm:$0xff]
      %v2894 = vld [vmem:[%s2842 + $0xe1] sm:$0xff]
      %v2895 = vld [vmem:[%s2842 + $0xf1] sm:$0xff]
      %v2896 = vld [vmem:[%s2842 + $0xf9] sm:$0xff]
      %v2897 = vld [vmem:[%s2842 + $0x109] sm:$0xff]
      %v2898 = vld [vmem:[%s2842 + $0x111] sm:$0xff]
      %v2899 = vld [vmem:[%s2842 + $0x121] sm:$0xff]
      %v2900 = vld [vmem:[%s2842 + $0x129] sm:$0xff]
      %v2901 = vld [vmem:[%s2842 + $0x139] sm:$0xff]
      %v2902 = vld [vmem:[%s2842 + $0x141] sm:$0xff]
      %v2903 = vld [vmem:[%s2842 + $0x151] sm:$0xff]
      %v2904 = vld [vmem:[%s2842 + $0x159] sm:$0xff]
      %v2905 = vld [vmem:[%s2842 + $0x169] sm:$0xff]
      %v2906 = vld [vmem:[%s2842 + $0x171] sm:$0xff]
      %v2907 = vld [vmem:[%s2842 + $0x2] sm:$0xff]
      %v2908 = vld [vmem:[%s2842 + $0xa] sm:$0xff]
      %v2909 = vld [vmem:[%s2842 + $0x1a] sm:$0xff]
      %v2910 = vld [vmem:[%s2842 + $0x22] sm:$0xff]
      %v2911 = vld [vmem:[%s2842 + $0x32] sm:$0xff]
      %v2912 = vld [vmem:[%s2842 + $0x3a] sm:$0xff]
      %v2913 = vld [vmem:[%s2842 + $0x4a] sm:$0xff]
      %v2914 = vld [vmem:[%s2842 + $0x52] sm:$0xff]
      %v2915 = vld [vmem:[%s2842 + $0x62] sm:$0xff]
      %v2916 = vld [vmem:[%s2842 + $0x6a] sm:$0xff]
      %v2917 = vld [vmem:[%s2842 + $0x7a] sm:$0xff]
      %v2918 = vld [vmem:[%s2842 + $0x82] sm:$0xff]
      %v2919 = vld [vmem:[%s2842 + $0x92] sm:$0xff]
      %v2920 = vld [vmem:[%s2842 + $0x9a] sm:$0xff]
      %v2921 = vld [vmem:[%s2842 + $0xaa] sm:$0xff]
      %v2922 = vld [vmem:[%s2842 + $0xb2] sm:$0xff]
      %v2923 = vld [vmem:[%s2842 + $0xc2] sm:$0xff]
      %v2924 = vld [vmem:[%s2842 + $0xca] sm:$0xff]
      %v2925 = vld [vmem:[%s2842 + $0xda] sm:$0xff]
      %v2926 = vld [vmem:[%s2842 + $0xe2] sm:$0xff]
      %v2927 = vld [vmem:[%s2842 + $0xf2] sm:$0xff]
      %v2928 = vld [vmem:[%s2842 + $0xfa] sm:$0xff]
      %v2929 = vld [vmem:[%s2842 + $0x10a] sm:$0xff]
      %v2930 = vld [vmem:[%s2842 + $0x112] sm:$0xff]
      %v2931 = vld [vmem:[%s2842 + $0x122] sm:$0xff]
      %v2932 = vld [vmem:[%s2842 + $0x12a] sm:$0xff]
      %v2933 = vld [vmem:[%s2842 + $0x13a] sm:$0xff]
      %v2934 = vld [vmem:[%s2842 + $0x142] sm:$0xff]
      %v2935 = vld [vmem:[%s2842 + $0x152] sm:$0xff]
      %v2936 = vld [vmem:[%s2842 + $0x15a] sm:$0xff]
      %v2937 = vld [vmem:[%s2842 + $0x16a] sm:$0xff]
      %v2938 = vld [vmem:[%s2842 + $0x172] sm:$0xff]
      %2971 = vrot.lane.b32.xlu0 %v2682, 4
      %v2972 = vpop.permute.xlu0 %2971
      %2973 = vrot.lane.b32.xlu0 %v2683, 4
      %v2974 = vpop.permute.xlu0 %2973
      %2975 = vrot.lane.b32.xlu0 %v2684, 4
      %v2976 = vpop.permute.xlu0 %2975
      %2977 = vrot.lane.b32.xlu0 %v2685, 4
      %v2978 = vpop.permute.xlu0 %2977
      %2979 = vrot.lane.b32.xlu0 %v2686, 4
      %v2980 = vpop.permute.xlu0 %2979
      %2981 = vrot.lane.b32.xlu0 %v2687, 4
      %v2982 = vpop.permute.xlu0 %2981
      %2983 = vrot.lane.b32.xlu0 %v2688, 4
      %v2984 = vpop.permute.xlu0 %2983
      %2985 = vrot.lane.b32.xlu0 %v2689, 4
      %v2986 = vpop.permute.xlu0 %2985
      %2987 = vrot.lane.b32.xlu0 %v2690, 4
      %v2988 = vpop.permute.xlu0 %2987
      %2989 = vrot.lane.b32.xlu0 %v2691, 4
      %v2990 = vpop.permute.xlu0 %2989
      %2991 = vrot.lane.b32.xlu0 %v2692, 4
      %v2992 = vpop.permute.xlu0 %2991
      %2993 = vrot.lane.b32.xlu0 %v2693, 4
      %v2994 = vpop.permute.xlu0 %2993
      %2995 = vrot.lane.b32.xlu0 %v2694, 4
      %v2996 = vpop.permute.xlu0 %2995
      %2997 = vrot.lane.b32.xlu0 %v2695, 4
      %v2998 = vpop.permute.xlu0 %2997
      %2999 = vrot.lane.b32.xlu0 %v2696, 4
      %v3000 = vpop.permute.xlu0 %2999
      %3001 = vrot.lane.b32.xlu0 %v2697, 4
      %v3002 = vpop.permute.xlu0 %3001
      %3003 = vrot.lane.b32.xlu0 %v2698, 4
      %v3004 = vpop.permute.xlu0 %3003
      %3005 = vrot.lane.b32.xlu0 %v2699, 4
      %v3006 = vpop.permute.xlu0 %3005
      %3007 = vrot.lane.b32.xlu0 %v2700, 4
      %v3008 = vpop.permute.xlu0 %3007
      %3009 = vrot.lane.b32.xlu0 %v2701, 4
      %v3010 = vpop.permute.xlu0 %3009
      %3011 = vrot.lane.b32.xlu0 %v2702, 4
      %v3012 = vpop.permute.xlu0 %3011
      %3013 = vrot.lane.b32.xlu0 %v2703, 4
      %v3014 = vpop.permute.xlu0 %3013
      %3015 = vrot.lane.b32.xlu0 %v2704, 4
      %v3016 = vpop.permute.xlu0 %3015
      %3017 = vrot.lane.b32.xlu0 %v2705, 4
      %v3018 = vpop.permute.xlu0 %3017
      %3019 = vrot.lane.b32.xlu0 %v2706, 4
      %v3020 = vpop.permute.xlu0 %3019
      %3021 = vrot.lane.b32.xlu0 %v2707, 4
      %v3022 = vpop.permute.xlu0 %3021
      %3023 = vrot.lane.b32.xlu0 %v2708, 4
      %v3024 = vpop.permute.xlu0 %3023
      %3025 = vrot.lane.b32.xlu0 %v2709, 4
      %v3026 = vpop.permute.xlu0 %3025
      %3027 = vrot.lane.b32.xlu0 %v2710, 4
      %v3028 = vpop.permute.xlu0 %3027
      %3029 = vrot.lane.b32.xlu0 %v2711, 4
      %v3030 = vpop.permute.xlu0 %3029
      %3031 = vrot.lane.b32.xlu0 %v2712, 4
      %v3032 = vpop.permute.xlu0 %3031
      %3033 = vrot.lane.b32.xlu0 %v2713, 4
      %v3034 = vpop.permute.xlu0 %3033
      %3099 = vrot.lane.b32.xlu0 %v2714, 8
      %v3100 = vpop.permute.xlu0 %3099
      %3101 = vrot.lane.b32.xlu0 %v2715, 8
      %v3102 = vpop.permute.xlu0 %3101
      %3103 = vrot.lane.b32.xlu0 %v2716, 8
      %v3104 = vpop.permute.xlu0 %3103
      %3105 = vrot.lane.b32.xlu0 %v2717, 8
      %v3106 = vpop.permute.xlu0 %3105
      %3107 = vrot.lane.b32.xlu0 %v2718, 8
      %v3108 = vpop.permute.xlu0 %3107
      %3109 = vrot.lane.b32.xlu0 %v2719, 8
      %v3110 = vpop.permute.xlu0 %3109
      %3111 = vrot.lane.b32.xlu0 %v2720, 8
      %v3112 = vpop.permute.xlu0 %3111
      %3113 = vrot.lane.b32.xlu0 %v2721, 8
      %v3114 = vpop.permute.xlu0 %3113
      %3115 = vrot.lane.b32.xlu0 %v2722, 8
      %v3116 = vpop.permute.xlu0 %3115
      %3117 = vrot.lane.b32.xlu0 %v2723, 8
      %v3118 = vpop.permute.xlu0 %3117
      %3119 = vrot.lane.b32.xlu0 %v2724, 8
      %v3120 = vpop.permute.xlu0 %3119
      %3121 = vrot.lane.b32.xlu0 %v2725, 8
      %v3122 = vpop.permute.xlu0 %3121
      %3123 = vrot.lane.b32.xlu0 %v2726, 8
      %v3124 = vpop.permute.xlu0 %3123
      %3125 = vrot.lane.b32.xlu0 %v2727, 8
      %v3126 = vpop.permute.xlu0 %3125
      %3127 = vrot.lane.b32.xlu0 %v2728, 8
      %v3128 = vpop.permute.xlu0 %3127
      %3129 = vrot.lane.b32.xlu0 %v2729, 8
      %v3130 = vpop.permute.xlu0 %3129
      %3131 = vrot.lane.b32.xlu0 %v2730, 8
      %v3132 = vpop.permute.xlu0 %3131
      %3133 = vrot.lane.b32.xlu0 %v2731, 8
      %v3134 = vpop.permute.xlu0 %3133
      %3135 = vrot.lane.b32.xlu0 %v2732, 8
      %v3136 = vpop.permute.xlu0 %3135
      %3137 = vrot.lane.b32.xlu0 %v2733, 8
      %v3138 = vpop.permute.xlu0 %3137
      %3139 = vrot.lane.b32.xlu0 %v2734, 8
      %v3140 = vpop.permute.xlu0 %3139
      %3141 = vrot.lane.b32.xlu0 %v2735, 8
      %v3142 = vpop.permute.xlu0 %3141
      %3143 = vrot.lane.b32.xlu0 %v2736, 8
      %v3144 = vpop.permute.xlu0 %3143
      %3145 = vrot.lane.b32.xlu0 %v2737, 8
      %v3146 = vpop.permute.xlu0 %3145
      %3147 = vrot.lane.b32.xlu0 %v2738, 8
      %v3148 = vpop.permute.xlu0 %3147
      %3149 = vrot.lane.b32.xlu0 %v2739, 8
      %v3150 = vpop.permute.xlu0 %3149
      %3151 = vrot.lane.b32.xlu0 %v2740, 8
      %v3152 = vpop.permute.xlu0 %3151
      %3153 = vrot.lane.b32.xlu0 %v2741, 8
      %v3154 = vpop.permute.xlu0 %3153
      %3155 = vrot.lane.b32.xlu0 %v2742, 8
      %v3156 = vpop.permute.xlu0 %3155
      %3157 = vrot.lane.b32.xlu0 %v2743, 8
      %v3158 = vpop.permute.xlu0 %3157
      %3159 = vrot.lane.b32.xlu0 %v2744, 8
      %v3160 = vpop.permute.xlu0 %3159
      %3161 = vrot.lane.b32.xlu0 %v2745, 8
      %v3162 = vpop.permute.xlu0 %3161
      %3227 = vrot.lane.b32.xlu0 %v2746, 12
      %v3228 = vpop.permute.xlu0 %3227
      %3229 = vrot.lane.b32.xlu0 %v2747, 12
      %v3230 = vpop.permute.xlu0 %3229
      %3231 = vrot.lane.b32.xlu0 %v2748, 12
      %v3232 = vpop.permute.xlu0 %3231
      %3233 = vrot.lane.b32.xlu0 %v2749, 12
      %v3234 = vpop.permute.xlu0 %3233
      %3235 = vrot.lane.b32.xlu0 %v2750, 12
      %v3236 = vpop.permute.xlu0 %3235
      %3237 = vrot.lane.b32.xlu0 %v2751, 12
      %v3238 = vpop.permute.xlu0 %3237
      %3239 = vrot.lane.b32.xlu0 %v2752, 12
      %v3240 = vpop.permute.xlu0 %3239
      %3241 = vrot.lane.b32.xlu0 %v2753, 12
      %v3242 = vpop.permute.xlu0 %3241
      %3243 = vrot.lane.b32.xlu0 %v2754, 12
      %v3244 = vpop.permute.xlu0 %3243
      %3245 = vrot.lane.b32.xlu0 %v2755, 12
      %v3246 = vpop.permute.xlu0 %3245
      %3247 = vrot.lane.b32.xlu0 %v2756, 12
      %v3248 = vpop.permute.xlu0 %3247
      %3249 = vrot.lane.b32.xlu0 %v2757, 12
      %v3250 = vpop.permute.xlu0 %3249
      %3251 = vrot.lane.b32.xlu0 %v2758, 12
      %v3252 = vpop.permute.xlu0 %3251
      %3253 = vrot.lane.b32.xlu0 %v2759, 12
      %v3254 = vpop.permute.xlu0 %3253
      %3255 = vrot.lane.b32.xlu0 %v2760, 12
      %v3256 = vpop.permute.xlu0 %3255
      %3257 = vrot.lane.b32.xlu0 %v2761, 12
      %v3258 = vpop.permute.xlu0 %3257
      %3259 = vrot.lane.b32.xlu0 %v2762, 12
      %v3260 = vpop.permute.xlu0 %3259
      %3261 = vrot.lane.b32.xlu0 %v2763, 12
      %v3262 = vpop.permute.xlu0 %3261
      %3263 = vrot.lane.b32.xlu0 %v2764, 12
      %v3264 = vpop.permute.xlu0 %3263
      %3265 = vrot.lane.b32.xlu0 %v2765, 12
      %v3266 = vpop.permute.xlu0 %3265
      %3267 = vrot.lane.b32.xlu0 %v2766, 12
      %v3268 = vpop.permute.xlu0 %3267
      %3269 = vrot.lane.b32.xlu0 %v2767, 12
      %v3270 = vpop.permute.xlu0 %3269
      %3271 = vrot.lane.b32.xlu0 %v2768, 12
      %v3272 = vpop.permute.xlu0 %3271
      %3273 = vrot.lane.b32.xlu0 %v2769, 12
      %v3274 = vpop.permute.xlu0 %3273
      %3275 = vrot.lane.b32.xlu0 %v2770, 12
      %v3276 = vpop.permute.xlu0 %3275
      %3277 = vrot.lane.b32.xlu0 %v2771, 12
      %v3278 = vpop.permute.xlu0 %3277
      %3279 = vrot.lane.b32.xlu0 %v2772, 12
      %v3280 = vpop.permute.xlu0 %3279
      %3281 = vrot.lane.b32.xlu0 %v2773, 12
      %v3282 = vpop.permute.xlu0 %3281
      %3283 = vrot.lane.b32.xlu0 %v2774, 12
      %v3284 = vpop.permute.xlu0 %3283
      %3285 = vrot.lane.b32.xlu0 %v2775, 12
      %v3286 = vpop.permute.xlu0 %3285
      %3287 = vrot.lane.b32.xlu0 %v2776, 12
      %v3288 = vpop.permute.xlu0 %3287
      %3289 = vrot.lane.b32.xlu0 %v2777, 12
      %v3290 = vpop.permute.xlu0 %3289
      %3355 = vrot.lane.b32.xlu0 %v2778, 16
      %v3356 = vpop.permute.xlu0 %3355
      %3357 = vrot.lane.b32.xlu0 %v2779, 16
      %v3358 = vpop.permute.xlu0 %3357
      %3359 = vrot.lane.b32.xlu0 %v2780, 16
      %v3360 = vpop.permute.xlu0 %3359
      %3361 = vrot.lane.b32.xlu0 %v2781, 16
      %v3362 = vpop.permute.xlu0 %3361
      %3363 = vrot.lane.b32.xlu0 %v2782, 16
      %v3364 = vpop.permute.xlu0 %3363
      %3365 = vrot.lane.b32.xlu0 %v2783, 16
      %v3366 = vpop.permute.xlu0 %3365
      %3367 = vrot.lane.b32.xlu0 %v2784, 16
      %v3368 = vpop.permute.xlu0 %3367
      %3369 = vrot.lane.b32.xlu0 %v2785, 16
      %v3370 = vpop.permute.xlu0 %3369
      %3371 = vrot.lane.b32.xlu0 %v2786, 16
      %v3372 = vpop.permute.xlu0 %3371
      %3373 = vrot.lane.b32.xlu0 %v2787, 16
      %v3374 = vpop.permute.xlu0 %3373
      %3375 = vrot.lane.b32.xlu0 %v2788, 16
      %v3376 = vpop.permute.xlu0 %3375
      %3377 = vrot.lane.b32.xlu0 %v2789, 16
      %v3378 = vpop.permute.xlu0 %3377
      %3379 = vrot.lane.b32.xlu0 %v2790, 16
      %v3380 = vpop.permute.xlu0 %3379
      %3381 = vrot.lane.b32.xlu0 %v2791, 16
      %v3382 = vpop.permute.xlu0 %3381
      %3383 = vrot.lane.b32.xlu0 %v2792, 16
      %v3384 = vpop.permute.xlu0 %3383
      %3385 = vrot.lane.b32.xlu0 %v2793, 16
      %v3386 = vpop.permute.xlu0 %3385
      %3387 = vrot.lane.b32.xlu0 %v2794, 16
      %v3388 = vpop.permute.xlu0 %3387
      %3389 = vrot.lane.b32.xlu0 %v2795, 16
      %v3390 = vpop.permute.xlu0 %3389
      %3391 = vrot.lane.b32.xlu0 %v2796, 16
      %v3392 = vpop.permute.xlu0 %3391
      %3393 = vrot.lane.b32.xlu0 %v2797, 16
      %v3394 = vpop.permute.xlu0 %3393
      %3395 = vrot.lane.b32.xlu0 %v2798, 16
      %v3396 = vpop.permute.xlu0 %3395
      %3397 = vrot.lane.b32.xlu0 %v2799, 16
      %v3398 = vpop.permute.xlu0 %3397
      %3399 = vrot.lane.b32.xlu0 %v2800, 16
      %v3400 = vpop.permute.xlu0 %3399
      %3401 = vrot.lane.b32.xlu0 %v2801, 16
      %v3402 = vpop.permute.xlu0 %3401
      %3403 = vrot.lane.b32.xlu0 %v2802, 16
      %v3404 = vpop.permute.xlu0 %3403
      %3405 = vrot.lane.b32.xlu0 %v2803, 16
      %v3406 = vpop.permute.xlu0 %3405
      %3407 = vrot.lane.b32.xlu0 %v2804, 16
      %v3408 = vpop.permute.xlu0 %3407
      %3409 = vrot.lane.b32.xlu0 %v2805, 16
      %v3410 = vpop.permute.xlu0 %3409
      %3411 = vrot.lane.b32.xlu0 %v2806, 16
      %v3412 = vpop.permute.xlu0 %3411
      %3413 = vrot.lane.b32.xlu0 %v2807, 16
      %v3414 = vpop.permute.xlu0 %3413
      %3415 = vrot.lane.b32.xlu0 %v2808, 16
      %v3416 = vpop.permute.xlu0 %3415
      %3417 = vrot.lane.b32.xlu0 %v2809, 16
      %v3418 = vpop.permute.xlu0 %3417
      %3483 = vrot.lane.b32.xlu0 %v2810, 20
      %v3484 = vpop.permute.xlu0 %3483
      %3485 = vrot.lane.b32.xlu0 %v2811, 20
      %v3486 = vpop.permute.xlu0 %3485
      %3487 = vrot.lane.b32.xlu0 %v2812, 20
      %v3488 = vpop.permute.xlu0 %3487
      %3489 = vrot.lane.b32.xlu0 %v2813, 20
      %v3490 = vpop.permute.xlu0 %3489
      %3491 = vrot.lane.b32.xlu0 %v2814, 20
      %v3492 = vpop.permute.xlu0 %3491
      %3493 = vrot.lane.b32.xlu0 %v2815, 20
      %v3494 = vpop.permute.xlu0 %3493
      %3495 = vrot.lane.b32.xlu0 %v2816, 20
      %v3496 = vpop.permute.xlu0 %3495
      %3497 = vrot.lane.b32.xlu0 %v2817, 20
      %v3498 = vpop.permute.xlu0 %3497
      %3499 = vrot.lane.b32.xlu0 %v2818, 20
      %v3500 = vpop.permute.xlu0 %3499
      %3501 = vrot.lane.b32.xlu0 %v2819, 20
      %v3502 = vpop.permute.xlu0 %3501
      %3503 = vrot.lane.b32.xlu0 %v2820, 20
      %v3504 = vpop.permute.xlu0 %3503
      %3505 = vrot.lane.b32.xlu0 %v2821, 20
      %v3506 = vpop.permute.xlu0 %3505
      %3507 = vrot.lane.b32.xlu0 %v2822, 20
      %v3508 = vpop.permute.xlu0 %3507
      %3509 = vrot.lane.b32.xlu0 %v2823, 20
      %v3510 = vpop.permute.xlu0 %3509
      %3511 = vrot.lane.b32.xlu0 %v2824, 20
      %v3512 = vpop.permute.xlu0 %3511
      %3513 = vrot.lane.b32.xlu0 %v2825, 20
      %v3514 = vpop.permute.xlu0 %3513
      %3515 = vrot.lane.b32.xlu0 %v2826, 20
      %v3516 = vpop.permute.xlu0 %3515
      %3517 = vrot.lane.b32.xlu0 %v2827, 20
      %v3518 = vpop.permute.xlu0 %3517
      %3519 = vrot.lane.b32.xlu0 %v2828, 20
      %v3520 = vpop.permute.xlu0 %3519
      %3521 = vrot.lane.b32.xlu0 %v2829, 20
      %v3522 = vpop.permute.xlu0 %3521
      %3523 = vrot.lane.b32.xlu0 %v2830, 20
      %v3524 = vpop.permute.xlu0 %3523
      %3525 = vrot.lane.b32.xlu0 %v2831, 20
      %v3526 = vpop.permute.xlu0 %3525
      %3527 = vrot.lane.b32.xlu0 %v2832, 20
      %v3528 = vpop.permute.xlu0 %3527
      %3529 = vrot.lane.b32.xlu0 %v2833, 20
      %v3530 = vpop.permute.xlu0 %3529
      %3531 = vrot.lane.b32.xlu0 %v2834, 20
      %v3532 = vpop.permute.xlu0 %3531
      %3533 = vrot.lane.b32.xlu0 %v2835, 20
      %v3534 = vpop.permute.xlu0 %3533
      %3535 = vrot.lane.b32.xlu0 %v2836, 20
      %v3536 = vpop.permute.xlu0 %3535
      %3537 = vrot.lane.b32.xlu0 %v2837, 20
      %v3538 = vpop.permute.xlu0 %3537
      %3539 = vrot.lane.b32.xlu0 %v2838, 20
      %v3540 = vpop.permute.xlu0 %3539
      %3541 = vrot.lane.b32.xlu0 %v2839, 20
      %v3542 = vpop.permute.xlu0 %3541
      %3543 = vrot.lane.b32.xlu0 %v2840, 20
      %v3544 = vpop.permute.xlu0 %3543
      %3545 = vrot.lane.b32.xlu0 %v2841, 20
      %v3546 = vpop.permute.xlu0 %3545
      %3611 = vrot.lane.b32.xlu0 %v2843, 24
      %v3612 = vpop.permute.xlu0 %3611
      %3613 = vrot.lane.b32.xlu0 %v2844, 24
      %v3614 = vpop.permute.xlu0 %3613
      %3615 = vrot.lane.b32.xlu0 %v2845, 24
      %v3616 = vpop.permute.xlu0 %3615
      %3617 = vrot.lane.b32.xlu0 %v2846, 24
      %v3618 = vpop.permute.xlu0 %3617
      %3619 = vrot.lane.b32.xlu0 %v2847, 24
      %v3620 = vpop.permute.xlu0 %3619
      %3621 = vrot.lane.b32.xlu0 %v2848, 24
      %v3622 = vpop.permute.xlu0 %3621
      %3623 = vrot.lane.b32.xlu0 %v2849, 24
      %v3624 = vpop.permute.xlu0 %3623
      %3625 = vrot.lane.b32.xlu0 %v2850, 24
      %v3626 = vpop.permute.xlu0 %3625
      %3627 = vrot.lane.b32.xlu0 %v2851, 24
      %v3628 = vpop.permute.xlu0 %3627
      %3629 = vrot.lane.b32.xlu0 %v2852, 24
      %v3630 = vpop.permute.xlu0 %3629
      %3631 = vrot.lane.b32.xlu0 %v2853, 24
      %v3632 = vpop.permute.xlu0 %3631
      %3633 = vrot.lane.b32.xlu0 %v2854, 24
      %v3634 = vpop.permute.xlu0 %3633
      %3635 = vrot.lane.b32.xlu0 %v2855, 24
      %v3636 = vpop.permute.xlu0 %3635
      %3637 = vrot.lane.b32.xlu0 %v2856, 24
      %v3638 = vpop.permute.xlu0 %3637
      %3639 = vrot.lane.b32.xlu0 %v2857, 24
      %v3640 = vpop.permute.xlu0 %3639
      %3641 = vrot.lane.b32.xlu0 %v2858, 24
      %v3642 = vpop.permute.xlu0 %3641
      %3643 = vrot.lane.b32.xlu0 %v2859, 24
      %v3644 = vpop.permute.xlu0 %3643
      %3645 = vrot.lane.b32.xlu0 %v2860, 24
      %v3646 = vpop.permute.xlu0 %3645
      %3647 = vrot.lane.b32.xlu0 %v2861, 24
      %v3648 = vpop.permute.xlu0 %3647
      %3649 = vrot.lane.b32.xlu0 %v2862, 24
      %v3650 = vpop.permute.xlu0 %3649
      %3651 = vrot.lane.b32.xlu0 %v2863, 24
      %v3652 = vpop.permute.xlu0 %3651
      %3653 = vrot.lane.b32.xlu0 %v2864, 24
      %v3654 = vpop.permute.xlu0 %3653
      %3655 = vrot.lane.b32.xlu0 %v2865, 24
      %v3656 = vpop.permute.xlu0 %3655
      %3657 = vrot.lane.b32.xlu0 %v2866, 24
      %v3658 = vpop.permute.xlu0 %3657
      %3659 = vrot.lane.b32.xlu0 %v2867, 24
      %v3660 = vpop.permute.xlu0 %3659
      %3661 = vrot.lane.b32.xlu0 %v2868, 24
      %v3662 = vpop.permute.xlu0 %3661
      %3663 = vrot.lane.b32.xlu0 %v2869, 24
      %v3664 = vpop.permute.xlu0 %3663
      %3665 = vrot.lane.b32.xlu0 %v2870, 24
      %v3666 = vpop.permute.xlu0 %3665
      %3667 = vrot.lane.b32.xlu0 %v2871, 24
      %v3668 = vpop.permute.xlu0 %3667
      %3669 = vrot.lane.b32.xlu0 %v2872, 24
      %v3670 = vpop.permute.xlu0 %3669
      %3671 = vrot.lane.b32.xlu0 %v2873, 24
      %v3672 = vpop.permute.xlu0 %3671
      %3673 = vrot.lane.b32.xlu0 %v2874, 24
      %v3674 = vpop.permute.xlu0 %3673
      %3739 = vrot.lane.b32.xlu0 %v2875, 28
      %v3740 = vpop.permute.xlu0 %3739
      %3741 = vrot.lane.b32.xlu0 %v2876, 28
      %v3742 = vpop.permute.xlu0 %3741
      %3743 = vrot.lane.b32.xlu0 %v2877, 28
      %v3744 = vpop.permute.xlu0 %3743
      %3745 = vrot.lane.b32.xlu0 %v2878, 28
      %v3746 = vpop.permute.xlu0 %3745
      %3747 = vrot.lane.b32.xlu0 %v2879, 28
      %v3748 = vpop.permute.xlu0 %3747
      %3749 = vrot.lane.b32.xlu0 %v2880, 28
      %v3750 = vpop.permute.xlu0 %3749
      %3751 = vrot.lane.b32.xlu0 %v2881, 28
      %v3752 = vpop.permute.xlu0 %3751
      %3753 = vrot.lane.b32.xlu0 %v2882, 28
      %v3754 = vpop.permute.xlu0 %3753
      %3755 = vrot.lane.b32.xlu0 %v2883, 28
      %v3756 = vpop.permute.xlu0 %3755
      %3757 = vrot.lane.b32.xlu0 %v2884, 28
      %v3758 = vpop.permute.xlu0 %3757
      %3759 = vrot.lane.b32.xlu0 %v2885, 28
      %v3760 = vpop.permute.xlu0 %3759
      %3761 = vrot.lane.b32.xlu0 %v2886, 28
      %v3762 = vpop.permute.xlu0 %3761
      %3763 = vrot.lane.b32.xlu0 %v2887, 28
      %v3764 = vpop.permute.xlu0 %3763
      %3765 = vrot.lane.b32.xlu0 %v2888, 28
      %v3766 = vpop.permute.xlu0 %3765
      %3767 = vrot.lane.b32.xlu0 %v2889, 28
      %v3768 = vpop.permute.xlu0 %3767
      %3769 = vrot.lane.b32.xlu0 %v2890, 28
      %v3770 = vpop.permute.xlu0 %3769
      %3771 = vrot.lane.b32.xlu0 %v2891, 28
      %v3772 = vpop.permute.xlu0 %3771
      %3773 = vrot.lane.b32.xlu0 %v2892, 28
      %v3774 = vpop.permute.xlu0 %3773
      %3775 = vrot.lane.b32.xlu0 %v2893, 28
      %v3776 = vpop.permute.xlu0 %3775
      %3777 = vrot.lane.b32.xlu0 %v2894, 28
      %v3778 = vpop.permute.xlu0 %3777
      %3779 = vrot.lane.b32.xlu0 %v2895, 28
      %v3780 = vpop.permute.xlu0 %3779
      %3781 = vrot.lane.b32.xlu0 %v2896, 28
      %v3782 = vpop.permute.xlu0 %3781
      %3783 = vrot.lane.b32.xlu0 %v2897, 28
      %v3784 = vpop.permute.xlu0 %3783
      %3785 = vrot.lane.b32.xlu0 %v2898, 28
      %v3786 = vpop.permute.xlu0 %3785
      %3787 = vrot.lane.b32.xlu0 %v2899, 28
      %v3788 = vpop.permute.xlu0 %3787
      %3789 = vrot.lane.b32.xlu0 %v2900, 28
      %v3790 = vpop.permute.xlu0 %3789
      %3791 = vrot.lane.b32.xlu0 %v2901, 28
      %v3792 = vpop.permute.xlu0 %3791
      %3793 = vrot.lane.b32.xlu0 %v2902, 28
      %v3794 = vpop.permute.xlu0 %3793
      %3795 = vrot.lane.b32.xlu0 %v2903, 28
      %v3796 = vpop.permute.xlu0 %3795
      %3797 = vrot.lane.b32.xlu0 %v2904, 28
      %v3798 = vpop.permute.xlu0 %3797
      %3799 = vrot.lane.b32.xlu0 %v2905, 28
      %v3800 = vpop.permute.xlu0 %3799
      %3801 = vrot.lane.b32.xlu0 %v2906, 28
      %v3802 = vpop.permute.xlu0 %3801
      %3867 = vrot.lane.b32.xlu0 %v2907, 32
      %v3868 = vpop.permute.xlu0 %3867
      %3869 = vrot.lane.b32.xlu0 %v2908, 32
      %v3870 = vpop.permute.xlu0 %3869
      %3871 = vrot.lane.b32.xlu0 %v2909, 32
      %v3872 = vpop.permute.xlu0 %3871
      %3873 = vrot.lane.b32.xlu0 %v2910, 32
      %v3874 = vpop.permute.xlu0 %3873
      %3875 = vrot.lane.b32.xlu0 %v2911, 32
      %v3876 = vpop.permute.xlu0 %3875
      %3877 = vrot.lane.b32.xlu0 %v2912, 32
      %v3878 = vpop.permute.xlu0 %3877
      %3879 = vrot.lane.b32.xlu0 %v2913, 32
      %v3880 = vpop.permute.xlu0 %3879
      %3881 = vrot.lane.b32.xlu0 %v2914, 32
      %v3882 = vpop.permute.xlu0 %3881
      %3883 = vrot.lane.b32.xlu0 %v2915, 32
      %v3884 = vpop.permute.xlu0 %3883
      %3885 = vrot.lane.b32.xlu0 %v2916, 32
      %v3886 = vpop.permute.xlu0 %3885
      %3887 = vrot.lane.b32.xlu0 %v2917, 32
      %v3888 = vpop.permute.xlu0 %3887
      %3889 = vrot.lane.b32.xlu0 %v2918, 32
      %v3890 = vpop.permute.xlu0 %3889
      %3891 = vrot.lane.b32.xlu0 %v2919, 32
      %v3892 = vpop.permute.xlu0 %3891
      %3893 = vrot.lane.b32.xlu0 %v2920, 32
      %v3894 = vpop.permute.xlu0 %3893
      %3895 = vrot.lane.b32.xlu0 %v2921, 32
      %v3896 = vpop.permute.xlu0 %3895
      %3897 = vrot.lane.b32.xlu0 %v2922, 32
      %v3898 = vpop.permute.xlu0 %3897
      %3899 = vrot.lane.b32.xlu0 %v2923, 32
      %v3900 = vpop.permute.xlu0 %3899
      %3901 = vrot.lane.b32.xlu0 %v2924, 32
      %v3902 = vpop.permute.xlu0 %3901
      %3903 = vrot.lane.b32.xlu0 %v2925, 32
      %v3904 = vpop.permute.xlu0 %3903
      %3905 = vrot.lane.b32.xlu0 %v2926, 32
      %v3906 = vpop.permute.xlu0 %3905
      %3907 = vrot.lane.b32.xlu0 %v2927, 32
      %v3908 = vpop.permute.xlu0 %3907
      %3909 = vrot.lane.b32.xlu0 %v2928, 32
      %v3910 = vpop.permute.xlu0 %3909
      %3911 = vrot.lane.b32.xlu0 %v2929, 32
      %v3912 = vpop.permute.xlu0 %3911
      %3913 = vrot.lane.b32.xlu0 %v2930, 32
      %v3914 = vpop.permute.xlu0 %3913
      %3915 = vrot.lane.b32.xlu0 %v2931, 32
      %v3916 = vpop.permute.xlu0 %3915
      %3917 = vrot.lane.b32.xlu0 %v2932, 32
      %v3918 = vpop.permute.xlu0 %3917
      %3919 = vrot.lane.b32.xlu0 %v2933, 32
      %v3920 = vpop.permute.xlu0 %3919
      %3921 = vrot.lane.b32.xlu0 %v2934, 32
      %v3922 = vpop.permute.xlu0 %3921
      %3923 = vrot.lane.b32.xlu0 %v2935, 32
      %v3924 = vpop.permute.xlu0 %3923
      %3925 = vrot.lane.b32.xlu0 %v2936, 32
      %v3926 = vpop.permute.xlu0 %3925
      %3927 = vrot.lane.b32.xlu0 %v2937, 32
      %v3928 = vpop.permute.xlu0 %3927
      %3929 = vrot.lane.b32.xlu0 %v2938, 32
      %v3930 = vpop.permute.xlu0 %3929
      %v3963 = vsel %vm387, %v2650, %v2972
      %v3964 = vsel %vm387, %v2651, %v2974
      %v3965 = vsel %vm387, %v2652, %v2976
      %v3966 = vsel %vm387, %v2653, %v2978
      %v3967 = vsel %vm387, %v2654, %v2980
      %v3968 = vsel %vm387, %v2655, %v2982
      %v3969 = vsel %vm387, %v2656, %v2984
      %v3970 = vsel %vm387, %v2657, %v2986
      %v3971 = vsel %vm387, %v2658, %v2988
      %v3972 = vsel %vm387, %v2659, %v2990
      %v3973 = vsel %vm387, %v2660, %v2992
      %v3974 = vsel %vm387, %v2661, %v2994
      %v3975 = vsel %vm387, %v2662, %v2996
      %v3976 = vsel %vm387, %v2663, %v2998
      %v3977 = vsel %vm387, %v2664, %v3000
      %v3978 = vsel %vm387, %v2665, %v3002
      %v3979 = vsel %vm387, %v2666, %v3004
      %v3980 = vsel %vm387, %v2667, %v3006
      %v3981 = vsel %vm387, %v2668, %v3008
      %v3982 = vsel %vm387, %v2669, %v3010
      %v3983 = vsel %vm387, %v2670, %v3012
      %v3984 = vsel %vm387, %v2671, %v3014
      %v3985 = vsel %vm387, %v2672, %v3016
      %v3986 = vsel %vm387, %v2673, %v3018
      %v3987 = vsel %vm387, %v2674, %v3020
      %v3988 = vsel %vm387, %v2675, %v3022
      %v3989 = vsel %vm387, %v2676, %v3024
      %v3990 = vsel %vm387, %v2677, %v3026
      %v3991 = vsel %vm387, %v2678, %v3028
      %v3992 = vsel %vm387, %v2679, %v3030
      %v3993 = vsel %vm387, %v2680, %v3032
      %v3994 = vsel %vm387, %v2681, %v3034
      %v3995 = vsel %vm1919, %v3963, %v3100
      %v3996 = vsel %vm1919, %v3964, %v3102
      %v3997 = vsel %vm1919, %v3965, %v3104
      %v3998 = vsel %vm1919, %v3966, %v3106
      %v3999 = vsel %vm1919, %v3967, %v3108
      %v4000 = vsel %vm1919, %v3968, %v3110
      %v4001 = vsel %vm1919, %v3969, %v3112
      %v4002 = vsel %vm1919, %v3970, %v3114
      %v4003 = vsel %vm1919, %v3971, %v3116
      %v4004 = vsel %vm1919, %v3972, %v3118
      %v4005 = vsel %vm1919, %v3973, %v3120
      %v4006 = vsel %vm1919, %v3974, %v3122
      %v4007 = vsel %vm1919, %v3975, %v3124
      %v4008 = vsel %vm1919, %v3976, %v3126
      %v4009 = vsel %vm1919, %v3977, %v3128
      %v4010 = vsel %vm1919, %v3978, %v3130
      %v4011 = vsel %vm1919, %v3979, %v3132
      %v4012 = vsel %vm1919, %v3980, %v3134
      %v4013 = vsel %vm1919, %v3981, %v3136
      %v4014 = vsel %vm1919, %v3982, %v3138
      %v4015 = vsel %vm1919, %v3983, %v3140
      %v4016 = vsel %vm1919, %v3984, %v3142
      %v4017 = vsel %vm1919, %v3985, %v3144
      %v4018 = vsel %vm1919, %v3986, %v3146
      %v4019 = vsel %vm1919, %v3987, %v3148
      %v4020 = vsel %vm1919, %v3988, %v3150
      %v4021 = vsel %vm1919, %v3989, %v3152
      %v4022 = vsel %vm1919, %v3990, %v3154
      %v4023 = vsel %vm1919, %v3991, %v3156
      %v4024 = vsel %vm1919, %v3992, %v3158
      %v4025 = vsel %vm1919, %v3993, %v3160
      %v4026 = vsel %vm1919, %v3994, %v3162
      %vm4027 = vcmask 97280
      %v4028 = vsel %vm4027, %v3995, %v3228
      %v4029 = vsel %vm4027, %v3996, %v3230
      %v4030 = vsel %vm4027, %v3997, %v3232
      %v4031 = vsel %vm4027, %v3998, %v3234
      %v4032 = vsel %vm4027, %v3999, %v3236
      %v4033 = vsel %vm4027, %v4000, %v3238
      %v4034 = vsel %vm4027, %v4001, %v3240
      %v4035 = vsel %vm4027, %v4002, %v3242
      %v4036 = vsel %vm4027, %v4003, %v3244
      %v4037 = vsel %vm4027, %v4004, %v3246
      %v4038 = vsel %vm4027, %v4005, %v3248
      %v4039 = vsel %vm4027, %v4006, %v3250
      %v4040 = vsel %vm4027, %v4007, %v3252
      %v4041 = vsel %vm4027, %v4008, %v3254
      %v4042 = vsel %vm4027, %v4009, %v3256
      %v4043 = vsel %vm4027, %v4010, %v3258
      %v4044 = vsel %vm4027, %v4011, %v3260
      %v4045 = vsel %vm4027, %v4012, %v3262
      %v4046 = vsel %vm4027, %v4013, %v3264
      %v4047 = vsel %vm4027, %v4014, %v3266
      %v4048 = vsel %vm4027, %v4015, %v3268
      %v4049 = vsel %vm4027, %v4016, %v3270
      %v4050 = vsel %vm4027, %v4017, %v3272
      %v4051 = vsel %vm4027, %v4018, %v3274
      %v4052 = vsel %vm4027, %v4019, %v3276
      %v4053 = vsel %vm4027, %v4020, %v3278
      %v4054 = vsel %vm4027, %v4021, %v3280
      %v4055 = vsel %vm4027, %v4022, %v3282
      %v4056 = vsel %vm4027, %v4023, %v3284
      %v4057 = vsel %vm4027, %v4024, %v3286
      %v4058 = vsel %vm4027, %v4025, %v3288
      %v4059 = vsel %vm4027, %v4026, %v3290
      %v4060 = vsel %vm1952, %v4028, %v3356
      %v4061 = vsel %vm1952, %v4029, %v3358
      %v4062 = vsel %vm1952, %v4030, %v3360
      %v4063 = vsel %vm1952, %v4031, %v3362
      %v4064 = vsel %vm1952, %v4032, %v3364
      %v4065 = vsel %vm1952, %v4033, %v3366
      %v4066 = vsel %vm1952, %v4034, %v3368
      %v4067 = vsel %vm1952, %v4035, %v3370
      %v4068 = vsel %vm1952, %v4036, %v3372
      %v4069 = vsel %vm1952, %v4037, %v3374
      %v4070 = vsel %vm1952, %v4038, %v3376
      %v4071 = vsel %vm1952, %v4039, %v3378
      %v4072 = vsel %vm1952, %v4040, %v3380
      %v4073 = vsel %vm1952, %v4041, %v3382
      %v4074 = vsel %vm1952, %v4042, %v3384
      %v4075 = vsel %vm1952, %v4043, %v3386
      %v4076 = vsel %vm1952, %v4044, %v3388
      %v4077 = vsel %vm1952, %v4045, %v3390
      %v4078 = vsel %vm1952, %v4046, %v3392
      %v4079 = vsel %vm1952, %v4047, %v3394
      %v4080 = vsel %vm1952, %v4048, %v3396
      %v4081 = vsel %vm1952, %v4049, %v3398
      %v4082 = vsel %vm1952, %v4050, %v3400
      %v4083 = vsel %vm1952, %v4051, %v3402
      %v4084 = vsel %vm1952, %v4052, %v3404
      %v4085 = vsel %vm1952, %v4053, %v3406
      %v4086 = vsel %vm1952, %v4054, %v3408
      %v4087 = vsel %vm1952, %v4055, %v3410
      %v4088 = vsel %vm1952, %v4056, %v3412
      %v4089 = vsel %vm1952, %v4057, %v3414
      %v4090 = vsel %vm1952, %v4058, %v3416
      %v4091 = vsel %vm1952, %v4059, %v3418
      %vm4092 = vcmask 162816
      %v4093 = vsel %vm4092, %v4060, %v3484
      %v4094 = vsel %vm4092, %v4061, %v3486
      %v4095 = vsel %vm4092, %v4062, %v3488
      %v4096 = vsel %vm4092, %v4063, %v3490
      %v4097 = vsel %vm4092, %v4064, %v3492
      %v4098 = vsel %vm4092, %v4065, %v3494
      %v4099 = vsel %vm4092, %v4066, %v3496
      %v4100 = vsel %vm4092, %v4067, %v3498
      %v4101 = vsel %vm4092, %v4068, %v3500
      %v4102 = vsel %vm4092, %v4069, %v3502
      %v4103 = vsel %vm4092, %v4070, %v3504
      %v4104 = vsel %vm4092, %v4071, %v3506
      %v4105 = vsel %vm4092, %v4072, %v3508
      %v4106 = vsel %vm4092, %v4073, %v3510
      %v4107 = vsel %vm4092, %v4074, %v3512
      %v4108 = vsel %vm4092, %v4075, %v3514
      %v4109 = vsel %vm4092, %v4076, %v3516
      %v4110 = vsel %vm4092, %v4077, %v3518
      %v4111 = vsel %vm4092, %v4078, %v3520
      %v4112 = vsel %vm4092, %v4079, %v3522
      %v4113 = vsel %vm4092, %v4080, %v3524
      %v4114 = vsel %vm4092, %v4081, %v3526
      %v4115 = vsel %vm4092, %v4082, %v3528
      %v4116 = vsel %vm4092, %v4083, %v3530
      %v4117 = vsel %vm4092, %v4084, %v3532
      %v4118 = vsel %vm4092, %v4085, %v3534
      %v4119 = vsel %vm4092, %v4086, %v3536
      %v4120 = vsel %vm4092, %v4087, %v3538
      %v4121 = vsel %vm4092, %v4088, %v3540
      %v4122 = vsel %vm4092, %v4089, %v3542
      %v4123 = vsel %vm4092, %v4090, %v3544
      %v4124 = vsel %vm4092, %v4091, %v3546
      %v4125 = vsel %vm1985, %v4093, %v3612
      %v4126 = vsel %vm1985, %v4094, %v3614
      %v4127 = vsel %vm1985, %v4095, %v3616
      %v4128 = vsel %vm1985, %v4096, %v3618
      %v4129 = vsel %vm1985, %v4097, %v3620
      %v4130 = vsel %vm1985, %v4098, %v3622
      %v4131 = vsel %vm1985, %v4099, %v3624
      %v4132 = vsel %vm1985, %v4100, %v3626
      %v4133 = vsel %vm1985, %v4101, %v3628
      %v4134 = vsel %vm1985, %v4102, %v3630
      %v4135 = vsel %vm1985, %v4103, %v3632
      %v4136 = vsel %vm1985, %v4104, %v3634
      %v4137 = vsel %vm1985, %v4105, %v3636
      %v4138 = vsel %vm1985, %v4106, %v3638
      %v4139 = vsel %vm1985, %v4107, %v3640
      %v4140 = vsel %vm1985, %v4108, %v3642
      %v4141 = vsel %vm1985, %v4109, %v3644
      %v4142 = vsel %vm1985, %v4110, %v3646
      %v4143 = vsel %vm1985, %v4111, %v3648
      %v4144 = vsel %vm1985, %v4112, %v3650
      %v4145 = vsel %vm1985, %v4113, %v3652
      %v4146 = vsel %vm1985, %v4114, %v3654
      %v4147 = vsel %vm1985, %v4115, %v3656
      %v4148 = vsel %vm1985, %v4116, %v3658
      %v4149 = vsel %vm1985, %v4117, %v3660
      %v4150 = vsel %vm1985, %v4118, %v3662
      %v4151 = vsel %vm1985, %v4119, %v3664
      %v4152 = vsel %vm1985, %v4120, %v3666
      %v4153 = vsel %vm1985, %v4121, %v3668
      %v4154 = vsel %vm1985, %v4122, %v3670
      %v4155 = vsel %vm1985, %v4123, %v3672
      %v4156 = vsel %vm1985, %v4124, %v3674
      %vm4157 = vcmask 228352
      %v4158 = vsel %vm4157, %v4125, %v3740
      %v4159 = vsel %vm4157, %v4126, %v3742
      %v4160 = vsel %vm4157, %v4127, %v3744
      %v4161 = vsel %vm4157, %v4128, %v3746
      %v4162 = vsel %vm4157, %v4129, %v3748
      %v4163 = vsel %vm4157, %v4130, %v3750
      %v4164 = vsel %vm4157, %v4131, %v3752
      %v4165 = vsel %vm4157, %v4132, %v3754
      %v4166 = vsel %vm4157, %v4133, %v3756
      %v4167 = vsel %vm4157, %v4134, %v3758
      %v4168 = vsel %vm4157, %v4135, %v3760
      %v4169 = vsel %vm4157, %v4136, %v3762
      %v4170 = vsel %vm4157, %v4137, %v3764
      %v4171 = vsel %vm4157, %v4138, %v3766
      %v4172 = vsel %vm4157, %v4139, %v3768
      %v4173 = vsel %vm4157, %v4140, %v3770
      %v4174 = vsel %vm4157, %v4141, %v3772
      %v4175 = vsel %vm4157, %v4142, %v3774
      %v4176 = vsel %vm4157, %v4143, %v3776
      %v4177 = vsel %vm4157, %v4144, %v3778
      %v4178 = vsel %vm4157, %v4145, %v3780
      %v4179 = vsel %vm4157, %v4146, %v3782
      %v4180 = vsel %vm4157, %v4147, %v3784
      %v4181 = vsel %vm4157, %v4148, %v3786
      %v4182 = vsel %vm4157, %v4149, %v3788
      %v4183 = vsel %vm4157, %v4150, %v3790
      %v4184 = vsel %vm4157, %v4151, %v3792
      %v4185 = vsel %vm4157, %v4152, %v3794
      %v4186 = vsel %vm4157, %v4153, %v3796
      %v4187 = vsel %vm4157, %v4154, %v3798
      %v4188 = vsel %vm4157, %v4155, %v3800
      %v4189 = vsel %vm4157, %v4156, %v3802
      %v4190 = vsel %vm2018, %v4158, %v3868
      %v4191 = vsel %vm2018, %v4159, %v3870
      %v4192 = vsel %vm2018, %v4160, %v3872
      %v4193 = vsel %vm2018, %v4161, %v3874
      %v4194 = vsel %vm2018, %v4162, %v3876
      %v4195 = vsel %vm2018, %v4163, %v3878
      %v4196 = vsel %vm2018, %v4164, %v3880
      %v4197 = vsel %vm2018, %v4165, %v3882
      %v4198 = vsel %vm2018, %v4166, %v3884
      %v4199 = vsel %vm2018, %v4167, %v3886
      %v4200 = vsel %vm2018, %v4168, %v3888
      %v4201 = vsel %vm2018, %v4169, %v3890
      %v4202 = vsel %vm2018, %v4170, %v3892
      %v4203 = vsel %vm2018, %v4171, %v3894
      %v4204 = vsel %vm2018, %v4172, %v3896
      %v4205 = vsel %vm2018, %v4173, %v3898
      %v4206 = vsel %vm2018, %v4174, %v3900
      %v4207 = vsel %vm2018, %v4175, %v3902
      %v4208 = vsel %vm2018, %v4176, %v3904
      %v4209 = vsel %vm2018, %v4177, %v3906
      %v4210 = vsel %vm2018, %v4178, %v3908
      %v4211 = vsel %vm2018, %v4179, %v3910
      %v4212 = vsel %vm2018, %v4180, %v3912
      %v4213 = vsel %vm2018, %v4181, %v3914
      %v4214 = vsel %vm2018, %v4182, %v3916
      %v4215 = vsel %vm2018, %v4183, %v3918
      %v4216 = vsel %vm2018, %v4184, %v3920
      %v4217 = vsel %vm2018, %v4185, %v3922
      %v4218 = vsel %vm2018, %v4186, %v3924
      %v4219 = vsel %vm2018, %v4187, %v3926
      %v4220 = vsel %vm2018, %v4188, %v3928
      %v4221 = vsel %vm2018, %v4189, %v3930
      %4254 = vrot.lane.b32.xlu0 %v4190, 72
      %v4255 = vpop.permute.xlu0 %4254
      %4256 = vrot.lane.b32.xlu0 %v4191, 72
      %v4257 = vpop.permute.xlu0 %4256
      %4258 = vrot.lane.b32.xlu0 %v4192, 72
      %v4259 = vpop.permute.xlu0 %4258
      %4260 = vrot.lane.b32.xlu0 %v4193, 72
      %v4261 = vpop.permute.xlu0 %4260
      %4262 = vrot.lane.b32.xlu0 %v4194, 72
      %v4263 = vpop.permute.xlu0 %4262
      %4264 = vrot.lane.b32.xlu0 %v4195, 72
      %v4265 = vpop.permute.xlu0 %4264
      %4266 = vrot.lane.b32.xlu0 %v4196, 72
      %v4267 = vpop.permute.xlu0 %4266
      %4268 = vrot.lane.b32.xlu0 %v4197, 72
      %v4269 = vpop.permute.xlu0 %4268
      %4270 = vrot.lane.b32.xlu0 %v4198, 72
      %v4271 = vpop.permute.xlu0 %4270
      %4272 = vrot.lane.b32.xlu0 %v4199, 72
      %v4273 = vpop.permute.xlu0 %4272
      %4274 = vrot.lane.b32.xlu0 %v4200, 72
      %v4275 = vpop.permute.xlu0 %4274
      %4276 = vrot.lane.b32.xlu0 %v4201, 72
      %v4277 = vpop.permute.xlu0 %4276
      %4278 = vrot.lane.b32.xlu0 %v4202, 72
      %v4279 = vpop.permute.xlu0 %4278
      %4280 = vrot.lane.b32.xlu0 %v4203, 72
      %v4281 = vpop.permute.xlu0 %4280
      %4282 = vrot.lane.b32.xlu0 %v4204, 72
      %v4283 = vpop.permute.xlu0 %4282
      %4284 = vrot.lane.b32.xlu0 %v4205, 72
      %v4285 = vpop.permute.xlu0 %4284
      %4286 = vrot.lane.b32.xlu0 %v4206, 72
      %v4287 = vpop.permute.xlu0 %4286
      %4288 = vrot.lane.b32.xlu0 %v4207, 72
      %v4289 = vpop.permute.xlu0 %4288
      %4290 = vrot.lane.b32.xlu0 %v4208, 72
      %v4291 = vpop.permute.xlu0 %4290
      %4292 = vrot.lane.b32.xlu0 %v4209, 72
      %v4293 = vpop.permute.xlu0 %4292
      %4294 = vrot.lane.b32.xlu0 %v4210, 72
      %v4295 = vpop.permute.xlu0 %4294
      %4296 = vrot.lane.b32.xlu0 %v4211, 72
      %v4297 = vpop.permute.xlu0 %4296
      %4298 = vrot.lane.b32.xlu0 %v4212, 72
      %v4299 = vpop.permute.xlu0 %4298
      %4300 = vrot.lane.b32.xlu0 %v4213, 72
      %v4301 = vpop.permute.xlu0 %4300
      %4302 = vrot.lane.b32.xlu0 %v4214, 72
      %v4303 = vpop.permute.xlu0 %4302
      %4304 = vrot.lane.b32.xlu0 %v4215, 72
      %v4305 = vpop.permute.xlu0 %4304
      %4306 = vrot.lane.b32.xlu0 %v4216, 72
      %v4307 = vpop.permute.xlu0 %4306
      %4308 = vrot.lane.b32.xlu0 %v4217, 72
      %v4309 = vpop.permute.xlu0 %4308
      %4310 = vrot.lane.b32.xlu0 %v4218, 72
      %v4311 = vpop.permute.xlu0 %4310
      %4312 = vrot.lane.b32.xlu0 %v4219, 72
      %v4313 = vpop.permute.xlu0 %4312
      %4314 = vrot.lane.b32.xlu0 %v4220, 72
      %v4315 = vpop.permute.xlu0 %4314
      %4316 = vrot.lane.b32.xlu0 %v4221, 72
      %v4317 = vpop.permute.xlu0 %4316
      %v4350 = vsel %vm2199, %v2151, %v4255
      %v4351 = vsel %vm2199, %v2152, %v4257
      %v4352 = vsel %vm2199, %v2153, %v4259
      %v4353 = vsel %vm2199, %v2154, %v4261
      %v4354 = vsel %vm2199, %v2155, %v4263
      %v4355 = vsel %vm2199, %v2156, %v4265
      %v4356 = vsel %vm2199, %v2157, %v4267
      %v4357 = vsel %vm2199, %v2158, %v4269
      %v4358 = vsel %vm2199, %v2159, %v4271
      %v4359 = vsel %vm2199, %v2160, %v4273
      %v4360 = vsel %vm2199, %v2161, %v4275
      %v4361 = vsel %vm2199, %v2162, %v4277
      %v4362 = vsel %vm2199, %v2163, %v4279
      %v4363 = vsel %vm2199, %v2164, %v4281
      %v4364 = vsel %vm2199, %v2165, %v4283
      %v4365 = vsel %vm2199, %v2166, %v4285
      %v4366 = vsel %vm2199, %v2167, %v4287
      %v4367 = vsel %vm2199, %v2168, %v4289
      %v4368 = vsel %vm2199, %v2169, %v4291
      %v4369 = vsel %vm2199, %v2170, %v4293
      %v4370 = vsel %vm2199, %v2171, %v4295
      %v4371 = vsel %vm2199, %v2172, %v4297
      %v4372 = vsel %vm2199, %v2173, %v4299
      %v4373 = vsel %vm2199, %v2174, %v4301
      %v4374 = vsel %vm2199, %v2175, %v4303
      %v4375 = vsel %vm2199, %v2176, %v4305
      %v4376 = vsel %vm2199, %v2177, %v4307
      %v4377 = vsel %vm2199, %v2178, %v4309
      %v4378 = vsel %vm2199, %v2179, %v4311
      %v4379 = vsel %vm2199, %v2180, %v4313
      %v4380 = vsel %vm2199, %v2181, %v4315
      %v4381 = vsel %vm2199, %v2182, %v4317
      %v4382 = vld [vmem:[%s2] sm:$0xff]
      %v4383 = vld [vmem:[%s2 + $0x8] sm:$0xff]
      %v4384 = vld [vmem:[%s2 + $0x10] sm:$0xff]
      %v4385 = vld [vmem:[%s2 + $0x18] sm:$0xff]
      %v4386 = vld [vmem:[%s2 + $0x20] sm:$0xff]
      %v4387 = vld [vmem:[%s2 + $0x28] sm:$0xff]
      %v4388 = vld [vmem:[%s2 + $0x30] sm:$0xff]
      %v4389 = vld [vmem:[%s2 + $0x38] sm:$0xff]
      %v4390 = vld [vmem:[%s2 + $0x40] sm:$0xff]
      %v4391 = vld [vmem:[%s2 + $0x48] sm:$0xff]
      %v4392 = vld [vmem:[%s2 + $0x50] sm:$0xff]
      %v4393 = vld [vmem:[%s2 + $0x58] sm:$0xff]
      %v4394 = vld [vmem:[%s2 + $0x60] sm:$0xff]
      %v4395 = vld [vmem:[%s2 + $0x68] sm:$0xf]
      %v4396 = vld [vmem:[%s7] sm:$0x1]
      %v4398 = vlaneseq
      %v4399 = vshrl.u32 %v4398, 7
      %v4400 = vsub.s32 0, %v4399
      %v4401 = vrot.slane %v4396, %v4400
      %vm4403 = vcmask 883712
      %v4405 = vsel %vm4403, %v4350, 0
      %v4408 = vsel %vm4403, %v4351, 0
      %v4411 = vsel %vm4403, %v4352, 0
      %v4414 = vsel %vm4403, %v4353, 0
      %v4417 = vsel %vm4403, %v4354, 0
      %v4420 = vsel %vm4403, %v4355, 0
      %v4423 = vsel %vm4403, %v4356, 0
      %v4426 = vsel %vm4403, %v4357, 0
      %v4429 = vsel %vm4403, %v4358, 0
      %v4432 = vsel %vm4403, %v4359, 0
      %v4435 = vsel %vm4403, %v4360, 0
      %v4438 = vsel %vm4403, %v4361, 0
      %v4441 = vsel %vm4403, %v4362, 0
      %v4444 = vsel %vm4403, %v4363, 0
      %v4447 = vsel %vm4403, %v4364, 0
      %v4450 = vsel %vm4403, %v4365, 0
      %v4453 = vsel %vm4403, %v4366, 0
      %v4456 = vsel %vm4403, %v4367, 0
      %v4459 = vsel %vm4403, %v4368, 0
      %v4462 = vsel %vm4403, %v4369, 0
      %v4465 = vsel %vm4403, %v4370, 0
      %v4468 = vsel %vm4403, %v4371, 0
      %v4471 = vsel %vm4403, %v4372, 0
      %v4474 = vsel %vm4403, %v4373, 0
      %v4477 = vsel %vm4403, %v4374, 0
      %v4480 = vsel %vm4403, %v4375, 0
      %v4483 = vsel %vm4403, %v4376, 0
      %v4486 = vsel %vm4403, %v4377, 0
      %v4489 = vsel %vm4403, %v4378, 0
      %v4492 = vsel %vm4403, %v4379, 0
      %v4495 = vsel %vm4403, %v4380, 0
      %v4498 = vsel %vm4403, %v4381, 0
      %vm4500 = vcmask 1043456
      %v4502 = vsel %vm4500, %v4395, 0
      %4504 = vmatprep.subr.mxu0 0.0
      %4505 = vmatpush1.msra.mxu0 0.0
      %4506 = vmatprep.subr.mxu0 0.0
      %4507 = vmatpush1.msra.mxu0 0.0
      %4508 = vmatprep.subr.mxu0 0.0
      %4509 = vmatpush1.msra.mxu0 %v4502
      %4510 = vmatprep.subr.mxu0 0.0
      %4511 = vmatpush1.msra.mxu0 %v4394
      %4512 = vmatprep.subr.mxu0 0.0
      %4513 = vmatpush1.msra.mxu0 %v4393
      %4514 = vmatprep.subr.mxu0 0.0
      %4515 = vmatpush1.msra.mxu0 %v4392
      %4516 = vmatprep.subr.mxu0 0.0
      %4517 = vmatpush1.msra.mxu0 %v4391
      %4518 = vmatprep.subr.mxu0 0.0
      %4519 = vmatpush1.msra.mxu0 %v4390
      %4520 = vmatprep.subr.mxu0 0.0
      %4521 = vmatpush1.msra.mxu0 %v4389
      %4522 = vmatprep.subr.mxu0 0.0
      %4523 = vmatpush1.msra.mxu0 %v4388
      %4524 = vmatprep.subr.mxu0 0.0
      %4525 = vmatpush1.msra.mxu0 %v4387
      %4526 = vmatprep.subr.mxu0 0.0
      %4527 = vmatpush1.msra.mxu0 %v4386
      %4528 = vmatprep.subr.mxu0 0.0
      %4529 = vmatpush1.msra.mxu0 %v4385
      %4530 = vmatprep.subr.mxu0 0.0
      %4531 = vmatpush1.msra.mxu0 %v4384
      %4532 = vmatprep.subr.mxu0 0.0
      %4533 = vmatpush1.msra.mxu0 %v4383
      %4534 = vmatprep.subr.mxu0 0.0
      %4535 = vmatpush1.msra.mxu0 %v4382
      %4536 = vmatprep.subr.mxu0 0.0
      %4537 = vmatpush2.msra.mxu0 0.0
      %4538 = vmatprep.subr.mxu0 0.0
      %4539 = vmatpush2.msra.mxu0 0.0
      %4540 = vmatprep.subr.mxu0 0.0
      %4541 = vmatpush2.msra.mxu0 0.0
      %4542 = vmatprep.subr.mxu0 0.0
      %4543 = vmatpush2.msra.mxu0 0.0
      %4544 = vmatprep.subr.mxu0 0.0
      %4545 = vmatpush2.msra.mxu0 0.0
      %4546 = vmatprep.subr.mxu0 0.0
      %4547 = vmatpush2.msra.mxu0 0.0
      %4548 = vmatprep.subr.mxu0 0.0
      %4549 = vmatpush2.msra.mxu0 0.0
      %4550 = vmatprep.subr.mxu0 0.0
      %4551 = vmatpush2.msra.mxu0 0.0
      %4552 = vmatprep.subr.mxu0 0.0
      %4553 = vmatpush2.msra.mxu0 0.0
      %4554 = vmatprep.subr.mxu0 0.0
      %4555 = vmatpush2.msra.mxu0 0.0
      %4556 = vmatprep.subr.mxu0 0.0
      %4557 = vmatpush2.msra.mxu0 0.0
      %4558 = vmatprep.subr.mxu0 0.0
      %4559 = vmatpush2.msra.mxu0 0.0
      %4560 = vmatprep.subr.mxu0 0.0
      %4561 = vmatpush2.msra.mxu0 0.0
      %4562 = vmatprep.subr.mxu0 0.0
      %4563 = vmatpush2.msra.mxu0 0.0
      %4564 = vmatprep.subr.mxu0 0.0
      %4565 = vmatpush2.msra.mxu0 0.0
      %4566 = vmatprep.subr.mxu0 0.0
      %4567 = vmatpush2.msra.mxu0 0.0
      %4568 = vmatprep.mubr.f32.mxu0 0.0
      %4569 = vmatmul.mubr.f32.gmra.mxu0 %v4405
      %v4570 = vpop.f32.mrf.mxu0
      %v4571 = vadd.f32 %v4401, %v4570
      %v4572 = vpop.f32.mrf.mxu0
      %4573 = vmatprep.mubr.f32.mxu0 0.0
      %4574 = vmatmul.mubr.f32.gmra.mxu0 %v4408
      %v4575 = vpop.f32.mrf.mxu0
      %v4576 = vadd.f32 %v4401, %v4575
      %v4577 = vpop.f32.mrf.mxu0
      %4578 = vmatprep.mubr.f32.mxu0 0.0
      %4579 = vmatmul.mubr.f32.gmra.mxu0 %v4411
      %v4580 = vpop.f32.mrf.mxu0
      %v4581 = vadd.f32 %v4401, %v4580
      %v4582 = vpop.f32.mrf.mxu0
      %4583 = vmatprep.mubr.f32.mxu0 0.0
      %4584 = vmatmul.mubr.f32.gmra.mxu0 %v4414
      %v4585 = vpop.f32.mrf.mxu0
      %v4586 = vadd.f32 %v4401, %v4585
      %v4587 = vpop.f32.mrf.mxu0
      %4588 = vmatprep.mubr.f32.mxu0 0.0
      %4589 = vmatmul.mubr.f32.gmra.mxu0 %v4417
      %v4590 = vpop.f32.mrf.mxu0
      %v4591 = vadd.f32 %v4401, %v4590
      %v4592 = vpop.f32.mrf.mxu0
      %4593 = vmatprep.mubr.f32.mxu0 0.0
      %4594 = vmatmul.mubr.f32.gmra.mxu0 %v4420
      %v4595 = vpop.f32.mrf.mxu0
      %v4596 = vadd.f32 %v4401, %v4595
      %v4597 = vpop.f32.mrf.mxu0
      %4598 = vmatprep.mubr.f32.mxu0 0.0
      %4599 = vmatmul.mubr.f32.gmra.mxu0 %v4423
      %v4600 = vpop.f32.mrf.mxu0
      %v4601 = vadd.f32 %v4401, %v4600
      %v4602 = vpop.f32.mrf.mxu0
      %4603 = vmatprep.mubr.f32.mxu0 0.0
      %4604 = vmatmul.mubr.f32.gmra.mxu0 %v4426
      %v4605 = vpop.f32.mrf.mxu0
      %v4606 = vadd.f32 %v4401, %v4605
      %v4607 = vpop.f32.mrf.mxu0
      %4608 = vmatprep.mubr.f32.mxu0 0.0
      %4609 = vmatmul.mubr.f32.gmra.mxu0 %v4429
      %v4610 = vpop.f32.mrf.mxu0
      %v4611 = vadd.f32 %v4401, %v4610
      %v4612 = vpop.f32.mrf.mxu0
      %4613 = vmatprep.mubr.f32.mxu0 0.0
      %4614 = vmatmul.mubr.f32.gmra.mxu0 %v4432
      %v4615 = vpop.f32.mrf.mxu0
      %v4616 = vadd.f32 %v4401, %v4615
      %v4617 = vpop.f32.mrf.mxu0
      %4618 = vmatprep.mubr.f32.mxu0 0.0
      %4619 = vmatmul.mubr.f32.gmra.mxu0 %v4435
      %v4620 = vpop.f32.mrf.mxu0
      %v4621 = vadd.f32 %v4401, %v4620
      %v4622 = vpop.f32.mrf.mxu0
      %4623 = vmatprep.mubr.f32.mxu0 0.0
      %4624 = vmatmul.mubr.f32.gmra.mxu0 %v4438
      %v4625 = vpop.f32.mrf.mxu0
      %v4626 = vadd.f32 %v4401, %v4625
      %v4627 = vpop.f32.mrf.mxu0
      %4628 = vmatprep.mubr.f32.mxu0 0.0
      %4629 = vmatmul.mubr.f32.gmra.mxu0 %v4441
      %v4630 = vpop.f32.mrf.mxu0
      %v4631 = vadd.f32 %v4401, %v4630
      %v4632 = vpop.f32.mrf.mxu0
      %4633 = vmatprep.mubr.f32.mxu0 0.0
      %4634 = vmatmul.mubr.f32.gmra.mxu0 %v4444
      %v4635 = vpop.f32.mrf.mxu0
      %v4636 = vadd.f32 %v4401, %v4635
      %v4637 = vpop.f32.mrf.mxu0
      %4638 = vmatprep.mubr.f32.mxu0 0.0
      %4639 = vmatmul.mubr.f32.gmra.mxu0 %v4447
      %v4640 = vpop.f32.mrf.mxu0
      %v4641 = vadd.f32 %v4401, %v4640
      %v4642 = vpop.f32.mrf.mxu0
      %4643 = vmatprep.mubr.f32.mxu0 0.0
      %4644 = vmatmul.mubr.f32.gmra.mxu0 %v4450
      %v4645 = vpop.f32.mrf.mxu0
      %v4646 = vadd.f32 %v4401, %v4645
      %v4647 = vpop.f32.mrf.mxu0
      %4648 = vmatprep.mubr.f32.mxu0 0.0
      %4649 = vmatmul.mubr.f32.gmra.mxu0 %v4453
      %v4650 = vpop.f32.mrf.mxu0
      %v4651 = vadd.f32 %v4401, %v4650
      %v4652 = vpop.f32.mrf.mxu0
      %4653 = vmatprep.mubr.f32.mxu0 0.0
      %4654 = vmatmul.mubr.f32.gmra.mxu0 %v4456
      %v4655 = vpop.f32.mrf.mxu0
      %v4656 = vadd.f32 %v4401, %v4655
      %v4657 = vpop.f32.mrf.mxu0
      %4658 = vmatprep.mubr.f32.mxu0 0.0
      %4659 = vmatmul.mubr.f32.gmra.mxu0 %v4459
      %v4660 = vpop.f32.mrf.mxu0
      %v4661 = vadd.f32 %v4401, %v4660
      %v4662 = vpop.f32.mrf.mxu0
      %4663 = vmatprep.mubr.f32.mxu0 0.0
      %4664 = vmatmul.mubr.f32.gmra.mxu0 %v4462
      %v4665 = vpop.f32.mrf.mxu0
      %v4666 = vadd.f32 %v4401, %v4665
      %v4667 = vpop.f32.mrf.mxu0
      %4668 = vmatprep.mubr.f32.mxu0 0.0
      %4669 = vmatmul.mubr.f32.gmra.mxu0 %v4465
      %v4670 = vpop.f32.mrf.mxu0
      %v4671 = vadd.f32 %v4401, %v4670
      %v4672 = vpop.f32.mrf.mxu0
      %4673 = vmatprep.mubr.f32.mxu0 0.0
      %4674 = vmatmul.mubr.f32.gmra.mxu0 %v4468
      %v4675 = vpop.f32.mrf.mxu0
      %v4676 = vadd.f32 %v4401, %v4675
      %v4677 = vpop.f32.mrf.mxu0
      %4678 = vmatprep.mubr.f32.mxu0 0.0
      %4679 = vmatmul.mubr.f32.gmra.mxu0 %v4471
      %v4680 = vpop.f32.mrf.mxu0
      %v4681 = vadd.f32 %v4401, %v4680
      %v4682 = vpop.f32.mrf.mxu0
      %4683 = vmatprep.mubr.f32.mxu0 0.0
      %4684 = vmatmul.mubr.f32.gmra.mxu0 %v4474
      %v4685 = vpop.f32.mrf.mxu0
      %v4686 = vadd.f32 %v4401, %v4685
      %v4687 = vpop.f32.mrf.mxu0
      %4688 = vmatprep.mubr.f32.mxu0 0.0
      %4689 = vmatmul.mubr.f32.gmra.mxu0 %v4477
      %v4690 = vpop.f32.mrf.mxu0
      %v4691 = vadd.f32 %v4401, %v4690
      %v4692 = vpop.f32.mrf.mxu0
      %4693 = vmatprep.mubr.f32.mxu0 0.0
      %4694 = vmatmul.mubr.f32.gmra.mxu0 %v4480
      %v4695 = vpop.f32.mrf.mxu0
      %v4696 = vadd.f32 %v4401, %v4695
      %v4697 = vpop.f32.mrf.mxu0
      %4698 = vmatprep.mubr.f32.mxu0 0.0
      %4699 = vmatmul.mubr.f32.gmra.mxu0 %v4483
      %v4700 = vpop.f32.mrf.mxu0
      %v4701 = vadd.f32 %v4401, %v4700
      %v4702 = vpop.f32.mrf.mxu0
      %4703 = vmatprep.mubr.f32.mxu0 0.0
      %4704 = vmatmul.mubr.f32.gmra.mxu0 %v4486
      %v4705 = vpop.f32.mrf.mxu0
      %v4706 = vadd.f32 %v4401, %v4705
      %v4707 = vpop.f32.mrf.mxu0
      %4708 = vmatprep.mubr.f32.mxu0 0.0
      %4709 = vmatmul.mubr.f32.gmra.mxu0 %v4489
      %v4710 = vpop.f32.mrf.mxu0
      %v4711 = vadd.f32 %v4401, %v4710
      %v4712 = vpop.f32.mrf.mxu0
      %4713 = vmatprep.mubr.f32.mxu0 0.0
      %4714 = vmatmul.mubr.f32.gmra.mxu0 %v4492
      %v4715 = vpop.f32.mrf.mxu0
      %v4716 = vadd.f32 %v4401, %v4715
      %v4717 = vpop.f32.mrf.mxu0
      %4718 = vmatprep.mubr.f32.mxu0 0.0
      %4719 = vmatmul.mubr.f32.gmra.mxu0 %v4495
      %v4720 = vpop.f32.mrf.mxu0
      %v4721 = vadd.f32 %v4401, %v4720
      %v4722 = vpop.f32.mrf.mxu0
      %4723 = vmatprep.mubr.f32.mxu0 0.0
      %4724 = vmatmul.mubr.f32.gmra.mxu0 %v4498
      %v4725 = vpop.f32.mrf.mxu0
      %v4726 = vadd.f32 %v4401, %v4725
      %v4727 = vpop.f32.mrf.mxu0
      %4728 = vdwg.mxu0
      %vm4729 = vcmp.gt.f32.partialorder %v4571, 0.0
      %vm4730 = vcmp.gt.f32.partialorder %v4576, 0.0
      %vm4731 = vcmp.gt.f32.partialorder %v4581, 0.0
      %vm4732 = vcmp.gt.f32.partialorder %v4586, 0.0
      %vm4733 = vcmp.gt.f32.partialorder %v4591, 0.0
      %vm4734 = vcmp.gt.f32.partialorder %v4596, 0.0
      %vm4735 = vcmp.gt.f32.partialorder %v4601, 0.0
      %vm4736 = vcmp.gt.f32.partialorder %v4606, 0.0
      %vm4737 = vcmp.gt.f32.partialorder %v4611, 0.0
      %vm4738 = vcmp.gt.f32.partialorder %v4616, 0.0
      %vm4739 = vcmp.gt.f32.partialorder %v4621, 0.0
      %vm4740 = vcmp.gt.f32.partialorder %v4626, 0.0
      %vm4741 = vcmp.gt.f32.partialorder %v4631, 0.0
      %vm4742 = vcmp.gt.f32.partialorder %v4636, 0.0
      %vm4743 = vcmp.gt.f32.partialorder %v4641, 0.0
      %vm4744 = vcmp.gt.f32.partialorder %v4646, 0.0
      %vm4745 = vcmp.gt.f32.partialorder %v4651, 0.0
      %vm4746 = vcmp.gt.f32.partialorder %v4656, 0.0
      %vm4747 = vcmp.gt.f32.partialorder %v4661, 0.0
      %vm4748 = vcmp.gt.f32.partialorder %v4666, 0.0
      %vm4749 = vcmp.gt.f32.partialorder %v4671, 0.0
      %vm4750 = vcmp.gt.f32.partialorder %v4676, 0.0
      %vm4751 = vcmp.gt.f32.partialorder %v4681, 0.0
      %vm4752 = vcmp.gt.f32.partialorder %v4686, 0.0
      %vm4753 = vcmp.gt.f32.partialorder %v4691, 0.0
      %vm4754 = vcmp.gt.f32.partialorder %v4696, 0.0
      %vm4755 = vcmp.gt.f32.partialorder %v4701, 0.0
      %vm4756 = vcmp.gt.f32.partialorder %v4706, 0.0
      %vm4757 = vcmp.gt.f32.partialorder %v4711, 0.0
      %vm4758 = vcmp.gt.f32.partialorder %v4716, 0.0
      %vm4759 = vcmp.gt.f32.partialorder %v4721, 0.0
      %vm4760 = vcmp.gt.f32.partialorder %v4726, 0.0
      %v4761 = vmul.f32 %v4571, 0.2
      %v4762 = vmul.f32 %v4576, 0.2
      %v4763 = vmul.f32 %v4581, 0.2
      %v4764 = vmul.f32 %v4586, 0.2
      %v4765 = vmul.f32 %v4591, 0.2
      %v4766 = vmul.f32 %v4596, 0.2
      %v4767 = vmul.f32 %v4601, 0.2
      %v4768 = vmul.f32 %v4606, 0.2
      %v4769 = vmul.f32 %v4611, 0.2
      %v4770 = vmul.f32 %v4616, 0.2
      %v4771 = vmul.f32 %v4621, 0.2
      %v4772 = vmul.f32 %v4626, 0.2
      %v4773 = vmul.f32 %v4631, 0.2
      %v4774 = vmul.f32 %v4636, 0.2
      %v4775 = vmul.f32 %v4641, 0.2
      %v4776 = vmul.f32 %v4646, 0.2
      %v4777 = vmul.f32 %v4651, 0.2
      %v4778 = vmul.f32 %v4656, 0.2
      %v4779 = vmul.f32 %v4661, 0.2
      %v4780 = vmul.f32 %v4666, 0.2
      %v4781 = vmul.f32 %v4671, 0.2
      %v4782 = vmul.f32 %v4676, 0.2
      %v4783 = vmul.f32 %v4681, 0.2
      %v4784 = vmul.f32 %v4686, 0.2
      %v4785 = vmul.f32 %v4691, 0.2
      %v4786 = vmul.f32 %v4696, 0.2
      %v4787 = vmul.f32 %v4701, 0.2
      %v4788 = vmul.f32 %v4706, 0.2
      %v4789 = vmul.f32 %v4711, 0.2
      %v4790 = vmul.f32 %v4716, 0.2
      %v4791 = vmul.f32 %v4721, 0.2
      %v4792 = vmul.f32 %v4726, 0.2
      %v4793 = vsel %vm4729, %v4571, %v4761
      %v4794 = vsel %vm4730, %v4576, %v4762
      %v4795 = vsel %vm4731, %v4581, %v4763
      %v4796 = vsel %vm4732, %v4586, %v4764
      %v4797 = vsel %vm4733, %v4591, %v4765
      %v4798 = vsel %vm4734, %v4596, %v4766
      %v4799 = vsel %vm4735, %v4601, %v4767
      %v4800 = vsel %vm4736, %v4606, %v4768
      %v4801 = vsel %vm4737, %v4611, %v4769
      %v4802 = vsel %vm4738, %v4616, %v4770
      %v4803 = vsel %vm4739, %v4621, %v4771
      %v4804 = vsel %vm4740, %v4626, %v4772
      %v4805 = vsel %vm4741, %v4631, %v4773
      %v4806 = vsel %vm4742, %v4636, %v4774
      %v4807 = vsel %vm4743, %v4641, %v4775
      %v4808 = vsel %vm4744, %v4646, %v4776
      %v4809 = vsel %vm4745, %v4651, %v4777
      %v4810 = vsel %vm4746, %v4656, %v4778
      %v4811 = vsel %vm4747, %v4661, %v4779
      %v4812 = vsel %vm4748, %v4666, %v4780
      %v4813 = vsel %vm4749, %v4671, %v4781
      %v4814 = vsel %vm4750, %v4676, %v4782
      %v4815 = vsel %vm4751, %v4681, %v4783
      %v4816 = vsel %vm4752, %v4686, %v4784
      %v4817 = vsel %vm4753, %v4691, %v4785
      %v4818 = vsel %vm4754, %v4696, %v4786
      %v4819 = vsel %vm4755, %v4701, %v4787
      %v4820 = vsel %vm4756, %v4706, %v4788
      %v4821 = vsel %vm4757, %v4711, %v4789
      %v4822 = vsel %vm4758, %v4716, %v4790
      %v4823 = vsel %vm4759, %v4721, %v4791
      %v4824 = vsel %vm4760, %v4726, %v4792
      %s4825 = scalar_lea.vmem [#allocation3], 24
      %4826 = vst.msk [vmem:[%s4825 + $0x1] sm:$0xff] %vm387, %v4793
      %4827 = vst.msk [vmem:[%s4825 + $0x9] sm:$0xff] %vm387, %v4794
      %4828 = vst.msk [vmem:[%s4825 + $0x19] sm:$0xff] %vm387, %v4795
      %4829 = vst.msk [vmem:[%s4825 + $0x21] sm:$0xff] %vm387, %v4796
      %4830 = vst.msk [vmem:[%s4825 + $0x31] sm:$0xff] %vm387, %v4797
      %4831 = vst.msk [vmem:[%s4825 + $0x39] sm:$0xff] %vm387, %v4798
      %4832 = vst.msk [vmem:[%s4825 + $0x49] sm:$0xff] %vm387, %v4799
      %4833 = vst.msk [vmem:[%s4825 + $0x51] sm:$0xff] %vm387, %v4800
      %4834 = vst.msk [vmem:[%s4825 + $0x61] sm:$0xff] %vm387, %v4801
      %4835 = vst.msk [vmem:[%s4825 + $0x69] sm:$0xff] %vm387, %v4802
      %4836 = vst.msk [vmem:[%s4825 + $0x79] sm:$0xff] %vm387, %v4803
      %4837 = vst.msk [vmem:[%s4825 + $0x81] sm:$0xff] %vm387, %v4804
      %4838 = vst.msk [vmem:[%s4825 + $0x91] sm:$0xff] %vm387, %v4805
      %4839 = vst.msk [vmem:[%s4825 + $0x99] sm:$0xff] %vm387, %v4806
      %4840 = vst.msk [vmem:[%s4825 + $0xa9] sm:$0xff] %vm387, %v4807
      %4841 = vst.msk [vmem:[%s4825 + $0xb1] sm:$0xff] %vm387, %v4808
      %4842 = vst.msk [vmem:[%s4825 + $0xc1] sm:$0xff] %vm387, %v4809
      %4843 = vst.msk [vmem:[%s4825 + $0xc9] sm:$0xff] %vm387, %v4810
      %4844 = vst.msk [vmem:[%s4825 + $0xd9] sm:$0xff] %vm387, %v4811
      %4845 = vst.msk [vmem:[%s4825 + $0xe1] sm:$0xff] %vm387, %v4812
      %4846 = vst.msk [vmem:[%s4825 + $0xf1] sm:$0xff] %vm387, %v4813
      %4847 = vst.msk [vmem:[%s4825 + $0xf9] sm:$0xff] %vm387, %v4814
      %4848 = vst.msk [vmem:[%s4825 + $0x109] sm:$0xff] %vm387, %v4815
      %4849 = vst.msk [vmem:[%s4825 + $0x111] sm:$0xff] %vm387, %v4816
      %4850 = vst.msk [vmem:[%s4825 + $0x121] sm:$0xff] %vm387, %v4817
      %4851 = vst.msk [vmem:[%s4825 + $0x129] sm:$0xff] %vm387, %v4818
      %4852 = vst.msk [vmem:[%s4825 + $0x139] sm:$0xff] %vm387, %v4819
      %4853 = vst.msk [vmem:[%s4825 + $0x141] sm:$0xff] %vm387, %v4820
      %4854 = vst.msk [vmem:[%s4825 + $0x151] sm:$0xff] %vm387, %v4821
      %4855 = vst.msk [vmem:[%s4825 + $0x159] sm:$0xff] %vm387, %v4822
      %4856 = vst.msk [vmem:[%s4825 + $0x169] sm:$0xff] %vm387, %v4823
      %4857 = vst.msk [vmem:[%s4825 + $0x171] sm:$0xff] %vm387, %v4824
      %v4858 = vld [vmem:[#allocation3] sm:$0xff]
      %v4859 = vld [vmem:[#allocation3 + $0x8] sm:$0xff]
      %v4860 = vld [vmem:[#allocation3 + $0x18] sm:$0xff]
      %v4861 = vld [vmem:[#allocation3 + $0x20] sm:$0xff]
      %v4862 = vld [vmem:[#allocation3 + $0x30] sm:$0xff]
      %v4863 = vld [vmem:[#allocation3 + $0x38] sm:$0xff]
      %v4864 = vld [vmem:[#allocation3 + $0x48] sm:$0xff]
      %v4865 = vld [vmem:[#allocation3 + $0x50] sm:$0xff]
      %v4866 = vld [vmem:[#allocation3 + $0x60] sm:$0xff]
      %v4867 = vld [vmem:[#allocation3 + $0x68] sm:$0xff]
      %v4868 = vld [vmem:[#allocation3 + $0x78] sm:$0xff]
      %v4869 = vld [vmem:[#allocation3 + $0x80] sm:$0xff]
      %v4870 = vld [vmem:[#allocation3 + $0x90] sm:$0xff]
      %v4871 = vld [vmem:[#allocation3 + $0x98] sm:$0xff]
      %v4872 = vld [vmem:[#allocation3 + $0xa8] sm:$0xff]
      %v4873 = vld [vmem:[#allocation3 + $0xb0] sm:$0xff]
      %v4874 = vld [vmem:[#allocation3 + $0xc0] sm:$0xff]
      %v4875 = vld [vmem:[#allocation3 + $0xc8] sm:$0xff]
      %v4876 = vld [vmem:[#allocation3 + $0xd8] sm:$0xff]
      %v4877 = vld [vmem:[#allocation3 + $0xe0] sm:$0xff]
      %v4878 = vld [vmem:[#allocation3 + $0xf0] sm:$0xff]
      %v4879 = vld [vmem:[#allocation3 + $0xf8] sm:$0xff]
      %v4880 = vld [vmem:[#allocation3 + $0x108] sm:$0xff]
      %v4881 = vld [vmem:[#allocation3 + $0x110] sm:$0xff]
      %v4882 = vld [vmem:[#allocation3 + $0x120] sm:$0xff]
      %v4883 = vld [vmem:[#allocation3 + $0x128] sm:$0xff]
      %v4884 = vld [vmem:[#allocation3 + $0x138] sm:$0xff]
      %v4885 = vld [vmem:[#allocation3 + $0x140] sm:$0xff]
      %v4886 = vld [vmem:[#allocation3 + $0x150] sm:$0xff]
      %v4887 = vld [vmem:[#allocation3 + $0x158] sm:$0xff]
      %v4888 = vld [vmem:[#allocation3 + $0x168] sm:$0xff]
      %v4889 = vld [vmem:[#allocation3 + $0x170] sm:$0xff]
      %v4890 = vld [vmem:[#allocation3 + $0x1] sm:$0xff]
      %v4891 = vld [vmem:[#allocation3 + $0x9] sm:$0xff]
      %v4892 = vld [vmem:[#allocation3 + $0x19] sm:$0xff]
      %v4893 = vld [vmem:[#allocation3 + $0x21] sm:$0xff]
      %v4894 = vld [vmem:[#allocation3 + $0x31] sm:$0xff]
      %v4895 = vld [vmem:[#allocation3 + $0x39] sm:$0xff]
      %v4896 = vld [vmem:[#allocation3 + $0x49] sm:$0xff]
      %v4897 = vld [vmem:[#allocation3 + $0x51] sm:$0xff]
      %v4898 = vld [vmem:[#allocation3 + $0x61] sm:$0xff]
      %v4899 = vld [vmem:[#allocation3 + $0x69] sm:$0xff]
      %v4900 = vld [vmem:[#allocation3 + $0x79] sm:$0xff]
      %v4901 = vld [vmem:[#allocation3 + $0x81] sm:$0xff]
      %v4902 = vld [vmem:[#allocation3 + $0x91] sm:$0xff]
      %v4903 = vld [vmem:[#allocation3 + $0x99] sm:$0xff]
      %v4904 = vld [vmem:[#allocation3 + $0xa9] sm:$0xff]
      %v4905 = vld [vmem:[#allocation3 + $0xb1] sm:$0xff]
      %v4906 = vld [vmem:[#allocation3 + $0xc1] sm:$0xff]
      %v4907 = vld [vmem:[#allocation3 + $0xc9] sm:$0xff]
      %v4908 = vld [vmem:[#allocation3 + $0xd9] sm:$0xff]
      %v4909 = vld [vmem:[#allocation3 + $0xe1] sm:$0xff]
      %v4910 = vld [vmem:[#allocation3 + $0xf1] sm:$0xff]
      %v4911 = vld [vmem:[#allocation3 + $0xf9] sm:$0xff]
      %v4912 = vld [vmem:[#allocation3 + $0x109] sm:$0xff]
      %v4913 = vld [vmem:[#allocation3 + $0x111] sm:$0xff]
      %v4914 = vld [vmem:[#allocation3 + $0x121] sm:$0xff]
      %v4915 = vld [vmem:[#allocation3 + $0x129] sm:$0xff]
      %v4916 = vld [vmem:[#allocation3 + $0x139] sm:$0xff]
      %v4917 = vld [vmem:[#allocation3 + $0x141] sm:$0xff]
      %v4918 = vld [vmem:[#allocation3 + $0x151] sm:$0xff]
      %v4919 = vld [vmem:[#allocation3 + $0x159] sm:$0xff]
      %v4920 = vld [vmem:[#allocation3 + $0x169] sm:$0xff]
      %v4921 = vld [vmem:[#allocation3 + $0x171] sm:$0xff]
      %v4922 = vld [vmem:[#allocation3 + $0x2] sm:$0xff]
      %v4923 = vld [vmem:[#allocation3 + $0xa] sm:$0xff]
      %v4924 = vld [vmem:[#allocation3 + $0x1a] sm:$0xff]
      %v4925 = vld [vmem:[#allocation3 + $0x22] sm:$0xff]
      %v4926 = vld [vmem:[#allocation3 + $0x32] sm:$0xff]
      %v4927 = vld [vmem:[#allocation3 + $0x3a] sm:$0xff]
      %v4928 = vld [vmem:[#allocation3 + $0x4a] sm:$0xff]
      %v4929 = vld [vmem:[#allocation3 + $0x52] sm:$0xff]
      %v4930 = vld [vmem:[#allocation3 + $0x62] sm:$0xff]
      %v4931 = vld [vmem:[#allocation3 + $0x6a] sm:$0xff]
      %v4932 = vld [vmem:[#allocation3 + $0x7a] sm:$0xff]
      %v4933 = vld [vmem:[#allocation3 + $0x82] sm:$0xff]
      %v4934 = vld [vmem:[#allocation3 + $0x92] sm:$0xff]
      %v4935 = vld [vmem:[#allocation3 + $0x9a] sm:$0xff]
      %v4936 = vld [vmem:[#allocation3 + $0xaa] sm:$0xff]
      %v4937 = vld [vmem:[#allocation3 + $0xb2] sm:$0xff]
      %v4938 = vld [vmem:[#allocation3 + $0xc2] sm:$0xff]
      %v4939 = vld [vmem:[#allocation3 + $0xca] sm:$0xff]
      %v4940 = vld [vmem:[#allocation3 + $0xda] sm:$0xff]
      %v4941 = vld [vmem:[#allocation3 + $0xe2] sm:$0xff]
      %v4942 = vld [vmem:[#allocation3 + $0xf2] sm:$0xff]
      %v4943 = vld [vmem:[#allocation3 + $0xfa] sm:$0xff]
      %v4944 = vld [vmem:[#allocation3 + $0x10a] sm:$0xff]
      %v4945 = vld [vmem:[#allocation3 + $0x112] sm:$0xff]
      %v4946 = vld [vmem:[#allocation3 + $0x122] sm:$0xff]
      %v4947 = vld [vmem:[#allocation3 + $0x12a] sm:$0xff]
      %v4948 = vld [vmem:[#allocation3 + $0x13a] sm:$0xff]
      %v4949 = vld [vmem:[#allocation3 + $0x142] sm:$0xff]
      %v4950 = vld [vmem:[#allocation3 + $0x152] sm:$0xff]
      %v4951 = vld [vmem:[#allocation3 + $0x15a] sm:$0xff]
      %v4952 = vld [vmem:[#allocation3 + $0x16a] sm:$0xff]
      %v4953 = vld [vmem:[#allocation3 + $0x172] sm:$0xff]
      %v4954 = vld [vmem:[%s4825] sm:$0xff]
      %v4955 = vld [vmem:[%s4825 + $0x8] sm:$0xff]
      %v4956 = vld [vmem:[%s4825 + $0x18] sm:$0xff]
      %v4957 = vld [vmem:[%s4825 + $0x20] sm:$0xff]
      %v4958 = vld [vmem:[%s4825 + $0x30] sm:$0xff]
      %v4959 = vld [vmem:[%s4825 + $0x38] sm:$0xff]
      %v4960 = vld [vmem:[%s4825 + $0x48] sm:$0xff]
      %v4961 = vld [vmem:[%s4825 + $0x50] sm:$0xff]
      %v4962 = vld [vmem:[%s4825 + $0x60] sm:$0xff]
      %v4963 = vld [vmem:[%s4825 + $0x68] sm:$0xff]
      %v4964 = vld [vmem:[%s4825 + $0x78] sm:$0xff]
      %v4965 = vld [vmem:[%s4825 + $0x80] sm:$0xff]
      %v4966 = vld [vmem:[%s4825 + $0x90] sm:$0xff]
      %v4967 = vld [vmem:[%s4825 + $0x98] sm:$0xff]
      %v4968 = vld [vmem:[%s4825 + $0xa8] sm:$0xff]
      %v4969 = vld [vmem:[%s4825 + $0xb0] sm:$0xff]
      %v4970 = vld [vmem:[%s4825 + $0xc0] sm:$0xff]
      %v4971 = vld [vmem:[%s4825 + $0xc8] sm:$0xff]
      %v4972 = vld [vmem:[%s4825 + $0xd8] sm:$0xff]
      %v4973 = vld [vmem:[%s4825 + $0xe0] sm:$0xff]
      %v4974 = vld [vmem:[%s4825 + $0xf0] sm:$0xff]
      %v4975 = vld [vmem:[%s4825 + $0xf8] sm:$0xff]
      %v4976 = vld [vmem:[%s4825 + $0x108] sm:$0xff]
      %v4977 = vld [vmem:[%s4825 + $0x110] sm:$0xff]
      %v4978 = vld [vmem:[%s4825 + $0x120] sm:$0xff]
      %v4979 = vld [vmem:[%s4825 + $0x128] sm:$0xff]
      %v4980 = vld [vmem:[%s4825 + $0x138] sm:$0xff]
      %v4981 = vld [vmem:[%s4825 + $0x140] sm:$0xff]
      %v4982 = vld [vmem:[%s4825 + $0x150] sm:$0xff]
      %v4983 = vld [vmem:[%s4825 + $0x158] sm:$0xff]
      %v4984 = vld [vmem:[%s4825 + $0x168] sm:$0xff]
      %v4985 = vld [vmem:[%s4825 + $0x170] sm:$0xff]
      %v4986 = vld [vmem:[%s4825 + $0x1] sm:$0xff]
      %v4987 = vld [vmem:[%s4825 + $0x9] sm:$0xff]
      %v4988 = vld [vmem:[%s4825 + $0x19] sm:$0xff]
      %v4989 = vld [vmem:[%s4825 + $0x21] sm:$0xff]
      %v4990 = vld [vmem:[%s4825 + $0x31] sm:$0xff]
      %v4991 = vld [vmem:[%s4825 + $0x39] sm:$0xff]
      %v4992 = vld [vmem:[%s4825 + $0x49] sm:$0xff]
      %v4993 = vld [vmem:[%s4825 + $0x51] sm:$0xff]
      %v4994 = vld [vmem:[%s4825 + $0x61] sm:$0xff]
      %v4995 = vld [vmem:[%s4825 + $0x69] sm:$0xff]
      %v4996 = vld [vmem:[%s4825 + $0x79] sm:$0xff]
      %v4997 = vld [vmem:[%s4825 + $0x81] sm:$0xff]
      %v4998 = vld [vmem:[%s4825 + $0x91] sm:$0xff]
      %v4999 = vld [vmem:[%s4825 + $0x99] sm:$0xff]
      %v5000 = vld [vmem:[%s4825 + $0xa9] sm:$0xff]
      %v5001 = vld [vmem:[%s4825 + $0xb1] sm:$0xff]
      %v5002 = vld [vmem:[%s4825 + $0xc1] sm:$0xff]
      %v5003 = vld [vmem:[%s4825 + $0xc9] sm:$0xff]
      %v5004 = vld [vmem:[%s4825 + $0xd9] sm:$0xff]
      %v5005 = vld [vmem:[%s4825 + $0xe1] sm:$0xff]
      %v5006 = vld [vmem:[%s4825 + $0xf1] sm:$0xff]
      %v5007 = vld [vmem:[%s4825 + $0xf9] sm:$0xff]
      %v5008 = vld [vmem:[%s4825 + $0x109] sm:$0xff]
      %v5009 = vld [vmem:[%s4825 + $0x111] sm:$0xff]
      %v5010 = vld [vmem:[%s4825 + $0x121] sm:$0xff]
      %v5011 = vld [vmem:[%s4825 + $0x129] sm:$0xff]
      %v5012 = vld [vmem:[%s4825 + $0x139] sm:$0xff]
      %v5013 = vld [vmem:[%s4825 + $0x141] sm:$0xff]
      %v5014 = vld [vmem:[%s4825 + $0x151] sm:$0xff]
      %v5015 = vld [vmem:[%s4825 + $0x159] sm:$0xff]
      %v5016 = vld [vmem:[%s4825 + $0x169] sm:$0xff]
      %v5017 = vld [vmem:[%s4825 + $0x171] sm:$0xff]
      %v5018 = vld [vmem:[%s4825 + $0x2] sm:$0xff]
      %v5019 = vld [vmem:[%s4825 + $0xa] sm:$0xff]
      %v5020 = vld [vmem:[%s4825 + $0x1a] sm:$0xff]
      %v5021 = vld [vmem:[%s4825 + $0x22] sm:$0xff]
      %v5022 = vld [vmem:[%s4825 + $0x32] sm:$0xff]
      %v5023 = vld [vmem:[%s4825 + $0x3a] sm:$0xff]
      %v5024 = vld [vmem:[%s4825 + $0x4a] sm:$0xff]
      %v5025 = vld [vmem:[%s4825 + $0x52] sm:$0xff]
      %v5026 = vld [vmem:[%s4825 + $0x62] sm:$0xff]
      %v5027 = vld [vmem:[%s4825 + $0x6a] sm:$0xff]
      %v5028 = vld [vmem:[%s4825 + $0x7a] sm:$0xff]
      %v5029 = vld [vmem:[%s4825 + $0x82] sm:$0xff]
      %v5030 = vld [vmem:[%s4825 + $0x92] sm:$0xff]
      %v5031 = vld [vmem:[%s4825 + $0x9a] sm:$0xff]
      %v5032 = vld [vmem:[%s4825 + $0xaa] sm:$0xff]
      %v5033 = vld [vmem:[%s4825 + $0xb2] sm:$0xff]
      %v5034 = vld [vmem:[%s4825 + $0xc2] sm:$0xff]
      %v5035 = vld [vmem:[%s4825 + $0xca] sm:$0xff]
      %v5036 = vld [vmem:[%s4825 + $0xda] sm:$0xff]
      %v5037 = vld [vmem:[%s4825 + $0xe2] sm:$0xff]
      %v5038 = vld [vmem:[%s4825 + $0xf2] sm:$0xff]
      %v5039 = vld [vmem:[%s4825 + $0xfa] sm:$0xff]
      %v5040 = vld [vmem:[%s4825 + $0x10a] sm:$0xff]
      %v5041 = vld [vmem:[%s4825 + $0x112] sm:$0xff]
      %v5042 = vld [vmem:[%s4825 + $0x122] sm:$0xff]
      %v5043 = vld [vmem:[%s4825 + $0x12a] sm:$0xff]
      %v5044 = vld [vmem:[%s4825 + $0x13a] sm:$0xff]
      %v5045 = vld [vmem:[%s4825 + $0x142] sm:$0xff]
      %v5046 = vld [vmem:[%s4825 + $0x152] sm:$0xff]
      %v5047 = vld [vmem:[%s4825 + $0x15a] sm:$0xff]
      %v5048 = vld [vmem:[%s4825 + $0x16a] sm:$0xff]
      %v5049 = vld [vmem:[%s4825 + $0x172] sm:$0xff]
      %s5050 = scalar_lea.vmem [#allocation3], 48
      %v5051 = vld [vmem:[%s5050] sm:$0xff]
      %v5052 = vld [vmem:[%s5050 + $0x8] sm:$0xff]
      %v5053 = vld [vmem:[%s5050 + $0x18] sm:$0xff]
      %v5054 = vld [vmem:[%s5050 + $0x20] sm:$0xff]
      %v5055 = vld [vmem:[%s5050 + $0x30] sm:$0xff]
      %v5056 = vld [vmem:[%s5050 + $0x38] sm:$0xff]
      %v5057 = vld [vmem:[%s5050 + $0x48] sm:$0xff]
      %v5058 = vld [vmem:[%s5050 + $0x50] sm:$0xff]
      %v5059 = vld [vmem:[%s5050 + $0x60] sm:$0xff]
      %v5060 = vld [vmem:[%s5050 + $0x68] sm:$0xff]
      %v5061 = vld [vmem:[%s5050 + $0x78] sm:$0xff]
      %v5062 = vld [vmem:[%s5050 + $0x80] sm:$0xff]
      %v5063 = vld [vmem:[%s5050 + $0x90] sm:$0xff]
      %v5064 = vld [vmem:[%s5050 + $0x98] sm:$0xff]
      %v5065 = vld [vmem:[%s5050 + $0xa8] sm:$0xff]
      %v5066 = vld [vmem:[%s5050 + $0xb0] sm:$0xff]
      %v5067 = vld [vmem:[%s5050 + $0xc0] sm:$0xff]
      %v5068 = vld [vmem:[%s5050 + $0xc8] sm:$0xff]
      %v5069 = vld [vmem:[%s5050 + $0xd8] sm:$0xff]
      %v5070 = vld [vmem:[%s5050 + $0xe0] sm:$0xff]
      %v5071 = vld [vmem:[%s5050 + $0xf0] sm:$0xff]
      %v5072 = vld [vmem:[%s5050 + $0xf8] sm:$0xff]
      %v5073 = vld [vmem:[%s5050 + $0x108] sm:$0xff]
      %v5074 = vld [vmem:[%s5050 + $0x110] sm:$0xff]
      %v5075 = vld [vmem:[%s5050 + $0x120] sm:$0xff]
      %v5076 = vld [vmem:[%s5050 + $0x128] sm:$0xff]
      %v5077 = vld [vmem:[%s5050 + $0x138] sm:$0xff]
      %v5078 = vld [vmem:[%s5050 + $0x140] sm:$0xff]
      %v5079 = vld [vmem:[%s5050 + $0x150] sm:$0xff]
      %v5080 = vld [vmem:[%s5050 + $0x158] sm:$0xff]
      %v5081 = vld [vmem:[%s5050 + $0x168] sm:$0xff]
      %v5082 = vld [vmem:[%s5050 + $0x170] sm:$0xff]
      %v5083 = vld [vmem:[%s5050 + $0x1] sm:$0xff]
      %v5084 = vld [vmem:[%s5050 + $0x9] sm:$0xff]
      %v5085 = vld [vmem:[%s5050 + $0x19] sm:$0xff]
      %v5086 = vld [vmem:[%s5050 + $0x21] sm:$0xff]
      %v5087 = vld [vmem:[%s5050 + $0x31] sm:$0xff]
      %v5088 = vld [vmem:[%s5050 + $0x39] sm:$0xff]
      %v5089 = vld [vmem:[%s5050 + $0x49] sm:$0xff]
      %v5090 = vld [vmem:[%s5050 + $0x51] sm:$0xff]
      %v5091 = vld [vmem:[%s5050 + $0x61] sm:$0xff]
      %v5092 = vld [vmem:[%s5050 + $0x69] sm:$0xff]
      %v5093 = vld [vmem:[%s5050 + $0x79] sm:$0xff]
      %v5094 = vld [vmem:[%s5050 + $0x81] sm:$0xff]
      %v5095 = vld [vmem:[%s5050 + $0x91] sm:$0xff]
      %v5096 = vld [vmem:[%s5050 + $0x99] sm:$0xff]
      %v5097 = vld [vmem:[%s5050 + $0xa9] sm:$0xff]
      %v5098 = vld [vmem:[%s5050 + $0xb1] sm:$0xff]
      %v5099 = vld [vmem:[%s5050 + $0xc1] sm:$0xff]
      %v5100 = vld [vmem:[%s5050 + $0xc9] sm:$0xff]
      %v5101 = vld [vmem:[%s5050 + $0xd9] sm:$0xff]
      %v5102 = vld [vmem:[%s5050 + $0xe1] sm:$0xff]
      %v5103 = vld [vmem:[%s5050 + $0xf1] sm:$0xff]
      %v5104 = vld [vmem:[%s5050 + $0xf9] sm:$0xff]
      %v5105 = vld [vmem:[%s5050 + $0x109] sm:$0xff]
      %v5106 = vld [vmem:[%s5050 + $0x111] sm:$0xff]
      %v5107 = vld [vmem:[%s5050 + $0x121] sm:$0xff]
      %v5108 = vld [vmem:[%s5050 + $0x129] sm:$0xff]
      %v5109 = vld [vmem:[%s5050 + $0x139] sm:$0xff]
      %v5110 = vld [vmem:[%s5050 + $0x141] sm:$0xff]
      %v5111 = vld [vmem:[%s5050 + $0x151] sm:$0xff]
      %v5112 = vld [vmem:[%s5050 + $0x159] sm:$0xff]
      %v5113 = vld [vmem:[%s5050 + $0x169] sm:$0xff]
      %v5114 = vld [vmem:[%s5050 + $0x171] sm:$0xff]
      %v5115 = vld [vmem:[%s5050 + $0x2] sm:$0xff]
      %v5116 = vld [vmem:[%s5050 + $0xa] sm:$0xff]
      %v5117 = vld [vmem:[%s5050 + $0x1a] sm:$0xff]
      %v5118 = vld [vmem:[%s5050 + $0x22] sm:$0xff]
      %v5119 = vld [vmem:[%s5050 + $0x32] sm:$0xff]
      %v5120 = vld [vmem:[%s5050 + $0x3a] sm:$0xff]
      %v5121 = vld [vmem:[%s5050 + $0x4a] sm:$0xff]
      %v5122 = vld [vmem:[%s5050 + $0x52] sm:$0xff]
      %v5123 = vld [vmem:[%s5050 + $0x62] sm:$0xff]
      %v5124 = vld [vmem:[%s5050 + $0x6a] sm:$0xff]
      %v5125 = vld [vmem:[%s5050 + $0x7a] sm:$0xff]
      %v5126 = vld [vmem:[%s5050 + $0x82] sm:$0xff]
      %v5127 = vld [vmem:[%s5050 + $0x92] sm:$0xff]
      %v5128 = vld [vmem:[%s5050 + $0x9a] sm:$0xff]
      %v5129 = vld [vmem:[%s5050 + $0xaa] sm:$0xff]
      %v5130 = vld [vmem:[%s5050 + $0xb2] sm:$0xff]
      %v5131 = vld [vmem:[%s5050 + $0xc2] sm:$0xff]
      %v5132 = vld [vmem:[%s5050 + $0xca] sm:$0xff]
      %v5133 = vld [vmem:[%s5050 + $0xda] sm:$0xff]
      %v5134 = vld [vmem:[%s5050 + $0xe2] sm:$0xff]
      %v5135 = vld [vmem:[%s5050 + $0xf2] sm:$0xff]
      %v5136 = vld [vmem:[%s5050 + $0xfa] sm:$0xff]
      %v5137 = vld [vmem:[%s5050 + $0x10a] sm:$0xff]
      %v5138 = vld [vmem:[%s5050 + $0x112] sm:$0xff]
      %v5139 = vld [vmem:[%s5050 + $0x122] sm:$0xff]
      %v5140 = vld [vmem:[%s5050 + $0x12a] sm:$0xff]
      %v5141 = vld [vmem:[%s5050 + $0x13a] sm:$0xff]
      %v5142 = vld [vmem:[%s5050 + $0x142] sm:$0xff]
      %v5143 = vld [vmem:[%s5050 + $0x152] sm:$0xff]
      %v5144 = vld [vmem:[%s5050 + $0x15a] sm:$0xff]
      %v5145 = vld [vmem:[%s5050 + $0x16a] sm:$0xff]
      %v5146 = vld [vmem:[%s5050 + $0x172] sm:$0xff]
      %5179 = vrot.lane.b32.xlu0 %v4890, 4
      %v5180 = vpop.permute.xlu0 %5179
      %5181 = vrot.lane.b32.xlu0 %v4891, 4
      %v5182 = vpop.permute.xlu0 %5181
      %5183 = vrot.lane.b32.xlu0 %v4892, 4
      %v5184 = vpop.permute.xlu0 %5183
      %5185 = vrot.lane.b32.xlu0 %v4893, 4
      %v5186 = vpop.permute.xlu0 %5185
      %5187 = vrot.lane.b32.xlu0 %v4894, 4
      %v5188 = vpop.permute.xlu0 %5187
      %5189 = vrot.lane.b32.xlu0 %v4895, 4
      %v5190 = vpop.permute.xlu0 %5189
      %5191 = vrot.lane.b32.xlu0 %v4896, 4
      %v5192 = vpop.permute.xlu0 %5191
      %5193 = vrot.lane.b32.xlu0 %v4897, 4
      %v5194 = vpop.permute.xlu0 %5193
      %5195 = vrot.lane.b32.xlu0 %v4898, 4
      %v5196 = vpop.permute.xlu0 %5195
      %5197 = vrot.lane.b32.xlu0 %v4899, 4
      %v5198 = vpop.permute.xlu0 %5197
      %5199 = vrot.lane.b32.xlu0 %v4900, 4
      %v5200 = vpop.permute.xlu0 %5199
      %5201 = vrot.lane.b32.xlu0 %v4901, 4
      %v5202 = vpop.permute.xlu0 %5201
      %5203 = vrot.lane.b32.xlu0 %v4902, 4
      %v5204 = vpop.permute.xlu0 %5203
      %5205 = vrot.lane.b32.xlu0 %v4903, 4
      %v5206 = vpop.permute.xlu0 %5205
      %5207 = vrot.lane.b32.xlu0 %v4904, 4
      %v5208 = vpop.permute.xlu0 %5207
      %5209 = vrot.lane.b32.xlu0 %v4905, 4
      %v5210 = vpop.permute.xlu0 %5209
      %5211 = vrot.lane.b32.xlu0 %v4906, 4
      %v5212 = vpop.permute.xlu0 %5211
      %5213 = vrot.lane.b32.xlu0 %v4907, 4
      %v5214 = vpop.permute.xlu0 %5213
      %5215 = vrot.lane.b32.xlu0 %v4908, 4
      %v5216 = vpop.permute.xlu0 %5215
      %5217 = vrot.lane.b32.xlu0 %v4909, 4
      %v5218 = vpop.permute.xlu0 %5217
      %5219 = vrot.lane.b32.xlu0 %v4910, 4
      %v5220 = vpop.permute.xlu0 %5219
      %5221 = vrot.lane.b32.xlu0 %v4911, 4
      %v5222 = vpop.permute.xlu0 %5221
      %5223 = vrot.lane.b32.xlu0 %v4912, 4
      %v5224 = vpop.permute.xlu0 %5223
      %5225 = vrot.lane.b32.xlu0 %v4913, 4
      %v5226 = vpop.permute.xlu0 %5225
      %5227 = vrot.lane.b32.xlu0 %v4914, 4
      %v5228 = vpop.permute.xlu0 %5227
      %5229 = vrot.lane.b32.xlu0 %v4915, 4
      %v5230 = vpop.permute.xlu0 %5229
      %5231 = vrot.lane.b32.xlu0 %v4916, 4
      %v5232 = vpop.permute.xlu0 %5231
      %5233 = vrot.lane.b32.xlu0 %v4917, 4
      %v5234 = vpop.permute.xlu0 %5233
      %5235 = vrot.lane.b32.xlu0 %v4918, 4
      %v5236 = vpop.permute.xlu0 %5235
      %5237 = vrot.lane.b32.xlu0 %v4919, 4
      %v5238 = vpop.permute.xlu0 %5237
      %5239 = vrot.lane.b32.xlu0 %v4920, 4
      %v5240 = vpop.permute.xlu0 %5239
      %5241 = vrot.lane.b32.xlu0 %v4921, 4
      %v5242 = vpop.permute.xlu0 %5241
      %5307 = vrot.lane.b32.xlu0 %v4922, 8
      %v5308 = vpop.permute.xlu0 %5307
      %5309 = vrot.lane.b32.xlu0 %v4923, 8
      %v5310 = vpop.permute.xlu0 %5309
      %5311 = vrot.lane.b32.xlu0 %v4924, 8
      %v5312 = vpop.permute.xlu0 %5311
      %5313 = vrot.lane.b32.xlu0 %v4925, 8
      %v5314 = vpop.permute.xlu0 %5313
      %5315 = vrot.lane.b32.xlu0 %v4926, 8
      %v5316 = vpop.permute.xlu0 %5315
      %5317 = vrot.lane.b32.xlu0 %v4927, 8
      %v5318 = vpop.permute.xlu0 %5317
      %5319 = vrot.lane.b32.xlu0 %v4928, 8
      %v5320 = vpop.permute.xlu0 %5319
      %5321 = vrot.lane.b32.xlu0 %v4929, 8
      %v5322 = vpop.permute.xlu0 %5321
      %5323 = vrot.lane.b32.xlu0 %v4930, 8
      %v5324 = vpop.permute.xlu0 %5323
      %5325 = vrot.lane.b32.xlu0 %v4931, 8
      %v5326 = vpop.permute.xlu0 %5325
      %5327 = vrot.lane.b32.xlu0 %v4932, 8
      %v5328 = vpop.permute.xlu0 %5327
      %5329 = vrot.lane.b32.xlu0 %v4933, 8
      %v5330 = vpop.permute.xlu0 %5329
      %5331 = vrot.lane.b32.xlu0 %v4934, 8
      %v5332 = vpop.permute.xlu0 %5331
      %5333 = vrot.lane.b32.xlu0 %v4935, 8
      %v5334 = vpop.permute.xlu0 %5333
      %5335 = vrot.lane.b32.xlu0 %v4936, 8
      %v5336 = vpop.permute.xlu0 %5335
      %5337 = vrot.lane.b32.xlu0 %v4937, 8
      %v5338 = vpop.permute.xlu0 %5337
      %5339 = vrot.lane.b32.xlu0 %v4938, 8
      %v5340 = vpop.permute.xlu0 %5339
      %5341 = vrot.lane.b32.xlu0 %v4939, 8
      %v5342 = vpop.permute.xlu0 %5341
      %5343 = vrot.lane.b32.xlu0 %v4940, 8
      %v5344 = vpop.permute.xlu0 %5343
      %5345 = vrot.lane.b32.xlu0 %v4941, 8
      %v5346 = vpop.permute.xlu0 %5345
      %5347 = vrot.lane.b32.xlu0 %v4942, 8
      %v5348 = vpop.permute.xlu0 %5347
      %5349 = vrot.lane.b32.xlu0 %v4943, 8
      %v5350 = vpop.permute.xlu0 %5349
      %5351 = vrot.lane.b32.xlu0 %v4944, 8
      %v5352 = vpop.permute.xlu0 %5351
      %5353 = vrot.lane.b32.xlu0 %v4945, 8
      %v5354 = vpop.permute.xlu0 %5353
      %5355 = vrot.lane.b32.xlu0 %v4946, 8
      %v5356 = vpop.permute.xlu0 %5355
      %5357 = vrot.lane.b32.xlu0 %v4947, 8
      %v5358 = vpop.permute.xlu0 %5357
      %5359 = vrot.lane.b32.xlu0 %v4948, 8
      %v5360 = vpop.permute.xlu0 %5359
      %5361 = vrot.lane.b32.xlu0 %v4949, 8
      %v5362 = vpop.permute.xlu0 %5361
      %5363 = vrot.lane.b32.xlu0 %v4950, 8
      %v5364 = vpop.permute.xlu0 %5363
      %5365 = vrot.lane.b32.xlu0 %v4951, 8
      %v5366 = vpop.permute.xlu0 %5365
      %5367 = vrot.lane.b32.xlu0 %v4952, 8
      %v5368 = vpop.permute.xlu0 %5367
      %5369 = vrot.lane.b32.xlu0 %v4953, 8
      %v5370 = vpop.permute.xlu0 %5369
      %5435 = vrot.lane.b32.xlu0 %v4954, 12
      %v5436 = vpop.permute.xlu0 %5435
      %5437 = vrot.lane.b32.xlu0 %v4955, 12
      %v5438 = vpop.permute.xlu0 %5437
      %5439 = vrot.lane.b32.xlu0 %v4956, 12
      %v5440 = vpop.permute.xlu0 %5439
      %5441 = vrot.lane.b32.xlu0 %v4957, 12
      %v5442 = vpop.permute.xlu0 %5441
      %5443 = vrot.lane.b32.xlu0 %v4958, 12
      %v5444 = vpop.permute.xlu0 %5443
      %5445 = vrot.lane.b32.xlu0 %v4959, 12
      %v5446 = vpop.permute.xlu0 %5445
      %5447 = vrot.lane.b32.xlu0 %v4960, 12
      %v5448 = vpop.permute.xlu0 %5447
      %5449 = vrot.lane.b32.xlu0 %v4961, 12
      %v5450 = vpop.permute.xlu0 %5449
      %5451 = vrot.lane.b32.xlu0 %v4962, 12
      %v5452 = vpop.permute.xlu0 %5451
      %5453 = vrot.lane.b32.xlu0 %v4963, 12
      %v5454 = vpop.permute.xlu0 %5453
      %5455 = vrot.lane.b32.xlu0 %v4964, 12
      %v5456 = vpop.permute.xlu0 %5455
      %5457 = vrot.lane.b32.xlu0 %v4965, 12
      %v5458 = vpop.permute.xlu0 %5457
      %5459 = vrot.lane.b32.xlu0 %v4966, 12
      %v5460 = vpop.permute.xlu0 %5459
      %5461 = vrot.lane.b32.xlu0 %v4967, 12
      %v5462 = vpop.permute.xlu0 %5461
      %5463 = vrot.lane.b32.xlu0 %v4968, 12
      %v5464 = vpop.permute.xlu0 %5463
      %5465 = vrot.lane.b32.xlu0 %v4969, 12
      %v5466 = vpop.permute.xlu0 %5465
      %5467 = vrot.lane.b32.xlu0 %v4970, 12
      %v5468 = vpop.permute.xlu0 %5467
      %5469 = vrot.lane.b32.xlu0 %v4971, 12
      %v5470 = vpop.permute.xlu0 %5469
      %5471 = vrot.lane.b32.xlu0 %v4972, 12
      %v5472 = vpop.permute.xlu0 %5471
      %5473 = vrot.lane.b32.xlu0 %v4973, 12
      %v5474 = vpop.permute.xlu0 %5473
      %5475 = vrot.lane.b32.xlu0 %v4974, 12
      %v5476 = vpop.permute.xlu0 %5475
      %5477 = vrot.lane.b32.xlu0 %v4975, 12
      %v5478 = vpop.permute.xlu0 %5477
      %5479 = vrot.lane.b32.xlu0 %v4976, 12
      %v5480 = vpop.permute.xlu0 %5479
      %5481 = vrot.lane.b32.xlu0 %v4977, 12
      %v5482 = vpop.permute.xlu0 %5481
      %5483 = vrot.lane.b32.xlu0 %v4978, 12
      %v5484 = vpop.permute.xlu0 %5483
      %5485 = vrot.lane.b32.xlu0 %v4979, 12
      %v5486 = vpop.permute.xlu0 %5485
      %5487 = vrot.lane.b32.xlu0 %v4980, 12
      %v5488 = vpop.permute.xlu0 %5487
      %5489 = vrot.lane.b32.xlu0 %v4981, 12
      %v5490 = vpop.permute.xlu0 %5489
      %5491 = vrot.lane.b32.xlu0 %v4982, 12
      %v5492 = vpop.permute.xlu0 %5491
      %5493 = vrot.lane.b32.xlu0 %v4983, 12
      %v5494 = vpop.permute.xlu0 %5493
      %5495 = vrot.lane.b32.xlu0 %v4984, 12
      %v5496 = vpop.permute.xlu0 %5495
      %5497 = vrot.lane.b32.xlu0 %v4985, 12
      %v5498 = vpop.permute.xlu0 %5497
      %5563 = vrot.lane.b32.xlu0 %v4986, 16
      %v5564 = vpop.permute.xlu0 %5563
      %5565 = vrot.lane.b32.xlu0 %v4987, 16
      %v5566 = vpop.permute.xlu0 %5565
      %5567 = vrot.lane.b32.xlu0 %v4988, 16
      %v5568 = vpop.permute.xlu0 %5567
      %5569 = vrot.lane.b32.xlu0 %v4989, 16
      %v5570 = vpop.permute.xlu0 %5569
      %5571 = vrot.lane.b32.xlu0 %v4990, 16
      %v5572 = vpop.permute.xlu0 %5571
      %5573 = vrot.lane.b32.xlu0 %v4991, 16
      %v5574 = vpop.permute.xlu0 %5573
      %5575 = vrot.lane.b32.xlu0 %v4992, 16
      %v5576 = vpop.permute.xlu0 %5575
      %5577 = vrot.lane.b32.xlu0 %v4993, 16
      %v5578 = vpop.permute.xlu0 %5577
      %5579 = vrot.lane.b32.xlu0 %v4994, 16
      %v5580 = vpop.permute.xlu0 %5579
      %5581 = vrot.lane.b32.xlu0 %v4995, 16
      %v5582 = vpop.permute.xlu0 %5581
      %5583 = vrot.lane.b32.xlu0 %v4996, 16
      %v5584 = vpop.permute.xlu0 %5583
      %5585 = vrot.lane.b32.xlu0 %v4997, 16
      %v5586 = vpop.permute.xlu0 %5585
      %5587 = vrot.lane.b32.xlu0 %v4998, 16
      %v5588 = vpop.permute.xlu0 %5587
      %5589 = vrot.lane.b32.xlu0 %v4999, 16
      %v5590 = vpop.permute.xlu0 %5589
      %5591 = vrot.lane.b32.xlu0 %v5000, 16
      %v5592 = vpop.permute.xlu0 %5591
      %5593 = vrot.lane.b32.xlu0 %v5001, 16
      %v5594 = vpop.permute.xlu0 %5593
      %5595 = vrot.lane.b32.xlu0 %v5002, 16
      %v5596 = vpop.permute.xlu0 %5595
      %5597 = vrot.lane.b32.xlu0 %v5003, 16
      %v5598 = vpop.permute.xlu0 %5597
      %5599 = vrot.lane.b32.xlu0 %v5004, 16
      %v5600 = vpop.permute.xlu0 %5599
      %5601 = vrot.lane.b32.xlu0 %v5005, 16
      %v5602 = vpop.permute.xlu0 %5601
      %5603 = vrot.lane.b32.xlu0 %v5006, 16
      %v5604 = vpop.permute.xlu0 %5603
      %5605 = vrot.lane.b32.xlu0 %v5007, 16
      %v5606 = vpop.permute.xlu0 %5605
      %5607 = vrot.lane.b32.xlu0 %v5008, 16
      %v5608 = vpop.permute.xlu0 %5607
      %5609 = vrot.lane.b32.xlu0 %v5009, 16
      %v5610 = vpop.permute.xlu0 %5609
      %5611 = vrot.lane.b32.xlu0 %v5010, 16
      %v5612 = vpop.permute.xlu0 %5611
      %5613 = vrot.lane.b32.xlu0 %v5011, 16
      %v5614 = vpop.permute.xlu0 %5613
      %5615 = vrot.lane.b32.xlu0 %v5012, 16
      %v5616 = vpop.permute.xlu0 %5615
      %5617 = vrot.lane.b32.xlu0 %v5013, 16
      %v5618 = vpop.permute.xlu0 %5617
      %5619 = vrot.lane.b32.xlu0 %v5014, 16
      %v5620 = vpop.permute.xlu0 %5619
      %5621 = vrot.lane.b32.xlu0 %v5015, 16
      %v5622 = vpop.permute.xlu0 %5621
      %5623 = vrot.lane.b32.xlu0 %v5016, 16
      %v5624 = vpop.permute.xlu0 %5623
      %5625 = vrot.lane.b32.xlu0 %v5017, 16
      %v5626 = vpop.permute.xlu0 %5625
      %5691 = vrot.lane.b32.xlu0 %v5018, 20
      %v5692 = vpop.permute.xlu0 %5691
      %5693 = vrot.lane.b32.xlu0 %v5019, 20
      %v5694 = vpop.permute.xlu0 %5693
      %5695 = vrot.lane.b32.xlu0 %v5020, 20
      %v5696 = vpop.permute.xlu0 %5695
      %5697 = vrot.lane.b32.xlu0 %v5021, 20
      %v5698 = vpop.permute.xlu0 %5697
      %5699 = vrot.lane.b32.xlu0 %v5022, 20
      %v5700 = vpop.permute.xlu0 %5699
      %5701 = vrot.lane.b32.xlu0 %v5023, 20
      %v5702 = vpop.permute.xlu0 %5701
      %5703 = vrot.lane.b32.xlu0 %v5024, 20
      %v5704 = vpop.permute.xlu0 %5703
      %5705 = vrot.lane.b32.xlu0 %v5025, 20
      %v5706 = vpop.permute.xlu0 %5705
      %5707 = vrot.lane.b32.xlu0 %v5026, 20
      %v5708 = vpop.permute.xlu0 %5707
      %5709 = vrot.lane.b32.xlu0 %v5027, 20
      %v5710 = vpop.permute.xlu0 %5709
      %5711 = vrot.lane.b32.xlu0 %v5028, 20
      %v5712 = vpop.permute.xlu0 %5711
      %5713 = vrot.lane.b32.xlu0 %v5029, 20
      %v5714 = vpop.permute.xlu0 %5713
      %5715 = vrot.lane.b32.xlu0 %v5030, 20
      %v5716 = vpop.permute.xlu0 %5715
      %5717 = vrot.lane.b32.xlu0 %v5031, 20
      %v5718 = vpop.permute.xlu0 %5717
      %5719 = vrot.lane.b32.xlu0 %v5032, 20
      %v5720 = vpop.permute.xlu0 %5719
      %5721 = vrot.lane.b32.xlu0 %v5033, 20
      %v5722 = vpop.permute.xlu0 %5721
      %5723 = vrot.lane.b32.xlu0 %v5034, 20
      %v5724 = vpop.permute.xlu0 %5723
      %5725 = vrot.lane.b32.xlu0 %v5035, 20
      %v5726 = vpop.permute.xlu0 %5725
      %5727 = vrot.lane.b32.xlu0 %v5036, 20
      %v5728 = vpop.permute.xlu0 %5727
      %5729 = vrot.lane.b32.xlu0 %v5037, 20
      %v5730 = vpop.permute.xlu0 %5729
      %5731 = vrot.lane.b32.xlu0 %v5038, 20
      %v5732 = vpop.permute.xlu0 %5731
      %5733 = vrot.lane.b32.xlu0 %v5039, 20
      %v5734 = vpop.permute.xlu0 %5733
      %5735 = vrot.lane.b32.xlu0 %v5040, 20
      %v5736 = vpop.permute.xlu0 %5735
      %5737 = vrot.lane.b32.xlu0 %v5041, 20
      %v5738 = vpop.permute.xlu0 %5737
      %5739 = vrot.lane.b32.xlu0 %v5042, 20
      %v5740 = vpop.permute.xlu0 %5739
      %5741 = vrot.lane.b32.xlu0 %v5043, 20
      %v5742 = vpop.permute.xlu0 %5741
      %5743 = vrot.lane.b32.xlu0 %v5044, 20
      %v5744 = vpop.permute.xlu0 %5743
      %5745 = vrot.lane.b32.xlu0 %v5045, 20
      %v5746 = vpop.permute.xlu0 %5745
      %5747 = vrot.lane.b32.xlu0 %v5046, 20
      %v5748 = vpop.permute.xlu0 %5747
      %5749 = vrot.lane.b32.xlu0 %v5047, 20
      %v5750 = vpop.permute.xlu0 %5749
      %5751 = vrot.lane.b32.xlu0 %v5048, 20
      %v5752 = vpop.permute.xlu0 %5751
      %5753 = vrot.lane.b32.xlu0 %v5049, 20
      %v5754 = vpop.permute.xlu0 %5753
      %5819 = vrot.lane.b32.xlu0 %v5051, 24
      %v5820 = vpop.permute.xlu0 %5819
      %5821 = vrot.lane.b32.xlu0 %v5052, 24
      %v5822 = vpop.permute.xlu0 %5821
      %5823 = vrot.lane.b32.xlu0 %v5053, 24
      %v5824 = vpop.permute.xlu0 %5823
      %5825 = vrot.lane.b32.xlu0 %v5054, 24
      %v5826 = vpop.permute.xlu0 %5825
      %5827 = vrot.lane.b32.xlu0 %v5055, 24
      %v5828 = vpop.permute.xlu0 %5827
      %5829 = vrot.lane.b32.xlu0 %v5056, 24
      %v5830 = vpop.permute.xlu0 %5829
      %5831 = vrot.lane.b32.xlu0 %v5057, 24
      %v5832 = vpop.permute.xlu0 %5831
      %5833 = vrot.lane.b32.xlu0 %v5058, 24
      %v5834 = vpop.permute.xlu0 %5833
      %5835 = vrot.lane.b32.xlu0 %v5059, 24
      %v5836 = vpop.permute.xlu0 %5835
      %5837 = vrot.lane.b32.xlu0 %v5060, 24
      %v5838 = vpop.permute.xlu0 %5837
      %5839 = vrot.lane.b32.xlu0 %v5061, 24
      %v5840 = vpop.permute.xlu0 %5839
      %5841 = vrot.lane.b32.xlu0 %v5062, 24
      %v5842 = vpop.permute.xlu0 %5841
      %5843 = vrot.lane.b32.xlu0 %v5063, 24
      %v5844 = vpop.permute.xlu0 %5843
      %5845 = vrot.lane.b32.xlu0 %v5064, 24
      %v5846 = vpop.permute.xlu0 %5845
      %5847 = vrot.lane.b32.xlu0 %v5065, 24
      %v5848 = vpop.permute.xlu0 %5847
      %5849 = vrot.lane.b32.xlu0 %v5066, 24
      %v5850 = vpop.permute.xlu0 %5849
      %5851 = vrot.lane.b32.xlu0 %v5067, 24
      %v5852 = vpop.permute.xlu0 %5851
      %5853 = vrot.lane.b32.xlu0 %v5068, 24
      %v5854 = vpop.permute.xlu0 %5853
      %5855 = vrot.lane.b32.xlu0 %v5069, 24
      %v5856 = vpop.permute.xlu0 %5855
      %5857 = vrot.lane.b32.xlu0 %v5070, 24
      %v5858 = vpop.permute.xlu0 %5857
      %5859 = vrot.lane.b32.xlu0 %v5071, 24
      %v5860 = vpop.permute.xlu0 %5859
      %5861 = vrot.lane.b32.xlu0 %v5072, 24
      %v5862 = vpop.permute.xlu0 %5861
      %5863 = vrot.lane.b32.xlu0 %v5073, 24
      %v5864 = vpop.permute.xlu0 %5863
      %5865 = vrot.lane.b32.xlu0 %v5074, 24
      %v5866 = vpop.permute.xlu0 %5865
      %5867 = vrot.lane.b32.xlu0 %v5075, 24
      %v5868 = vpop.permute.xlu0 %5867
      %5869 = vrot.lane.b32.xlu0 %v5076, 24
      %v5870 = vpop.permute.xlu0 %5869
      %5871 = vrot.lane.b32.xlu0 %v5077, 24
      %v5872 = vpop.permute.xlu0 %5871
      %5873 = vrot.lane.b32.xlu0 %v5078, 24
      %v5874 = vpop.permute.xlu0 %5873
      %5875 = vrot.lane.b32.xlu0 %v5079, 24
      %v5876 = vpop.permute.xlu0 %5875
      %5877 = vrot.lane.b32.xlu0 %v5080, 24
      %v5878 = vpop.permute.xlu0 %5877
      %5879 = vrot.lane.b32.xlu0 %v5081, 24
      %v5880 = vpop.permute.xlu0 %5879
      %5881 = vrot.lane.b32.xlu0 %v5082, 24
      %v5882 = vpop.permute.xlu0 %5881
      %5947 = vrot.lane.b32.xlu0 %v5083, 28
      %v5948 = vpop.permute.xlu0 %5947
      %5949 = vrot.lane.b32.xlu0 %v5084, 28
      %v5950 = vpop.permute.xlu0 %5949
      %5951 = vrot.lane.b32.xlu0 %v5085, 28
      %v5952 = vpop.permute.xlu0 %5951
      %5953 = vrot.lane.b32.xlu0 %v5086, 28
      %v5954 = vpop.permute.xlu0 %5953
      %5955 = vrot.lane.b32.xlu0 %v5087, 28
      %v5956 = vpop.permute.xlu0 %5955
      %5957 = vrot.lane.b32.xlu0 %v5088, 28
      %v5958 = vpop.permute.xlu0 %5957
      %5959 = vrot.lane.b32.xlu0 %v5089, 28
      %v5960 = vpop.permute.xlu0 %5959
      %5961 = vrot.lane.b32.xlu0 %v5090, 28
      %v5962 = vpop.permute.xlu0 %5961
      %5963 = vrot.lane.b32.xlu0 %v5091, 28
      %v5964 = vpop.permute.xlu0 %5963
      %5965 = vrot.lane.b32.xlu0 %v5092, 28
      %v5966 = vpop.permute.xlu0 %5965
      %5967 = vrot.lane.b32.xlu0 %v5093, 28
      %v5968 = vpop.permute.xlu0 %5967
      %5969 = vrot.lane.b32.xlu0 %v5094, 28
      %v5970 = vpop.permute.xlu0 %5969
      %5971 = vrot.lane.b32.xlu0 %v5095, 28
      %v5972 = vpop.permute.xlu0 %5971
      %5973 = vrot.lane.b32.xlu0 %v5096, 28
      %v5974 = vpop.permute.xlu0 %5973
      %5975 = vrot.lane.b32.xlu0 %v5097, 28
      %v5976 = vpop.permute.xlu0 %5975
      %5977 = vrot.lane.b32.xlu0 %v5098, 28
      %v5978 = vpop.permute.xlu0 %5977
      %5979 = vrot.lane.b32.xlu0 %v5099, 28
      %v5980 = vpop.permute.xlu0 %5979
      %5981 = vrot.lane.b32.xlu0 %v5100, 28
      %v5982 = vpop.permute.xlu0 %5981
      %5983 = vrot.lane.b32.xlu0 %v5101, 28
      %v5984 = vpop.permute.xlu0 %5983
      %5985 = vrot.lane.b32.xlu0 %v5102, 28
      %v5986 = vpop.permute.xlu0 %5985
      %5987 = vrot.lane.b32.xlu0 %v5103, 28
      %v5988 = vpop.permute.xlu0 %5987
      %5989 = vrot.lane.b32.xlu0 %v5104, 28
      %v5990 = vpop.permute.xlu0 %5989
      %5991 = vrot.lane.b32.xlu0 %v5105, 28
      %v5992 = vpop.permute.xlu0 %5991
      %5993 = vrot.lane.b32.xlu0 %v5106, 28
      %v5994 = vpop.permute.xlu0 %5993
      %5995 = vrot.lane.b32.xlu0 %v5107, 28
      %v5996 = vpop.permute.xlu0 %5995
      %5997 = vrot.lane.b32.xlu0 %v5108, 28
      %v5998 = vpop.permute.xlu0 %5997
      %5999 = vrot.lane.b32.xlu0 %v5109, 28
      %v6000 = vpop.permute.xlu0 %5999
      %6001 = vrot.lane.b32.xlu0 %v5110, 28
      %v6002 = vpop.permute.xlu0 %6001
      %6003 = vrot.lane.b32.xlu0 %v5111, 28
      %v6004 = vpop.permute.xlu0 %6003
      %6005 = vrot.lane.b32.xlu0 %v5112, 28
      %v6006 = vpop.permute.xlu0 %6005
      %6007 = vrot.lane.b32.xlu0 %v5113, 28
      %v6008 = vpop.permute.xlu0 %6007
      %6009 = vrot.lane.b32.xlu0 %v5114, 28
      %v6010 = vpop.permute.xlu0 %6009
      %6075 = vrot.lane.b32.xlu0 %v5115, 32
      %v6076 = vpop.permute.xlu0 %6075
      %6077 = vrot.lane.b32.xlu0 %v5116, 32
      %v6078 = vpop.permute.xlu0 %6077
      %6079 = vrot.lane.b32.xlu0 %v5117, 32
      %v6080 = vpop.permute.xlu0 %6079
      %6081 = vrot.lane.b32.xlu0 %v5118, 32
      %v6082 = vpop.permute.xlu0 %6081
      %6083 = vrot.lane.b32.xlu0 %v5119, 32
      %v6084 = vpop.permute.xlu0 %6083
      %6085 = vrot.lane.b32.xlu0 %v5120, 32
      %v6086 = vpop.permute.xlu0 %6085
      %6087 = vrot.lane.b32.xlu0 %v5121, 32
      %v6088 = vpop.permute.xlu0 %6087
      %6089 = vrot.lane.b32.xlu0 %v5122, 32
      %v6090 = vpop.permute.xlu0 %6089
      %6091 = vrot.lane.b32.xlu0 %v5123, 32
      %v6092 = vpop.permute.xlu0 %6091
      %6093 = vrot.lane.b32.xlu0 %v5124, 32
      %v6094 = vpop.permute.xlu0 %6093
      %6095 = vrot.lane.b32.xlu0 %v5125, 32
      %v6096 = vpop.permute.xlu0 %6095
      %6097 = vrot.lane.b32.xlu0 %v5126, 32
      %v6098 = vpop.permute.xlu0 %6097
      %6099 = vrot.lane.b32.xlu0 %v5127, 32
      %v6100 = vpop.permute.xlu0 %6099
      %6101 = vrot.lane.b32.xlu0 %v5128, 32
      %v6102 = vpop.permute.xlu0 %6101
      %6103 = vrot.lane.b32.xlu0 %v5129, 32
      %v6104 = vpop.permute.xlu0 %6103
      %6105 = vrot.lane.b32.xlu0 %v5130, 32
      %v6106 = vpop.permute.xlu0 %6105
      %6107 = vrot.lane.b32.xlu0 %v5131, 32
      %v6108 = vpop.permute.xlu0 %6107
      %6109 = vrot.lane.b32.xlu0 %v5132, 32
      %v6110 = vpop.permute.xlu0 %6109
      %6111 = vrot.lane.b32.xlu0 %v5133, 32
      %v6112 = vpop.permute.xlu0 %6111
      %6113 = vrot.lane.b32.xlu0 %v5134, 32
      %v6114 = vpop.permute.xlu0 %6113
      %6115 = vrot.lane.b32.xlu0 %v5135, 32
      %v6116 = vpop.permute.xlu0 %6115
      %6117 = vrot.lane.b32.xlu0 %v5136, 32
      %v6118 = vpop.permute.xlu0 %6117
      %6119 = vrot.lane.b32.xlu0 %v5137, 32
      %v6120 = vpop.permute.xlu0 %6119
      %6121 = vrot.lane.b32.xlu0 %v5138, 32
      %v6122 = vpop.permute.xlu0 %6121
      %6123 = vrot.lane.b32.xlu0 %v5139, 32
      %v6124 = vpop.permute.xlu0 %6123
      %6125 = vrot.lane.b32.xlu0 %v5140, 32
      %v6126 = vpop.permute.xlu0 %6125
      %6127 = vrot.lane.b32.xlu0 %v5141, 32
      %v6128 = vpop.permute.xlu0 %6127
      %6129 = vrot.lane.b32.xlu0 %v5142, 32
      %v6130 = vpop.permute.xlu0 %6129
      %6131 = vrot.lane.b32.xlu0 %v5143, 32
      %v6132 = vpop.permute.xlu0 %6131
      %6133 = vrot.lane.b32.xlu0 %v5144, 32
      %v6134 = vpop.permute.xlu0 %6133
      %6135 = vrot.lane.b32.xlu0 %v5145, 32
      %v6136 = vpop.permute.xlu0 %6135
      %6137 = vrot.lane.b32.xlu0 %v5146, 32
      %v6138 = vpop.permute.xlu0 %6137
      %v6171 = vsel %vm387, %v4858, %v5180
      %v6172 = vsel %vm387, %v4859, %v5182
      %v6173 = vsel %vm387, %v4860, %v5184
      %v6174 = vsel %vm387, %v4861, %v5186
      %v6175 = vsel %vm387, %v4862, %v5188
      %v6176 = vsel %vm387, %v4863, %v5190
      %v6177 = vsel %vm387, %v4864, %v5192
      %v6178 = vsel %vm387, %v4865, %v5194
      %v6179 = vsel %vm387, %v4866, %v5196
      %v6180 = vsel %vm387, %v4867, %v5198
      %v6181 = vsel %vm387, %v4868, %v5200
      %v6182 = vsel %vm387, %v4869, %v5202
      %v6183 = vsel %vm387, %v4870, %v5204
      %v6184 = vsel %vm387, %v4871, %v5206
      %v6185 = vsel %vm387, %v4872, %v5208
      %v6186 = vsel %vm387, %v4873, %v5210
      %v6187 = vsel %vm387, %v4874, %v5212
      %v6188 = vsel %vm387, %v4875, %v5214
      %v6189 = vsel %vm387, %v4876, %v5216
      %v6190 = vsel %vm387, %v4877, %v5218
      %v6191 = vsel %vm387, %v4878, %v5220
      %v6192 = vsel %vm387, %v4879, %v5222
      %v6193 = vsel %vm387, %v4880, %v5224
      %v6194 = vsel %vm387, %v4881, %v5226
      %v6195 = vsel %vm387, %v4882, %v5228
      %v6196 = vsel %vm387, %v4883, %v5230
      %v6197 = vsel %vm387, %v4884, %v5232
      %v6198 = vsel %vm387, %v4885, %v5234
      %v6199 = vsel %vm387, %v4886, %v5236
      %v6200 = vsel %vm387, %v4887, %v5238
      %v6201 = vsel %vm387, %v4888, %v5240
      %v6202 = vsel %vm387, %v4889, %v5242
      %v6203 = vsel %vm1919, %v6171, %v5308
      %v6204 = vsel %vm1919, %v6172, %v5310
      %v6205 = vsel %vm1919, %v6173, %v5312
      %v6206 = vsel %vm1919, %v6174, %v5314
      %v6207 = vsel %vm1919, %v6175, %v5316
      %v6208 = vsel %vm1919, %v6176, %v5318
      %v6209 = vsel %vm1919, %v6177, %v5320
      %v6210 = vsel %vm1919, %v6178, %v5322
      %v6211 = vsel %vm1919, %v6179, %v5324
      %v6212 = vsel %vm1919, %v6180, %v5326
      %v6213 = vsel %vm1919, %v6181, %v5328
      %v6214 = vsel %vm1919, %v6182, %v5330
      %v6215 = vsel %vm1919, %v6183, %v5332
      %v6216 = vsel %vm1919, %v6184, %v5334
      %v6217 = vsel %vm1919, %v6185, %v5336
      %v6218 = vsel %vm1919, %v6186, %v5338
      %v6219 = vsel %vm1919, %v6187, %v5340
      %v6220 = vsel %vm1919, %v6188, %v5342
      %v6221 = vsel %vm1919, %v6189, %v5344
      %v6222 = vsel %vm1919, %v6190, %v5346
      %v6223 = vsel %vm1919, %v6191, %v5348
      %v6224 = vsel %vm1919, %v6192, %v5350
      %v6225 = vsel %vm1919, %v6193, %v5352
      %v6226 = vsel %vm1919, %v6194, %v5354
      %v6227 = vsel %vm1919, %v6195, %v5356
      %v6228 = vsel %vm1919, %v6196, %v5358
      %v6229 = vsel %vm1919, %v6197, %v5360
      %v6230 = vsel %vm1919, %v6198, %v5362
      %v6231 = vsel %vm1919, %v6199, %v5364
      %v6232 = vsel %vm1919, %v6200, %v5366
      %v6233 = vsel %vm1919, %v6201, %v5368
      %v6234 = vsel %vm1919, %v6202, %v5370
      %v6235 = vsel %vm4027, %v6203, %v5436
      %v6236 = vsel %vm4027, %v6204, %v5438
      %v6237 = vsel %vm4027, %v6205, %v5440
      %v6238 = vsel %vm4027, %v6206, %v5442
      %v6239 = vsel %vm4027, %v6207, %v5444
      %v6240 = vsel %vm4027, %v6208, %v5446
      %v6241 = vsel %vm4027, %v6209, %v5448
      %v6242 = vsel %vm4027, %v6210, %v5450
      %v6243 = vsel %vm4027, %v6211, %v5452
      %v6244 = vsel %vm4027, %v6212, %v5454
      %v6245 = vsel %vm4027, %v6213, %v5456
      %v6246 = vsel %vm4027, %v6214, %v5458
      %v6247 = vsel %vm4027, %v6215, %v5460
      %v6248 = vsel %vm4027, %v6216, %v5462
      %v6249 = vsel %vm4027, %v6217, %v5464
      %v6250 = vsel %vm4027, %v6218, %v5466
      %v6251 = vsel %vm4027, %v6219, %v5468
      %v6252 = vsel %vm4027, %v6220, %v5470
      %v6253 = vsel %vm4027, %v6221, %v5472
      %v6254 = vsel %vm4027, %v6222, %v5474
      %v6255 = vsel %vm4027, %v6223, %v5476
      %v6256 = vsel %vm4027, %v6224, %v5478
      %v6257 = vsel %vm4027, %v6225, %v5480
      %v6258 = vsel %vm4027, %v6226, %v5482
      %v6259 = vsel %vm4027, %v6227, %v5484
      %v6260 = vsel %vm4027, %v6228, %v5486
      %v6261 = vsel %vm4027, %v6229, %v5488
      %v6262 = vsel %vm4027, %v6230, %v5490
      %v6263 = vsel %vm4027, %v6231, %v5492
      %v6264 = vsel %vm4027, %v6232, %v5494
      %v6265 = vsel %vm4027, %v6233, %v5496
      %v6266 = vsel %vm4027, %v6234, %v5498
      %v6267 = vsel %vm1952, %v6235, %v5564
      %v6268 = vsel %vm1952, %v6236, %v5566
      %v6269 = vsel %vm1952, %v6237, %v5568
      %v6270 = vsel %vm1952, %v6238, %v5570
      %v6271 = vsel %vm1952, %v6239, %v5572
      %v6272 = vsel %vm1952, %v6240, %v5574
      %v6273 = vsel %vm1952, %v6241, %v5576
      %v6274 = vsel %vm1952, %v6242, %v5578
      %v6275 = vsel %vm1952, %v6243, %v5580
      %v6276 = vsel %vm1952, %v6244, %v5582
      %v6277 = vsel %vm1952, %v6245, %v5584
      %v6278 = vsel %vm1952, %v6246, %v5586
      %v6279 = vsel %vm1952, %v6247, %v5588
      %v6280 = vsel %vm1952, %v6248, %v5590
      %v6281 = vsel %vm1952, %v6249, %v5592
      %v6282 = vsel %vm1952, %v6250, %v5594
      %v6283 = vsel %vm1952, %v6251, %v5596
      %v6284 = vsel %vm1952, %v6252, %v5598
      %v6285 = vsel %vm1952, %v6253, %v5600
      %v6286 = vsel %vm1952, %v6254, %v5602
      %v6287 = vsel %vm1952, %v6255, %v5604
      %v6288 = vsel %vm1952, %v6256, %v5606
      %v6289 = vsel %vm1952, %v6257, %v5608
      %v6290 = vsel %vm1952, %v6258, %v5610
      %v6291 = vsel %vm1952, %v6259, %v5612
      %v6292 = vsel %vm1952, %v6260, %v5614
      %v6293 = vsel %vm1952, %v6261, %v5616
      %v6294 = vsel %vm1952, %v6262, %v5618
      %v6295 = vsel %vm1952, %v6263, %v5620
      %v6296 = vsel %vm1952, %v6264, %v5622
      %v6297 = vsel %vm1952, %v6265, %v5624
      %v6298 = vsel %vm1952, %v6266, %v5626
      %v6299 = vsel %vm4092, %v6267, %v5692
      %v6300 = vsel %vm4092, %v6268, %v5694
      %v6301 = vsel %vm4092, %v6269, %v5696
      %v6302 = vsel %vm4092, %v6270, %v5698
      %v6303 = vsel %vm4092, %v6271, %v5700
      %v6304 = vsel %vm4092, %v6272, %v5702
      %v6305 = vsel %vm4092, %v6273, %v5704
      %v6306 = vsel %vm4092, %v6274, %v5706
      %v6307 = vsel %vm4092, %v6275, %v5708
      %v6308 = vsel %vm4092, %v6276, %v5710
      %v6309 = vsel %vm4092, %v6277, %v5712
      %v6310 = vsel %vm4092, %v6278, %v5714
      %v6311 = vsel %vm4092, %v6279, %v5716
      %v6312 = vsel %vm4092, %v6280, %v5718
      %v6313 = vsel %vm4092, %v6281, %v5720
      %v6314 = vsel %vm4092, %v6282, %v5722
      %v6315 = vsel %vm4092, %v6283, %v5724
      %v6316 = vsel %vm4092, %v6284, %v5726
      %v6317 = vsel %vm4092, %v6285, %v5728
      %v6318 = vsel %vm4092, %v6286, %v5730
      %v6319 = vsel %vm4092, %v6287, %v5732
      %v6320 = vsel %vm4092, %v6288, %v5734
      %v6321 = vsel %vm4092, %v6289, %v5736
      %v6322 = vsel %vm4092, %v6290, %v5738
      %v6323 = vsel %vm4092, %v6291, %v5740
      %v6324 = vsel %vm4092, %v6292, %v5742
      %v6325 = vsel %vm4092, %v6293, %v5744
      %v6326 = vsel %vm4092, %v6294, %v5746
      %v6327 = vsel %vm4092, %v6295, %v5748
      %v6328 = vsel %vm4092, %v6296, %v5750
      %v6329 = vsel %vm4092, %v6297, %v5752
      %v6330 = vsel %vm4092, %v6298, %v5754
      %v6331 = vsel %vm1985, %v6299, %v5820
      %v6332 = vsel %vm1985, %v6300, %v5822
      %v6333 = vsel %vm1985, %v6301, %v5824
      %v6334 = vsel %vm1985, %v6302, %v5826
      %v6335 = vsel %vm1985, %v6303, %v5828
      %v6336 = vsel %vm1985, %v6304, %v5830
      %v6337 = vsel %vm1985, %v6305, %v5832
      %v6338 = vsel %vm1985, %v6306, %v5834
      %v6339 = vsel %vm1985, %v6307, %v5836
      %v6340 = vsel %vm1985, %v6308, %v5838
      %v6341 = vsel %vm1985, %v6309, %v5840
      %v6342 = vsel %vm1985, %v6310, %v5842
      %v6343 = vsel %vm1985, %v6311, %v5844
      %v6344 = vsel %vm1985, %v6312, %v5846
      %v6345 = vsel %vm1985, %v6313, %v5848
      %v6346 = vsel %vm1985, %v6314, %v5850
      %v6347 = vsel %vm1985, %v6315, %v5852
      %v6348 = vsel %vm1985, %v6316, %v5854
      %v6349 = vsel %vm1985, %v6317, %v5856
      %v6350 = vsel %vm1985, %v6318, %v5858
      %v6351 = vsel %vm1985, %v6319, %v5860
      %v6352 = vsel %vm1985, %v6320, %v5862
      %v6353 = vsel %vm1985, %v6321, %v5864
      %v6354 = vsel %vm1985, %v6322, %v5866
      %v6355 = vsel %vm1985, %v6323, %v5868
      %v6356 = vsel %vm1985, %v6324, %v5870
      %v6357 = vsel %vm1985, %v6325, %v5872
      %v6358 = vsel %vm1985, %v6326, %v5874
      %v6359 = vsel %vm1985, %v6327, %v5876
      %v6360 = vsel %vm1985, %v6328, %v5878
      %v6361 = vsel %vm1985, %v6329, %v5880
      %v6362 = vsel %vm1985, %v6330, %v5882
      %v6363 = vsel %vm4157, %v6331, %v5948
      %v6364 = vsel %vm4157, %v6332, %v5950
      %v6365 = vsel %vm4157, %v6333, %v5952
      %v6366 = vsel %vm4157, %v6334, %v5954
      %v6367 = vsel %vm4157, %v6335, %v5956
      %v6368 = vsel %vm4157, %v6336, %v5958
      %v6369 = vsel %vm4157, %v6337, %v5960
      %v6370 = vsel %vm4157, %v6338, %v5962
      %v6371 = vsel %vm4157, %v6339, %v5964
      %v6372 = vsel %vm4157, %v6340, %v5966
      %v6373 = vsel %vm4157, %v6341, %v5968
      %v6374 = vsel %vm4157, %v6342, %v5970
      %v6375 = vsel %vm4157, %v6343, %v5972
      %v6376 = vsel %vm4157, %v6344, %v5974
      %v6377 = vsel %vm4157, %v6345, %v5976
      %v6378 = vsel %vm4157, %v6346, %v5978
      %v6379 = vsel %vm4157, %v6347, %v5980
      %v6380 = vsel %vm4157, %v6348, %v5982
      %v6381 = vsel %vm4157, %v6349, %v5984
      %v6382 = vsel %vm4157, %v6350, %v5986
      %v6383 = vsel %vm4157, %v6351, %v5988
      %v6384 = vsel %vm4157, %v6352, %v5990
      %v6385 = vsel %vm4157, %v6353, %v5992
      %v6386 = vsel %vm4157, %v6354, %v5994
      %v6387 = vsel %vm4157, %v6355, %v5996
      %v6388 = vsel %vm4157, %v6356, %v5998
      %v6389 = vsel %vm4157, %v6357, %v6000
      %v6390 = vsel %vm4157, %v6358, %v6002
      %v6391 = vsel %vm4157, %v6359, %v6004
      %v6392 = vsel %vm4157, %v6360, %v6006
      %v6393 = vsel %vm4157, %v6361, %v6008
      %v6394 = vsel %vm4157, %v6362, %v6010
      %v6395 = vsel %vm2018, %v6363, %v6076
      %v6396 = vsel %vm2018, %v6364, %v6078
      %v6397 = vsel %vm2018, %v6365, %v6080
      %v6398 = vsel %vm2018, %v6366, %v6082
      %v6399 = vsel %vm2018, %v6367, %v6084
      %v6400 = vsel %vm2018, %v6368, %v6086
      %v6401 = vsel %vm2018, %v6369, %v6088
      %v6402 = vsel %vm2018, %v6370, %v6090
      %v6403 = vsel %vm2018, %v6371, %v6092
      %v6404 = vsel %vm2018, %v6372, %v6094
      %v6405 = vsel %vm2018, %v6373, %v6096
      %v6406 = vsel %vm2018, %v6374, %v6098
      %v6407 = vsel %vm2018, %v6375, %v6100
      %v6408 = vsel %vm2018, %v6376, %v6102
      %v6409 = vsel %vm2018, %v6377, %v6104
      %v6410 = vsel %vm2018, %v6378, %v6106
      %v6411 = vsel %vm2018, %v6379, %v6108
      %v6412 = vsel %vm2018, %v6380, %v6110
      %v6413 = vsel %vm2018, %v6381, %v6112
      %v6414 = vsel %vm2018, %v6382, %v6114
      %v6415 = vsel %vm2018, %v6383, %v6116
      %v6416 = vsel %vm2018, %v6384, %v6118
      %v6417 = vsel %vm2018, %v6385, %v6120
      %v6418 = vsel %vm2018, %v6386, %v6122
      %v6419 = vsel %vm2018, %v6387, %v6124
      %v6420 = vsel %vm2018, %v6388, %v6126
      %v6421 = vsel %vm2018, %v6389, %v6128
      %v6422 = vsel %vm2018, %v6390, %v6130
      %v6423 = vsel %vm2018, %v6391, %v6132
      %v6424 = vsel %vm2018, %v6392, %v6134
      %v6425 = vsel %vm2018, %v6393, %v6136
      %v6426 = vsel %vm2018, %v6394, %v6138
      %6459 = vrot.lane.b32.xlu0 %v6395, 108
      %v6460 = vpop.permute.xlu0 %6459
      %6461 = vrot.lane.b32.xlu0 %v6396, 108
      %v6462 = vpop.permute.xlu0 %6461
      %6463 = vrot.lane.b32.xlu0 %v6397, 108
      %v6464 = vpop.permute.xlu0 %6463
      %6465 = vrot.lane.b32.xlu0 %v6398, 108
      %v6466 = vpop.permute.xlu0 %6465
      %6467 = vrot.lane.b32.xlu0 %v6399, 108
      %v6468 = vpop.permute.xlu0 %6467
      %6469 = vrot.lane.b32.xlu0 %v6400, 108
      %v6470 = vpop.permute.xlu0 %6469
      %6471 = vrot.lane.b32.xlu0 %v6401, 108
      %v6472 = vpop.permute.xlu0 %6471
      %6473 = vrot.lane.b32.xlu0 %v6402, 108
      %v6474 = vpop.permute.xlu0 %6473
      %6475 = vrot.lane.b32.xlu0 %v6403, 108
      %v6476 = vpop.permute.xlu0 %6475
      %6477 = vrot.lane.b32.xlu0 %v6404, 108
      %v6478 = vpop.permute.xlu0 %6477
      %6479 = vrot.lane.b32.xlu0 %v6405, 108
      %v6480 = vpop.permute.xlu0 %6479
      %6481 = vrot.lane.b32.xlu0 %v6406, 108
      %v6482 = vpop.permute.xlu0 %6481
      %6483 = vrot.lane.b32.xlu0 %v6407, 108
      %v6484 = vpop.permute.xlu0 %6483
      %6485 = vrot.lane.b32.xlu0 %v6408, 108
      %v6486 = vpop.permute.xlu0 %6485
      %6487 = vrot.lane.b32.xlu0 %v6409, 108
      %v6488 = vpop.permute.xlu0 %6487
      %6489 = vrot.lane.b32.xlu0 %v6410, 108
      %v6490 = vpop.permute.xlu0 %6489
      %6491 = vrot.lane.b32.xlu0 %v6411, 108
      %v6492 = vpop.permute.xlu0 %6491
      %6493 = vrot.lane.b32.xlu0 %v6412, 108
      %v6494 = vpop.permute.xlu0 %6493
      %6495 = vrot.lane.b32.xlu0 %v6413, 108
      %v6496 = vpop.permute.xlu0 %6495
      %6497 = vrot.lane.b32.xlu0 %v6414, 108
      %v6498 = vpop.permute.xlu0 %6497
      %6499 = vrot.lane.b32.xlu0 %v6415, 108
      %v6500 = vpop.permute.xlu0 %6499
      %6501 = vrot.lane.b32.xlu0 %v6416, 108
      %v6502 = vpop.permute.xlu0 %6501
      %6503 = vrot.lane.b32.xlu0 %v6417, 108
      %v6504 = vpop.permute.xlu0 %6503
      %6505 = vrot.lane.b32.xlu0 %v6418, 108
      %v6506 = vpop.permute.xlu0 %6505
      %6507 = vrot.lane.b32.xlu0 %v6419, 108
      %v6508 = vpop.permute.xlu0 %6507
      %6509 = vrot.lane.b32.xlu0 %v6420, 108
      %v6510 = vpop.permute.xlu0 %6509
      %6511 = vrot.lane.b32.xlu0 %v6421, 108
      %v6512 = vpop.permute.xlu0 %6511
      %6513 = vrot.lane.b32.xlu0 %v6422, 108
      %v6514 = vpop.permute.xlu0 %6513
      %6515 = vrot.lane.b32.xlu0 %v6423, 108
      %v6516 = vpop.permute.xlu0 %6515
      %6517 = vrot.lane.b32.xlu0 %v6424, 108
      %v6518 = vpop.permute.xlu0 %6517
      %6519 = vrot.lane.b32.xlu0 %v6425, 108
      %v6520 = vpop.permute.xlu0 %6519
      %6521 = vrot.lane.b32.xlu0 %v6426, 108
      %v6522 = vpop.permute.xlu0 %6521
      %v6555 = vsel %vm4403, %v4350, %v6460
      %v6556 = vsel %vm4403, %v4351, %v6462
      %v6557 = vsel %vm4403, %v4352, %v6464
      %v6558 = vsel %vm4403, %v4353, %v6466
      %v6559 = vsel %vm4403, %v4354, %v6468
      %v6560 = vsel %vm4403, %v4355, %v6470
      %v6561 = vsel %vm4403, %v4356, %v6472
      %v6562 = vsel %vm4403, %v4357, %v6474
      %v6563 = vsel %vm4403, %v4358, %v6476
      %v6564 = vsel %vm4403, %v4359, %v6478
      %v6565 = vsel %vm4403, %v4360, %v6480
      %v6566 = vsel %vm4403, %v4361, %v6482
      %v6567 = vsel %vm4403, %v4362, %v6484
      %v6568 = vsel %vm4403, %v4363, %v6486
      %v6569 = vsel %vm4403, %v4364, %v6488
      %v6570 = vsel %vm4403, %v4365, %v6490
      %v6571 = vsel %vm4403, %v4366, %v6492
      %v6572 = vsel %vm4403, %v4367, %v6494
      %v6573 = vsel %vm4403, %v4368, %v6496
      %v6574 = vsel %vm4403, %v4369, %v6498
      %v6575 = vsel %vm4403, %v4370, %v6500
      %v6576 = vsel %vm4403, %v4371, %v6502
      %v6577 = vsel %vm4403, %v4372, %v6504
      %v6578 = vsel %vm4403, %v4373, %v6506
      %v6579 = vsel %vm4403, %v4374, %v6508
      %v6580 = vsel %vm4403, %v4375, %v6510
      %v6581 = vsel %vm4403, %v4376, %v6512
      %v6582 = vsel %vm4403, %v4377, %v6514
      %v6583 = vsel %vm4403, %v4378, %v6516
      %v6584 = vsel %vm4403, %v4379, %v6518
      %v6585 = vsel %vm4403, %v4380, %v6520
      %v6586 = vsel %vm4403, %v4381, %v6522
      %v6587 = vld [vmem:[%s3] sm:$0xff]
      %v6588 = vld [vmem:[%s3 + $0x8] sm:$0xff]
      %v6589 = vld [vmem:[%s3 + $0x10] sm:$0xff]
      %v6590 = vld [vmem:[%s3 + $0x18] sm:$0xff]
      %v6591 = vld [vmem:[%s3 + $0x20] sm:$0xff]
      %v6592 = vld [vmem:[%s3 + $0x28] sm:$0xff]
      %v6593 = vld [vmem:[%s3 + $0x30] sm:$0xff]
      %v6594 = vld [vmem:[%s3 + $0x38] sm:$0xff]
      %v6595 = vld [vmem:[%s3 + $0x40] sm:$0xff]
      %v6596 = vld [vmem:[%s3 + $0x48] sm:$0xff]
      %v6597 = vld [vmem:[%s3 + $0x50] sm:$0xff]
      %v6598 = vld [vmem:[%s3 + $0x58] sm:$0xff]
      %v6599 = vld [vmem:[%s3 + $0x60] sm:$0xff]
      %v6600 = vld [vmem:[%s3 + $0x68] sm:$0xff]
      %v6601 = vld [vmem:[%s3 + $0x70] sm:$0xff]
      %v6602 = vld [vmem:[%s3 + $0x78] sm:$0xff]
      %v6603 = vld [vmem:[%s3 + $0x80] sm:$0xff]
      %v6604 = vld [vmem:[%s3 + $0x88] sm:$0xff]
      %v6605 = vld [vmem:[%s8] sm:$0x1]
      %v6607 = vlaneseq
      %v6608 = vshrl.u32 %v6607, 7
      %v6609 = vsub.s32 0, %v6608
      %v6610 = vrot.slane %v6605, %v6609
      %v6612 = vsel %vm1952, %v6460, 0
      %v6614 = vsel %vm1952, %v6462, 0
      %v6616 = vsel %vm1952, %v6464, 0
      %v6618 = vsel %vm1952, %v6466, 0
      %v6620 = vsel %vm1952, %v6468, 0
      %v6622 = vsel %vm1952, %v6470, 0
      %v6624 = vsel %vm1952, %v6472, 0
      %v6626 = vsel %vm1952, %v6474, 0
      %v6628 = vsel %vm1952, %v6476, 0
      %v6630 = vsel %vm1952, %v6478, 0
      %v6632 = vsel %vm1952, %v6480, 0
      %v6634 = vsel %vm1952, %v6482, 0
      %v6636 = vsel %vm1952, %v6484, 0
      %v6638 = vsel %vm1952, %v6486, 0
      %v6640 = vsel %vm1952, %v6488, 0
      %v6642 = vsel %vm1952, %v6490, 0
      %v6644 = vsel %vm1952, %v6492, 0
      %v6646 = vsel %vm1952, %v6494, 0
      %v6648 = vsel %vm1952, %v6496, 0
      %v6650 = vsel %vm1952, %v6498, 0
      %v6652 = vsel %vm1952, %v6500, 0
      %v6654 = vsel %vm1952, %v6502, 0
      %v6656 = vsel %vm1952, %v6504, 0
      %v6658 = vsel %vm1952, %v6506, 0
      %v6660 = vsel %vm1952, %v6508, 0
      %v6662 = vsel %vm1952, %v6510, 0
      %v6664 = vsel %vm1952, %v6512, 0
      %v6666 = vsel %vm1952, %v6514, 0
      %v6668 = vsel %vm1952, %v6516, 0
      %v6670 = vsel %vm1952, %v6518, 0
      %v6672 = vsel %vm1952, %v6520, 0
      %v6674 = vsel %vm1952, %v6522, 0
      %6676 = vmatprep.subr.mxu0 0.0
      %6677 = vmatpush1.msra.mxu0 %v6602
      %6678 = vmatprep.subr.mxu0 0.0
      %6679 = vmatpush1.msra.mxu0 %v6601
      %6680 = vmatprep.subr.mxu0 0.0
      %6681 = vmatpush1.msra.mxu0 %v6600
      %6682 = vmatprep.subr.mxu0 0.0
      %6683 = vmatpush1.msra.mxu0 %v6599
      %6684 = vmatprep.subr.mxu0 0.0
      %6685 = vmatpush1.msra.mxu0 %v6598
      %6686 = vmatprep.subr.mxu0 0.0
      %6687 = vmatpush1.msra.mxu0 %v6597
      %6688 = vmatprep.subr.mxu0 0.0
      %6689 = vmatpush1.msra.mxu0 %v6596
      %6690 = vmatprep.subr.mxu0 0.0
      %6691 = vmatpush1.msra.mxu0 %v6595
      %6692 = vmatprep.subr.mxu0 0.0
      %6693 = vmatpush1.msra.mxu0 %v6594
      %6694 = vmatprep.subr.mxu0 0.0
      %6695 = vmatpush1.msra.mxu0 %v6593
      %6696 = vmatprep.subr.mxu0 0.0
      %6697 = vmatpush1.msra.mxu0 %v6592
      %6698 = vmatprep.subr.mxu0 0.0
      %6699 = vmatpush1.msra.mxu0 %v6591
      %6700 = vmatprep.subr.mxu0 0.0
      %6701 = vmatpush1.msra.mxu0 %v6590
      %6702 = vmatprep.subr.mxu0 0.0
      %6703 = vmatpush1.msra.mxu0 %v6589
      %6704 = vmatprep.subr.mxu0 0.0
      %6705 = vmatpush1.msra.mxu0 %v6588
      %6706 = vmatprep.subr.mxu0 0.0
      %6707 = vmatpush1.msra.mxu0 %v6587
      %6708 = vmatprep.subr.mxu0 0.0
      %6709 = vmatpush2.msra.mxu0 0.0
      %6710 = vmatprep.subr.mxu0 0.0
      %6711 = vmatpush2.msra.mxu0 0.0
      %6712 = vmatprep.subr.mxu0 0.0
      %6713 = vmatpush2.msra.mxu0 0.0
      %6714 = vmatprep.subr.mxu0 0.0
      %6715 = vmatpush2.msra.mxu0 0.0
      %6716 = vmatprep.subr.mxu0 0.0
      %6717 = vmatpush2.msra.mxu0 0.0
      %6718 = vmatprep.subr.mxu0 0.0
      %6719 = vmatpush2.msra.mxu0 0.0
      %6720 = vmatprep.subr.mxu0 0.0
      %6721 = vmatpush2.msra.mxu0 0.0
      %6722 = vmatprep.subr.mxu0 0.0
      %6723 = vmatpush2.msra.mxu0 0.0
      %6724 = vmatprep.subr.mxu0 0.0
      %6725 = vmatpush2.msra.mxu0 0.0
      %6726 = vmatprep.subr.mxu0 0.0
      %6727 = vmatpush2.msra.mxu0 0.0
      %6728 = vmatprep.subr.mxu0 0.0
      %6729 = vmatpush2.msra.mxu0 0.0
      %6730 = vmatprep.subr.mxu0 0.0
      %6731 = vmatpush2.msra.mxu0 0.0
      %6732 = vmatprep.subr.mxu0 0.0
      %6733 = vmatpush2.msra.mxu0 0.0
      %6734 = vmatprep.subr.mxu0 0.0
      %6735 = vmatpush2.msra.mxu0 0.0
      %6736 = vmatprep.subr.mxu0 0.0
      %6737 = vmatpush2.msra.mxu0 %v6604
      %6738 = vmatprep.subr.mxu0 0.0
      %6739 = vmatpush2.msra.mxu0 %v6603
      %6740 = vmatprep.mubr.f32.mxu0 %v6612
      %6741 = vmatmul.mubr.f32.gmra.mxu0 %v6555
      %v6742 = vpop.f32.mrf.mxu0
      %v6743 = vadd.f32 %v6610, %v6742
      %v6744 = vpop.f32.mrf.mxu0
      %6745 = vmatprep.mubr.f32.mxu0 %v6614
      %6746 = vmatmul.mubr.f32.gmra.mxu0 %v6556
      %v6747 = vpop.f32.mrf.mxu0
      %v6748 = vadd.f32 %v6610, %v6747
      %v6749 = vpop.f32.mrf.mxu0
      %6750 = vmatprep.mubr.f32.mxu0 %v6616
      %6751 = vmatmul.mubr.f32.gmra.mxu0 %v6557
      %v6752 = vpop.f32.mrf.mxu0
      %v6753 = vadd.f32 %v6610, %v6752
      %v6754 = vpop.f32.mrf.mxu0
      %6755 = vmatprep.mubr.f32.mxu0 %v6618
      %6756 = vmatmul.mubr.f32.gmra.mxu0 %v6558
      %v6757 = vpop.f32.mrf.mxu0
      %v6758 = vadd.f32 %v6610, %v6757
      %v6759 = vpop.f32.mrf.mxu0
      %6760 = vmatprep.mubr.f32.mxu0 %v6620
      %6761 = vmatmul.mubr.f32.gmra.mxu0 %v6559
      %v6762 = vpop.f32.mrf.mxu0
      %v6763 = vadd.f32 %v6610, %v6762
      %v6764 = vpop.f32.mrf.mxu0
      %6765 = vmatprep.mubr.f32.mxu0 %v6622
      %6766 = vmatmul.mubr.f32.gmra.mxu0 %v6560
      %v6767 = vpop.f32.mrf.mxu0
      %v6768 = vadd.f32 %v6610, %v6767
      %v6769 = vpop.f32.mrf.mxu0
      %6770 = vmatprep.mubr.f32.mxu0 %v6624
      %6771 = vmatmul.mubr.f32.gmra.mxu0 %v6561
      %v6772 = vpop.f32.mrf.mxu0
      %v6773 = vadd.f32 %v6610, %v6772
      %v6774 = vpop.f32.mrf.mxu0
      %6775 = vmatprep.mubr.f32.mxu0 %v6626
      %6776 = vmatmul.mubr.f32.gmra.mxu0 %v6562
      %v6777 = vpop.f32.mrf.mxu0
      %v6778 = vadd.f32 %v6610, %v6777
      %v6779 = vpop.f32.mrf.mxu0
      %6780 = vmatprep.mubr.f32.mxu0 %v6628
      %6781 = vmatmul.mubr.f32.gmra.mxu0 %v6563
      %v6782 = vpop.f32.mrf.mxu0
      %v6783 = vadd.f32 %v6610, %v6782
      %v6784 = vpop.f32.mrf.mxu0
      %6785 = vmatprep.mubr.f32.mxu0 %v6630
      %6786 = vmatmul.mubr.f32.gmra.mxu0 %v6564
      %v6787 = vpop.f32.mrf.mxu0
      %v6788 = vadd.f32 %v6610, %v6787
      %v6789 = vpop.f32.mrf.mxu0
      %6790 = vmatprep.mubr.f32.mxu0 %v6632
      %6791 = vmatmul.mubr.f32.gmra.mxu0 %v6565
      %v6792 = vpop.f32.mrf.mxu0
      %v6793 = vadd.f32 %v6610, %v6792
      %v6794 = vpop.f32.mrf.mxu0
      %6795 = vmatprep.mubr.f32.mxu0 %v6634
      %6796 = vmatmul.mubr.f32.gmra.mxu0 %v6566
      %v6797 = vpop.f32.mrf.mxu0
      %v6798 = vadd.f32 %v6610, %v6797
      %v6799 = vpop.f32.mrf.mxu0
      %6800 = vmatprep.mubr.f32.mxu0 %v6636
      %6801 = vmatmul.mubr.f32.gmra.mxu0 %v6567
      %v6802 = vpop.f32.mrf.mxu0
      %v6803 = vadd.f32 %v6610, %v6802
      %v6804 = vpop.f32.mrf.mxu0
      %6805 = vmatprep.mubr.f32.mxu0 %v6638
      %6806 = vmatmul.mubr.f32.gmra.mxu0 %v6568
      %v6807 = vpop.f32.mrf.mxu0
      %v6808 = vadd.f32 %v6610, %v6807
      %v6809 = vpop.f32.mrf.mxu0
      %6810 = vmatprep.mubr.f32.mxu0 %v6640
      %6811 = vmatmul.mubr.f32.gmra.mxu0 %v6569
      %v6812 = vpop.f32.mrf.mxu0
      %v6813 = vadd.f32 %v6610, %v6812
      %v6814 = vpop.f32.mrf.mxu0
      %6815 = vmatprep.mubr.f32.mxu0 %v6642
      %6816 = vmatmul.mubr.f32.gmra.mxu0 %v6570
      %v6817 = vpop.f32.mrf.mxu0
      %v6818 = vadd.f32 %v6610, %v6817
      %v6819 = vpop.f32.mrf.mxu0
      %6820 = vmatprep.mubr.f32.mxu0 %v6644
      %6821 = vmatmul.mubr.f32.gmra.mxu0 %v6571
      %v6822 = vpop.f32.mrf.mxu0
      %v6823 = vadd.f32 %v6610, %v6822
      %v6824 = vpop.f32.mrf.mxu0
      %6825 = vmatprep.mubr.f32.mxu0 %v6646
      %6826 = vmatmul.mubr.f32.gmra.mxu0 %v6572
      %v6827 = vpop.f32.mrf.mxu0
      %v6828 = vadd.f32 %v6610, %v6827
      %v6829 = vpop.f32.mrf.mxu0
      %6830 = vmatprep.mubr.f32.mxu0 %v6648
      %6831 = vmatmul.mubr.f32.gmra.mxu0 %v6573
      %v6832 = vpop.f32.mrf.mxu0
      %v6833 = vadd.f32 %v6610, %v6832
      %v6834 = vpop.f32.mrf.mxu0
      %6835 = vmatprep.mubr.f32.mxu0 %v6650
      %6836 = vmatmul.mubr.f32.gmra.mxu0 %v6574
      %v6837 = vpop.f32.mrf.mxu0
      %v6838 = vadd.f32 %v6610, %v6837
      %v6839 = vpop.f32.mrf.mxu0
      %6840 = vmatprep.mubr.f32.mxu0 %v6652
      %6841 = vmatmul.mubr.f32.gmra.mxu0 %v6575
      %v6842 = vpop.f32.mrf.mxu0
      %v6843 = vadd.f32 %v6610, %v6842
      %v6844 = vpop.f32.mrf.mxu0
      %6845 = vmatprep.mubr.f32.mxu0 %v6654
      %6846 = vmatmul.mubr.f32.gmra.mxu0 %v6576
      %v6847 = vpop.f32.mrf.mxu0
      %v6848 = vadd.f32 %v6610, %v6847
      %v6849 = vpop.f32.mrf.mxu0
      %6850 = vmatprep.mubr.f32.mxu0 %v6656
      %6851 = vmatmul.mubr.f32.gmra.mxu0 %v6577
      %v6852 = vpop.f32.mrf.mxu0
      %v6853 = vadd.f32 %v6610, %v6852
      %v6854 = vpop.f32.mrf.mxu0
      %6855 = vmatprep.mubr.f32.mxu0 %v6658
      %6856 = vmatmul.mubr.f32.gmra.mxu0 %v6578
      %v6857 = vpop.f32.mrf.mxu0
      %v6858 = vadd.f32 %v6610, %v6857
      %v6859 = vpop.f32.mrf.mxu0
      %6860 = vmatprep.mubr.f32.mxu0 %v6660
      %6861 = vmatmul.mubr.f32.gmra.mxu0 %v6579
      %v6862 = vpop.f32.mrf.mxu0
      %v6863 = vadd.f32 %v6610, %v6862
      %v6864 = vpop.f32.mrf.mxu0
      %6865 = vmatprep.mubr.f32.mxu0 %v6662
      %6866 = vmatmul.mubr.f32.gmra.mxu0 %v6580
      %v6867 = vpop.f32.mrf.mxu0
      %v6868 = vadd.f32 %v6610, %v6867
      %v6869 = vpop.f32.mrf.mxu0
      %6870 = vmatprep.mubr.f32.mxu0 %v6664
      %6871 = vmatmul.mubr.f32.gmra.mxu0 %v6581
      %v6872 = vpop.f32.mrf.mxu0
      %v6873 = vadd.f32 %v6610, %v6872
      %v6874 = vpop.f32.mrf.mxu0
      %6875 = vmatprep.mubr.f32.mxu0 %v6666
      %6876 = vmatmul.mubr.f32.gmra.mxu0 %v6582
      %v6877 = vpop.f32.mrf.mxu0
      %v6878 = vadd.f32 %v6610, %v6877
      %v6879 = vpop.f32.mrf.mxu0
      %6880 = vmatprep.mubr.f32.mxu0 %v6668
      %6881 = vmatmul.mubr.f32.gmra.mxu0 %v6583
      %v6882 = vpop.f32.mrf.mxu0
      %v6883 = vadd.f32 %v6610, %v6882
      %v6884 = vpop.f32.mrf.mxu0
      %6885 = vmatprep.mubr.f32.mxu0 %v6670
      %6886 = vmatmul.mubr.f32.gmra.mxu0 %v6584
      %v6887 = vpop.f32.mrf.mxu0
      %v6888 = vadd.f32 %v6610, %v6887
      %v6889 = vpop.f32.mrf.mxu0
      %6890 = vmatprep.mubr.f32.mxu0 %v6672
      %6891 = vmatmul.mubr.f32.gmra.mxu0 %v6585
      %v6892 = vpop.f32.mrf.mxu0
      %v6893 = vadd.f32 %v6610, %v6892
      %v6894 = vpop.f32.mrf.mxu0
      %6895 = vmatprep.mubr.f32.mxu0 %v6674
      %6896 = vmatmul.mubr.f32.gmra.mxu0 %v6586
      %v6897 = vpop.f32.mrf.mxu0
      %v6898 = vadd.f32 %v6610, %v6897
      %v6899 = vpop.f32.mrf.mxu0
      %6900 = vdwg.mxu0
      %vm6901 = vcmp.gt.f32.partialorder %v6743, 0.0
      %vm6902 = vcmp.gt.f32.partialorder %v6748, 0.0
      %vm6903 = vcmp.gt.f32.partialorder %v6753, 0.0
      %vm6904 = vcmp.gt.f32.partialorder %v6758, 0.0
      %vm6905 = vcmp.gt.f32.partialorder %v6763, 0.0
      %vm6906 = vcmp.gt.f32.partialorder %v6768, 0.0
      %vm6907 = vcmp.gt.f32.partialorder %v6773, 0.0
      %vm6908 = vcmp.gt.f32.partialorder %v6778, 0.0
      %vm6909 = vcmp.gt.f32.partialorder %v6783, 0.0
      %vm6910 = vcmp.gt.f32.partialorder %v6788, 0.0
      %vm6911 = vcmp.gt.f32.partialorder %v6793, 0.0
      %vm6912 = vcmp.gt.f32.partialorder %v6798, 0.0
      %vm6913 = vcmp.gt.f32.partialorder %v6803, 0.0
      %vm6914 = vcmp.gt.f32.partialorder %v6808, 0.0
      %vm6915 = vcmp.gt.f32.partialorder %v6813, 0.0
      %vm6916 = vcmp.gt.f32.partialorder %v6818, 0.0
      %vm6917 = vcmp.gt.f32.partialorder %v6823, 0.0
      %vm6918 = vcmp.gt.f32.partialorder %v6828, 0.0
      %vm6919 = vcmp.gt.f32.partialorder %v6833, 0.0
      %vm6920 = vcmp.gt.f32.partialorder %v6838, 0.0
      %vm6921 = vcmp.gt.f32.partialorder %v6843, 0.0
      %vm6922 = vcmp.gt.f32.partialorder %v6848, 0.0
      %vm6923 = vcmp.gt.f32.partialorder %v6853, 0.0
      %vm6924 = vcmp.gt.f32.partialorder %v6858, 0.0
      %vm6925 = vcmp.gt.f32.partialorder %v6863, 0.0
      %vm6926 = vcmp.gt.f32.partialorder %v6868, 0.0
      %vm6927 = vcmp.gt.f32.partialorder %v6873, 0.0
      %vm6928 = vcmp.gt.f32.partialorder %v6878, 0.0
      %vm6929 = vcmp.gt.f32.partialorder %v6883, 0.0
      %vm6930 = vcmp.gt.f32.partialorder %v6888, 0.0
      %vm6931 = vcmp.gt.f32.partialorder %v6893, 0.0
      %vm6932 = vcmp.gt.f32.partialorder %v6898, 0.0
      %v6933 = vmul.f32 %v6743, 0.2
      %v6934 = vmul.f32 %v6748, 0.2
      %v6935 = vmul.f32 %v6753, 0.2
      %v6936 = vmul.f32 %v6758, 0.2
      %v6937 = vmul.f32 %v6763, 0.2
      %v6938 = vmul.f32 %v6768, 0.2
      %v6939 = vmul.f32 %v6773, 0.2
      %v6940 = vmul.f32 %v6778, 0.2
      %v6941 = vmul.f32 %v6783, 0.2
      %v6942 = vmul.f32 %v6788, 0.2
      %v6943 = vmul.f32 %v6793, 0.2
      %v6944 = vmul.f32 %v6798, 0.2
      %v6945 = vmul.f32 %v6803, 0.2
      %v6946 = vmul.f32 %v6808, 0.2
      %v6947 = vmul.f32 %v6813, 0.2
      %v6948 = vmul.f32 %v6818, 0.2
      %v6949 = vmul.f32 %v6823, 0.2
      %v6950 = vmul.f32 %v6828, 0.2
      %v6951 = vmul.f32 %v6833, 0.2
      %v6952 = vmul.f32 %v6838, 0.2
      %v6953 = vmul.f32 %v6843, 0.2
      %v6954 = vmul.f32 %v6848, 0.2
      %v6955 = vmul.f32 %v6853, 0.2
      %v6956 = vmul.f32 %v6858, 0.2
      %v6957 = vmul.f32 %v6863, 0.2
      %v6958 = vmul.f32 %v6868, 0.2
      %v6959 = vmul.f32 %v6873, 0.2
      %v6960 = vmul.f32 %v6878, 0.2
      %v6961 = vmul.f32 %v6883, 0.2
      %v6962 = vmul.f32 %v6888, 0.2
      %v6963 = vmul.f32 %v6893, 0.2
      %v6964 = vmul.f32 %v6898, 0.2
      %v6965 = vsel %vm6901, %v6743, %v6933
      %v6966 = vsel %vm6902, %v6748, %v6934
      %v6967 = vsel %vm6903, %v6753, %v6935
      %v6968 = vsel %vm6904, %v6758, %v6936
      %v6969 = vsel %vm6905, %v6763, %v6937
      %v6970 = vsel %vm6906, %v6768, %v6938
      %v6971 = vsel %vm6907, %v6773, %v6939
      %v6972 = vsel %vm6908, %v6778, %v6940
      %v6973 = vsel %vm6909, %v6783, %v6941
      %v6974 = vsel %vm6910, %v6788, %v6942
      %v6975 = vsel %vm6911, %v6793, %v6943
      %v6976 = vsel %vm6912, %v6798, %v6944
      %v6977 = vsel %vm6913, %v6803, %v6945
      %v6978 = vsel %vm6914, %v6808, %v6946
      %v6979 = vsel %vm6915, %v6813, %v6947
      %v6980 = vsel %vm6916, %v6818, %v6948
      %v6981 = vsel %vm6917, %v6823, %v6949
      %v6982 = vsel %vm6918, %v6828, %v6950
      %v6983 = vsel %vm6919, %v6833, %v6951
      %v6984 = vsel %vm6920, %v6838, %v6952
      %v6985 = vsel %vm6921, %v6843, %v6953
      %v6986 = vsel %vm6922, %v6848, %v6954
      %v6987 = vsel %vm6923, %v6853, %v6955
      %v6988 = vsel %vm6924, %v6858, %v6956
      %v6989 = vsel %vm6925, %v6863, %v6957
      %v6990 = vsel %vm6926, %v6868, %v6958
      %v6991 = vsel %vm6927, %v6873, %v6959
      %v6992 = vsel %vm6928, %v6878, %v6960
      %v6993 = vsel %vm6929, %v6883, %v6961
      %v6994 = vsel %vm6930, %v6888, %v6962
      %v6995 = vsel %vm6931, %v6893, %v6963
      %v6996 = vsel %vm6932, %v6898, %v6964
      %s6997 = scalar_lea.vmem [#allocation4], 24
      %6998 = vst.msk [vmem:[%s6997 + $0x1] sm:$0xff] %vm387, %v6965
      %6999 = vst.msk [vmem:[%s6997 + $0x9] sm:$0xff] %vm387, %v6966
      %7000 = vst.msk [vmem:[%s6997 + $0x19] sm:$0xff] %vm387, %v6967
      %7001 = vst.msk [vmem:[%s6997 + $0x21] sm:$0xff] %vm387, %v6968
      %7002 = vst.msk [vmem:[%s6997 + $0x31] sm:$0xff] %vm387, %v6969
      %7003 = vst.msk [vmem:[%s6997 + $0x39] sm:$0xff] %vm387, %v6970
      %7004 = vst.msk [vmem:[%s6997 + $0x49] sm:$0xff] %vm387, %v6971
      %7005 = vst.msk [vmem:[%s6997 + $0x51] sm:$0xff] %vm387, %v6972
      %7006 = vst.msk [vmem:[%s6997 + $0x61] sm:$0xff] %vm387, %v6973
      %7007 = vst.msk [vmem:[%s6997 + $0x69] sm:$0xff] %vm387, %v6974
      %7008 = vst.msk [vmem:[%s6997 + $0x79] sm:$0xff] %vm387, %v6975
      %7009 = vst.msk [vmem:[%s6997 + $0x81] sm:$0xff] %vm387, %v6976
      %7010 = vst.msk [vmem:[%s6997 + $0x91] sm:$0xff] %vm387, %v6977
      %7011 = vst.msk [vmem:[%s6997 + $0x99] sm:$0xff] %vm387, %v6978
      %7012 = vst.msk [vmem:[%s6997 + $0xa9] sm:$0xff] %vm387, %v6979
      %7013 = vst.msk [vmem:[%s6997 + $0xb1] sm:$0xff] %vm387, %v6980
      %7014 = vst.msk [vmem:[%s6997 + $0xc1] sm:$0xff] %vm387, %v6981
      %7015 = vst.msk [vmem:[%s6997 + $0xc9] sm:$0xff] %vm387, %v6982
      %7016 = vst.msk [vmem:[%s6997 + $0xd9] sm:$0xff] %vm387, %v6983
      %7017 = vst.msk [vmem:[%s6997 + $0xe1] sm:$0xff] %vm387, %v6984
      %7018 = vst.msk [vmem:[%s6997 + $0xf1] sm:$0xff] %vm387, %v6985
      %7019 = vst.msk [vmem:[%s6997 + $0xf9] sm:$0xff] %vm387, %v6986
      %7020 = vst.msk [vmem:[%s6997 + $0x109] sm:$0xff] %vm387, %v6987
      %7021 = vst.msk [vmem:[%s6997 + $0x111] sm:$0xff] %vm387, %v6988
      %7022 = vst.msk [vmem:[%s6997 + $0x121] sm:$0xff] %vm387, %v6989
      %7023 = vst.msk [vmem:[%s6997 + $0x129] sm:$0xff] %vm387, %v6990
      %7024 = vst.msk [vmem:[%s6997 + $0x139] sm:$0xff] %vm387, %v6991
      %7025 = vst.msk [vmem:[%s6997 + $0x141] sm:$0xff] %vm387, %v6992
      %7026 = vst.msk [vmem:[%s6997 + $0x151] sm:$0xff] %vm387, %v6993
      %7027 = vst.msk [vmem:[%s6997 + $0x159] sm:$0xff] %vm387, %v6994
      %7028 = vst.msk [vmem:[%s6997 + $0x169] sm:$0xff] %vm387, %v6995
      %7029 = vst.msk [vmem:[%s6997 + $0x171] sm:$0xff] %vm387, %v6996
      %v7030 = vld [vmem:[#allocation4] sm:$0xff]
      %v7031 = vld [vmem:[#allocation4 + $0x8] sm:$0xff]
      %v7032 = vld [vmem:[#allocation4 + $0x18] sm:$0xff]
      %v7033 = vld [vmem:[#allocation4 + $0x20] sm:$0xff]
      %v7034 = vld [vmem:[#allocation4 + $0x30] sm:$0xff]
      %v7035 = vld [vmem:[#allocation4 + $0x38] sm:$0xff]
      %v7036 = vld [vmem:[#allocation4 + $0x48] sm:$0xff]
      %v7037 = vld [vmem:[#allocation4 + $0x50] sm:$0xff]
      %v7038 = vld [vmem:[#allocation4 + $0x60] sm:$0xff]
      %v7039 = vld [vmem:[#allocation4 + $0x68] sm:$0xff]
      %v7040 = vld [vmem:[#allocation4 + $0x78] sm:$0xff]
      %v7041 = vld [vmem:[#allocation4 + $0x80] sm:$0xff]
      %v7042 = vld [vmem:[#allocation4 + $0x90] sm:$0xff]
      %v7043 = vld [vmem:[#allocation4 + $0x98] sm:$0xff]
      %v7044 = vld [vmem:[#allocation4 + $0xa8] sm:$0xff]
      %v7045 = vld [vmem:[#allocation4 + $0xb0] sm:$0xff]
      %v7046 = vld [vmem:[#allocation4 + $0xc0] sm:$0xff]
      %v7047 = vld [vmem:[#allocation4 + $0xc8] sm:$0xff]
      %v7048 = vld [vmem:[#allocation4 + $0xd8] sm:$0xff]
      %v7049 = vld [vmem:[#allocation4 + $0xe0] sm:$0xff]
      %v7050 = vld [vmem:[#allocation4 + $0xf0] sm:$0xff]
      %v7051 = vld [vmem:[#allocation4 + $0xf8] sm:$0xff]
      %v7052 = vld [vmem:[#allocation4 + $0x108] sm:$0xff]
      %v7053 = vld [vmem:[#allocation4 + $0x110] sm:$0xff]
      %v7054 = vld [vmem:[#allocation4 + $0x120] sm:$0xff]
      %v7055 = vld [vmem:[#allocation4 + $0x128] sm:$0xff]
      %v7056 = vld [vmem:[#allocation4 + $0x138] sm:$0xff]
      %v7057 = vld [vmem:[#allocation4 + $0x140] sm:$0xff]
      %v7058 = vld [vmem:[#allocation4 + $0x150] sm:$0xff]
      %v7059 = vld [vmem:[#allocation4 + $0x158] sm:$0xff]
      %v7060 = vld [vmem:[#allocation4 + $0x168] sm:$0xff]
      %v7061 = vld [vmem:[#allocation4 + $0x170] sm:$0xff]
      %v7062 = vld [vmem:[#allocation4 + $0x1] sm:$0xff]
      %v7063 = vld [vmem:[#allocation4 + $0x9] sm:$0xff]
      %v7064 = vld [vmem:[#allocation4 + $0x19] sm:$0xff]
      %v7065 = vld [vmem:[#allocation4 + $0x21] sm:$0xff]
      %v7066 = vld [vmem:[#allocation4 + $0x31] sm:$0xff]
      %v7067 = vld [vmem:[#allocation4 + $0x39] sm:$0xff]
      %v7068 = vld [vmem:[#allocation4 + $0x49] sm:$0xff]
      %v7069 = vld [vmem:[#allocation4 + $0x51] sm:$0xff]
      %v7070 = vld [vmem:[#allocation4 + $0x61] sm:$0xff]
      %v7071 = vld [vmem:[#allocation4 + $0x69] sm:$0xff]
      %v7072 = vld [vmem:[#allocation4 + $0x79] sm:$0xff]
      %v7073 = vld [vmem:[#allocation4 + $0x81] sm:$0xff]
      %v7074 = vld [vmem:[#allocation4 + $0x91] sm:$0xff]
      %v7075 = vld [vmem:[#allocation4 + $0x99] sm:$0xff]
      %v7076 = vld [vmem:[#allocation4 + $0xa9] sm:$0xff]
      %v7077 = vld [vmem:[#allocation4 + $0xb1] sm:$0xff]
      %v7078 = vld [vmem:[#allocation4 + $0xc1] sm:$0xff]
      %v7079 = vld [vmem:[#allocation4 + $0xc9] sm:$0xff]
      %v7080 = vld [vmem:[#allocation4 + $0xd9] sm:$0xff]
      %v7081 = vld [vmem:[#allocation4 + $0xe1] sm:$0xff]
      %v7082 = vld [vmem:[#allocation4 + $0xf1] sm:$0xff]
      %v7083 = vld [vmem:[#allocation4 + $0xf9] sm:$0xff]
      %v7084 = vld [vmem:[#allocation4 + $0x109] sm:$0xff]
      %v7085 = vld [vmem:[#allocation4 + $0x111] sm:$0xff]
      %v7086 = vld [vmem:[#allocation4 + $0x121] sm:$0xff]
      %v7087 = vld [vmem:[#allocation4 + $0x129] sm:$0xff]
      %v7088 = vld [vmem:[#allocation4 + $0x139] sm:$0xff]
      %v7089 = vld [vmem:[#allocation4 + $0x141] sm:$0xff]
      %v7090 = vld [vmem:[#allocation4 + $0x151] sm:$0xff]
      %v7091 = vld [vmem:[#allocation4 + $0x159] sm:$0xff]
      %v7092 = vld [vmem:[#allocation4 + $0x169] sm:$0xff]
      %v7093 = vld [vmem:[#allocation4 + $0x171] sm:$0xff]
      %v7094 = vld [vmem:[#allocation4 + $0x2] sm:$0xff]
      %v7095 = vld [vmem:[#allocation4 + $0xa] sm:$0xff]
      %v7096 = vld [vmem:[#allocation4 + $0x1a] sm:$0xff]
      %v7097 = vld [vmem:[#allocation4 + $0x22] sm:$0xff]
      %v7098 = vld [vmem:[#allocation4 + $0x32] sm:$0xff]
      %v7099 = vld [vmem:[#allocation4 + $0x3a] sm:$0xff]
      %v7100 = vld [vmem:[#allocation4 + $0x4a] sm:$0xff]
      %v7101 = vld [vmem:[#allocation4 + $0x52] sm:$0xff]
      %v7102 = vld [vmem:[#allocation4 + $0x62] sm:$0xff]
      %v7103 = vld [vmem:[#allocation4 + $0x6a] sm:$0xff]
      %v7104 = vld [vmem:[#allocation4 + $0x7a] sm:$0xff]
      %v7105 = vld [vmem:[#allocation4 + $0x82] sm:$0xff]
      %v7106 = vld [vmem:[#allocation4 + $0x92] sm:$0xff]
      %v7107 = vld [vmem:[#allocation4 + $0x9a] sm:$0xff]
      %v7108 = vld [vmem:[#allocation4 + $0xaa] sm:$0xff]
      %v7109 = vld [vmem:[#allocation4 + $0xb2] sm:$0xff]
      %v7110 = vld [vmem:[#allocation4 + $0xc2] sm:$0xff]
      %v7111 = vld [vmem:[#allocation4 + $0xca] sm:$0xff]
      %v7112 = vld [vmem:[#allocation4 + $0xda] sm:$0xff]
      %v7113 = vld [vmem:[#allocation4 + $0xe2] sm:$0xff]
      %v7114 = vld [vmem:[#allocation4 + $0xf2] sm:$0xff]
      %v7115 = vld [vmem:[#allocation4 + $0xfa] sm:$0xff]
      %v7116 = vld [vmem:[#allocation4 + $0x10a] sm:$0xff]
      %v7117 = vld [vmem:[#allocation4 + $0x112] sm:$0xff]
      %v7118 = vld [vmem:[#allocation4 + $0x122] sm:$0xff]
      %v7119 = vld [vmem:[#allocation4 + $0x12a] sm:$0xff]
      %v7120 = vld [vmem:[#allocation4 + $0x13a] sm:$0xff]
      %v7121 = vld [vmem:[#allocation4 + $0x142] sm:$0xff]
      %v7122 = vld [vmem:[#allocation4 + $0x152] sm:$0xff]
      %v7123 = vld [vmem:[#allocation4 + $0x15a] sm:$0xff]
      %v7124 = vld [vmem:[#allocation4 + $0x16a] sm:$0xff]
      %v7125 = vld [vmem:[#allocation4 + $0x172] sm:$0xff]
      %v7126 = vld [vmem:[%s6997] sm:$0xff]
      %v7127 = vld [vmem:[%s6997 + $0x8] sm:$0xff]
      %v7128 = vld [vmem:[%s6997 + $0x18] sm:$0xff]
      %v7129 = vld [vmem:[%s6997 + $0x20] sm:$0xff]
      %v7130 = vld [vmem:[%s6997 + $0x30] sm:$0xff]
      %v7131 = vld [vmem:[%s6997 + $0x38] sm:$0xff]
      %v7132 = vld [vmem:[%s6997 + $0x48] sm:$0xff]
      %v7133 = vld [vmem:[%s6997 + $0x50] sm:$0xff]
      %v7134 = vld [vmem:[%s6997 + $0x60] sm:$0xff]
      %v7135 = vld [vmem:[%s6997 + $0x68] sm:$0xff]
      %v7136 = vld [vmem:[%s6997 + $0x78] sm:$0xff]
      %v7137 = vld [vmem:[%s6997 + $0x80] sm:$0xff]
      %v7138 = vld [vmem:[%s6997 + $0x90] sm:$0xff]
      %v7139 = vld [vmem:[%s6997 + $0x98] sm:$0xff]
      %v7140 = vld [vmem:[%s6997 + $0xa8] sm:$0xff]
      %v7141 = vld [vmem:[%s6997 + $0xb0] sm:$0xff]
      %v7142 = vld [vmem:[%s6997 + $0xc0] sm:$0xff]
      %v7143 = vld [vmem:[%s6997 + $0xc8] sm:$0xff]
      %v7144 = vld [vmem:[%s6997 + $0xd8] sm:$0xff]
      %v7145 = vld [vmem:[%s6997 + $0xe0] sm:$0xff]
      %v7146 = vld [vmem:[%s6997 + $0xf0] sm:$0xff]
      %v7147 = vld [vmem:[%s6997 + $0xf8] sm:$0xff]
      %v7148 = vld [vmem:[%s6997 + $0x108] sm:$0xff]
      %v7149 = vld [vmem:[%s6997 + $0x110] sm:$0xff]
      %v7150 = vld [vmem:[%s6997 + $0x120] sm:$0xff]
      %v7151 = vld [vmem:[%s6997 + $0x128] sm:$0xff]
      %v7152 = vld [vmem:[%s6997 + $0x138] sm:$0xff]
      %v7153 = vld [vmem:[%s6997 + $0x140] sm:$0xff]
      %v7154 = vld [vmem:[%s6997 + $0x150] sm:$0xff]
      %v7155 = vld [vmem:[%s6997 + $0x158] sm:$0xff]
      %v7156 = vld [vmem:[%s6997 + $0x168] sm:$0xff]
      %v7157 = vld [vmem:[%s6997 + $0x170] sm:$0xff]
      %v7158 = vld [vmem:[%s6997 + $0x1] sm:$0xff]
      %v7159 = vld [vmem:[%s6997 + $0x9] sm:$0xff]
      %v7160 = vld [vmem:[%s6997 + $0x19] sm:$0xff]
      %v7161 = vld [vmem:[%s6997 + $0x21] sm:$0xff]
      %v7162 = vld [vmem:[%s6997 + $0x31] sm:$0xff]
      %v7163 = vld [vmem:[%s6997 + $0x39] sm:$0xff]
      %v7164 = vld [vmem:[%s6997 + $0x49] sm:$0xff]
      %v7165 = vld [vmem:[%s6997 + $0x51] sm:$0xff]
      %v7166 = vld [vmem:[%s6997 + $0x61] sm:$0xff]
      %v7167 = vld [vmem:[%s6997 + $0x69] sm:$0xff]
      %v7168 = vld [vmem:[%s6997 + $0x79] sm:$0xff]
      %v7169 = vld [vmem:[%s6997 + $0x81] sm:$0xff]
      %v7170 = vld [vmem:[%s6997 + $0x91] sm:$0xff]
      %v7171 = vld [vmem:[%s6997 + $0x99] sm:$0xff]
      %v7172 = vld [vmem:[%s6997 + $0xa9] sm:$0xff]
      %v7173 = vld [vmem:[%s6997 + $0xb1] sm:$0xff]
      %v7174 = vld [vmem:[%s6997 + $0xc1] sm:$0xff]
      %v7175 = vld [vmem:[%s6997 + $0xc9] sm:$0xff]
      %v7176 = vld [vmem:[%s6997 + $0xd9] sm:$0xff]
      %v7177 = vld [vmem:[%s6997 + $0xe1] sm:$0xff]
      %v7178 = vld [vmem:[%s6997 + $0xf1] sm:$0xff]
      %v7179 = vld [vmem:[%s6997 + $0xf9] sm:$0xff]
      %v7180 = vld [vmem:[%s6997 + $0x109] sm:$0xff]
      %v7181 = vld [vmem:[%s6997 + $0x111] sm:$0xff]
      %v7182 = vld [vmem:[%s6997 + $0x121] sm:$0xff]
      %v7183 = vld [vmem:[%s6997 + $0x129] sm:$0xff]
      %v7184 = vld [vmem:[%s6997 + $0x139] sm:$0xff]
      %v7185 = vld [vmem:[%s6997 + $0x141] sm:$0xff]
      %v7186 = vld [vmem:[%s6997 + $0x151] sm:$0xff]
      %v7187 = vld [vmem:[%s6997 + $0x159] sm:$0xff]
      %v7188 = vld [vmem:[%s6997 + $0x169] sm:$0xff]
      %v7189 = vld [vmem:[%s6997 + $0x171] sm:$0xff]
      %v7190 = vld [vmem:[%s6997 + $0x2] sm:$0xff]
      %v7191 = vld [vmem:[%s6997 + $0xa] sm:$0xff]
      %v7192 = vld [vmem:[%s6997 + $0x1a] sm:$0xff]
      %v7193 = vld [vmem:[%s6997 + $0x22] sm:$0xff]
      %v7194 = vld [vmem:[%s6997 + $0x32] sm:$0xff]
      %v7195 = vld [vmem:[%s6997 + $0x3a] sm:$0xff]
      %v7196 = vld [vmem:[%s6997 + $0x4a] sm:$0xff]
      %v7197 = vld [vmem:[%s6997 + $0x52] sm:$0xff]
      %v7198 = vld [vmem:[%s6997 + $0x62] sm:$0xff]
      %v7199 = vld [vmem:[%s6997 + $0x6a] sm:$0xff]
      %v7200 = vld [vmem:[%s6997 + $0x7a] sm:$0xff]
      %v7201 = vld [vmem:[%s6997 + $0x82] sm:$0xff]
      %v7202 = vld [vmem:[%s6997 + $0x92] sm:$0xff]
      %v7203 = vld [vmem:[%s6997 + $0x9a] sm:$0xff]
      %v7204 = vld [vmem:[%s6997 + $0xaa] sm:$0xff]
      %v7205 = vld [vmem:[%s6997 + $0xb2] sm:$0xff]
      %v7206 = vld [vmem:[%s6997 + $0xc2] sm:$0xff]
      %v7207 = vld [vmem:[%s6997 + $0xca] sm:$0xff]
      %v7208 = vld [vmem:[%s6997 + $0xda] sm:$0xff]
      %v7209 = vld [vmem:[%s6997 + $0xe2] sm:$0xff]
      %v7210 = vld [vmem:[%s6997 + $0xf2] sm:$0xff]
      %v7211 = vld [vmem:[%s6997 + $0xfa] sm:$0xff]
      %v7212 = vld [vmem:[%s6997 + $0x10a] sm:$0xff]
      %v7213 = vld [vmem:[%s6997 + $0x112] sm:$0xff]
      %v7214 = vld [vmem:[%s6997 + $0x122] sm:$0xff]
      %v7215 = vld [vmem:[%s6997 + $0x12a] sm:$0xff]
      %v7216 = vld [vmem:[%s6997 + $0x13a] sm:$0xff]
      %v7217 = vld [vmem:[%s6997 + $0x142] sm:$0xff]
      %v7218 = vld [vmem:[%s6997 + $0x152] sm:$0xff]
      %v7219 = vld [vmem:[%s6997 + $0x15a] sm:$0xff]
      %v7220 = vld [vmem:[%s6997 + $0x16a] sm:$0xff]
      %v7221 = vld [vmem:[%s6997 + $0x172] sm:$0xff]
      %s7222 = scalar_lea.vmem [#allocation4], 48
      %v7223 = vld [vmem:[%s7222] sm:$0xff]
      %v7224 = vld [vmem:[%s7222 + $0x8] sm:$0xff]
      %v7225 = vld [vmem:[%s7222 + $0x18] sm:$0xff]
      %v7226 = vld [vmem:[%s7222 + $0x20] sm:$0xff]
      %v7227 = vld [vmem:[%s7222 + $0x30] sm:$0xff]
      %v7228 = vld [vmem:[%s7222 + $0x38] sm:$0xff]
      %v7229 = vld [vmem:[%s7222 + $0x48] sm:$0xff]
      %v7230 = vld [vmem:[%s7222 + $0x50] sm:$0xff]
      %v7231 = vld [vmem:[%s7222 + $0x60] sm:$0xff]
      %v7232 = vld [vmem:[%s7222 + $0x68] sm:$0xff]
      %v7233 = vld [vmem:[%s7222 + $0x78] sm:$0xff]
      %v7234 = vld [vmem:[%s7222 + $0x80] sm:$0xff]
      %v7235 = vld [vmem:[%s7222 + $0x90] sm:$0xff]
      %v7236 = vld [vmem:[%s7222 + $0x98] sm:$0xff]
      %v7237 = vld [vmem:[%s7222 + $0xa8] sm:$0xff]
      %v7238 = vld [vmem:[%s7222 + $0xb0] sm:$0xff]
      %v7239 = vld [vmem:[%s7222 + $0xc0] sm:$0xff]
      %v7240 = vld [vmem:[%s7222 + $0xc8] sm:$0xff]
      %v7241 = vld [vmem:[%s7222 + $0xd8] sm:$0xff]
      %v7242 = vld [vmem:[%s7222 + $0xe0] sm:$0xff]
      %v7243 = vld [vmem:[%s7222 + $0xf0] sm:$0xff]
      %v7244 = vld [vmem:[%s7222 + $0xf8] sm:$0xff]
      %v7245 = vld [vmem:[%s7222 + $0x108] sm:$0xff]
      %v7246 = vld [vmem:[%s7222 + $0x110] sm:$0xff]
      %v7247 = vld [vmem:[%s7222 + $0x120] sm:$0xff]
      %v7248 = vld [vmem:[%s7222 + $0x128] sm:$0xff]
      %v7249 = vld [vmem:[%s7222 + $0x138] sm:$0xff]
      %v7250 = vld [vmem:[%s7222 + $0x140] sm:$0xff]
      %v7251 = vld [vmem:[%s7222 + $0x150] sm:$0xff]
      %v7252 = vld [vmem:[%s7222 + $0x158] sm:$0xff]
      %v7253 = vld [vmem:[%s7222 + $0x168] sm:$0xff]
      %v7254 = vld [vmem:[%s7222 + $0x170] sm:$0xff]
      %v7255 = vld [vmem:[%s7222 + $0x1] sm:$0xff]
      %v7256 = vld [vmem:[%s7222 + $0x9] sm:$0xff]
      %v7257 = vld [vmem:[%s7222 + $0x19] sm:$0xff]
      %v7258 = vld [vmem:[%s7222 + $0x21] sm:$0xff]
      %v7259 = vld [vmem:[%s7222 + $0x31] sm:$0xff]
      %v7260 = vld [vmem:[%s7222 + $0x39] sm:$0xff]
      %v7261 = vld [vmem:[%s7222 + $0x49] sm:$0xff]
      %v7262 = vld [vmem:[%s7222 + $0x51] sm:$0xff]
      %v7263 = vld [vmem:[%s7222 + $0x61] sm:$0xff]
      %v7264 = vld [vmem:[%s7222 + $0x69] sm:$0xff]
      %v7265 = vld [vmem:[%s7222 + $0x79] sm:$0xff]
      %v7266 = vld [vmem:[%s7222 + $0x81] sm:$0xff]
      %v7267 = vld [vmem:[%s7222 + $0x91] sm:$0xff]
      %v7268 = vld [vmem:[%s7222 + $0x99] sm:$0xff]
      %v7269 = vld [vmem:[%s7222 + $0xa9] sm:$0xff]
      %v7270 = vld [vmem:[%s7222 + $0xb1] sm:$0xff]
      %v7271 = vld [vmem:[%s7222 + $0xc1] sm:$0xff]
      %v7272 = vld [vmem:[%s7222 + $0xc9] sm:$0xff]
      %v7273 = vld [vmem:[%s7222 + $0xd9] sm:$0xff]
      %v7274 = vld [vmem:[%s7222 + $0xe1] sm:$0xff]
      %v7275 = vld [vmem:[%s7222 + $0xf1] sm:$0xff]
      %v7276 = vld [vmem:[%s7222 + $0xf9] sm:$0xff]
      %v7277 = vld [vmem:[%s7222 + $0x109] sm:$0xff]
      %v7278 = vld [vmem:[%s7222 + $0x111] sm:$0xff]
      %v7279 = vld [vmem:[%s7222 + $0x121] sm:$0xff]
      %v7280 = vld [vmem:[%s7222 + $0x129] sm:$0xff]
      %v7281 = vld [vmem:[%s7222 + $0x139] sm:$0xff]
      %v7282 = vld [vmem:[%s7222 + $0x141] sm:$0xff]
      %v7283 = vld [vmem:[%s7222 + $0x151] sm:$0xff]
      %v7284 = vld [vmem:[%s7222 + $0x159] sm:$0xff]
      %v7285 = vld [vmem:[%s7222 + $0x169] sm:$0xff]
      %v7286 = vld [vmem:[%s7222 + $0x171] sm:$0xff]
      %v7287 = vld [vmem:[%s7222 + $0x2] sm:$0xff]
      %v7288 = vld [vmem:[%s7222 + $0xa] sm:$0xff]
      %v7289 = vld [vmem:[%s7222 + $0x1a] sm:$0xff]
      %v7290 = vld [vmem:[%s7222 + $0x22] sm:$0xff]
      %v7291 = vld [vmem:[%s7222 + $0x32] sm:$0xff]
      %v7292 = vld [vmem:[%s7222 + $0x3a] sm:$0xff]
      %v7293 = vld [vmem:[%s7222 + $0x4a] sm:$0xff]
      %v7294 = vld [vmem:[%s7222 + $0x52] sm:$0xff]
      %v7295 = vld [vmem:[%s7222 + $0x62] sm:$0xff]
      %v7296 = vld [vmem:[%s7222 + $0x6a] sm:$0xff]
      %v7297 = vld [vmem:[%s7222 + $0x7a] sm:$0xff]
      %v7298 = vld [vmem:[%s7222 + $0x82] sm:$0xff]
      %v7299 = vld [vmem:[%s7222 + $0x92] sm:$0xff]
      %v7300 = vld [vmem:[%s7222 + $0x9a] sm:$0xff]
      %v7301 = vld [vmem:[%s7222 + $0xaa] sm:$0xff]
      %v7302 = vld [vmem:[%s7222 + $0xb2] sm:$0xff]
      %v7303 = vld [vmem:[%s7222 + $0xc2] sm:$0xff]
      %v7304 = vld [vmem:[%s7222 + $0xca] sm:$0xff]
      %v7305 = vld [vmem:[%s7222 + $0xda] sm:$0xff]
      %v7306 = vld [vmem:[%s7222 + $0xe2] sm:$0xff]
      %v7307 = vld [vmem:[%s7222 + $0xf2] sm:$0xff]
      %v7308 = vld [vmem:[%s7222 + $0xfa] sm:$0xff]
      %v7309 = vld [vmem:[%s7222 + $0x10a] sm:$0xff]
      %v7310 = vld [vmem:[%s7222 + $0x112] sm:$0xff]
      %v7311 = vld [vmem:[%s7222 + $0x122] sm:$0xff]
      %v7312 = vld [vmem:[%s7222 + $0x12a] sm:$0xff]
      %v7313 = vld [vmem:[%s7222 + $0x13a] sm:$0xff]
      %v7314 = vld [vmem:[%s7222 + $0x142] sm:$0xff]
      %v7315 = vld [vmem:[%s7222 + $0x152] sm:$0xff]
      %v7316 = vld [vmem:[%s7222 + $0x15a] sm:$0xff]
      %v7317 = vld [vmem:[%s7222 + $0x16a] sm:$0xff]
      %v7318 = vld [vmem:[%s7222 + $0x172] sm:$0xff]
      %7351 = vrot.lane.b32.xlu0 %v7062, 4
      %v7352 = vpop.permute.xlu0 %7351
      %7353 = vrot.lane.b32.xlu0 %v7063, 4
      %v7354 = vpop.permute.xlu0 %7353
      %7355 = vrot.lane.b32.xlu0 %v7064, 4
      %v7356 = vpop.permute.xlu0 %7355
      %7357 = vrot.lane.b32.xlu0 %v7065, 4
      %v7358 = vpop.permute.xlu0 %7357
      %7359 = vrot.lane.b32.xlu0 %v7066, 4
      %v7360 = vpop.permute.xlu0 %7359
      %7361 = vrot.lane.b32.xlu0 %v7067, 4
      %v7362 = vpop.permute.xlu0 %7361
      %7363 = vrot.lane.b32.xlu0 %v7068, 4
      %v7364 = vpop.permute.xlu0 %7363
      %7365 = vrot.lane.b32.xlu0 %v7069, 4
      %v7366 = vpop.permute.xlu0 %7365
      %7367 = vrot.lane.b32.xlu0 %v7070, 4
      %v7368 = vpop.permute.xlu0 %7367
      %7369 = vrot.lane.b32.xlu0 %v7071, 4
      %v7370 = vpop.permute.xlu0 %7369
      %7371 = vrot.lane.b32.xlu0 %v7072, 4
      %v7372 = vpop.permute.xlu0 %7371
      %7373 = vrot.lane.b32.xlu0 %v7073, 4
      %v7374 = vpop.permute.xlu0 %7373
      %7375 = vrot.lane.b32.xlu0 %v7074, 4
      %v7376 = vpop.permute.xlu0 %7375
      %7377 = vrot.lane.b32.xlu0 %v7075, 4
      %v7378 = vpop.permute.xlu0 %7377
      %7379 = vrot.lane.b32.xlu0 %v7076, 4
      %v7380 = vpop.permute.xlu0 %7379
      %7381 = vrot.lane.b32.xlu0 %v7077, 4
      %v7382 = vpop.permute.xlu0 %7381
      %7383 = vrot.lane.b32.xlu0 %v7078, 4
      %v7384 = vpop.permute.xlu0 %7383
      %7385 = vrot.lane.b32.xlu0 %v7079, 4
      %v7386 = vpop.permute.xlu0 %7385
      %7387 = vrot.lane.b32.xlu0 %v7080, 4
      %v7388 = vpop.permute.xlu0 %7387
      %7389 = vrot.lane.b32.xlu0 %v7081, 4
      %v7390 = vpop.permute.xlu0 %7389
      %7391 = vrot.lane.b32.xlu0 %v7082, 4
      %v7392 = vpop.permute.xlu0 %7391
      %7393 = vrot.lane.b32.xlu0 %v7083, 4
      %v7394 = vpop.permute.xlu0 %7393
      %7395 = vrot.lane.b32.xlu0 %v7084, 4
      %v7396 = vpop.permute.xlu0 %7395
      %7397 = vrot.lane.b32.xlu0 %v7085, 4
      %v7398 = vpop.permute.xlu0 %7397
      %7399 = vrot.lane.b32.xlu0 %v7086, 4
      %v7400 = vpop.permute.xlu0 %7399
      %7401 = vrot.lane.b32.xlu0 %v7087, 4
      %v7402 = vpop.permute.xlu0 %7401
      %7403 = vrot.lane.b32.xlu0 %v7088, 4
      %v7404 = vpop.permute.xlu0 %7403
      %7405 = vrot.lane.b32.xlu0 %v7089, 4
      %v7406 = vpop.permute.xlu0 %7405
      %7407 = vrot.lane.b32.xlu0 %v7090, 4
      %v7408 = vpop.permute.xlu0 %7407
      %7409 = vrot.lane.b32.xlu0 %v7091, 4
      %v7410 = vpop.permute.xlu0 %7409
      %7411 = vrot.lane.b32.xlu0 %v7092, 4
      %v7412 = vpop.permute.xlu0 %7411
      %7413 = vrot.lane.b32.xlu0 %v7093, 4
      %v7414 = vpop.permute.xlu0 %7413
      %7479 = vrot.lane.b32.xlu0 %v7094, 8
      %v7480 = vpop.permute.xlu0 %7479
      %7481 = vrot.lane.b32.xlu0 %v7095, 8
      %v7482 = vpop.permute.xlu0 %7481
      %7483 = vrot.lane.b32.xlu0 %v7096, 8
      %v7484 = vpop.permute.xlu0 %7483
      %7485 = vrot.lane.b32.xlu0 %v7097, 8
      %v7486 = vpop.permute.xlu0 %7485
      %7487 = vrot.lane.b32.xlu0 %v7098, 8
      %v7488 = vpop.permute.xlu0 %7487
      %7489 = vrot.lane.b32.xlu0 %v7099, 8
      %v7490 = vpop.permute.xlu0 %7489
      %7491 = vrot.lane.b32.xlu0 %v7100, 8
      %v7492 = vpop.permute.xlu0 %7491
      %7493 = vrot.lane.b32.xlu0 %v7101, 8
      %v7494 = vpop.permute.xlu0 %7493
      %7495 = vrot.lane.b32.xlu0 %v7102, 8
      %v7496 = vpop.permute.xlu0 %7495
      %7497 = vrot.lane.b32.xlu0 %v7103, 8
      %v7498 = vpop.permute.xlu0 %7497
      %7499 = vrot.lane.b32.xlu0 %v7104, 8
      %v7500 = vpop.permute.xlu0 %7499
      %7501 = vrot.lane.b32.xlu0 %v7105, 8
      %v7502 = vpop.permute.xlu0 %7501
      %7503 = vrot.lane.b32.xlu0 %v7106, 8
      %v7504 = vpop.permute.xlu0 %7503
      %7505 = vrot.lane.b32.xlu0 %v7107, 8
      %v7506 = vpop.permute.xlu0 %7505
      %7507 = vrot.lane.b32.xlu0 %v7108, 8
      %v7508 = vpop.permute.xlu0 %7507
      %7509 = vrot.lane.b32.xlu0 %v7109, 8
      %v7510 = vpop.permute.xlu0 %7509
      %7511 = vrot.lane.b32.xlu0 %v7110, 8
      %v7512 = vpop.permute.xlu0 %7511
      %7513 = vrot.lane.b32.xlu0 %v7111, 8
      %v7514 = vpop.permute.xlu0 %7513
      %7515 = vrot.lane.b32.xlu0 %v7112, 8
      %v7516 = vpop.permute.xlu0 %7515
      %7517 = vrot.lane.b32.xlu0 %v7113, 8
      %v7518 = vpop.permute.xlu0 %7517
      %7519 = vrot.lane.b32.xlu0 %v7114, 8
      %v7520 = vpop.permute.xlu0 %7519
      %7521 = vrot.lane.b32.xlu0 %v7115, 8
      %v7522 = vpop.permute.xlu0 %7521
      %7523 = vrot.lane.b32.xlu0 %v7116, 8
      %v7524 = vpop.permute.xlu0 %7523
      %7525 = vrot.lane.b32.xlu0 %v7117, 8
      %v7526 = vpop.permute.xlu0 %7525
      %7527 = vrot.lane.b32.xlu0 %v7118, 8
      %v7528 = vpop.permute.xlu0 %7527
      %7529 = vrot.lane.b32.xlu0 %v7119, 8
      %v7530 = vpop.permute.xlu0 %7529
      %7531 = vrot.lane.b32.xlu0 %v7120, 8
      %v7532 = vpop.permute.xlu0 %7531
      %7533 = vrot.lane.b32.xlu0 %v7121, 8
      %v7534 = vpop.permute.xlu0 %7533
      %7535 = vrot.lane.b32.xlu0 %v7122, 8
      %v7536 = vpop.permute.xlu0 %7535
      %7537 = vrot.lane.b32.xlu0 %v7123, 8
      %v7538 = vpop.permute.xlu0 %7537
      %7539 = vrot.lane.b32.xlu0 %v7124, 8
      %v7540 = vpop.permute.xlu0 %7539
      %7541 = vrot.lane.b32.xlu0 %v7125, 8
      %v7542 = vpop.permute.xlu0 %7541
      %7607 = vrot.lane.b32.xlu0 %v7126, 12
      %v7608 = vpop.permute.xlu0 %7607
      %7609 = vrot.lane.b32.xlu0 %v7127, 12
      %v7610 = vpop.permute.xlu0 %7609
      %7611 = vrot.lane.b32.xlu0 %v7128, 12
      %v7612 = vpop.permute.xlu0 %7611
      %7613 = vrot.lane.b32.xlu0 %v7129, 12
      %v7614 = vpop.permute.xlu0 %7613
      %7615 = vrot.lane.b32.xlu0 %v7130, 12
      %v7616 = vpop.permute.xlu0 %7615
      %7617 = vrot.lane.b32.xlu0 %v7131, 12
      %v7618 = vpop.permute.xlu0 %7617
      %7619 = vrot.lane.b32.xlu0 %v7132, 12
      %v7620 = vpop.permute.xlu0 %7619
      %7621 = vrot.lane.b32.xlu0 %v7133, 12
      %v7622 = vpop.permute.xlu0 %7621
      %7623 = vrot.lane.b32.xlu0 %v7134, 12
      %v7624 = vpop.permute.xlu0 %7623
      %7625 = vrot.lane.b32.xlu0 %v7135, 12
      %v7626 = vpop.permute.xlu0 %7625
      %7627 = vrot.lane.b32.xlu0 %v7136, 12
      %v7628 = vpop.permute.xlu0 %7627
      %7629 = vrot.lane.b32.xlu0 %v7137, 12
      %v7630 = vpop.permute.xlu0 %7629
      %7631 = vrot.lane.b32.xlu0 %v7138, 12
      %v7632 = vpop.permute.xlu0 %7631
      %7633 = vrot.lane.b32.xlu0 %v7139, 12
      %v7634 = vpop.permute.xlu0 %7633
      %7635 = vrot.lane.b32.xlu0 %v7140, 12
      %v7636 = vpop.permute.xlu0 %7635
      %7637 = vrot.lane.b32.xlu0 %v7141, 12
      %v7638 = vpop.permute.xlu0 %7637
      %7639 = vrot.lane.b32.xlu0 %v7142, 12
      %v7640 = vpop.permute.xlu0 %7639
      %7641 = vrot.lane.b32.xlu0 %v7143, 12
      %v7642 = vpop.permute.xlu0 %7641
      %7643 = vrot.lane.b32.xlu0 %v7144, 12
      %v7644 = vpop.permute.xlu0 %7643
      %7645 = vrot.lane.b32.xlu0 %v7145, 12
      %v7646 = vpop.permute.xlu0 %7645
      %7647 = vrot.lane.b32.xlu0 %v7146, 12
      %v7648 = vpop.permute.xlu0 %7647
      %7649 = vrot.lane.b32.xlu0 %v7147, 12
      %v7650 = vpop.permute.xlu0 %7649
      %7651 = vrot.lane.b32.xlu0 %v7148, 12
      %v7652 = vpop.permute.xlu0 %7651
      %7653 = vrot.lane.b32.xlu0 %v7149, 12
      %v7654 = vpop.permute.xlu0 %7653
      %7655 = vrot.lane.b32.xlu0 %v7150, 12
      %v7656 = vpop.permute.xlu0 %7655
      %7657 = vrot.lane.b32.xlu0 %v7151, 12
      %v7658 = vpop.permute.xlu0 %7657
      %7659 = vrot.lane.b32.xlu0 %v7152, 12
      %v7660 = vpop.permute.xlu0 %7659
      %7661 = vrot.lane.b32.xlu0 %v7153, 12
      %v7662 = vpop.permute.xlu0 %7661
      %7663 = vrot.lane.b32.xlu0 %v7154, 12
      %v7664 = vpop.permute.xlu0 %7663
      %7665 = vrot.lane.b32.xlu0 %v7155, 12
      %v7666 = vpop.permute.xlu0 %7665
      %7667 = vrot.lane.b32.xlu0 %v7156, 12
      %v7668 = vpop.permute.xlu0 %7667
      %7669 = vrot.lane.b32.xlu0 %v7157, 12
      %v7670 = vpop.permute.xlu0 %7669
      %7735 = vrot.lane.b32.xlu0 %v7158, 16
      %v7736 = vpop.permute.xlu0 %7735
      %7737 = vrot.lane.b32.xlu0 %v7159, 16
      %v7738 = vpop.permute.xlu0 %7737
      %7739 = vrot.lane.b32.xlu0 %v7160, 16
      %v7740 = vpop.permute.xlu0 %7739
      %7741 = vrot.lane.b32.xlu0 %v7161, 16
      %v7742 = vpop.permute.xlu0 %7741
      %7743 = vrot.lane.b32.xlu0 %v7162, 16
      %v7744 = vpop.permute.xlu0 %7743
      %7745 = vrot.lane.b32.xlu0 %v7163, 16
      %v7746 = vpop.permute.xlu0 %7745
      %7747 = vrot.lane.b32.xlu0 %v7164, 16
      %v7748 = vpop.permute.xlu0 %7747
      %7749 = vrot.lane.b32.xlu0 %v7165, 16
      %v7750 = vpop.permute.xlu0 %7749
      %7751 = vrot.lane.b32.xlu0 %v7166, 16
      %v7752 = vpop.permute.xlu0 %7751
      %7753 = vrot.lane.b32.xlu0 %v7167, 16
      %v7754 = vpop.permute.xlu0 %7753
      %7755 = vrot.lane.b32.xlu0 %v7168, 16
      %v7756 = vpop.permute.xlu0 %7755
      %7757 = vrot.lane.b32.xlu0 %v7169, 16
      %v7758 = vpop.permute.xlu0 %7757
      %7759 = vrot.lane.b32.xlu0 %v7170, 16
      %v7760 = vpop.permute.xlu0 %7759
      %7761 = vrot.lane.b32.xlu0 %v7171, 16
      %v7762 = vpop.permute.xlu0 %7761
      %7763 = vrot.lane.b32.xlu0 %v7172, 16
      %v7764 = vpop.permute.xlu0 %7763
      %7765 = vrot.lane.b32.xlu0 %v7173, 16
      %v7766 = vpop.permute.xlu0 %7765
      %7767 = vrot.lane.b32.xlu0 %v7174, 16
      %v7768 = vpop.permute.xlu0 %7767
      %7769 = vrot.lane.b32.xlu0 %v7175, 16
      %v7770 = vpop.permute.xlu0 %7769
      %7771 = vrot.lane.b32.xlu0 %v7176, 16
      %v7772 = vpop.permute.xlu0 %7771
      %7773 = vrot.lane.b32.xlu0 %v7177, 16
      %v7774 = vpop.permute.xlu0 %7773
      %7775 = vrot.lane.b32.xlu0 %v7178, 16
      %v7776 = vpop.permute.xlu0 %7775
      %7777 = vrot.lane.b32.xlu0 %v7179, 16
      %v7778 = vpop.permute.xlu0 %7777
      %7779 = vrot.lane.b32.xlu0 %v7180, 16
      %v7780 = vpop.permute.xlu0 %7779
      %7781 = vrot.lane.b32.xlu0 %v7181, 16
      %v7782 = vpop.permute.xlu0 %7781
      %7783 = vrot.lane.b32.xlu0 %v7182, 16
      %v7784 = vpop.permute.xlu0 %7783
      %7785 = vrot.lane.b32.xlu0 %v7183, 16
      %v7786 = vpop.permute.xlu0 %7785
      %7787 = vrot.lane.b32.xlu0 %v7184, 16
      %v7788 = vpop.permute.xlu0 %7787
      %7789 = vrot.lane.b32.xlu0 %v7185, 16
      %v7790 = vpop.permute.xlu0 %7789
      %7791 = vrot.lane.b32.xlu0 %v7186, 16
      %v7792 = vpop.permute.xlu0 %7791
      %7793 = vrot.lane.b32.xlu0 %v7187, 16
      %v7794 = vpop.permute.xlu0 %7793
      %7795 = vrot.lane.b32.xlu0 %v7188, 16
      %v7796 = vpop.permute.xlu0 %7795
      %7797 = vrot.lane.b32.xlu0 %v7189, 16
      %v7798 = vpop.permute.xlu0 %7797
      %7863 = vrot.lane.b32.xlu0 %v7190, 20
      %v7864 = vpop.permute.xlu0 %7863
      %7865 = vrot.lane.b32.xlu0 %v7191, 20
      %v7866 = vpop.permute.xlu0 %7865
      %7867 = vrot.lane.b32.xlu0 %v7192, 20
      %v7868 = vpop.permute.xlu0 %7867
      %7869 = vrot.lane.b32.xlu0 %v7193, 20
      %v7870 = vpop.permute.xlu0 %7869
      %7871 = vrot.lane.b32.xlu0 %v7194, 20
      %v7872 = vpop.permute.xlu0 %7871
      %7873 = vrot.lane.b32.xlu0 %v7195, 20
      %v7874 = vpop.permute.xlu0 %7873
      %7875 = vrot.lane.b32.xlu0 %v7196, 20
      %v7876 = vpop.permute.xlu0 %7875
      %7877 = vrot.lane.b32.xlu0 %v7197, 20
      %v7878 = vpop.permute.xlu0 %7877
      %7879 = vrot.lane.b32.xlu0 %v7198, 20
      %v7880 = vpop.permute.xlu0 %7879
      %7881 = vrot.lane.b32.xlu0 %v7199, 20
      %v7882 = vpop.permute.xlu0 %7881
      %7883 = vrot.lane.b32.xlu0 %v7200, 20
      %v7884 = vpop.permute.xlu0 %7883
      %7885 = vrot.lane.b32.xlu0 %v7201, 20
      %v7886 = vpop.permute.xlu0 %7885
      %7887 = vrot.lane.b32.xlu0 %v7202, 20
      %v7888 = vpop.permute.xlu0 %7887
      %7889 = vrot.lane.b32.xlu0 %v7203, 20
      %v7890 = vpop.permute.xlu0 %7889
      %7891 = vrot.lane.b32.xlu0 %v7204, 20
      %v7892 = vpop.permute.xlu0 %7891
      %7893 = vrot.lane.b32.xlu0 %v7205, 20
      %v7894 = vpop.permute.xlu0 %7893
      %7895 = vrot.lane.b32.xlu0 %v7206, 20
      %v7896 = vpop.permute.xlu0 %7895
      %7897 = vrot.lane.b32.xlu0 %v7207, 20
      %v7898 = vpop.permute.xlu0 %7897
      %7899 = vrot.lane.b32.xlu0 %v7208, 20
      %v7900 = vpop.permute.xlu0 %7899
      %7901 = vrot.lane.b32.xlu0 %v7209, 20
      %v7902 = vpop.permute.xlu0 %7901
      %7903 = vrot.lane.b32.xlu0 %v7210, 20
      %v7904 = vpop.permute.xlu0 %7903
      %7905 = vrot.lane.b32.xlu0 %v7211, 20
      %v7906 = vpop.permute.xlu0 %7905
      %7907 = vrot.lane.b32.xlu0 %v7212, 20
      %v7908 = vpop.permute.xlu0 %7907
      %7909 = vrot.lane.b32.xlu0 %v7213, 20
      %v7910 = vpop.permute.xlu0 %7909
      %7911 = vrot.lane.b32.xlu0 %v7214, 20
      %v7912 = vpop.permute.xlu0 %7911
      %7913 = vrot.lane.b32.xlu0 %v7215, 20
      %v7914 = vpop.permute.xlu0 %7913
      %7915 = vrot.lane.b32.xlu0 %v7216, 20
      %v7916 = vpop.permute.xlu0 %7915
      %7917 = vrot.lane.b32.xlu0 %v7217, 20
      %v7918 = vpop.permute.xlu0 %7917
      %7919 = vrot.lane.b32.xlu0 %v7218, 20
      %v7920 = vpop.permute.xlu0 %7919
      %7921 = vrot.lane.b32.xlu0 %v7219, 20
      %v7922 = vpop.permute.xlu0 %7921
      %7923 = vrot.lane.b32.xlu0 %v7220, 20
      %v7924 = vpop.permute.xlu0 %7923
      %7925 = vrot.lane.b32.xlu0 %v7221, 20
      %v7926 = vpop.permute.xlu0 %7925
      %7991 = vrot.lane.b32.xlu0 %v7223, 24
      %v7992 = vpop.permute.xlu0 %7991
      %7993 = vrot.lane.b32.xlu0 %v7224, 24
      %v7994 = vpop.permute.xlu0 %7993
      %7995 = vrot.lane.b32.xlu0 %v7225, 24
      %v7996 = vpop.permute.xlu0 %7995
      %7997 = vrot.lane.b32.xlu0 %v7226, 24
      %v7998 = vpop.permute.xlu0 %7997
      %7999 = vrot.lane.b32.xlu0 %v7227, 24
      %v8000 = vpop.permute.xlu0 %7999
      %8001 = vrot.lane.b32.xlu0 %v7228, 24
      %v8002 = vpop.permute.xlu0 %8001
      %8003 = vrot.lane.b32.xlu0 %v7229, 24
      %v8004 = vpop.permute.xlu0 %8003
      %8005 = vrot.lane.b32.xlu0 %v7230, 24
      %v8006 = vpop.permute.xlu0 %8005
      %8007 = vrot.lane.b32.xlu0 %v7231, 24
      %v8008 = vpop.permute.xlu0 %8007
      %8009 = vrot.lane.b32.xlu0 %v7232, 24
      %v8010 = vpop.permute.xlu0 %8009
      %8011 = vrot.lane.b32.xlu0 %v7233, 24
      %v8012 = vpop.permute.xlu0 %8011
      %8013 = vrot.lane.b32.xlu0 %v7234, 24
      %v8014 = vpop.permute.xlu0 %8013
      %8015 = vrot.lane.b32.xlu0 %v7235, 24
      %v8016 = vpop.permute.xlu0 %8015
      %8017 = vrot.lane.b32.xlu0 %v7236, 24
      %v8018 = vpop.permute.xlu0 %8017
      %8019 = vrot.lane.b32.xlu0 %v7237, 24
      %v8020 = vpop.permute.xlu0 %8019
      %8021 = vrot.lane.b32.xlu0 %v7238, 24
      %v8022 = vpop.permute.xlu0 %8021
      %8023 = vrot.lane.b32.xlu0 %v7239, 24
      %v8024 = vpop.permute.xlu0 %8023
      %8025 = vrot.lane.b32.xlu0 %v7240, 24
      %v8026 = vpop.permute.xlu0 %8025
      %8027 = vrot.lane.b32.xlu0 %v7241, 24
      %v8028 = vpop.permute.xlu0 %8027
      %8029 = vrot.lane.b32.xlu0 %v7242, 24
      %v8030 = vpop.permute.xlu0 %8029
      %8031 = vrot.lane.b32.xlu0 %v7243, 24
      %v8032 = vpop.permute.xlu0 %8031
      %8033 = vrot.lane.b32.xlu0 %v7244, 24
      %v8034 = vpop.permute.xlu0 %8033
      %8035 = vrot.lane.b32.xlu0 %v7245, 24
      %v8036 = vpop.permute.xlu0 %8035
      %8037 = vrot.lane.b32.xlu0 %v7246, 24
      %v8038 = vpop.permute.xlu0 %8037
      %8039 = vrot.lane.b32.xlu0 %v7247, 24
      %v8040 = vpop.permute.xlu0 %8039
      %8041 = vrot.lane.b32.xlu0 %v7248, 24
      %v8042 = vpop.permute.xlu0 %8041
      %8043 = vrot.lane.b32.xlu0 %v7249, 24
      %v8044 = vpop.permute.xlu0 %8043
      %8045 = vrot.lane.b32.xlu0 %v7250, 24
      %v8046 = vpop.permute.xlu0 %8045
      %8047 = vrot.lane.b32.xlu0 %v7251, 24
      %v8048 = vpop.permute.xlu0 %8047
      %8049 = vrot.lane.b32.xlu0 %v7252, 24
      %v8050 = vpop.permute.xlu0 %8049
      %8051 = vrot.lane.b32.xlu0 %v7253, 24
      %v8052 = vpop.permute.xlu0 %8051
      %8053 = vrot.lane.b32.xlu0 %v7254, 24
      %v8054 = vpop.permute.xlu0 %8053
      %8119 = vrot.lane.b32.xlu0 %v7255, 28
      %v8120 = vpop.permute.xlu0 %8119
      %8121 = vrot.lane.b32.xlu0 %v7256, 28
      %v8122 = vpop.permute.xlu0 %8121
      %8123 = vrot.lane.b32.xlu0 %v7257, 28
      %v8124 = vpop.permute.xlu0 %8123
      %8125 = vrot.lane.b32.xlu0 %v7258, 28
      %v8126 = vpop.permute.xlu0 %8125
      %8127 = vrot.lane.b32.xlu0 %v7259, 28
      %v8128 = vpop.permute.xlu0 %8127
      %8129 = vrot.lane.b32.xlu0 %v7260, 28
      %v8130 = vpop.permute.xlu0 %8129
      %8131 = vrot.lane.b32.xlu0 %v7261, 28
      %v8132 = vpop.permute.xlu0 %8131
      %8133 = vrot.lane.b32.xlu0 %v7262, 28
      %v8134 = vpop.permute.xlu0 %8133
      %8135 = vrot.lane.b32.xlu0 %v7263, 28
      %v8136 = vpop.permute.xlu0 %8135
      %8137 = vrot.lane.b32.xlu0 %v7264, 28
      %v8138 = vpop.permute.xlu0 %8137
      %8139 = vrot.lane.b32.xlu0 %v7265, 28
      %v8140 = vpop.permute.xlu0 %8139
      %8141 = vrot.lane.b32.xlu0 %v7266, 28
      %v8142 = vpop.permute.xlu0 %8141
      %8143 = vrot.lane.b32.xlu0 %v7267, 28
      %v8144 = vpop.permute.xlu0 %8143
      %8145 = vrot.lane.b32.xlu0 %v7268, 28
      %v8146 = vpop.permute.xlu0 %8145
      %8147 = vrot.lane.b32.xlu0 %v7269, 28
      %v8148 = vpop.permute.xlu0 %8147
      %8149 = vrot.lane.b32.xlu0 %v7270, 28
      %v8150 = vpop.permute.xlu0 %8149
      %8151 = vrot.lane.b32.xlu0 %v7271, 28
      %v8152 = vpop.permute.xlu0 %8151
      %8153 = vrot.lane.b32.xlu0 %v7272, 28
      %v8154 = vpop.permute.xlu0 %8153
      %8155 = vrot.lane.b32.xlu0 %v7273, 28
      %v8156 = vpop.permute.xlu0 %8155
      %8157 = vrot.lane.b32.xlu0 %v7274, 28
      %v8158 = vpop.permute.xlu0 %8157
      %8159 = vrot.lane.b32.xlu0 %v7275, 28
      %v8160 = vpop.permute.xlu0 %8159
      %8161 = vrot.lane.b32.xlu0 %v7276, 28
      %v8162 = vpop.permute.xlu0 %8161
      %8163 = vrot.lane.b32.xlu0 %v7277, 28
      %v8164 = vpop.permute.xlu0 %8163
      %8165 = vrot.lane.b32.xlu0 %v7278, 28
      %v8166 = vpop.permute.xlu0 %8165
      %8167 = vrot.lane.b32.xlu0 %v7279, 28
      %v8168 = vpop.permute.xlu0 %8167
      %8169 = vrot.lane.b32.xlu0 %v7280, 28
      %v8170 = vpop.permute.xlu0 %8169
      %8171 = vrot.lane.b32.xlu0 %v7281, 28
      %v8172 = vpop.permute.xlu0 %8171
      %8173 = vrot.lane.b32.xlu0 %v7282, 28
      %v8174 = vpop.permute.xlu0 %8173
      %8175 = vrot.lane.b32.xlu0 %v7283, 28
      %v8176 = vpop.permute.xlu0 %8175
      %8177 = vrot.lane.b32.xlu0 %v7284, 28
      %v8178 = vpop.permute.xlu0 %8177
      %8179 = vrot.lane.b32.xlu0 %v7285, 28
      %v8180 = vpop.permute.xlu0 %8179
      %8181 = vrot.lane.b32.xlu0 %v7286, 28
      %v8182 = vpop.permute.xlu0 %8181
      %8247 = vrot.lane.b32.xlu0 %v7287, 32
      %v8248 = vpop.permute.xlu0 %8247
      %8249 = vrot.lane.b32.xlu0 %v7288, 32
      %v8250 = vpop.permute.xlu0 %8249
      %8251 = vrot.lane.b32.xlu0 %v7289, 32
      %v8252 = vpop.permute.xlu0 %8251
      %8253 = vrot.lane.b32.xlu0 %v7290, 32
      %v8254 = vpop.permute.xlu0 %8253
      %8255 = vrot.lane.b32.xlu0 %v7291, 32
      %v8256 = vpop.permute.xlu0 %8255
      %8257 = vrot.lane.b32.xlu0 %v7292, 32
      %v8258 = vpop.permute.xlu0 %8257
      %8259 = vrot.lane.b32.xlu0 %v7293, 32
      %v8260 = vpop.permute.xlu0 %8259
      %8261 = vrot.lane.b32.xlu0 %v7294, 32
      %v8262 = vpop.permute.xlu0 %8261
      %8263 = vrot.lane.b32.xlu0 %v7295, 32
      %v8264 = vpop.permute.xlu0 %8263
      %8265 = vrot.lane.b32.xlu0 %v7296, 32
      %v8266 = vpop.permute.xlu0 %8265
      %8267 = vrot.lane.b32.xlu0 %v7297, 32
      %v8268 = vpop.permute.xlu0 %8267
      %8269 = vrot.lane.b32.xlu0 %v7298, 32
      %v8270 = vpop.permute.xlu0 %8269
      %8271 = vrot.lane.b32.xlu0 %v7299, 32
      %v8272 = vpop.permute.xlu0 %8271
      %8273 = vrot.lane.b32.xlu0 %v7300, 32
      %v8274 = vpop.permute.xlu0 %8273
      %8275 = vrot.lane.b32.xlu0 %v7301, 32
      %v8276 = vpop.permute.xlu0 %8275
      %8277 = vrot.lane.b32.xlu0 %v7302, 32
      %v8278 = vpop.permute.xlu0 %8277
      %8279 = vrot.lane.b32.xlu0 %v7303, 32
      %v8280 = vpop.permute.xlu0 %8279
      %8281 = vrot.lane.b32.xlu0 %v7304, 32
      %v8282 = vpop.permute.xlu0 %8281
      %8283 = vrot.lane.b32.xlu0 %v7305, 32
      %v8284 = vpop.permute.xlu0 %8283
      %8285 = vrot.lane.b32.xlu0 %v7306, 32
      %v8286 = vpop.permute.xlu0 %8285
      %8287 = vrot.lane.b32.xlu0 %v7307, 32
      %v8288 = vpop.permute.xlu0 %8287
      %8289 = vrot.lane.b32.xlu0 %v7308, 32
      %v8290 = vpop.permute.xlu0 %8289
      %8291 = vrot.lane.b32.xlu0 %v7309, 32
      %v8292 = vpop.permute.xlu0 %8291
      %8293 = vrot.lane.b32.xlu0 %v7310, 32
      %v8294 = vpop.permute.xlu0 %8293
      %8295 = vrot.lane.b32.xlu0 %v7311, 32
      %v8296 = vpop.permute.xlu0 %8295
      %8297 = vrot.lane.b32.xlu0 %v7312, 32
      %v8298 = vpop.permute.xlu0 %8297
      %8299 = vrot.lane.b32.xlu0 %v7313, 32
      %v8300 = vpop.permute.xlu0 %8299
      %8301 = vrot.lane.b32.xlu0 %v7314, 32
      %v8302 = vpop.permute.xlu0 %8301
      %8303 = vrot.lane.b32.xlu0 %v7315, 32
      %v8304 = vpop.permute.xlu0 %8303
      %8305 = vrot.lane.b32.xlu0 %v7316, 32
      %v8306 = vpop.permute.xlu0 %8305
      %8307 = vrot.lane.b32.xlu0 %v7317, 32
      %v8308 = vpop.permute.xlu0 %8307
      %8309 = vrot.lane.b32.xlu0 %v7318, 32
      %v8310 = vpop.permute.xlu0 %8309
      %v8343 = vsel %vm387, %v7030, %v7352
      %v8344 = vsel %vm387, %v7031, %v7354
      %v8345 = vsel %vm387, %v7032, %v7356
      %v8346 = vsel %vm387, %v7033, %v7358
      %v8347 = vsel %vm387, %v7034, %v7360
      %v8348 = vsel %vm387, %v7035, %v7362
      %v8349 = vsel %vm387, %v7036, %v7364
      %v8350 = vsel %vm387, %v7037, %v7366
      %v8351 = vsel %vm387, %v7038, %v7368
      %v8352 = vsel %vm387, %v7039, %v7370
      %v8353 = vsel %vm387, %v7040, %v7372
      %v8354 = vsel %vm387, %v7041, %v7374
      %v8355 = vsel %vm387, %v7042, %v7376
      %v8356 = vsel %vm387, %v7043, %v7378
      %v8357 = vsel %vm387, %v7044, %v7380
      %v8358 = vsel %vm387, %v7045, %v7382
      %v8359 = vsel %vm387, %v7046, %v7384
      %v8360 = vsel %vm387, %v7047, %v7386
      %v8361 = vsel %vm387, %v7048, %v7388
      %v8362 = vsel %vm387, %v7049, %v7390
      %v8363 = vsel %vm387, %v7050, %v7392
      %v8364 = vsel %vm387, %v7051, %v7394
      %v8365 = vsel %vm387, %v7052, %v7396
      %v8366 = vsel %vm387, %v7053, %v7398
      %v8367 = vsel %vm387, %v7054, %v7400
      %v8368 = vsel %vm387, %v7055, %v7402
      %v8369 = vsel %vm387, %v7056, %v7404
      %v8370 = vsel %vm387, %v7057, %v7406
      %v8371 = vsel %vm387, %v7058, %v7408
      %v8372 = vsel %vm387, %v7059, %v7410
      %v8373 = vsel %vm387, %v7060, %v7412
      %v8374 = vsel %vm387, %v7061, %v7414
      %v8375 = vsel %vm1919, %v8343, %v7480
      %v8376 = vsel %vm1919, %v8344, %v7482
      %v8377 = vsel %vm1919, %v8345, %v7484
      %v8378 = vsel %vm1919, %v8346, %v7486
      %v8379 = vsel %vm1919, %v8347, %v7488
      %v8380 = vsel %vm1919, %v8348, %v7490
      %v8381 = vsel %vm1919, %v8349, %v7492
      %v8382 = vsel %vm1919, %v8350, %v7494
      %v8383 = vsel %vm1919, %v8351, %v7496
      %v8384 = vsel %vm1919, %v8352, %v7498
      %v8385 = vsel %vm1919, %v8353, %v7500
      %v8386 = vsel %vm1919, %v8354, %v7502
      %v8387 = vsel %vm1919, %v8355, %v7504
      %v8388 = vsel %vm1919, %v8356, %v7506
      %v8389 = vsel %vm1919, %v8357, %v7508
      %v8390 = vsel %vm1919, %v8358, %v7510
      %v8391 = vsel %vm1919, %v8359, %v7512
      %v8392 = vsel %vm1919, %v8360, %v7514
      %v8393 = vsel %vm1919, %v8361, %v7516
      %v8394 = vsel %vm1919, %v8362, %v7518
      %v8395 = vsel %vm1919, %v8363, %v7520
      %v8396 = vsel %vm1919, %v8364, %v7522
      %v8397 = vsel %vm1919, %v8365, %v7524
      %v8398 = vsel %vm1919, %v8366, %v7526
      %v8399 = vsel %vm1919, %v8367, %v7528
      %v8400 = vsel %vm1919, %v8368, %v7530
      %v8401 = vsel %vm1919, %v8369, %v7532
      %v8402 = vsel %vm1919, %v8370, %v7534
      %v8403 = vsel %vm1919, %v8371, %v7536
      %v8404 = vsel %vm1919, %v8372, %v7538
      %v8405 = vsel %vm1919, %v8373, %v7540
      %v8406 = vsel %vm1919, %v8374, %v7542
      %v8407 = vsel %vm4027, %v8375, %v7608
      %v8408 = vsel %vm4027, %v8376, %v7610
      %v8409 = vsel %vm4027, %v8377, %v7612
      %v8410 = vsel %vm4027, %v8378, %v7614
      %v8411 = vsel %vm4027, %v8379, %v7616
      %v8412 = vsel %vm4027, %v8380, %v7618
      %v8413 = vsel %vm4027, %v8381, %v7620
      %v8414 = vsel %vm4027, %v8382, %v7622
      %v8415 = vsel %vm4027, %v8383, %v7624
      %v8416 = vsel %vm4027, %v8384, %v7626
      %v8417 = vsel %vm4027, %v8385, %v7628
      %v8418 = vsel %vm4027, %v8386, %v7630
      %v8419 = vsel %vm4027, %v8387, %v7632
      %v8420 = vsel %vm4027, %v8388, %v7634
      %v8421 = vsel %vm4027, %v8389, %v7636
      %v8422 = vsel %vm4027, %v8390, %v7638
      %v8423 = vsel %vm4027, %v8391, %v7640
      %v8424 = vsel %vm4027, %v8392, %v7642
      %v8425 = vsel %vm4027, %v8393, %v7644
      %v8426 = vsel %vm4027, %v8394, %v7646
      %v8427 = vsel %vm4027, %v8395, %v7648
      %v8428 = vsel %vm4027, %v8396, %v7650
      %v8429 = vsel %vm4027, %v8397, %v7652
      %v8430 = vsel %vm4027, %v8398, %v7654
      %v8431 = vsel %vm4027, %v8399, %v7656
      %v8432 = vsel %vm4027, %v8400, %v7658
      %v8433 = vsel %vm4027, %v8401, %v7660
      %v8434 = vsel %vm4027, %v8402, %v7662
      %v8435 = vsel %vm4027, %v8403, %v7664
      %v8436 = vsel %vm4027, %v8404, %v7666
      %v8437 = vsel %vm4027, %v8405, %v7668
      %v8438 = vsel %vm4027, %v8406, %v7670
      %v8439 = vsel %vm1952, %v8407, %v7736
      %v8440 = vsel %vm1952, %v8408, %v7738
      %v8441 = vsel %vm1952, %v8409, %v7740
      %v8442 = vsel %vm1952, %v8410, %v7742
      %v8443 = vsel %vm1952, %v8411, %v7744
      %v8444 = vsel %vm1952, %v8412, %v7746
      %v8445 = vsel %vm1952, %v8413, %v7748
      %v8446 = vsel %vm1952, %v8414, %v7750
      %v8447 = vsel %vm1952, %v8415, %v7752
      %v8448 = vsel %vm1952, %v8416, %v7754
      %v8449 = vsel %vm1952, %v8417, %v7756
      %v8450 = vsel %vm1952, %v8418, %v7758
      %v8451 = vsel %vm1952, %v8419, %v7760
      %v8452 = vsel %vm1952, %v8420, %v7762
      %v8453 = vsel %vm1952, %v8421, %v7764
      %v8454 = vsel %vm1952, %v8422, %v7766
      %v8455 = vsel %vm1952, %v8423, %v7768
      %v8456 = vsel %vm1952, %v8424, %v7770
      %v8457 = vsel %vm1952, %v8425, %v7772
      %v8458 = vsel %vm1952, %v8426, %v7774
      %v8459 = vsel %vm1952, %v8427, %v7776
      %v8460 = vsel %vm1952, %v8428, %v7778
      %v8461 = vsel %vm1952, %v8429, %v7780
      %v8462 = vsel %vm1952, %v8430, %v7782
      %v8463 = vsel %vm1952, %v8431, %v7784
      %v8464 = vsel %vm1952, %v8432, %v7786
      %v8465 = vsel %vm1952, %v8433, %v7788
      %v8466 = vsel %vm1952, %v8434, %v7790
      %v8467 = vsel %vm1952, %v8435, %v7792
      %v8468 = vsel %vm1952, %v8436, %v7794
      %v8469 = vsel %vm1952, %v8437, %v7796
      %v8470 = vsel %vm1952, %v8438, %v7798
      %v8471 = vsel %vm4092, %v8439, %v7864
      %v8472 = vsel %vm4092, %v8440, %v7866
      %v8473 = vsel %vm4092, %v8441, %v7868
      %v8474 = vsel %vm4092, %v8442, %v7870
      %v8475 = vsel %vm4092, %v8443, %v7872
      %v8476 = vsel %vm4092, %v8444, %v7874
      %v8477 = vsel %vm4092, %v8445, %v7876
      %v8478 = vsel %vm4092, %v8446, %v7878
      %v8479 = vsel %vm4092, %v8447, %v7880
      %v8480 = vsel %vm4092, %v8448, %v7882
      %v8481 = vsel %vm4092, %v8449, %v7884
      %v8482 = vsel %vm4092, %v8450, %v7886
      %v8483 = vsel %vm4092, %v8451, %v7888
      %v8484 = vsel %vm4092, %v8452, %v7890
      %v8485 = vsel %vm4092, %v8453, %v7892
      %v8486 = vsel %vm4092, %v8454, %v7894
      %v8487 = vsel %vm4092, %v8455, %v7896
      %v8488 = vsel %vm4092, %v8456, %v7898
      %v8489 = vsel %vm4092, %v8457, %v7900
      %v8490 = vsel %vm4092, %v8458, %v7902
      %v8491 = vsel %vm4092, %v8459, %v7904
      %v8492 = vsel %vm4092, %v8460, %v7906
      %v8493 = vsel %vm4092, %v8461, %v7908
      %v8494 = vsel %vm4092, %v8462, %v7910
      %v8495 = vsel %vm4092, %v8463, %v7912
      %v8496 = vsel %vm4092, %v8464, %v7914
      %v8497 = vsel %vm4092, %v8465, %v7916
      %v8498 = vsel %vm4092, %v8466, %v7918
      %v8499 = vsel %vm4092, %v8467, %v7920
      %v8500 = vsel %vm4092, %v8468, %v7922
      %v8501 = vsel %vm4092, %v8469, %v7924
      %v8502 = vsel %vm4092, %v8470, %v7926
      %v8503 = vsel %vm1985, %v8471, %v7992
      %v8504 = vsel %vm1985, %v8472, %v7994
      %v8505 = vsel %vm1985, %v8473, %v7996
      %v8506 = vsel %vm1985, %v8474, %v7998
      %v8507 = vsel %vm1985, %v8475, %v8000
      %v8508 = vsel %vm1985, %v8476, %v8002
      %v8509 = vsel %vm1985, %v8477, %v8004
      %v8510 = vsel %vm1985, %v8478, %v8006
      %v8511 = vsel %vm1985, %v8479, %v8008
      %v8512 = vsel %vm1985, %v8480, %v8010
      %v8513 = vsel %vm1985, %v8481, %v8012
      %v8514 = vsel %vm1985, %v8482, %v8014
      %v8515 = vsel %vm1985, %v8483, %v8016
      %v8516 = vsel %vm1985, %v8484, %v8018
      %v8517 = vsel %vm1985, %v8485, %v8020
      %v8518 = vsel %vm1985, %v8486, %v8022
      %v8519 = vsel %vm1985, %v8487, %v8024
      %v8520 = vsel %vm1985, %v8488, %v8026
      %v8521 = vsel %vm1985, %v8489, %v8028
      %v8522 = vsel %vm1985, %v8490, %v8030
      %v8523 = vsel %vm1985, %v8491, %v8032
      %v8524 = vsel %vm1985, %v8492, %v8034
      %v8525 = vsel %vm1985, %v8493, %v8036
      %v8526 = vsel %vm1985, %v8494, %v8038
      %v8527 = vsel %vm1985, %v8495, %v8040
      %v8528 = vsel %vm1985, %v8496, %v8042
      %v8529 = vsel %vm1985, %v8497, %v8044
      %v8530 = vsel %vm1985, %v8498, %v8046
      %v8531 = vsel %vm1985, %v8499, %v8048
      %v8532 = vsel %vm1985, %v8500, %v8050
      %v8533 = vsel %vm1985, %v8501, %v8052
      %v8534 = vsel %vm1985, %v8502, %v8054
      %v8535 = vsel %vm4157, %v8503, %v8120
      %v8536 = vsel %vm4157, %v8504, %v8122
      %v8537 = vsel %vm4157, %v8505, %v8124
      %v8538 = vsel %vm4157, %v8506, %v8126
      %v8539 = vsel %vm4157, %v8507, %v8128
      %v8540 = vsel %vm4157, %v8508, %v8130
      %v8541 = vsel %vm4157, %v8509, %v8132
      %v8542 = vsel %vm4157, %v8510, %v8134
      %v8543 = vsel %vm4157, %v8511, %v8136
      %v8544 = vsel %vm4157, %v8512, %v8138
      %v8545 = vsel %vm4157, %v8513, %v8140
      %v8546 = vsel %vm4157, %v8514, %v8142
      %v8547 = vsel %vm4157, %v8515, %v8144
      %v8548 = vsel %vm4157, %v8516, %v8146
      %v8549 = vsel %vm4157, %v8517, %v8148
      %v8550 = vsel %vm4157, %v8518, %v8150
      %v8551 = vsel %vm4157, %v8519, %v8152
      %v8552 = vsel %vm4157, %v8520, %v8154
      %v8553 = vsel %vm4157, %v8521, %v8156
      %v8554 = vsel %vm4157, %v8522, %v8158
      %v8555 = vsel %vm4157, %v8523, %v8160
      %v8556 = vsel %vm4157, %v8524, %v8162
      %v8557 = vsel %vm4157, %v8525, %v8164
      %v8558 = vsel %vm4157, %v8526, %v8166
      %v8559 = vsel %vm4157, %v8527, %v8168
      %v8560 = vsel %vm4157, %v8528, %v8170
      %v8561 = vsel %vm4157, %v8529, %v8172
      %v8562 = vsel %vm4157, %v8530, %v8174
      %v8563 = vsel %vm4157, %v8531, %v8176
      %v8564 = vsel %vm4157, %v8532, %v8178
      %v8565 = vsel %vm4157, %v8533, %v8180
      %v8566 = vsel %vm4157, %v8534, %v8182
      %v8567 = vsel %vm2018, %v8535, %v8248
      %v8568 = vsel %vm2018, %v8536, %v8250
      %v8569 = vsel %vm2018, %v8537, %v8252
      %v8570 = vsel %vm2018, %v8538, %v8254
      %v8571 = vsel %vm2018, %v8539, %v8256
      %v8572 = vsel %vm2018, %v8540, %v8258
      %v8573 = vsel %vm2018, %v8541, %v8260
      %v8574 = vsel %vm2018, %v8542, %v8262
      %v8575 = vsel %vm2018, %v8543, %v8264
      %v8576 = vsel %vm2018, %v8544, %v8266
      %v8577 = vsel %vm2018, %v8545, %v8268
      %v8578 = vsel %vm2018, %v8546, %v8270
      %v8579 = vsel %vm2018, %v8547, %v8272
      %v8580 = vsel %vm2018, %v8548, %v8274
      %v8581 = vsel %vm2018, %v8549, %v8276
      %v8582 = vsel %vm2018, %v8550, %v8278
      %v8583 = vsel %vm2018, %v8551, %v8280
      %v8584 = vsel %vm2018, %v8552, %v8282
      %v8585 = vsel %vm2018, %v8553, %v8284
      %v8586 = vsel %vm2018, %v8554, %v8286
      %v8587 = vsel %vm2018, %v8555, %v8288
      %v8588 = vsel %vm2018, %v8556, %v8290
      %v8589 = vsel %vm2018, %v8557, %v8292
      %v8590 = vsel %vm2018, %v8558, %v8294
      %v8591 = vsel %vm2018, %v8559, %v8296
      %v8592 = vsel %vm2018, %v8560, %v8298
      %v8593 = vsel %vm2018, %v8561, %v8300
      %v8594 = vsel %vm2018, %v8562, %v8302
      %v8595 = vsel %vm2018, %v8563, %v8304
      %v8596 = vsel %vm2018, %v8564, %v8306
      %v8597 = vsel %vm2018, %v8565, %v8308
      %v8598 = vsel %vm2018, %v8566, %v8310
      %8631 = vrot.lane.b32.xlu0 %v8567, 16
      %v8632 = vpop.permute.xlu0 %8631
      %8633 = vrot.lane.b32.xlu0 %v8568, 16
      %v8634 = vpop.permute.xlu0 %8633
      %8635 = vrot.lane.b32.xlu0 %v8569, 16
      %v8636 = vpop.permute.xlu0 %8635
      %8637 = vrot.lane.b32.xlu0 %v8570, 16
      %v8638 = vpop.permute.xlu0 %8637
      %8639 = vrot.lane.b32.xlu0 %v8571, 16
      %v8640 = vpop.permute.xlu0 %8639
      %8641 = vrot.lane.b32.xlu0 %v8572, 16
      %v8642 = vpop.permute.xlu0 %8641
      %8643 = vrot.lane.b32.xlu0 %v8573, 16
      %v8644 = vpop.permute.xlu0 %8643
      %8645 = vrot.lane.b32.xlu0 %v8574, 16
      %v8646 = vpop.permute.xlu0 %8645
      %8647 = vrot.lane.b32.xlu0 %v8575, 16
      %v8648 = vpop.permute.xlu0 %8647
      %8649 = vrot.lane.b32.xlu0 %v8576, 16
      %v8650 = vpop.permute.xlu0 %8649
      %8651 = vrot.lane.b32.xlu0 %v8577, 16
      %v8652 = vpop.permute.xlu0 %8651
      %8653 = vrot.lane.b32.xlu0 %v8578, 16
      %v8654 = vpop.permute.xlu0 %8653
      %8655 = vrot.lane.b32.xlu0 %v8579, 16
      %v8656 = vpop.permute.xlu0 %8655
      %8657 = vrot.lane.b32.xlu0 %v8580, 16
      %v8658 = vpop.permute.xlu0 %8657
      %8659 = vrot.lane.b32.xlu0 %v8581, 16
      %v8660 = vpop.permute.xlu0 %8659
      %8661 = vrot.lane.b32.xlu0 %v8582, 16
      %v8662 = vpop.permute.xlu0 %8661
      %8663 = vrot.lane.b32.xlu0 %v8583, 16
      %v8664 = vpop.permute.xlu0 %8663
      %8665 = vrot.lane.b32.xlu0 %v8584, 16
      %v8666 = vpop.permute.xlu0 %8665
      %8667 = vrot.lane.b32.xlu0 %v8585, 16
      %v8668 = vpop.permute.xlu0 %8667
      %8669 = vrot.lane.b32.xlu0 %v8586, 16
      %v8670 = vpop.permute.xlu0 %8669
      %8671 = vrot.lane.b32.xlu0 %v8587, 16
      %v8672 = vpop.permute.xlu0 %8671
      %8673 = vrot.lane.b32.xlu0 %v8588, 16
      %v8674 = vpop.permute.xlu0 %8673
      %8675 = vrot.lane.b32.xlu0 %v8589, 16
      %v8676 = vpop.permute.xlu0 %8675
      %8677 = vrot.lane.b32.xlu0 %v8590, 16
      %v8678 = vpop.permute.xlu0 %8677
      %8679 = vrot.lane.b32.xlu0 %v8591, 16
      %v8680 = vpop.permute.xlu0 %8679
      %8681 = vrot.lane.b32.xlu0 %v8592, 16
      %v8682 = vpop.permute.xlu0 %8681
      %8683 = vrot.lane.b32.xlu0 %v8593, 16
      %v8684 = vpop.permute.xlu0 %8683
      %8685 = vrot.lane.b32.xlu0 %v8594, 16
      %v8686 = vpop.permute.xlu0 %8685
      %8687 = vrot.lane.b32.xlu0 %v8595, 16
      %v8688 = vpop.permute.xlu0 %8687
      %8689 = vrot.lane.b32.xlu0 %v8596, 16
      %v8690 = vpop.permute.xlu0 %8689
      %8691 = vrot.lane.b32.xlu0 %v8597, 16
      %v8692 = vpop.permute.xlu0 %8691
      %8693 = vrot.lane.b32.xlu0 %v8598, 16
      %v8694 = vpop.permute.xlu0 %8693
      %v8727 = vsel %vm1952, %v6460, %v8632
      %v8728 = vsel %vm1952, %v6462, %v8634
      %v8729 = vsel %vm1952, %v6464, %v8636
      %v8730 = vsel %vm1952, %v6466, %v8638
      %v8731 = vsel %vm1952, %v6468, %v8640
      %v8732 = vsel %vm1952, %v6470, %v8642
      %v8733 = vsel %vm1952, %v6472, %v8644
      %v8734 = vsel %vm1952, %v6474, %v8646
      %v8735 = vsel %vm1952, %v6476, %v8648
      %v8736 = vsel %vm1952, %v6478, %v8650
      %v8737 = vsel %vm1952, %v6480, %v8652
      %v8738 = vsel %vm1952, %v6482, %v8654
      %v8739 = vsel %vm1952, %v6484, %v8656
      %v8740 = vsel %vm1952, %v6486, %v8658
      %v8741 = vsel %vm1952, %v6488, %v8660
      %v8742 = vsel %vm1952, %v6490, %v8662
      %v8743 = vsel %vm1952, %v6492, %v8664
      %v8744 = vsel %vm1952, %v6494, %v8666
      %v8745 = vsel %vm1952, %v6496, %v8668
      %v8746 = vsel %vm1952, %v6498, %v8670
      %v8747 = vsel %vm1952, %v6500, %v8672
      %v8748 = vsel %vm1952, %v6502, %v8674
      %v8749 = vsel %vm1952, %v6504, %v8676
      %v8750 = vsel %vm1952, %v6506, %v8678
      %v8751 = vsel %vm1952, %v6508, %v8680
      %v8752 = vsel %vm1952, %v6510, %v8682
      %v8753 = vsel %vm1952, %v6512, %v8684
      %v8754 = vsel %vm1952, %v6514, %v8686
      %v8755 = vsel %vm1952, %v6516, %v8688
      %v8756 = vsel %vm1952, %v6518, %v8690
      %v8757 = vsel %vm1952, %v6520, %v8692
      %v8758 = vsel %vm1952, %v6522, %v8694
      %v8759 = vld [vmem:[%s4] sm:$0xff]
      %v8760 = vld [vmem:[%s4 + $0x8] sm:$0xff]
      %v8761 = vld [vmem:[%s4 + $0x10] sm:$0xff]
      %v8762 = vld [vmem:[%s4 + $0x18] sm:$0xff]
      %v8763 = vld [vmem:[%s4 + $0x20] sm:$0xff]
      %v8764 = vld [vmem:[%s4 + $0x28] sm:$0xff]
      %v8765 = vld [vmem:[%s4 + $0x30] sm:$0xff]
      %v8766 = vld [vmem:[%s4 + $0x38] sm:$0xff]
      %v8767 = vld [vmem:[%s4 + $0x40] sm:$0xff]
      %v8768 = vld [vmem:[%s4 + $0x48] sm:$0xff]
      %v8769 = vld [vmem:[%s4 + $0x50] sm:$0xff]
      %v8770 = vld [vmem:[%s4 + $0x58] sm:$0xff]
      %v8771 = vld [vmem:[%s4 + $0x60] sm:$0xff]
      %v8772 = vld [vmem:[%s4 + $0x68] sm:$0xff]
      %v8773 = vld [vmem:[%s4 + $0x70] sm:$0xff]
      %v8774 = vld [vmem:[%s4 + $0x78] sm:$0xff]
      %v8775 = vld [vmem:[%s4 + $0x80] sm:$0xff]
      %v8776 = vld [vmem:[%s4 + $0x88] sm:$0xff]
      %v8777 = vld [vmem:[%s4 + $0x90] sm:$0xff]
      %v8778 = vld [vmem:[%s4 + $0x98] sm:$0xff]
      %v8779 = vld [vmem:[%s4 + $0xa0] sm:$0xff]
      %v8780 = vld [vmem:[%s4 + $0xa8] sm:$0xff]
      %v8781 = vld [vmem:[%s4 + $0xb0] sm:$0xf]
      %v8782 = vld [vmem:[%s9] sm:$0x1]
      %v8784 = vlaneseq
      %v8785 = vshrl.u32 %v8784, 7
      %v8786 = vsub.s32 0, %v8785
      %v8787 = vrot.slane %v8782, %v8786
      %vm8789 = vcmask 424960
      %v8791 = vsel %vm8789, %v8727, 0
      %v8794 = vsel %vm8789, %v8728, 0
      %v8797 = vsel %vm8789, %v8729, 0
      %v8800 = vsel %vm8789, %v8730, 0
      %v8803 = vsel %vm8789, %v8731, 0
      %v8806 = vsel %vm8789, %v8732, 0
      %v8809 = vsel %vm8789, %v8733, 0
      %v8812 = vsel %vm8789, %v8734, 0
      %v8815 = vsel %vm8789, %v8735, 0
      %v8818 = vsel %vm8789, %v8736, 0
      %v8821 = vsel %vm8789, %v8737, 0
      %v8824 = vsel %vm8789, %v8738, 0
      %v8827 = vsel %vm8789, %v8739, 0
      %v8830 = vsel %vm8789, %v8740, 0
      %v8833 = vsel %vm8789, %v8741, 0
      %v8836 = vsel %vm8789, %v8742, 0
      %v8839 = vsel %vm8789, %v8743, 0
      %v8842 = vsel %vm8789, %v8744, 0
      %v8845 = vsel %vm8789, %v8745, 0
      %v8848 = vsel %vm8789, %v8746, 0
      %v8851 = vsel %vm8789, %v8747, 0
      %v8854 = vsel %vm8789, %v8748, 0
      %v8857 = vsel %vm8789, %v8749, 0
      %v8860 = vsel %vm8789, %v8750, 0
      %v8863 = vsel %vm8789, %v8751, 0
      %v8866 = vsel %vm8789, %v8752, 0
      %v8869 = vsel %vm8789, %v8753, 0
      %v8872 = vsel %vm8789, %v8754, 0
      %v8875 = vsel %vm8789, %v8755, 0
      %v8878 = vsel %vm8789, %v8756, 0
      %v8881 = vsel %vm8789, %v8757, 0
      %v8884 = vsel %vm8789, %v8758, 0
      %v8887 = vsel %vm4500, %v8781, 0
      %8889 = vmatprep.subr.mxu0 0.0
      %8890 = vmatpush1.msra.mxu0 %v8774
      %8891 = vmatprep.subr.mxu0 0.0
      %8892 = vmatpush1.msra.mxu0 %v8773
      %8893 = vmatprep.subr.mxu0 0.0
      %8894 = vmatpush1.msra.mxu0 %v8772
      %8895 = vmatprep.subr.mxu0 0.0
      %8896 = vmatpush1.msra.mxu0 %v8771
      %8897 = vmatprep.subr.mxu0 0.0
      %8898 = vmatpush1.msra.mxu0 %v8770
      %8899 = vmatprep.subr.mxu0 0.0
      %8900 = vmatpush1.msra.mxu0 %v8769
      %8901 = vmatprep.subr.mxu0 0.0
      %8902 = vmatpush1.msra.mxu0 %v8768
      %8903 = vmatprep.subr.mxu0 0.0
      %8904 = vmatpush1.msra.mxu0 %v8767
      %8905 = vmatprep.subr.mxu0 0.0
      %8906 = vmatpush1.msra.mxu0 %v8766
      %8907 = vmatprep.subr.mxu0 0.0
      %8908 = vmatpush1.msra.mxu0 %v8765
      %8909 = vmatprep.subr.mxu0 0.0
      %8910 = vmatpush1.msra.mxu0 %v8764
      %8911 = vmatprep.subr.mxu0 0.0
      %8912 = vmatpush1.msra.mxu0 %v8763
      %8913 = vmatprep.subr.mxu0 0.0
      %8914 = vmatpush1.msra.mxu0 %v8762
      %8915 = vmatprep.subr.mxu0 0.0
      %8916 = vmatpush1.msra.mxu0 %v8761
      %8917 = vmatprep.subr.mxu0 0.0
      %8918 = vmatpush1.msra.mxu0 %v8760
      %8919 = vmatprep.subr.mxu0 0.0
      %8920 = vmatpush1.msra.mxu0 %v8759
      %8921 = vmatprep.subr.mxu0 0.0
      %8922 = vmatpush2.msra.mxu0 0.0
      %8923 = vmatprep.subr.mxu0 0.0
      %8924 = vmatpush2.msra.mxu0 0.0
      %8925 = vmatprep.subr.mxu0 0.0
      %8926 = vmatpush2.msra.mxu0 0.0
      %8927 = vmatprep.subr.mxu0 0.0
      %8928 = vmatpush2.msra.mxu0 0.0
      %8929 = vmatprep.subr.mxu0 0.0
      %8930 = vmatpush2.msra.mxu0 0.0
      %8931 = vmatprep.subr.mxu0 0.0
      %8932 = vmatpush2.msra.mxu0 0.0
      %8933 = vmatprep.subr.mxu0 0.0
      %8934 = vmatpush2.msra.mxu0 0.0
      %8935 = vmatprep.subr.mxu0 0.0
      %8936 = vmatpush2.msra.mxu0 0.0
      %8937 = vmatprep.subr.mxu0 0.0
      %8938 = vmatpush2.msra.mxu0 0.0
      %8939 = vmatprep.subr.mxu0 0.0
      %8940 = vmatpush2.msra.mxu0 %v8887
      %8941 = vmatprep.subr.mxu0 0.0
      %8942 = vmatpush2.msra.mxu0 %v8780
      %8943 = vmatprep.subr.mxu0 0.0
      %8944 = vmatpush2.msra.mxu0 %v8779
      %8945 = vmatprep.subr.mxu0 0.0
      %8946 = vmatpush2.msra.mxu0 %v8778
      %8947 = vmatprep.subr.mxu0 0.0
      %8948 = vmatpush2.msra.mxu0 %v8777
      %8949 = vmatprep.subr.mxu0 0.0
      %8950 = vmatpush2.msra.mxu0 %v8776
      %8951 = vmatprep.subr.mxu0 0.0
      %8952 = vmatpush2.msra.mxu0 %v8775
      %8953 = vmatprep.mubr.f32.mxu0 %v8791
      %8954 = vmatmul.mubr.f32.gmra.mxu0 %v6555
      %v8955 = vpop.f32.mrf.mxu0
      %v8956 = vadd.f32 %v8787, %v8955
      %v8957 = vpop.f32.mrf.mxu0
      %8958 = vmatprep.mubr.f32.mxu0 %v8794
      %8959 = vmatmul.mubr.f32.gmra.mxu0 %v6556
      %v8960 = vpop.f32.mrf.mxu0
      %v8961 = vadd.f32 %v8787, %v8960
      %v8962 = vpop.f32.mrf.mxu0
      %8963 = vmatprep.mubr.f32.mxu0 %v8797
      %8964 = vmatmul.mubr.f32.gmra.mxu0 %v6557
      %v8965 = vpop.f32.mrf.mxu0
      %v8966 = vadd.f32 %v8787, %v8965
      %v8967 = vpop.f32.mrf.mxu0
      %8968 = vmatprep.mubr.f32.mxu0 %v8800
      %8969 = vmatmul.mubr.f32.gmra.mxu0 %v6558
      %v8970 = vpop.f32.mrf.mxu0
      %v8971 = vadd.f32 %v8787, %v8970
      %v8972 = vpop.f32.mrf.mxu0
      %8973 = vmatprep.mubr.f32.mxu0 %v8803
      %8974 = vmatmul.mubr.f32.gmra.mxu0 %v6559
      %v8975 = vpop.f32.mrf.mxu0
      %v8976 = vadd.f32 %v8787, %v8975
      %v8977 = vpop.f32.mrf.mxu0
      %8978 = vmatprep.mubr.f32.mxu0 %v8806
      %8979 = vmatmul.mubr.f32.gmra.mxu0 %v6560
      %v8980 = vpop.f32.mrf.mxu0
      %v8981 = vadd.f32 %v8787, %v8980
      %v8982 = vpop.f32.mrf.mxu0
      %8983 = vmatprep.mubr.f32.mxu0 %v8809
      %8984 = vmatmul.mubr.f32.gmra.mxu0 %v6561
      %v8985 = vpop.f32.mrf.mxu0
      %v8986 = vadd.f32 %v8787, %v8985
      %v8987 = vpop.f32.mrf.mxu0
      %8988 = vmatprep.mubr.f32.mxu0 %v8812
      %8989 = vmatmul.mubr.f32.gmra.mxu0 %v6562
      %v8990 = vpop.f32.mrf.mxu0
      %v8991 = vadd.f32 %v8787, %v8990
      %v8992 = vpop.f32.mrf.mxu0
      %8993 = vmatprep.mubr.f32.mxu0 %v8815
      %8994 = vmatmul.mubr.f32.gmra.mxu0 %v6563
      %v8995 = vpop.f32.mrf.mxu0
      %v8996 = vadd.f32 %v8787, %v8995
      %v8997 = vpop.f32.mrf.mxu0
      %8998 = vmatprep.mubr.f32.mxu0 %v8818
      %8999 = vmatmul.mubr.f32.gmra.mxu0 %v6564
      %v9000 = vpop.f32.mrf.mxu0
      %v9001 = vadd.f32 %v8787, %v9000
      %v9002 = vpop.f32.mrf.mxu0
      %9003 = vmatprep.mubr.f32.mxu0 %v8821
      %9004 = vmatmul.mubr.f32.gmra.mxu0 %v6565
      %v9005 = vpop.f32.mrf.mxu0
      %v9006 = vadd.f32 %v8787, %v9005
      %v9007 = vpop.f32.mrf.mxu0
      %9008 = vmatprep.mubr.f32.mxu0 %v8824
      %9009 = vmatmul.mubr.f32.gmra.mxu0 %v6566
      %v9010 = vpop.f32.mrf.mxu0
      %v9011 = vadd.f32 %v8787, %v9010
      %v9012 = vpop.f32.mrf.mxu0
      %9013 = vmatprep.mubr.f32.mxu0 %v8827
      %9014 = vmatmul.mubr.f32.gmra.mxu0 %v6567
      %v9015 = vpop.f32.mrf.mxu0
      %v9016 = vadd.f32 %v8787, %v9015
      %v9017 = vpop.f32.mrf.mxu0
      %9018 = vmatprep.mubr.f32.mxu0 %v8830
      %9019 = vmatmul.mubr.f32.gmra.mxu0 %v6568
      %v9020 = vpop.f32.mrf.mxu0
      %v9021 = vadd.f32 %v8787, %v9020
      %v9022 = vpop.f32.mrf.mxu0
      %9023 = vmatprep.mubr.f32.mxu0 %v8833
      %9024 = vmatmul.mubr.f32.gmra.mxu0 %v6569
      %v9025 = vpop.f32.mrf.mxu0
      %v9026 = vadd.f32 %v8787, %v9025
      %v9027 = vpop.f32.mrf.mxu0
      %9028 = vmatprep.mubr.f32.mxu0 %v8836
      %9029 = vmatmul.mubr.f32.gmra.mxu0 %v6570
      %v9030 = vpop.f32.mrf.mxu0
      %v9031 = vadd.f32 %v8787, %v9030
      %v9032 = vpop.f32.mrf.mxu0
      %9033 = vmatprep.mubr.f32.mxu0 %v8839
      %9034 = vmatmul.mubr.f32.gmra.mxu0 %v6571
      %v9035 = vpop.f32.mrf.mxu0
      %v9036 = vadd.f32 %v8787, %v9035
      %v9037 = vpop.f32.mrf.mxu0
      %9038 = vmatprep.mubr.f32.mxu0 %v8842
      %9039 = vmatmul.mubr.f32.gmra.mxu0 %v6572
      %v9040 = vpop.f32.mrf.mxu0
      %v9041 = vadd.f32 %v8787, %v9040
      %v9042 = vpop.f32.mrf.mxu0
      %9043 = vmatprep.mubr.f32.mxu0 %v8845
      %9044 = vmatmul.mubr.f32.gmra.mxu0 %v6573
      %v9045 = vpop.f32.mrf.mxu0
      %v9046 = vadd.f32 %v8787, %v9045
      %v9047 = vpop.f32.mrf.mxu0
      %9048 = vmatprep.mubr.f32.mxu0 %v8848
      %9049 = vmatmul.mubr.f32.gmra.mxu0 %v6574
      %v9050 = vpop.f32.mrf.mxu0
      %v9051 = vadd.f32 %v8787, %v9050
      %v9052 = vpop.f32.mrf.mxu0
      %9053 = vmatprep.mubr.f32.mxu0 %v8851
      %9054 = vmatmul.mubr.f32.gmra.mxu0 %v6575
      %v9055 = vpop.f32.mrf.mxu0
      %v9056 = vadd.f32 %v8787, %v9055
      %v9057 = vpop.f32.mrf.mxu0
      %9058 = vmatprep.mubr.f32.mxu0 %v8854
      %9059 = vmatmul.mubr.f32.gmra.mxu0 %v6576
      %v9060 = vpop.f32.mrf.mxu0
      %v9061 = vadd.f32 %v8787, %v9060
      %v9062 = vpop.f32.mrf.mxu0
      %9063 = vmatprep.mubr.f32.mxu0 %v8857
      %9064 = vmatmul.mubr.f32.gmra.mxu0 %v6577
      %v9065 = vpop.f32.mrf.mxu0
      %v9066 = vadd.f32 %v8787, %v9065
      %v9067 = vpop.f32.mrf.mxu0
      %9068 = vmatprep.mubr.f32.mxu0 %v8860
      %9069 = vmatmul.mubr.f32.gmra.mxu0 %v6578
      %v9070 = vpop.f32.mrf.mxu0
      %v9071 = vadd.f32 %v8787, %v9070
      %v9072 = vpop.f32.mrf.mxu0
      %9073 = vmatprep.mubr.f32.mxu0 %v8863
      %9074 = vmatmul.mubr.f32.gmra.mxu0 %v6579
      %v9075 = vpop.f32.mrf.mxu0
      %v9076 = vadd.f32 %v8787, %v9075
      %v9077 = vpop.f32.mrf.mxu0
      %9078 = vmatprep.mubr.f32.mxu0 %v8866
      %9079 = vmatmul.mubr.f32.gmra.mxu0 %v6580
      %v9080 = vpop.f32.mrf.mxu0
      %v9081 = vadd.f32 %v8787, %v9080
      %v9082 = vpop.f32.mrf.mxu0
      %9083 = vmatprep.mubr.f32.mxu0 %v8869
      %9084 = vmatmul.mubr.f32.gmra.mxu0 %v6581
      %v9085 = vpop.f32.mrf.mxu0
      %v9086 = vadd.f32 %v8787, %v9085
      %v9087 = vpop.f32.mrf.mxu0
      %9088 = vmatprep.mubr.f32.mxu0 %v8872
      %9089 = vmatmul.mubr.f32.gmra.mxu0 %v6582
      %v9090 = vpop.f32.mrf.mxu0
      %v9091 = vadd.f32 %v8787, %v9090
      %v9092 = vpop.f32.mrf.mxu0
      %9093 = vmatprep.mubr.f32.mxu0 %v8875
      %9094 = vmatmul.mubr.f32.gmra.mxu0 %v6583
      %v9095 = vpop.f32.mrf.mxu0
      %v9096 = vadd.f32 %v8787, %v9095
      %v9097 = vpop.f32.mrf.mxu0
      %9098 = vmatprep.mubr.f32.mxu0 %v8878
      %9099 = vmatmul.mubr.f32.gmra.mxu0 %v6584
      %v9100 = vpop.f32.mrf.mxu0
      %v9101 = vadd.f32 %v8787, %v9100
      %v9102 = vpop.f32.mrf.mxu0
      %9103 = vmatprep.mubr.f32.mxu0 %v8881
      %9104 = vmatmul.mubr.f32.gmra.mxu0 %v6585
      %v9105 = vpop.f32.mrf.mxu0
      %v9106 = vadd.f32 %v8787, %v9105
      %v9107 = vpop.f32.mrf.mxu0
      %9108 = vmatprep.mubr.f32.mxu0 %v8884
      %9109 = vmatmul.mubr.f32.gmra.mxu0 %v6586
      %v9110 = vpop.f32.mrf.mxu0
      %v9111 = vadd.f32 %v8787, %v9110
      %v9112 = vpop.f32.mrf.mxu0
      %9113 = vdwg.mxu0
      %vm9114 = vcmp.gt.f32.partialorder %v8956, 0.0
      %vm9115 = vcmp.gt.f32.partialorder %v8961, 0.0
      %vm9116 = vcmp.gt.f32.partialorder %v8966, 0.0
      %vm9117 = vcmp.gt.f32.partialorder %v8971, 0.0
      %vm9118 = vcmp.gt.f32.partialorder %v8976, 0.0
      %vm9119 = vcmp.gt.f32.partialorder %v8981, 0.0
      %vm9120 = vcmp.gt.f32.partialorder %v8986, 0.0
      %vm9121 = vcmp.gt.f32.partialorder %v8991, 0.0
      %vm9122 = vcmp.gt.f32.partialorder %v8996, 0.0
      %vm9123 = vcmp.gt.f32.partialorder %v9001, 0.0
      %vm9124 = vcmp.gt.f32.partialorder %v9006, 0.0
      %vm9125 = vcmp.gt.f32.partialorder %v9011, 0.0
      %vm9126 = vcmp.gt.f32.partialorder %v9016, 0.0
      %vm9127 = vcmp.gt.f32.partialorder %v9021, 0.0
      %vm9128 = vcmp.gt.f32.partialorder %v9026, 0.0
      %vm9129 = vcmp.gt.f32.partialorder %v9031, 0.0
      %vm9130 = vcmp.gt.f32.partialorder %v9036, 0.0
      %vm9131 = vcmp.gt.f32.partialorder %v9041, 0.0
      %vm9132 = vcmp.gt.f32.partialorder %v9046, 0.0
      %vm9133 = vcmp.gt.f32.partialorder %v9051, 0.0
      %vm9134 = vcmp.gt.f32.partialorder %v9056, 0.0
      %vm9135 = vcmp.gt.f32.partialorder %v9061, 0.0
      %vm9136 = vcmp.gt.f32.partialorder %v9066, 0.0
      %vm9137 = vcmp.gt.f32.partialorder %v9071, 0.0
      %vm9138 = vcmp.gt.f32.partialorder %v9076, 0.0
      %vm9139 = vcmp.gt.f32.partialorder %v9081, 0.0
      %vm9140 = vcmp.gt.f32.partialorder %v9086, 0.0
      %vm9141 = vcmp.gt.f32.partialorder %v9091, 0.0
      %vm9142 = vcmp.gt.f32.partialorder %v9096, 0.0
      %vm9143 = vcmp.gt.f32.partialorder %v9101, 0.0
      %vm9144 = vcmp.gt.f32.partialorder %v9106, 0.0
      %vm9145 = vcmp.gt.f32.partialorder %v9111, 0.0
      %v9146 = vmul.f32 %v8956, 0.2
      %v9147 = vmul.f32 %v8961, 0.2
      %v9148 = vmul.f32 %v8966, 0.2
      %v9149 = vmul.f32 %v8971, 0.2
      %v9150 = vmul.f32 %v8976, 0.2
      %v9151 = vmul.f32 %v8981, 0.2
      %v9152 = vmul.f32 %v8986, 0.2
      %v9153 = vmul.f32 %v8991, 0.2
      %v9154 = vmul.f32 %v8996, 0.2
      %v9155 = vmul.f32 %v9001, 0.2
      %v9156 = vmul.f32 %v9006, 0.2
      %v9157 = vmul.f32 %v9011, 0.2
      %v9158 = vmul.f32 %v9016, 0.2
      %v9159 = vmul.f32 %v9021, 0.2
      %v9160 = vmul.f32 %v9026, 0.2
      %v9161 = vmul.f32 %v9031, 0.2
      %v9162 = vmul.f32 %v9036, 0.2
      %v9163 = vmul.f32 %v9041, 0.2
      %v9164 = vmul.f32 %v9046, 0.2
      %v9165 = vmul.f32 %v9051, 0.2
      %v9166 = vmul.f32 %v9056, 0.2
      %v9167 = vmul.f32 %v9061, 0.2
      %v9168 = vmul.f32 %v9066, 0.2
      %v9169 = vmul.f32 %v9071, 0.2
      %v9170 = vmul.f32 %v9076, 0.2
      %v9171 = vmul.f32 %v9081, 0.2
      %v9172 = vmul.f32 %v9086, 0.2
      %v9173 = vmul.f32 %v9091, 0.2
      %v9174 = vmul.f32 %v9096, 0.2
      %v9175 = vmul.f32 %v9101, 0.2
      %v9176 = vmul.f32 %v9106, 0.2
      %v9177 = vmul.f32 %v9111, 0.2
      %v9178 = vsel %vm9114, %v8956, %v9146
      %v9179 = vsel %vm9115, %v8961, %v9147
      %v9180 = vsel %vm9116, %v8966, %v9148
      %v9181 = vsel %vm9117, %v8971, %v9149
      %v9182 = vsel %vm9118, %v8976, %v9150
      %v9183 = vsel %vm9119, %v8981, %v9151
      %v9184 = vsel %vm9120, %v8986, %v9152
      %v9185 = vsel %vm9121, %v8991, %v9153
      %v9186 = vsel %vm9122, %v8996, %v9154
      %v9187 = vsel %vm9123, %v9001, %v9155
      %v9188 = vsel %vm9124, %v9006, %v9156
      %v9189 = vsel %vm9125, %v9011, %v9157
      %v9190 = vsel %vm9126, %v9016, %v9158
      %v9191 = vsel %vm9127, %v9021, %v9159
      %v9192 = vsel %vm9128, %v9026, %v9160
      %v9193 = vsel %vm9129, %v9031, %v9161
      %v9194 = vsel %vm9130, %v9036, %v9162
      %v9195 = vsel %vm9131, %v9041, %v9163
      %v9196 = vsel %vm9132, %v9046, %v9164
      %v9197 = vsel %vm9133, %v9051, %v9165
      %v9198 = vsel %vm9134, %v9056, %v9166
      %v9199 = vsel %vm9135, %v9061, %v9167
      %v9200 = vsel %vm9136, %v9066, %v9168
      %v9201 = vsel %vm9137, %v9071, %v9169
      %v9202 = vsel %vm9138, %v9076, %v9170
      %v9203 = vsel %vm9139, %v9081, %v9171
      %v9204 = vsel %vm9140, %v9086, %v9172
      %v9205 = vsel %vm9141, %v9091, %v9173
      %v9206 = vsel %vm9142, %v9096, %v9174
      %v9207 = vsel %vm9143, %v9101, %v9175
      %v9208 = vsel %vm9144, %v9106, %v9176
      %v9209 = vsel %vm9145, %v9111, %v9177
      %s9210 = scalar_lea.vmem [#allocation5], 24
      %9211 = vst.msk [vmem:[%s9210 + $0x1] sm:$0xff] %vm387, %v9178
      %9212 = vst.msk [vmem:[%s9210 + $0x9] sm:$0xff] %vm387, %v9179
      %9213 = vst.msk [vmem:[%s9210 + $0x19] sm:$0xff] %vm387, %v9180
      %9214 = vst.msk [vmem:[%s9210 + $0x21] sm:$0xff] %vm387, %v9181
      %9215 = vst.msk [vmem:[%s9210 + $0x31] sm:$0xff] %vm387, %v9182
      %9216 = vst.msk [vmem:[%s9210 + $0x39] sm:$0xff] %vm387, %v9183
      %9217 = vst.msk [vmem:[%s9210 + $0x49] sm:$0xff] %vm387, %v9184
      %9218 = vst.msk [vmem:[%s9210 + $0x51] sm:$0xff] %vm387, %v9185
      %9219 = vst.msk [vmem:[%s9210 + $0x61] sm:$0xff] %vm387, %v9186
      %9220 = vst.msk [vmem:[%s9210 + $0x69] sm:$0xff] %vm387, %v9187
      %9221 = vst.msk [vmem:[%s9210 + $0x79] sm:$0xff] %vm387, %v9188
      %9222 = vst.msk [vmem:[%s9210 + $0x81] sm:$0xff] %vm387, %v9189
      %9223 = vst.msk [vmem:[%s9210 + $0x91] sm:$0xff] %vm387, %v9190
      %9224 = vst.msk [vmem:[%s9210 + $0x99] sm:$0xff] %vm387, %v9191
      %9225 = vst.msk [vmem:[%s9210 + $0xa9] sm:$0xff] %vm387, %v9192
      %9226 = vst.msk [vmem:[%s9210 + $0xb1] sm:$0xff] %vm387, %v9193
      %9227 = vst.msk [vmem:[%s9210 + $0xc1] sm:$0xff] %vm387, %v9194
      %9228 = vst.msk [vmem:[%s9210 + $0xc9] sm:$0xff] %vm387, %v9195
      %9229 = vst.msk [vmem:[%s9210 + $0xd9] sm:$0xff] %vm387, %v9196
      %9230 = vst.msk [vmem:[%s9210 + $0xe1] sm:$0xff] %vm387, %v9197
      %9231 = vst.msk [vmem:[%s9210 + $0xf1] sm:$0xff] %vm387, %v9198
      %9232 = vst.msk [vmem:[%s9210 + $0xf9] sm:$0xff] %vm387, %v9199
      %9233 = vst.msk [vmem:[%s9210 + $0x109] sm:$0xff] %vm387, %v9200
      %9234 = vst.msk [vmem:[%s9210 + $0x111] sm:$0xff] %vm387, %v9201
      %9235 = vst.msk [vmem:[%s9210 + $0x121] sm:$0xff] %vm387, %v9202
      %9236 = vst.msk [vmem:[%s9210 + $0x129] sm:$0xff] %vm387, %v9203
      %9237 = vst.msk [vmem:[%s9210 + $0x139] sm:$0xff] %vm387, %v9204
      %9238 = vst.msk [vmem:[%s9210 + $0x141] sm:$0xff] %vm387, %v9205
      %9239 = vst.msk [vmem:[%s9210 + $0x151] sm:$0xff] %vm387, %v9206
      %9240 = vst.msk [vmem:[%s9210 + $0x159] sm:$0xff] %vm387, %v9207
      %9241 = vst.msk [vmem:[%s9210 + $0x169] sm:$0xff] %vm387, %v9208
      %9242 = vst.msk [vmem:[%s9210 + $0x171] sm:$0xff] %vm387, %v9209
      %v9243 = vld [vmem:[#allocation5] sm:$0xff]
      %v9244 = vld [vmem:[#allocation5 + $0x8] sm:$0xff]
      %v9245 = vld [vmem:[#allocation5 + $0x18] sm:$0xff]
      %v9246 = vld [vmem:[#allocation5 + $0x20] sm:$0xff]
      %v9247 = vld [vmem:[#allocation5 + $0x30] sm:$0xff]
      %v9248 = vld [vmem:[#allocation5 + $0x38] sm:$0xff]
      %v9249 = vld [vmem:[#allocation5 + $0x48] sm:$0xff]
      %v9250 = vld [vmem:[#allocation5 + $0x50] sm:$0xff]
      %v9251 = vld [vmem:[#allocation5 + $0x60] sm:$0xff]
      %v9252 = vld [vmem:[#allocation5 + $0x68] sm:$0xff]
      %v9253 = vld [vmem:[#allocation5 + $0x78] sm:$0xff]
      %v9254 = vld [vmem:[#allocation5 + $0x80] sm:$0xff]
      %v9255 = vld [vmem:[#allocation5 + $0x90] sm:$0xff]
      %v9256 = vld [vmem:[#allocation5 + $0x98] sm:$0xff]
      %v9257 = vld [vmem:[#allocation5 + $0xa8] sm:$0xff]
      %v9258 = vld [vmem:[#allocation5 + $0xb0] sm:$0xff]
      %v9259 = vld [vmem:[#allocation5 + $0xc0] sm:$0xff]
      %v9260 = vld [vmem:[#allocation5 + $0xc8] sm:$0xff]
      %v9261 = vld [vmem:[#allocation5 + $0xd8] sm:$0xff]
      %v9262 = vld [vmem:[#allocation5 + $0xe0] sm:$0xff]
      %v9263 = vld [vmem:[#allocation5 + $0xf0] sm:$0xff]
      %v9264 = vld [vmem:[#allocation5 + $0xf8] sm:$0xff]
      %v9265 = vld [vmem:[#allocation5 + $0x108] sm:$0xff]
      %v9266 = vld [vmem:[#allocation5 + $0x110] sm:$0xff]
      %v9267 = vld [vmem:[#allocation5 + $0x120] sm:$0xff]
      %v9268 = vld [vmem:[#allocation5 + $0x128] sm:$0xff]
      %v9269 = vld [vmem:[#allocation5 + $0x138] sm:$0xff]
      %v9270 = vld [vmem:[#allocation5 + $0x140] sm:$0xff]
      %v9271 = vld [vmem:[#allocation5 + $0x150] sm:$0xff]
      %v9272 = vld [vmem:[#allocation5 + $0x158] sm:$0xff]
      %v9273 = vld [vmem:[#allocation5 + $0x168] sm:$0xff]
      %v9274 = vld [vmem:[#allocation5 + $0x170] sm:$0xff]
      %v9275 = vld [vmem:[#allocation5 + $0x1] sm:$0xff]
      %v9276 = vld [vmem:[#allocation5 + $0x9] sm:$0xff]
      %v9277 = vld [vmem:[#allocation5 + $0x19] sm:$0xff]
      %v9278 = vld [vmem:[#allocation5 + $0x21] sm:$0xff]
      %v9279 = vld [vmem:[#allocation5 + $0x31] sm:$0xff]
      %v9280 = vld [vmem:[#allocation5 + $0x39] sm:$0xff]
      %v9281 = vld [vmem:[#allocation5 + $0x49] sm:$0xff]
      %v9282 = vld [vmem:[#allocation5 + $0x51] sm:$0xff]
      %v9283 = vld [vmem:[#allocation5 + $0x61] sm:$0xff]
      %v9284 = vld [vmem:[#allocation5 + $0x69] sm:$0xff]
      %v9285 = vld [vmem:[#allocation5 + $0x79] sm:$0xff]
      %v9286 = vld [vmem:[#allocation5 + $0x81] sm:$0xff]
      %v9287 = vld [vmem:[#allocation5 + $0x91] sm:$0xff]
      %v9288 = vld [vmem:[#allocation5 + $0x99] sm:$0xff]
      %v9289 = vld [vmem:[#allocation5 + $0xa9] sm:$0xff]
      %v9290 = vld [vmem:[#allocation5 + $0xb1] sm:$0xff]
      %v9291 = vld [vmem:[#allocation5 + $0xc1] sm:$0xff]
      %v9292 = vld [vmem:[#allocation5 + $0xc9] sm:$0xff]
      %v9293 = vld [vmem:[#allocation5 + $0xd9] sm:$0xff]
      %v9294 = vld [vmem:[#allocation5 + $0xe1] sm:$0xff]
      %v9295 = vld [vmem:[#allocation5 + $0xf1] sm:$0xff]
      %v9296 = vld [vmem:[#allocation5 + $0xf9] sm:$0xff]
      %v9297 = vld [vmem:[#allocation5 + $0x109] sm:$0xff]
      %v9298 = vld [vmem:[#allocation5 + $0x111] sm:$0xff]
      %v9299 = vld [vmem:[#allocation5 + $0x121] sm:$0xff]
      %v9300 = vld [vmem:[#allocation5 + $0x129] sm:$0xff]
      %v9301 = vld [vmem:[#allocation5 + $0x139] sm:$0xff]
      %v9302 = vld [vmem:[#allocation5 + $0x141] sm:$0xff]
      %v9303 = vld [vmem:[#allocation5 + $0x151] sm:$0xff]
      %v9304 = vld [vmem:[#allocation5 + $0x159] sm:$0xff]
      %v9305 = vld [vmem:[#allocation5 + $0x169] sm:$0xff]
      %v9306 = vld [vmem:[#allocation5 + $0x171] sm:$0xff]
      %v9307 = vld [vmem:[#allocation5 + $0x2] sm:$0xff]
      %v9308 = vld [vmem:[#allocation5 + $0xa] sm:$0xff]
      %v9309 = vld [vmem:[#allocation5 + $0x1a] sm:$0xff]
      %v9310 = vld [vmem:[#allocation5 + $0x22] sm:$0xff]
      %v9311 = vld [vmem:[#allocation5 + $0x32] sm:$0xff]
      %v9312 = vld [vmem:[#allocation5 + $0x3a] sm:$0xff]
      %v9313 = vld [vmem:[#allocation5 + $0x4a] sm:$0xff]
      %v9314 = vld [vmem:[#allocation5 + $0x52] sm:$0xff]
      %v9315 = vld [vmem:[#allocation5 + $0x62] sm:$0xff]
      %v9316 = vld [vmem:[#allocation5 + $0x6a] sm:$0xff]
      %v9317 = vld [vmem:[#allocation5 + $0x7a] sm:$0xff]
      %v9318 = vld [vmem:[#allocation5 + $0x82] sm:$0xff]
      %v9319 = vld [vmem:[#allocation5 + $0x92] sm:$0xff]
      %v9320 = vld [vmem:[#allocation5 + $0x9a] sm:$0xff]
      %v9321 = vld [vmem:[#allocation5 + $0xaa] sm:$0xff]
      %v9322 = vld [vmem:[#allocation5 + $0xb2] sm:$0xff]
      %v9323 = vld [vmem:[#allocation5 + $0xc2] sm:$0xff]
      %v9324 = vld [vmem:[#allocation5 + $0xca] sm:$0xff]
      %v9325 = vld [vmem:[#allocation5 + $0xda] sm:$0xff]
      %v9326 = vld [vmem:[#allocation5 + $0xe2] sm:$0xff]
      %v9327 = vld [vmem:[#allocation5 + $0xf2] sm:$0xff]
      %v9328 = vld [vmem:[#allocation5 + $0xfa] sm:$0xff]
      %v9329 = vld [vmem:[#allocation5 + $0x10a] sm:$0xff]
      %v9330 = vld [vmem:[#allocation5 + $0x112] sm:$0xff]
      %v9331 = vld [vmem:[#allocation5 + $0x122] sm:$0xff]
      %v9332 = vld [vmem:[#allocation5 + $0x12a] sm:$0xff]
      %v9333 = vld [vmem:[#allocation5 + $0x13a] sm:$0xff]
      %v9334 = vld [vmem:[#allocation5 + $0x142] sm:$0xff]
      %v9335 = vld [vmem:[#allocation5 + $0x152] sm:$0xff]
      %v9336 = vld [vmem:[#allocation5 + $0x15a] sm:$0xff]
      %v9337 = vld [vmem:[#allocation5 + $0x16a] sm:$0xff]
      %v9338 = vld [vmem:[#allocation5 + $0x172] sm:$0xff]
      %v9339 = vld [vmem:[%s9210] sm:$0xff]
      %v9340 = vld [vmem:[%s9210 + $0x8] sm:$0xff]
      %v9341 = vld [vmem:[%s9210 + $0x18] sm:$0xff]
      %v9342 = vld [vmem:[%s9210 + $0x20] sm:$0xff]
      %v9343 = vld [vmem:[%s9210 + $0x30] sm:$0xff]
      %v9344 = vld [vmem:[%s9210 + $0x38] sm:$0xff]
      %v9345 = vld [vmem:[%s9210 + $0x48] sm:$0xff]
      %v9346 = vld [vmem:[%s9210 + $0x50] sm:$0xff]
      %v9347 = vld [vmem:[%s9210 + $0x60] sm:$0xff]
      %v9348 = vld [vmem:[%s9210 + $0x68] sm:$0xff]
      %v9349 = vld [vmem:[%s9210 + $0x78] sm:$0xff]
      %v9350 = vld [vmem:[%s9210 + $0x80] sm:$0xff]
      %v9351 = vld [vmem:[%s9210 + $0x90] sm:$0xff]
      %v9352 = vld [vmem:[%s9210 + $0x98] sm:$0xff]
      %v9353 = vld [vmem:[%s9210 + $0xa8] sm:$0xff]
      %v9354 = vld [vmem:[%s9210 + $0xb0] sm:$0xff]
      %v9355 = vld [vmem:[%s9210 + $0xc0] sm:$0xff]
      %v9356 = vld [vmem:[%s9210 + $0xc8] sm:$0xff]
      %v9357 = vld [vmem:[%s9210 + $0xd8] sm:$0xff]
      %v9358 = vld [vmem:[%s9210 + $0xe0] sm:$0xff]
      %v9359 = vld [vmem:[%s9210 + $0xf0] sm:$0xff]
      %v9360 = vld [vmem:[%s9210 + $0xf8] sm:$0xff]
      %v9361 = vld [vmem:[%s9210 + $0x108] sm:$0xff]
      %v9362 = vld [vmem:[%s9210 + $0x110] sm:$0xff]
      %v9363 = vld [vmem:[%s9210 + $0x120] sm:$0xff]
      %v9364 = vld [vmem:[%s9210 + $0x128] sm:$0xff]
      %v9365 = vld [vmem:[%s9210 + $0x138] sm:$0xff]
      %v9366 = vld [vmem:[%s9210 + $0x140] sm:$0xff]
      %v9367 = vld [vmem:[%s9210 + $0x150] sm:$0xff]
      %v9368 = vld [vmem:[%s9210 + $0x158] sm:$0xff]
      %v9369 = vld [vmem:[%s9210 + $0x168] sm:$0xff]
      %v9370 = vld [vmem:[%s9210 + $0x170] sm:$0xff]
      %v9371 = vld [vmem:[%s9210 + $0x1] sm:$0xff]
      %v9372 = vld [vmem:[%s9210 + $0x9] sm:$0xff]
      %v9373 = vld [vmem:[%s9210 + $0x19] sm:$0xff]
      %v9374 = vld [vmem:[%s9210 + $0x21] sm:$0xff]
      %v9375 = vld [vmem:[%s9210 + $0x31] sm:$0xff]
      %v9376 = vld [vmem:[%s9210 + $0x39] sm:$0xff]
      %v9377 = vld [vmem:[%s9210 + $0x49] sm:$0xff]
      %v9378 = vld [vmem:[%s9210 + $0x51] sm:$0xff]
      %v9379 = vld [vmem:[%s9210 + $0x61] sm:$0xff]
      %v9380 = vld [vmem:[%s9210 + $0x69] sm:$0xff]
      %v9381 = vld [vmem:[%s9210 + $0x79] sm:$0xff]
      %v9382 = vld [vmem:[%s9210 + $0x81] sm:$0xff]
      %v9383 = vld [vmem:[%s9210 + $0x91] sm:$0xff]
      %v9384 = vld [vmem:[%s9210 + $0x99] sm:$0xff]
      %v9385 = vld [vmem:[%s9210 + $0xa9] sm:$0xff]
      %v9386 = vld [vmem:[%s9210 + $0xb1] sm:$0xff]
      %v9387 = vld [vmem:[%s9210 + $0xc1] sm:$0xff]
      %v9388 = vld [vmem:[%s9210 + $0xc9] sm:$0xff]
      %v9389 = vld [vmem:[%s9210 + $0xd9] sm:$0xff]
      %v9390 = vld [vmem:[%s9210 + $0xe1] sm:$0xff]
      %v9391 = vld [vmem:[%s9210 + $0xf1] sm:$0xff]
      %v9392 = vld [vmem:[%s9210 + $0xf9] sm:$0xff]
      %v9393 = vld [vmem:[%s9210 + $0x109] sm:$0xff]
      %v9394 = vld [vmem:[%s9210 + $0x111] sm:$0xff]
      %v9395 = vld [vmem:[%s9210 + $0x121] sm:$0xff]
      %v9396 = vld [vmem:[%s9210 + $0x129] sm:$0xff]
      %v9397 = vld [vmem:[%s9210 + $0x139] sm:$0xff]
      %v9398 = vld [vmem:[%s9210 + $0x141] sm:$0xff]
      %v9399 = vld [vmem:[%s9210 + $0x151] sm:$0xff]
      %v9400 = vld [vmem:[%s9210 + $0x159] sm:$0xff]
      %v9401 = vld [vmem:[%s9210 + $0x169] sm:$0xff]
      %v9402 = vld [vmem:[%s9210 + $0x171] sm:$0xff]
      %v9403 = vld [vmem:[%s9210 + $0x2] sm:$0xff]
      %v9404 = vld [vmem:[%s9210 + $0xa] sm:$0xff]
      %v9405 = vld [vmem:[%s9210 + $0x1a] sm:$0xff]
      %v9406 = vld [vmem:[%s9210 + $0x22] sm:$0xff]
      %v9407 = vld [vmem:[%s9210 + $0x32] sm:$0xff]
      %v9408 = vld [vmem:[%s9210 + $0x3a] sm:$0xff]
      %v9409 = vld [vmem:[%s9210 + $0x4a] sm:$0xff]
      %v9410 = vld [vmem:[%s9210 + $0x52] sm:$0xff]
      %v9411 = vld [vmem:[%s9210 + $0x62] sm:$0xff]
      %v9412 = vld [vmem:[%s9210 + $0x6a] sm:$0xff]
      %v9413 = vld [vmem:[%s9210 + $0x7a] sm:$0xff]
      %v9414 = vld [vmem:[%s9210 + $0x82] sm:$0xff]
      %v9415 = vld [vmem:[%s9210 + $0x92] sm:$0xff]
      %v9416 = vld [vmem:[%s9210 + $0x9a] sm:$0xff]
      %v9417 = vld [vmem:[%s9210 + $0xaa] sm:$0xff]
      %v9418 = vld [vmem:[%s9210 + $0xb2] sm:$0xff]
      %v9419 = vld [vmem:[%s9210 + $0xc2] sm:$0xff]
      %v9420 = vld [vmem:[%s9210 + $0xca] sm:$0xff]
      %v9421 = vld [vmem:[%s9210 + $0xda] sm:$0xff]
      %v9422 = vld [vmem:[%s9210 + $0xe2] sm:$0xff]
      %v9423 = vld [vmem:[%s9210 + $0xf2] sm:$0xff]
      %v9424 = vld [vmem:[%s9210 + $0xfa] sm:$0xff]
      %v9425 = vld [vmem:[%s9210 + $0x10a] sm:$0xff]
      %v9426 = vld [vmem:[%s9210 + $0x112] sm:$0xff]
      %v9427 = vld [vmem:[%s9210 + $0x122] sm:$0xff]
      %v9428 = vld [vmem:[%s9210 + $0x12a] sm:$0xff]
      %v9429 = vld [vmem:[%s9210 + $0x13a] sm:$0xff]
      %v9430 = vld [vmem:[%s9210 + $0x142] sm:$0xff]
      %v9431 = vld [vmem:[%s9210 + $0x152] sm:$0xff]
      %v9432 = vld [vmem:[%s9210 + $0x15a] sm:$0xff]
      %v9433 = vld [vmem:[%s9210 + $0x16a] sm:$0xff]
      %v9434 = vld [vmem:[%s9210 + $0x172] sm:$0xff]
      %s9435 = scalar_lea.vmem [#allocation5], 48
      %v9436 = vld [vmem:[%s9435] sm:$0xff]
      %v9437 = vld [vmem:[%s9435 + $0x8] sm:$0xff]
      %v9438 = vld [vmem:[%s9435 + $0x18] sm:$0xff]
      %v9439 = vld [vmem:[%s9435 + $0x20] sm:$0xff]
      %v9440 = vld [vmem:[%s9435 + $0x30] sm:$0xff]
      %v9441 = vld [vmem:[%s9435 + $0x38] sm:$0xff]
      %v9442 = vld [vmem:[%s9435 + $0x48] sm:$0xff]
      %v9443 = vld [vmem:[%s9435 + $0x50] sm:$0xff]
      %v9444 = vld [vmem:[%s9435 + $0x60] sm:$0xff]
      %v9445 = vld [vmem:[%s9435 + $0x68] sm:$0xff]
      %v9446 = vld [vmem:[%s9435 + $0x78] sm:$0xff]
      %v9447 = vld [vmem:[%s9435 + $0x80] sm:$0xff]
      %v9448 = vld [vmem:[%s9435 + $0x90] sm:$0xff]
      %v9449 = vld [vmem:[%s9435 + $0x98] sm:$0xff]
      %v9450 = vld [vmem:[%s9435 + $0xa8] sm:$0xff]
      %v9451 = vld [vmem:[%s9435 + $0xb0] sm:$0xff]
      %v9452 = vld [vmem:[%s9435 + $0xc0] sm:$0xff]
      %v9453 = vld [vmem:[%s9435 + $0xc8] sm:$0xff]
      %v9454 = vld [vmem:[%s9435 + $0xd8] sm:$0xff]
      %v9455 = vld [vmem:[%s9435 + $0xe0] sm:$0xff]
      %v9456 = vld [vmem:[%s9435 + $0xf0] sm:$0xff]
      %v9457 = vld [vmem:[%s9435 + $0xf8] sm:$0xff]
      %v9458 = vld [vmem:[%s9435 + $0x108] sm:$0xff]
      %v9459 = vld [vmem:[%s9435 + $0x110] sm:$0xff]
      %v9460 = vld [vmem:[%s9435 + $0x120] sm:$0xff]
      %v9461 = vld [vmem:[%s9435 + $0x128] sm:$0xff]
      %v9462 = vld [vmem:[%s9435 + $0x138] sm:$0xff]
      %v9463 = vld [vmem:[%s9435 + $0x140] sm:$0xff]
      %v9464 = vld [vmem:[%s9435 + $0x150] sm:$0xff]
      %v9465 = vld [vmem:[%s9435 + $0x158] sm:$0xff]
      %v9466 = vld [vmem:[%s9435 + $0x168] sm:$0xff]
      %v9467 = vld [vmem:[%s9435 + $0x170] sm:$0xff]
      %v9468 = vld [vmem:[%s9435 + $0x1] sm:$0xff]
      %v9469 = vld [vmem:[%s9435 + $0x9] sm:$0xff]
      %v9470 = vld [vmem:[%s9435 + $0x19] sm:$0xff]
      %v9471 = vld [vmem:[%s9435 + $0x21] sm:$0xff]
      %v9472 = vld [vmem:[%s9435 + $0x31] sm:$0xff]
      %v9473 = vld [vmem:[%s9435 + $0x39] sm:$0xff]
      %v9474 = vld [vmem:[%s9435 + $0x49] sm:$0xff]
      %v9475 = vld [vmem:[%s9435 + $0x51] sm:$0xff]
      %v9476 = vld [vmem:[%s9435 + $0x61] sm:$0xff]
      %v9477 = vld [vmem:[%s9435 + $0x69] sm:$0xff]
      %v9478 = vld [vmem:[%s9435 + $0x79] sm:$0xff]
      %v9479 = vld [vmem:[%s9435 + $0x81] sm:$0xff]
      %v9480 = vld [vmem:[%s9435 + $0x91] sm:$0xff]
      %v9481 = vld [vmem:[%s9435 + $0x99] sm:$0xff]
      %v9482 = vld [vmem:[%s9435 + $0xa9] sm:$0xff]
      %v9483 = vld [vmem:[%s9435 + $0xb1] sm:$0xff]
      %v9484 = vld [vmem:[%s9435 + $0xc1] sm:$0xff]
      %v9485 = vld [vmem:[%s9435 + $0xc9] sm:$0xff]
      %v9486 = vld [vmem:[%s9435 + $0xd9] sm:$0xff]
      %v9487 = vld [vmem:[%s9435 + $0xe1] sm:$0xff]
      %v9488 = vld [vmem:[%s9435 + $0xf1] sm:$0xff]
      %v9489 = vld [vmem:[%s9435 + $0xf9] sm:$0xff]
      %v9490 = vld [vmem:[%s9435 + $0x109] sm:$0xff]
      %v9491 = vld [vmem:[%s9435 + $0x111] sm:$0xff]
      %v9492 = vld [vmem:[%s9435 + $0x121] sm:$0xff]
      %v9493 = vld [vmem:[%s9435 + $0x129] sm:$0xff]
      %v9494 = vld [vmem:[%s9435 + $0x139] sm:$0xff]
      %v9495 = vld [vmem:[%s9435 + $0x141] sm:$0xff]
      %v9496 = vld [vmem:[%s9435 + $0x151] sm:$0xff]
      %v9497 = vld [vmem:[%s9435 + $0x159] sm:$0xff]
      %v9498 = vld [vmem:[%s9435 + $0x169] sm:$0xff]
      %v9499 = vld [vmem:[%s9435 + $0x171] sm:$0xff]
      %v9500 = vld [vmem:[%s9435 + $0x2] sm:$0xff]
      %v9501 = vld [vmem:[%s9435 + $0xa] sm:$0xff]
      %v9502 = vld [vmem:[%s9435 + $0x1a] sm:$0xff]
      %v9503 = vld [vmem:[%s9435 + $0x22] sm:$0xff]
      %v9504 = vld [vmem:[%s9435 + $0x32] sm:$0xff]
      %v9505 = vld [vmem:[%s9435 + $0x3a] sm:$0xff]
      %v9506 = vld [vmem:[%s9435 + $0x4a] sm:$0xff]
      %v9507 = vld [vmem:[%s9435 + $0x52] sm:$0xff]
      %v9508 = vld [vmem:[%s9435 + $0x62] sm:$0xff]
      %v9509 = vld [vmem:[%s9435 + $0x6a] sm:$0xff]
      %v9510 = vld [vmem:[%s9435 + $0x7a] sm:$0xff]
      %v9511 = vld [vmem:[%s9435 + $0x82] sm:$0xff]
      %v9512 = vld [vmem:[%s9435 + $0x92] sm:$0xff]
      %v9513 = vld [vmem:[%s9435 + $0x9a] sm:$0xff]
      %v9514 = vld [vmem:[%s9435 + $0xaa] sm:$0xff]
      %v9515 = vld [vmem:[%s9435 + $0xb2] sm:$0xff]
      %v9516 = vld [vmem:[%s9435 + $0xc2] sm:$0xff]
      %v9517 = vld [vmem:[%s9435 + $0xca] sm:$0xff]
      %v9518 = vld [vmem:[%s9435 + $0xda] sm:$0xff]
      %v9519 = vld [vmem:[%s9435 + $0xe2] sm:$0xff]
      %v9520 = vld [vmem:[%s9435 + $0xf2] sm:$0xff]
      %v9521 = vld [vmem:[%s9435 + $0xfa] sm:$0xff]
      %v9522 = vld [vmem:[%s9435 + $0x10a] sm:$0xff]
      %v9523 = vld [vmem:[%s9435 + $0x112] sm:$0xff]
      %v9524 = vld [vmem:[%s9435 + $0x122] sm:$0xff]
      %v9525 = vld [vmem:[%s9435 + $0x12a] sm:$0xff]
      %v9526 = vld [vmem:[%s9435 + $0x13a] sm:$0xff]
      %v9527 = vld [vmem:[%s9435 + $0x142] sm:$0xff]
      %v9528 = vld [vmem:[%s9435 + $0x152] sm:$0xff]
      %v9529 = vld [vmem:[%s9435 + $0x15a] sm:$0xff]
      %v9530 = vld [vmem:[%s9435 + $0x16a] sm:$0xff]
      %v9531 = vld [vmem:[%s9435 + $0x172] sm:$0xff]
      %9564 = vrot.lane.b32.xlu0 %v9275, 4
      %v9565 = vpop.permute.xlu0 %9564
      %9566 = vrot.lane.b32.xlu0 %v9276, 4
      %v9567 = vpop.permute.xlu0 %9566
      %9568 = vrot.lane.b32.xlu0 %v9277, 4
      %v9569 = vpop.permute.xlu0 %9568
      %9570 = vrot.lane.b32.xlu0 %v9278, 4
      %v9571 = vpop.permute.xlu0 %9570
      %9572 = vrot.lane.b32.xlu0 %v9279, 4
      %v9573 = vpop.permute.xlu0 %9572
      %9574 = vrot.lane.b32.xlu0 %v9280, 4
      %v9575 = vpop.permute.xlu0 %9574
      %9576 = vrot.lane.b32.xlu0 %v9281, 4
      %v9577 = vpop.permute.xlu0 %9576
      %9578 = vrot.lane.b32.xlu0 %v9282, 4
      %v9579 = vpop.permute.xlu0 %9578
      %9580 = vrot.lane.b32.xlu0 %v9283, 4
      %v9581 = vpop.permute.xlu0 %9580
      %9582 = vrot.lane.b32.xlu0 %v9284, 4
      %v9583 = vpop.permute.xlu0 %9582
      %9584 = vrot.lane.b32.xlu0 %v9285, 4
      %v9585 = vpop.permute.xlu0 %9584
      %9586 = vrot.lane.b32.xlu0 %v9286, 4
      %v9587 = vpop.permute.xlu0 %9586
      %9588 = vrot.lane.b32.xlu0 %v9287, 4
      %v9589 = vpop.permute.xlu0 %9588
      %9590 = vrot.lane.b32.xlu0 %v9288, 4
      %v9591 = vpop.permute.xlu0 %9590
      %9592 = vrot.lane.b32.xlu0 %v9289, 4
      %v9593 = vpop.permute.xlu0 %9592
      %9594 = vrot.lane.b32.xlu0 %v9290, 4
      %v9595 = vpop.permute.xlu0 %9594
      %9596 = vrot.lane.b32.xlu0 %v9291, 4
      %v9597 = vpop.permute.xlu0 %9596
      %9598 = vrot.lane.b32.xlu0 %v9292, 4
      %v9599 = vpop.permute.xlu0 %9598
      %9600 = vrot.lane.b32.xlu0 %v9293, 4
      %v9601 = vpop.permute.xlu0 %9600
      %9602 = vrot.lane.b32.xlu0 %v9294, 4
      %v9603 = vpop.permute.xlu0 %9602
      %9604 = vrot.lane.b32.xlu0 %v9295, 4
      %v9605 = vpop.permute.xlu0 %9604
      %9606 = vrot.lane.b32.xlu0 %v9296, 4
      %v9607 = vpop.permute.xlu0 %9606
      %9608 = vrot.lane.b32.xlu0 %v9297, 4
      %v9609 = vpop.permute.xlu0 %9608
      %9610 = vrot.lane.b32.xlu0 %v9298, 4
      %v9611 = vpop.permute.xlu0 %9610
      %9612 = vrot.lane.b32.xlu0 %v9299, 4
      %v9613 = vpop.permute.xlu0 %9612
      %9614 = vrot.lane.b32.xlu0 %v9300, 4
      %v9615 = vpop.permute.xlu0 %9614
      %9616 = vrot.lane.b32.xlu0 %v9301, 4
      %v9617 = vpop.permute.xlu0 %9616
      %9618 = vrot.lane.b32.xlu0 %v9302, 4
      %v9619 = vpop.permute.xlu0 %9618
      %9620 = vrot.lane.b32.xlu0 %v9303, 4
      %v9621 = vpop.permute.xlu0 %9620
      %9622 = vrot.lane.b32.xlu0 %v9304, 4
      %v9623 = vpop.permute.xlu0 %9622
      %9624 = vrot.lane.b32.xlu0 %v9305, 4
      %v9625 = vpop.permute.xlu0 %9624
      %9626 = vrot.lane.b32.xlu0 %v9306, 4
      %v9627 = vpop.permute.xlu0 %9626
      %9692 = vrot.lane.b32.xlu0 %v9307, 8
      %v9693 = vpop.permute.xlu0 %9692
      %9694 = vrot.lane.b32.xlu0 %v9308, 8
      %v9695 = vpop.permute.xlu0 %9694
      %9696 = vrot.lane.b32.xlu0 %v9309, 8
      %v9697 = vpop.permute.xlu0 %9696
      %9698 = vrot.lane.b32.xlu0 %v9310, 8
      %v9699 = vpop.permute.xlu0 %9698
      %9700 = vrot.lane.b32.xlu0 %v9311, 8
      %v9701 = vpop.permute.xlu0 %9700
      %9702 = vrot.lane.b32.xlu0 %v9312, 8
      %v9703 = vpop.permute.xlu0 %9702
      %9704 = vrot.lane.b32.xlu0 %v9313, 8
      %v9705 = vpop.permute.xlu0 %9704
      %9706 = vrot.lane.b32.xlu0 %v9314, 8
      %v9707 = vpop.permute.xlu0 %9706
      %9708 = vrot.lane.b32.xlu0 %v9315, 8
      %v9709 = vpop.permute.xlu0 %9708
      %9710 = vrot.lane.b32.xlu0 %v9316, 8
      %v9711 = vpop.permute.xlu0 %9710
      %9712 = vrot.lane.b32.xlu0 %v9317, 8
      %v9713 = vpop.permute.xlu0 %9712
      %9714 = vrot.lane.b32.xlu0 %v9318, 8
      %v9715 = vpop.permute.xlu0 %9714
      %9716 = vrot.lane.b32.xlu0 %v9319, 8
      %v9717 = vpop.permute.xlu0 %9716
      %9718 = vrot.lane.b32.xlu0 %v9320, 8
      %v9719 = vpop.permute.xlu0 %9718
      %9720 = vrot.lane.b32.xlu0 %v9321, 8
      %v9721 = vpop.permute.xlu0 %9720
      %9722 = vrot.lane.b32.xlu0 %v9322, 8
      %v9723 = vpop.permute.xlu0 %9722
      %9724 = vrot.lane.b32.xlu0 %v9323, 8
      %v9725 = vpop.permute.xlu0 %9724
      %9726 = vrot.lane.b32.xlu0 %v9324, 8
      %v9727 = vpop.permute.xlu0 %9726
      %9728 = vrot.lane.b32.xlu0 %v9325, 8
      %v9729 = vpop.permute.xlu0 %9728
      %9730 = vrot.lane.b32.xlu0 %v9326, 8
      %v9731 = vpop.permute.xlu0 %9730
      %9732 = vrot.lane.b32.xlu0 %v9327, 8
      %v9733 = vpop.permute.xlu0 %9732
      %9734 = vrot.lane.b32.xlu0 %v9328, 8
      %v9735 = vpop.permute.xlu0 %9734
      %9736 = vrot.lane.b32.xlu0 %v9329, 8
      %v9737 = vpop.permute.xlu0 %9736
      %9738 = vrot.lane.b32.xlu0 %v9330, 8
      %v9739 = vpop.permute.xlu0 %9738
      %9740 = vrot.lane.b32.xlu0 %v9331, 8
      %v9741 = vpop.permute.xlu0 %9740
      %9742 = vrot.lane.b32.xlu0 %v9332, 8
      %v9743 = vpop.permute.xlu0 %9742
      %9744 = vrot.lane.b32.xlu0 %v9333, 8
      %v9745 = vpop.permute.xlu0 %9744
      %9746 = vrot.lane.b32.xlu0 %v9334, 8
      %v9747 = vpop.permute.xlu0 %9746
      %9748 = vrot.lane.b32.xlu0 %v9335, 8
      %v9749 = vpop.permute.xlu0 %9748
      %9750 = vrot.lane.b32.xlu0 %v9336, 8
      %v9751 = vpop.permute.xlu0 %9750
      %9752 = vrot.lane.b32.xlu0 %v9337, 8
      %v9753 = vpop.permute.xlu0 %9752
      %9754 = vrot.lane.b32.xlu0 %v9338, 8
      %v9755 = vpop.permute.xlu0 %9754
      %9820 = vrot.lane.b32.xlu0 %v9339, 12
      %v9821 = vpop.permute.xlu0 %9820
      %9822 = vrot.lane.b32.xlu0 %v9340, 12
      %v9823 = vpop.permute.xlu0 %9822
      %9824 = vrot.lane.b32.xlu0 %v9341, 12
      %v9825 = vpop.permute.xlu0 %9824
      %9826 = vrot.lane.b32.xlu0 %v9342, 12
      %v9827 = vpop.permute.xlu0 %9826
      %9828 = vrot.lane.b32.xlu0 %v9343, 12
      %v9829 = vpop.permute.xlu0 %9828
      %9830 = vrot.lane.b32.xlu0 %v9344, 12
      %v9831 = vpop.permute.xlu0 %9830
      %9832 = vrot.lane.b32.xlu0 %v9345, 12
      %v9833 = vpop.permute.xlu0 %9832
      %9834 = vrot.lane.b32.xlu0 %v9346, 12
      %v9835 = vpop.permute.xlu0 %9834
      %9836 = vrot.lane.b32.xlu0 %v9347, 12
      %v9837 = vpop.permute.xlu0 %9836
      %9838 = vrot.lane.b32.xlu0 %v9348, 12
      %v9839 = vpop.permute.xlu0 %9838
      %9840 = vrot.lane.b32.xlu0 %v9349, 12
      %v9841 = vpop.permute.xlu0 %9840
      %9842 = vrot.lane.b32.xlu0 %v9350, 12
      %v9843 = vpop.permute.xlu0 %9842
      %9844 = vrot.lane.b32.xlu0 %v9351, 12
      %v9845 = vpop.permute.xlu0 %9844
      %9846 = vrot.lane.b32.xlu0 %v9352, 12
      %v9847 = vpop.permute.xlu0 %9846
      %9848 = vrot.lane.b32.xlu0 %v9353, 12
      %v9849 = vpop.permute.xlu0 %9848
      %9850 = vrot.lane.b32.xlu0 %v9354, 12
      %v9851 = vpop.permute.xlu0 %9850
      %9852 = vrot.lane.b32.xlu0 %v9355, 12
      %v9853 = vpop.permute.xlu0 %9852
      %9854 = vrot.lane.b32.xlu0 %v9356, 12
      %v9855 = vpop.permute.xlu0 %9854
      %9856 = vrot.lane.b32.xlu0 %v9357, 12
      %v9857 = vpop.permute.xlu0 %9856
      %9858 = vrot.lane.b32.xlu0 %v9358, 12
      %v9859 = vpop.permute.xlu0 %9858
      %9860 = vrot.lane.b32.xlu0 %v9359, 12
      %v9861 = vpop.permute.xlu0 %9860
      %9862 = vrot.lane.b32.xlu0 %v9360, 12
      %v9863 = vpop.permute.xlu0 %9862
      %9864 = vrot.lane.b32.xlu0 %v9361, 12
      %v9865 = vpop.permute.xlu0 %9864
      %9866 = vrot.lane.b32.xlu0 %v9362, 12
      %v9867 = vpop.permute.xlu0 %9866
      %9868 = vrot.lane.b32.xlu0 %v9363, 12
      %v9869 = vpop.permute.xlu0 %9868
      %9870 = vrot.lane.b32.xlu0 %v9364, 12
      %v9871 = vpop.permute.xlu0 %9870
      %9872 = vrot.lane.b32.xlu0 %v9365, 12
      %v9873 = vpop.permute.xlu0 %9872
      %9874 = vrot.lane.b32.xlu0 %v9366, 12
      %v9875 = vpop.permute.xlu0 %9874
      %9876 = vrot.lane.b32.xlu0 %v9367, 12
      %v9877 = vpop.permute.xlu0 %9876
      %9878 = vrot.lane.b32.xlu0 %v9368, 12
      %v9879 = vpop.permute.xlu0 %9878
      %9880 = vrot.lane.b32.xlu0 %v9369, 12
      %v9881 = vpop.permute.xlu0 %9880
      %9882 = vrot.lane.b32.xlu0 %v9370, 12
      %v9883 = vpop.permute.xlu0 %9882
      %9948 = vrot.lane.b32.xlu0 %v9371, 16
      %v9949 = vpop.permute.xlu0 %9948
      %9950 = vrot.lane.b32.xlu0 %v9372, 16
      %v9951 = vpop.permute.xlu0 %9950
      %9952 = vrot.lane.b32.xlu0 %v9373, 16
      %v9953 = vpop.permute.xlu0 %9952
      %9954 = vrot.lane.b32.xlu0 %v9374, 16
      %v9955 = vpop.permute.xlu0 %9954
      %9956 = vrot.lane.b32.xlu0 %v9375, 16
      %v9957 = vpop.permute.xlu0 %9956
      %9958 = vrot.lane.b32.xlu0 %v9376, 16
      %v9959 = vpop.permute.xlu0 %9958
      %9960 = vrot.lane.b32.xlu0 %v9377, 16
      %v9961 = vpop.permute.xlu0 %9960
      %9962 = vrot.lane.b32.xlu0 %v9378, 16
      %v9963 = vpop.permute.xlu0 %9962
      %9964 = vrot.lane.b32.xlu0 %v9379, 16
      %v9965 = vpop.permute.xlu0 %9964
      %9966 = vrot.lane.b32.xlu0 %v9380, 16
      %v9967 = vpop.permute.xlu0 %9966
      %9968 = vrot.lane.b32.xlu0 %v9381, 16
      %v9969 = vpop.permute.xlu0 %9968
      %9970 = vrot.lane.b32.xlu0 %v9382, 16
      %v9971 = vpop.permute.xlu0 %9970
      %9972 = vrot.lane.b32.xlu0 %v9383, 16
      %v9973 = vpop.permute.xlu0 %9972
      %9974 = vrot.lane.b32.xlu0 %v9384, 16
      %v9975 = vpop.permute.xlu0 %9974
      %9976 = vrot.lane.b32.xlu0 %v9385, 16
      %v9977 = vpop.permute.xlu0 %9976
      %9978 = vrot.lane.b32.xlu0 %v9386, 16
      %v9979 = vpop.permute.xlu0 %9978
      %9980 = vrot.lane.b32.xlu0 %v9387, 16
      %v9981 = vpop.permute.xlu0 %9980
      %9982 = vrot.lane.b32.xlu0 %v9388, 16
      %v9983 = vpop.permute.xlu0 %9982
      %9984 = vrot.lane.b32.xlu0 %v9389, 16
      %v9985 = vpop.permute.xlu0 %9984
      %9986 = vrot.lane.b32.xlu0 %v9390, 16
      %v9987 = vpop.permute.xlu0 %9986
      %9988 = vrot.lane.b32.xlu0 %v9391, 16
      %v9989 = vpop.permute.xlu0 %9988
      %9990 = vrot.lane.b32.xlu0 %v9392, 16
      %v9991 = vpop.permute.xlu0 %9990
      %9992 = vrot.lane.b32.xlu0 %v9393, 16
      %v9993 = vpop.permute.xlu0 %9992
      %9994 = vrot.lane.b32.xlu0 %v9394, 16
      %v9995 = vpop.permute.xlu0 %9994
      %9996 = vrot.lane.b32.xlu0 %v9395, 16
      %v9997 = vpop.permute.xlu0 %9996
      %9998 = vrot.lane.b32.xlu0 %v9396, 16
      %v9999 = vpop.permute.xlu0 %9998
      %10000 = vrot.lane.b32.xlu0 %v9397, 16
      %v10001 = vpop.permute.xlu0 %10000
      %10002 = vrot.lane.b32.xlu0 %v9398, 16
      %v10003 = vpop.permute.xlu0 %10002
      %10004 = vrot.lane.b32.xlu0 %v9399, 16
      %v10005 = vpop.permute.xlu0 %10004
      %10006 = vrot.lane.b32.xlu0 %v9400, 16
      %v10007 = vpop.permute.xlu0 %10006
      %10008 = vrot.lane.b32.xlu0 %v9401, 16
      %v10009 = vpop.permute.xlu0 %10008
      %10010 = vrot.lane.b32.xlu0 %v9402, 16
      %v10011 = vpop.permute.xlu0 %10010
      %10076 = vrot.lane.b32.xlu0 %v9403, 20
      %v10077 = vpop.permute.xlu0 %10076
      %10078 = vrot.lane.b32.xlu0 %v9404, 20
      %v10079 = vpop.permute.xlu0 %10078
      %10080 = vrot.lane.b32.xlu0 %v9405, 20
      %v10081 = vpop.permute.xlu0 %10080
      %10082 = vrot.lane.b32.xlu0 %v9406, 20
      %v10083 = vpop.permute.xlu0 %10082
      %10084 = vrot.lane.b32.xlu0 %v9407, 20
      %v10085 = vpop.permute.xlu0 %10084
      %10086 = vrot.lane.b32.xlu0 %v9408, 20
      %v10087 = vpop.permute.xlu0 %10086
      %10088 = vrot.lane.b32.xlu0 %v9409, 20
      %v10089 = vpop.permute.xlu0 %10088
      %10090 = vrot.lane.b32.xlu0 %v9410, 20
      %v10091 = vpop.permute.xlu0 %10090
      %10092 = vrot.lane.b32.xlu0 %v9411, 20
      %v10093 = vpop.permute.xlu0 %10092
      %10094 = vrot.lane.b32.xlu0 %v9412, 20
      %v10095 = vpop.permute.xlu0 %10094
      %10096 = vrot.lane.b32.xlu0 %v9413, 20
      %v10097 = vpop.permute.xlu0 %10096
      %10098 = vrot.lane.b32.xlu0 %v9414, 20
      %v10099 = vpop.permute.xlu0 %10098
      %10100 = vrot.lane.b32.xlu0 %v9415, 20
      %v10101 = vpop.permute.xlu0 %10100
      %10102 = vrot.lane.b32.xlu0 %v9416, 20
      %v10103 = vpop.permute.xlu0 %10102
      %10104 = vrot.lane.b32.xlu0 %v9417, 20
      %v10105 = vpop.permute.xlu0 %10104
      %10106 = vrot.lane.b32.xlu0 %v9418, 20
      %v10107 = vpop.permute.xlu0 %10106
      %10108 = vrot.lane.b32.xlu0 %v9419, 20
      %v10109 = vpop.permute.xlu0 %10108
      %10110 = vrot.lane.b32.xlu0 %v9420, 20
      %v10111 = vpop.permute.xlu0 %10110
      %10112 = vrot.lane.b32.xlu0 %v9421, 20
      %v10113 = vpop.permute.xlu0 %10112
      %10114 = vrot.lane.b32.xlu0 %v9422, 20
      %v10115 = vpop.permute.xlu0 %10114
      %10116 = vrot.lane.b32.xlu0 %v9423, 20
      %v10117 = vpop.permute.xlu0 %10116
      %10118 = vrot.lane.b32.xlu0 %v9424, 20
      %v10119 = vpop.permute.xlu0 %10118
      %10120 = vrot.lane.b32.xlu0 %v9425, 20
      %v10121 = vpop.permute.xlu0 %10120
      %10122 = vrot.lane.b32.xlu0 %v9426, 20
      %v10123 = vpop.permute.xlu0 %10122
      %10124 = vrot.lane.b32.xlu0 %v9427, 20
      %v10125 = vpop.permute.xlu0 %10124
      %10126 = vrot.lane.b32.xlu0 %v9428, 20
      %v10127 = vpop.permute.xlu0 %10126
      %10128 = vrot.lane.b32.xlu0 %v9429, 20
      %v10129 = vpop.permute.xlu0 %10128
      %10130 = vrot.lane.b32.xlu0 %v9430, 20
      %v10131 = vpop.permute.xlu0 %10130
      %10132 = vrot.lane.b32.xlu0 %v9431, 20
      %v10133 = vpop.permute.xlu0 %10132
      %10134 = vrot.lane.b32.xlu0 %v9432, 20
      %v10135 = vpop.permute.xlu0 %10134
      %10136 = vrot.lane.b32.xlu0 %v9433, 20
      %v10137 = vpop.permute.xlu0 %10136
      %10138 = vrot.lane.b32.xlu0 %v9434, 20
      %v10139 = vpop.permute.xlu0 %10138
      %10204 = vrot.lane.b32.xlu0 %v9436, 24
      %v10205 = vpop.permute.xlu0 %10204
      %10206 = vrot.lane.b32.xlu0 %v9437, 24
      %v10207 = vpop.permute.xlu0 %10206
      %10208 = vrot.lane.b32.xlu0 %v9438, 24
      %v10209 = vpop.permute.xlu0 %10208
      %10210 = vrot.lane.b32.xlu0 %v9439, 24
      %v10211 = vpop.permute.xlu0 %10210
      %10212 = vrot.lane.b32.xlu0 %v9440, 24
      %v10213 = vpop.permute.xlu0 %10212
      %10214 = vrot.lane.b32.xlu0 %v9441, 24
      %v10215 = vpop.permute.xlu0 %10214
      %10216 = vrot.lane.b32.xlu0 %v9442, 24
      %v10217 = vpop.permute.xlu0 %10216
      %10218 = vrot.lane.b32.xlu0 %v9443, 24
      %v10219 = vpop.permute.xlu0 %10218
      %10220 = vrot.lane.b32.xlu0 %v9444, 24
      %v10221 = vpop.permute.xlu0 %10220
      %10222 = vrot.lane.b32.xlu0 %v9445, 24
      %v10223 = vpop.permute.xlu0 %10222
      %10224 = vrot.lane.b32.xlu0 %v9446, 24
      %v10225 = vpop.permute.xlu0 %10224
      %10226 = vrot.lane.b32.xlu0 %v9447, 24
      %v10227 = vpop.permute.xlu0 %10226
      %10228 = vrot.lane.b32.xlu0 %v9448, 24
      %v10229 = vpop.permute.xlu0 %10228
      %10230 = vrot.lane.b32.xlu0 %v9449, 24
      %v10231 = vpop.permute.xlu0 %10230
      %10232 = vrot.lane.b32.xlu0 %v9450, 24
      %v10233 = vpop.permute.xlu0 %10232
      %10234 = vrot.lane.b32.xlu0 %v9451, 24
      %v10235 = vpop.permute.xlu0 %10234
      %10236 = vrot.lane.b32.xlu0 %v9452, 24
      %v10237 = vpop.permute.xlu0 %10236
      %10238 = vrot.lane.b32.xlu0 %v9453, 24
      %v10239 = vpop.permute.xlu0 %10238
      %10240 = vrot.lane.b32.xlu0 %v9454, 24
      %v10241 = vpop.permute.xlu0 %10240
      %10242 = vrot.lane.b32.xlu0 %v9455, 24
      %v10243 = vpop.permute.xlu0 %10242
      %10244 = vrot.lane.b32.xlu0 %v9456, 24
      %v10245 = vpop.permute.xlu0 %10244
      %10246 = vrot.lane.b32.xlu0 %v9457, 24
      %v10247 = vpop.permute.xlu0 %10246
      %10248 = vrot.lane.b32.xlu0 %v9458, 24
      %v10249 = vpop.permute.xlu0 %10248
      %10250 = vrot.lane.b32.xlu0 %v9459, 24
      %v10251 = vpop.permute.xlu0 %10250
      %10252 = vrot.lane.b32.xlu0 %v9460, 24
      %v10253 = vpop.permute.xlu0 %10252
      %10254 = vrot.lane.b32.xlu0 %v9461, 24
      %v10255 = vpop.permute.xlu0 %10254
      %10256 = vrot.lane.b32.xlu0 %v9462, 24
      %v10257 = vpop.permute.xlu0 %10256
      %10258 = vrot.lane.b32.xlu0 %v9463, 24
      %v10259 = vpop.permute.xlu0 %10258
      %10260 = vrot.lane.b32.xlu0 %v9464, 24
      %v10261 = vpop.permute.xlu0 %10260
      %10262 = vrot.lane.b32.xlu0 %v9465, 24
      %v10263 = vpop.permute.xlu0 %10262
      %10264 = vrot.lane.b32.xlu0 %v9466, 24
      %v10265 = vpop.permute.xlu0 %10264
      %10266 = vrot.lane.b32.xlu0 %v9467, 24
      %v10267 = vpop.permute.xlu0 %10266
      %10332 = vrot.lane.b32.xlu0 %v9468, 28
      %v10333 = vpop.permute.xlu0 %10332
      %10334 = vrot.lane.b32.xlu0 %v9469, 28
      %v10335 = vpop.permute.xlu0 %10334
      %10336 = vrot.lane.b32.xlu0 %v9470, 28
      %v10337 = vpop.permute.xlu0 %10336
      %10338 = vrot.lane.b32.xlu0 %v9471, 28
      %v10339 = vpop.permute.xlu0 %10338
      %10340 = vrot.lane.b32.xlu0 %v9472, 28
      %v10341 = vpop.permute.xlu0 %10340
      %10342 = vrot.lane.b32.xlu0 %v9473, 28
      %v10343 = vpop.permute.xlu0 %10342
      %10344 = vrot.lane.b32.xlu0 %v9474, 28
      %v10345 = vpop.permute.xlu0 %10344
      %10346 = vrot.lane.b32.xlu0 %v9475, 28
      %v10347 = vpop.permute.xlu0 %10346
      %10348 = vrot.lane.b32.xlu0 %v9476, 28
      %v10349 = vpop.permute.xlu0 %10348
      %10350 = vrot.lane.b32.xlu0 %v9477, 28
      %v10351 = vpop.permute.xlu0 %10350
      %10352 = vrot.lane.b32.xlu0 %v9478, 28
      %v10353 = vpop.permute.xlu0 %10352
      %10354 = vrot.lane.b32.xlu0 %v9479, 28
      %v10355 = vpop.permute.xlu0 %10354
      %10356 = vrot.lane.b32.xlu0 %v9480, 28
      %v10357 = vpop.permute.xlu0 %10356
      %10358 = vrot.lane.b32.xlu0 %v9481, 28
      %v10359 = vpop.permute.xlu0 %10358
      %10360 = vrot.lane.b32.xlu0 %v9482, 28
      %v10361 = vpop.permute.xlu0 %10360
      %10362 = vrot.lane.b32.xlu0 %v9483, 28
      %v10363 = vpop.permute.xlu0 %10362
      %10364 = vrot.lane.b32.xlu0 %v9484, 28
      %v10365 = vpop.permute.xlu0 %10364
      %10366 = vrot.lane.b32.xlu0 %v9485, 28
      %v10367 = vpop.permute.xlu0 %10366
      %10368 = vrot.lane.b32.xlu0 %v9486, 28
      %v10369 = vpop.permute.xlu0 %10368
      %10370 = vrot.lane.b32.xlu0 %v9487, 28
      %v10371 = vpop.permute.xlu0 %10370
      %10372 = vrot.lane.b32.xlu0 %v9488, 28
      %v10373 = vpop.permute.xlu0 %10372
      %10374 = vrot.lane.b32.xlu0 %v9489, 28
      %v10375 = vpop.permute.xlu0 %10374
      %10376 = vrot.lane.b32.xlu0 %v9490, 28
      %v10377 = vpop.permute.xlu0 %10376
      %10378 = vrot.lane.b32.xlu0 %v9491, 28
      %v10379 = vpop.permute.xlu0 %10378
      %10380 = vrot.lane.b32.xlu0 %v9492, 28
      %v10381 = vpop.permute.xlu0 %10380
      %10382 = vrot.lane.b32.xlu0 %v9493, 28
      %v10383 = vpop.permute.xlu0 %10382
      %10384 = vrot.lane.b32.xlu0 %v9494, 28
      %v10385 = vpop.permute.xlu0 %10384
      %10386 = vrot.lane.b32.xlu0 %v9495, 28
      %v10387 = vpop.permute.xlu0 %10386
      %10388 = vrot.lane.b32.xlu0 %v9496, 28
      %v10389 = vpop.permute.xlu0 %10388
      %10390 = vrot.lane.b32.xlu0 %v9497, 28
      %v10391 = vpop.permute.xlu0 %10390
      %10392 = vrot.lane.b32.xlu0 %v9498, 28
      %v10393 = vpop.permute.xlu0 %10392
      %10394 = vrot.lane.b32.xlu0 %v9499, 28
      %v10395 = vpop.permute.xlu0 %10394
      %10460 = vrot.lane.b32.xlu0 %v9500, 32
      %v10461 = vpop.permute.xlu0 %10460
      %10462 = vrot.lane.b32.xlu0 %v9501, 32
      %v10463 = vpop.permute.xlu0 %10462
      %10464 = vrot.lane.b32.xlu0 %v9502, 32
      %v10465 = vpop.permute.xlu0 %10464
      %10466 = vrot.lane.b32.xlu0 %v9503, 32
      %v10467 = vpop.permute.xlu0 %10466
      %10468 = vrot.lane.b32.xlu0 %v9504, 32
      %v10469 = vpop.permute.xlu0 %10468
      %10470 = vrot.lane.b32.xlu0 %v9505, 32
      %v10471 = vpop.permute.xlu0 %10470
      %10472 = vrot.lane.b32.xlu0 %v9506, 32
      %v10473 = vpop.permute.xlu0 %10472
      %10474 = vrot.lane.b32.xlu0 %v9507, 32
      %v10475 = vpop.permute.xlu0 %10474
      %10476 = vrot.lane.b32.xlu0 %v9508, 32
      %v10477 = vpop.permute.xlu0 %10476
      %10478 = vrot.lane.b32.xlu0 %v9509, 32
      %v10479 = vpop.permute.xlu0 %10478
      %10480 = vrot.lane.b32.xlu0 %v9510, 32
      %v10481 = vpop.permute.xlu0 %10480
      %10482 = vrot.lane.b32.xlu0 %v9511, 32
      %v10483 = vpop.permute.xlu0 %10482
      %10484 = vrot.lane.b32.xlu0 %v9512, 32
      %v10485 = vpop.permute.xlu0 %10484
      %10486 = vrot.lane.b32.xlu0 %v9513, 32
      %v10487 = vpop.permute.xlu0 %10486
      %10488 = vrot.lane.b32.xlu0 %v9514, 32
      %v10489 = vpop.permute.xlu0 %10488
      %10490 = vrot.lane.b32.xlu0 %v9515, 32
      %v10491 = vpop.permute.xlu0 %10490
      %10492 = vrot.lane.b32.xlu0 %v9516, 32
      %v10493 = vpop.permute.xlu0 %10492
      %10494 = vrot.lane.b32.xlu0 %v9517, 32
      %v10495 = vpop.permute.xlu0 %10494
      %10496 = vrot.lane.b32.xlu0 %v9518, 32
      %v10497 = vpop.permute.xlu0 %10496
      %10498 = vrot.lane.b32.xlu0 %v9519, 32
      %v10499 = vpop.permute.xlu0 %10498
      %10500 = vrot.lane.b32.xlu0 %v9520, 32
      %v10501 = vpop.permute.xlu0 %10500
      %10502 = vrot.lane.b32.xlu0 %v9521, 32
      %v10503 = vpop.permute.xlu0 %10502
      %10504 = vrot.lane.b32.xlu0 %v9522, 32
      %v10505 = vpop.permute.xlu0 %10504
      %10506 = vrot.lane.b32.xlu0 %v9523, 32
      %v10507 = vpop.permute.xlu0 %10506
      %10508 = vrot.lane.b32.xlu0 %v9524, 32
      %v10509 = vpop.permute.xlu0 %10508
      %10510 = vrot.lane.b32.xlu0 %v9525, 32
      %v10511 = vpop.permute.xlu0 %10510
      %10512 = vrot.lane.b32.xlu0 %v9526, 32
      %v10513 = vpop.permute.xlu0 %10512
      %10514 = vrot.lane.b32.xlu0 %v9527, 32
      %v10515 = vpop.permute.xlu0 %10514
      %10516 = vrot.lane.b32.xlu0 %v9528, 32
      %v10517 = vpop.permute.xlu0 %10516
      %10518 = vrot.lane.b32.xlu0 %v9529, 32
      %v10519 = vpop.permute.xlu0 %10518
      %10520 = vrot.lane.b32.xlu0 %v9530, 32
      %v10521 = vpop.permute.xlu0 %10520
      %10522 = vrot.lane.b32.xlu0 %v9531, 32
      %v10523 = vpop.permute.xlu0 %10522
      %v10556 = vsel %vm387, %v9243, %v9565
      %v10557 = vsel %vm387, %v9244, %v9567
      %v10558 = vsel %vm387, %v9245, %v9569
      %v10559 = vsel %vm387, %v9246, %v9571
      %v10560 = vsel %vm387, %v9247, %v9573
      %v10561 = vsel %vm387, %v9248, %v9575
      %v10562 = vsel %vm387, %v9249, %v9577
      %v10563 = vsel %vm387, %v9250, %v9579
      %v10564 = vsel %vm387, %v9251, %v9581
      %v10565 = vsel %vm387, %v9252, %v9583
      %v10566 = vsel %vm387, %v9253, %v9585
      %v10567 = vsel %vm387, %v9254, %v9587
      %v10568 = vsel %vm387, %v9255, %v9589
      %v10569 = vsel %vm387, %v9256, %v9591
      %v10570 = vsel %vm387, %v9257, %v9593
      %v10571 = vsel %vm387, %v9258, %v9595
      %v10572 = vsel %vm387, %v9259, %v9597
      %v10573 = vsel %vm387, %v9260, %v9599
      %v10574 = vsel %vm387, %v9261, %v9601
      %v10575 = vsel %vm387, %v9262, %v9603
      %v10576 = vsel %vm387, %v9263, %v9605
      %v10577 = vsel %vm387, %v9264, %v9607
      %v10578 = vsel %vm387, %v9265, %v9609
      %v10579 = vsel %vm387, %v9266, %v9611
      %v10580 = vsel %vm387, %v9267, %v9613
      %v10581 = vsel %vm387, %v9268, %v9615
      %v10582 = vsel %vm387, %v9269, %v9617
      %v10583 = vsel %vm387, %v9270, %v9619
      %v10584 = vsel %vm387, %v9271, %v9621
      %v10585 = vsel %vm387, %v9272, %v9623
      %v10586 = vsel %vm387, %v9273, %v9625
      %v10587 = vsel %vm387, %v9274, %v9627
      %v10588 = vsel %vm1919, %v10556, %v9693
      %v10589 = vsel %vm1919, %v10557, %v9695
      %v10590 = vsel %vm1919, %v10558, %v9697
      %v10591 = vsel %vm1919, %v10559, %v9699
      %v10592 = vsel %vm1919, %v10560, %v9701
      %v10593 = vsel %vm1919, %v10561, %v9703
      %v10594 = vsel %vm1919, %v10562, %v9705
      %v10595 = vsel %vm1919, %v10563, %v9707
      %v10596 = vsel %vm1919, %v10564, %v9709
      %v10597 = vsel %vm1919, %v10565, %v9711
      %v10598 = vsel %vm1919, %v10566, %v9713
      %v10599 = vsel %vm1919, %v10567, %v9715
      %v10600 = vsel %vm1919, %v10568, %v9717
      %v10601 = vsel %vm1919, %v10569, %v9719
      %v10602 = vsel %vm1919, %v10570, %v9721
      %v10603 = vsel %vm1919, %v10571, %v9723
      %v10604 = vsel %vm1919, %v10572, %v9725
      %v10605 = vsel %vm1919, %v10573, %v9727
      %v10606 = vsel %vm1919, %v10574, %v9729
      %v10607 = vsel %vm1919, %v10575, %v9731
      %v10608 = vsel %vm1919, %v10576, %v9733
      %v10609 = vsel %vm1919, %v10577, %v9735
      %v10610 = vsel %vm1919, %v10578, %v9737
      %v10611 = vsel %vm1919, %v10579, %v9739
      %v10612 = vsel %vm1919, %v10580, %v9741
      %v10613 = vsel %vm1919, %v10581, %v9743
      %v10614 = vsel %vm1919, %v10582, %v9745
      %v10615 = vsel %vm1919, %v10583, %v9747
      %v10616 = vsel %vm1919, %v10584, %v9749
      %v10617 = vsel %vm1919, %v10585, %v9751
      %v10618 = vsel %vm1919, %v10586, %v9753
      %v10619 = vsel %vm1919, %v10587, %v9755
      %v10620 = vsel %vm4027, %v10588, %v9821
      %v10621 = vsel %vm4027, %v10589, %v9823
      %v10622 = vsel %vm4027, %v10590, %v9825
      %v10623 = vsel %vm4027, %v10591, %v9827
      %v10624 = vsel %vm4027, %v10592, %v9829
      %v10625 = vsel %vm4027, %v10593, %v9831
      %v10626 = vsel %vm4027, %v10594, %v9833
      %v10627 = vsel %vm4027, %v10595, %v9835
      %v10628 = vsel %vm4027, %v10596, %v9837
      %v10629 = vsel %vm4027, %v10597, %v9839
      %v10630 = vsel %vm4027, %v10598, %v9841
      %v10631 = vsel %vm4027, %v10599, %v9843
      %v10632 = vsel %vm4027, %v10600, %v9845
      %v10633 = vsel %vm4027, %v10601, %v9847
      %v10634 = vsel %vm4027, %v10602, %v9849
      %v10635 = vsel %vm4027, %v10603, %v9851
      %v10636 = vsel %vm4027, %v10604, %v9853
      %v10637 = vsel %vm4027, %v10605, %v9855
      %v10638 = vsel %vm4027, %v10606, %v9857
      %v10639 = vsel %vm4027, %v10607, %v9859
      %v10640 = vsel %vm4027, %v10608, %v9861
      %v10641 = vsel %vm4027, %v10609, %v9863
      %v10642 = vsel %vm4027, %v10610, %v9865
      %v10643 = vsel %vm4027, %v10611, %v9867
      %v10644 = vsel %vm4027, %v10612, %v9869
      %v10645 = vsel %vm4027, %v10613, %v9871
      %v10646 = vsel %vm4027, %v10614, %v9873
      %v10647 = vsel %vm4027, %v10615, %v9875
      %v10648 = vsel %vm4027, %v10616, %v9877
      %v10649 = vsel %vm4027, %v10617, %v9879
      %v10650 = vsel %vm4027, %v10618, %v9881
      %v10651 = vsel %vm4027, %v10619, %v9883
      %v10652 = vsel %vm1952, %v10620, %v9949
      %v10653 = vsel %vm1952, %v10621, %v9951
      %v10654 = vsel %vm1952, %v10622, %v9953
      %v10655 = vsel %vm1952, %v10623, %v9955
      %v10656 = vsel %vm1952, %v10624, %v9957
      %v10657 = vsel %vm1952, %v10625, %v9959
      %v10658 = vsel %vm1952, %v10626, %v9961
      %v10659 = vsel %vm1952, %v10627, %v9963
      %v10660 = vsel %vm1952, %v10628, %v9965
      %v10661 = vsel %vm1952, %v10629, %v9967
      %v10662 = vsel %vm1952, %v10630, %v9969
      %v10663 = vsel %vm1952, %v10631, %v9971
      %v10664 = vsel %vm1952, %v10632, %v9973
      %v10665 = vsel %vm1952, %v10633, %v9975
      %v10666 = vsel %vm1952, %v10634, %v9977
      %v10667 = vsel %vm1952, %v10635, %v9979
      %v10668 = vsel %vm1952, %v10636, %v9981
      %v10669 = vsel %vm1952, %v10637, %v9983
      %v10670 = vsel %vm1952, %v10638, %v9985
      %v10671 = vsel %vm1952, %v10639, %v9987
      %v10672 = vsel %vm1952, %v10640, %v9989
      %v10673 = vsel %vm1952, %v10641, %v9991
      %v10674 = vsel %vm1952, %v10642, %v9993
      %v10675 = vsel %vm1952, %v10643, %v9995
      %v10676 = vsel %vm1952, %v10644, %v9997
      %v10677 = vsel %vm1952, %v10645, %v9999
      %v10678 = vsel %vm1952, %v10646, %v10001
      %v10679 = vsel %vm1952, %v10647, %v10003
      %v10680 = vsel %vm1952, %v10648, %v10005
      %v10681 = vsel %vm1952, %v10649, %v10007
      %v10682 = vsel %vm1952, %v10650, %v10009
      %v10683 = vsel %vm1952, %v10651, %v10011
      %v10684 = vsel %vm4092, %v10652, %v10077
      %v10685 = vsel %vm4092, %v10653, %v10079
      %v10686 = vsel %vm4092, %v10654, %v10081
      %v10687 = vsel %vm4092, %v10655, %v10083
      %v10688 = vsel %vm4092, %v10656, %v10085
      %v10689 = vsel %vm4092, %v10657, %v10087
      %v10690 = vsel %vm4092, %v10658, %v10089
      %v10691 = vsel %vm4092, %v10659, %v10091
      %v10692 = vsel %vm4092, %v10660, %v10093
      %v10693 = vsel %vm4092, %v10661, %v10095
      %v10694 = vsel %vm4092, %v10662, %v10097
      %v10695 = vsel %vm4092, %v10663, %v10099
      %v10696 = vsel %vm4092, %v10664, %v10101
      %v10697 = vsel %vm4092, %v10665, %v10103
      %v10698 = vsel %vm4092, %v10666, %v10105
      %v10699 = vsel %vm4092, %v10667, %v10107
      %v10700 = vsel %vm4092, %v10668, %v10109
      %v10701 = vsel %vm4092, %v10669, %v10111
      %v10702 = vsel %vm4092, %v10670, %v10113
      %v10703 = vsel %vm4092, %v10671, %v10115
      %v10704 = vsel %vm4092, %v10672, %v10117
      %v10705 = vsel %vm4092, %v10673, %v10119
      %v10706 = vsel %vm4092, %v10674, %v10121
      %v10707 = vsel %vm4092, %v10675, %v10123
      %v10708 = vsel %vm4092, %v10676, %v10125
      %v10709 = vsel %vm4092, %v10677, %v10127
      %v10710 = vsel %vm4092, %v10678, %v10129
      %v10711 = vsel %vm4092, %v10679, %v10131
      %v10712 = vsel %vm4092, %v10680, %v10133
      %v10713 = vsel %vm4092, %v10681, %v10135
      %v10714 = vsel %vm4092, %v10682, %v10137
      %v10715 = vsel %vm4092, %v10683, %v10139
      %v10716 = vsel %vm1985, %v10684, %v10205
      %v10717 = vsel %vm1985, %v10685, %v10207
      %v10718 = vsel %vm1985, %v10686, %v10209
      %v10719 = vsel %vm1985, %v10687, %v10211
      %v10720 = vsel %vm1985, %v10688, %v10213
      %v10721 = vsel %vm1985, %v10689, %v10215
      %v10722 = vsel %vm1985, %v10690, %v10217
      %v10723 = vsel %vm1985, %v10691, %v10219
      %v10724 = vsel %vm1985, %v10692, %v10221
      %v10725 = vsel %vm1985, %v10693, %v10223
      %v10726 = vsel %vm1985, %v10694, %v10225
      %v10727 = vsel %vm1985, %v10695, %v10227
      %v10728 = vsel %vm1985, %v10696, %v10229
      %v10729 = vsel %vm1985, %v10697, %v10231
      %v10730 = vsel %vm1985, %v10698, %v10233
      %v10731 = vsel %vm1985, %v10699, %v10235
      %v10732 = vsel %vm1985, %v10700, %v10237
      %v10733 = vsel %vm1985, %v10701, %v10239
      %v10734 = vsel %vm1985, %v10702, %v10241
      %v10735 = vsel %vm1985, %v10703, %v10243
      %v10736 = vsel %vm1985, %v10704, %v10245
      %v10737 = vsel %vm1985, %v10705, %v10247
      %v10738 = vsel %vm1985, %v10706, %v10249
      %v10739 = vsel %vm1985, %v10707, %v10251
      %v10740 = vsel %vm1985, %v10708, %v10253
      %v10741 = vsel %vm1985, %v10709, %v10255
      %v10742 = vsel %vm1985, %v10710, %v10257
      %v10743 = vsel %vm1985, %v10711, %v10259
      %v10744 = vsel %vm1985, %v10712, %v10261
      %v10745 = vsel %vm1985, %v10713, %v10263
      %v10746 = vsel %vm1985, %v10714, %v10265
      %v10747 = vsel %vm1985, %v10715, %v10267
      %v10748 = vsel %vm4157, %v10716, %v10333
      %v10749 = vsel %vm4157, %v10717, %v10335
      %v10750 = vsel %vm4157, %v10718, %v10337
      %v10751 = vsel %vm4157, %v10719, %v10339
      %v10752 = vsel %vm4157, %v10720, %v10341
      %v10753 = vsel %vm4157, %v10721, %v10343
      %v10754 = vsel %vm4157, %v10722, %v10345
      %v10755 = vsel %vm4157, %v10723, %v10347
      %v10756 = vsel %vm4157, %v10724, %v10349
      %v10757 = vsel %vm4157, %v10725, %v10351
      %v10758 = vsel %vm4157, %v10726, %v10353
      %v10759 = vsel %vm4157, %v10727, %v10355
      %v10760 = vsel %vm4157, %v10728, %v10357
      %v10761 = vsel %vm4157, %v10729, %v10359
      %v10762 = vsel %vm4157, %v10730, %v10361
      %v10763 = vsel %vm4157, %v10731, %v10363
      %v10764 = vsel %vm4157, %v10732, %v10365
      %v10765 = vsel %vm4157, %v10733, %v10367
      %v10766 = vsel %vm4157, %v10734, %v10369
      %v10767 = vsel %vm4157, %v10735, %v10371
      %v10768 = vsel %vm4157, %v10736, %v10373
      %v10769 = vsel %vm4157, %v10737, %v10375
      %v10770 = vsel %vm4157, %v10738, %v10377
      %v10771 = vsel %vm4157, %v10739, %v10379
      %v10772 = vsel %vm4157, %v10740, %v10381
      %v10773 = vsel %vm4157, %v10741, %v10383
      %v10774 = vsel %vm4157, %v10742, %v10385
      %v10775 = vsel %vm4157, %v10743, %v10387
      %v10776 = vsel %vm4157, %v10744, %v10389
      %v10777 = vsel %vm4157, %v10745, %v10391
      %v10778 = vsel %vm4157, %v10746, %v10393
      %v10779 = vsel %vm4157, %v10747, %v10395
      %v10780 = vsel %vm2018, %v10748, %v10461
      %v10781 = vsel %vm2018, %v10749, %v10463
      %v10782 = vsel %vm2018, %v10750, %v10465
      %v10783 = vsel %vm2018, %v10751, %v10467
      %v10784 = vsel %vm2018, %v10752, %v10469
      %v10785 = vsel %vm2018, %v10753, %v10471
      %v10786 = vsel %vm2018, %v10754, %v10473
      %v10787 = vsel %vm2018, %v10755, %v10475
      %v10788 = vsel %vm2018, %v10756, %v10477
      %v10789 = vsel %vm2018, %v10757, %v10479
      %v10790 = vsel %vm2018, %v10758, %v10481
      %v10791 = vsel %vm2018, %v10759, %v10483
      %v10792 = vsel %vm2018, %v10760, %v10485
      %v10793 = vsel %vm2018, %v10761, %v10487
      %v10794 = vsel %vm2018, %v10762, %v10489
      %v10795 = vsel %vm2018, %v10763, %v10491
      %v10796 = vsel %vm2018, %v10764, %v10493
      %v10797 = vsel %vm2018, %v10765, %v10495
      %v10798 = vsel %vm2018, %v10766, %v10497
      %v10799 = vsel %vm2018, %v10767, %v10499
      %v10800 = vsel %vm2018, %v10768, %v10501
      %v10801 = vsel %vm2018, %v10769, %v10503
      %v10802 = vsel %vm2018, %v10770, %v10505
      %v10803 = vsel %vm2018, %v10771, %v10507
      %v10804 = vsel %vm2018, %v10772, %v10509
      %v10805 = vsel %vm2018, %v10773, %v10511
      %v10806 = vsel %vm2018, %v10774, %v10513
      %v10807 = vsel %vm2018, %v10775, %v10515
      %v10808 = vsel %vm2018, %v10776, %v10517
      %v10809 = vsel %vm2018, %v10777, %v10519
      %v10810 = vsel %vm2018, %v10778, %v10521
      %v10811 = vsel %vm2018, %v10779, %v10523
      %10844 = vrot.lane.b32.xlu0 %v10780, 52
      %v10845 = vpop.permute.xlu0 %10844
      %10846 = vrot.lane.b32.xlu0 %v10781, 52
      %v10847 = vpop.permute.xlu0 %10846
      %10848 = vrot.lane.b32.xlu0 %v10782, 52
      %v10849 = vpop.permute.xlu0 %10848
      %10850 = vrot.lane.b32.xlu0 %v10783, 52
      %v10851 = vpop.permute.xlu0 %10850
      %10852 = vrot.lane.b32.xlu0 %v10784, 52
      %v10853 = vpop.permute.xlu0 %10852
      %10854 = vrot.lane.b32.xlu0 %v10785, 52
      %v10855 = vpop.permute.xlu0 %10854
      %10856 = vrot.lane.b32.xlu0 %v10786, 52
      %v10857 = vpop.permute.xlu0 %10856
      %10858 = vrot.lane.b32.xlu0 %v10787, 52
      %v10859 = vpop.permute.xlu0 %10858
      %10860 = vrot.lane.b32.xlu0 %v10788, 52
      %v10861 = vpop.permute.xlu0 %10860
      %10862 = vrot.lane.b32.xlu0 %v10789, 52
      %v10863 = vpop.permute.xlu0 %10862
      %10864 = vrot.lane.b32.xlu0 %v10790, 52
      %v10865 = vpop.permute.xlu0 %10864
      %10866 = vrot.lane.b32.xlu0 %v10791, 52
      %v10867 = vpop.permute.xlu0 %10866
      %10868 = vrot.lane.b32.xlu0 %v10792, 52
      %v10869 = vpop.permute.xlu0 %10868
      %10870 = vrot.lane.b32.xlu0 %v10793, 52
      %v10871 = vpop.permute.xlu0 %10870
      %10872 = vrot.lane.b32.xlu0 %v10794, 52
      %v10873 = vpop.permute.xlu0 %10872
      %10874 = vrot.lane.b32.xlu0 %v10795, 52
      %v10875 = vpop.permute.xlu0 %10874
      %10876 = vrot.lane.b32.xlu0 %v10796, 52
      %v10877 = vpop.permute.xlu0 %10876
      %10878 = vrot.lane.b32.xlu0 %v10797, 52
      %v10879 = vpop.permute.xlu0 %10878
      %10880 = vrot.lane.b32.xlu0 %v10798, 52
      %v10881 = vpop.permute.xlu0 %10880
      %10882 = vrot.lane.b32.xlu0 %v10799, 52
      %v10883 = vpop.permute.xlu0 %10882
      %10884 = vrot.lane.b32.xlu0 %v10800, 52
      %v10885 = vpop.permute.xlu0 %10884
      %10886 = vrot.lane.b32.xlu0 %v10801, 52
      %v10887 = vpop.permute.xlu0 %10886
      %10888 = vrot.lane.b32.xlu0 %v10802, 52
      %v10889 = vpop.permute.xlu0 %10888
      %10890 = vrot.lane.b32.xlu0 %v10803, 52
      %v10891 = vpop.permute.xlu0 %10890
      %10892 = vrot.lane.b32.xlu0 %v10804, 52
      %v10893 = vpop.permute.xlu0 %10892
      %10894 = vrot.lane.b32.xlu0 %v10805, 52
      %v10895 = vpop.permute.xlu0 %10894
      %10896 = vrot.lane.b32.xlu0 %v10806, 52
      %v10897 = vpop.permute.xlu0 %10896
      %10898 = vrot.lane.b32.xlu0 %v10807, 52
      %v10899 = vpop.permute.xlu0 %10898
      %10900 = vrot.lane.b32.xlu0 %v10808, 52
      %v10901 = vpop.permute.xlu0 %10900
      %10902 = vrot.lane.b32.xlu0 %v10809, 52
      %v10903 = vpop.permute.xlu0 %10902
      %10904 = vrot.lane.b32.xlu0 %v10810, 52
      %v10905 = vpop.permute.xlu0 %10904
      %10906 = vrot.lane.b32.xlu0 %v10811, 52
      %v10907 = vpop.permute.xlu0 %10906
      %v10940 = vsel %vm8789, %v8727, %v10845
      %v10941 = vsel %vm8789, %v8728, %v10847
      %v10942 = vsel %vm8789, %v8729, %v10849
      %v10943 = vsel %vm8789, %v8730, %v10851
      %v10944 = vsel %vm8789, %v8731, %v10853
      %v10945 = vsel %vm8789, %v8732, %v10855
      %v10946 = vsel %vm8789, %v8733, %v10857
      %v10947 = vsel %vm8789, %v8734, %v10859
      %v10948 = vsel %vm8789, %v8735, %v10861
      %v10949 = vsel %vm8789, %v8736, %v10863
      %v10950 = vsel %vm8789, %v8737, %v10865
      %v10951 = vsel %vm8789, %v8738, %v10867
      %v10952 = vsel %vm8789, %v8739, %v10869
      %v10953 = vsel %vm8789, %v8740, %v10871
      %v10954 = vsel %vm8789, %v8741, %v10873
      %v10955 = vsel %vm8789, %v8742, %v10875
      %v10956 = vsel %vm8789, %v8743, %v10877
      %v10957 = vsel %vm8789, %v8744, %v10879
      %v10958 = vsel %vm8789, %v8745, %v10881
      %v10959 = vsel %vm8789, %v8746, %v10883
      %v10960 = vsel %vm8789, %v8747, %v10885
      %v10961 = vsel %vm8789, %v8748, %v10887
      %v10962 = vsel %vm8789, %v8749, %v10889
      %v10963 = vsel %vm8789, %v8750, %v10891
      %v10964 = vsel %vm8789, %v8751, %v10893
      %v10965 = vsel %vm8789, %v8752, %v10895
      %v10966 = vsel %vm8789, %v8753, %v10897
      %v10967 = vsel %vm8789, %v8754, %v10899
      %v10968 = vsel %vm8789, %v8755, %v10901
      %v10969 = vsel %vm8789, %v8756, %v10903
      %v10970 = vsel %vm8789, %v8757, %v10905
      %v10971 = vsel %vm8789, %v8758, %v10907
      %v10972 = vld [vmem:[%s5] sm:$0xff]
      %v10973 = vld [vmem:[%s5 + $0x8] sm:$0xff]
      %v10974 = vld [vmem:[%s5 + $0x10] sm:$0xff]
      %v10975 = vld [vmem:[%s5 + $0x18] sm:$0xff]
      %v10976 = vld [vmem:[%s5 + $0x20] sm:$0xff]
      %v10977 = vld [vmem:[%s5 + $0x28] sm:$0xff]
      %v10978 = vld [vmem:[%s5 + $0x30] sm:$0xff]
      %v10979 = vld [vmem:[%s5 + $0x38] sm:$0xff]
      %v10980 = vld [vmem:[%s5 + $0x40] sm:$0xff]
      %v10981 = vld [vmem:[%s5 + $0x48] sm:$0xff]
      %v10982 = vld [vmem:[%s5 + $0x50] sm:$0xff]
      %v10983 = vld [vmem:[%s5 + $0x58] sm:$0xff]
      %v10984 = vld [vmem:[%s5 + $0x60] sm:$0xff]
      %v10985 = vld [vmem:[%s5 + $0x68] sm:$0xff]
      %v10986 = vld [vmem:[%s5 + $0x70] sm:$0xff]
      %v10987 = vld [vmem:[%s5 + $0x78] sm:$0xff]
      %v10988 = vld [vmem:[%s5 + $0x80] sm:$0xff]
      %v10989 = vld [vmem:[%s5 + $0x88] sm:$0xff]
      %v10990 = vld [vmem:[%s5 + $0x90] sm:$0xff]
      %v10991 = vld [vmem:[%s5 + $0x98] sm:$0xff]
      %v10992 = vld [vmem:[%s5 + $0xa0] sm:$0xff]
      %v10993 = vld [vmem:[%s5 + $0xa8] sm:$0xff]
      %v10994 = vld [vmem:[%s5 + $0xb0] sm:$0xff]
      %v10995 = vld [vmem:[%s5 + $0xb8] sm:$0xff]
      %v10996 = vld [vmem:[%s5 + $0xc0] sm:$0xff]
      %v10997 = vld [vmem:[%s5 + $0xc8] sm:$0xff]
      %v10998 = vld [vmem:[%s5 + $0xd0] sm:$0xff]
      %v10999 = vld [vmem:[%s10] sm:$0x1]
      %v11001 = vlaneseq
      %v11002 = vshrl.u32 %v11001, 7
      %v11003 = vsub.s32 0, %v11002
      %v11004 = vrot.slane %v10999, %v11003
      %vm11006 = vcmask 719872
      %v11008 = vsel %vm11006, %v10940, 0
      %v11011 = vsel %vm11006, %v10941, 0
      %v11014 = vsel %vm11006, %v10942, 0
      %v11017 = vsel %vm11006, %v10943, 0
      %v11020 = vsel %vm11006, %v10944, 0
      %v11023 = vsel %vm11006, %v10945, 0
      %v11026 = vsel %vm11006, %v10946, 0
      %v11029 = vsel %vm11006, %v10947, 0
      %v11032 = vsel %vm11006, %v10948, 0
      %v11035 = vsel %vm11006, %v10949, 0
      %v11038 = vsel %vm11006, %v10950, 0
      %v11041 = vsel %vm11006, %v10951, 0
      %v11044 = vsel %vm11006, %v10952, 0
      %v11047 = vsel %vm11006, %v10953, 0
      %v11050 = vsel %vm11006, %v10954, 0
      %v11053 = vsel %vm11006, %v10955, 0
      %v11056 = vsel %vm11006, %v10956, 0
      %v11059 = vsel %vm11006, %v10957, 0
      %v11062 = vsel %vm11006, %v10958, 0
      %v11065 = vsel %vm11006, %v10959, 0
      %v11068 = vsel %vm11006, %v10960, 0
      %v11071 = vsel %vm11006, %v10961, 0
      %v11074 = vsel %vm11006, %v10962, 0
      %v11077 = vsel %vm11006, %v10963, 0
      %v11080 = vsel %vm11006, %v10964, 0
      %v11083 = vsel %vm11006, %v10965, 0
      %v11086 = vsel %vm11006, %v10966, 0
      %v11089 = vsel %vm11006, %v10967, 0
      %v11092 = vsel %vm11006, %v10968, 0
      %v11095 = vsel %vm11006, %v10969, 0
      %v11098 = vsel %vm11006, %v10970, 0
      %v11101 = vsel %vm11006, %v10971, 0
      %11103 = vmatprep.subr.mxu0 0.0
      %11104 = vmatpush1.msra.mxu0 %v10987
      %11105 = vmatprep.subr.mxu0 0.0
      %11106 = vmatpush1.msra.mxu0 %v10986
      %11107 = vmatprep.subr.mxu0 0.0
      %11108 = vmatpush1.msra.mxu0 %v10985
      %11109 = vmatprep.subr.mxu0 0.0
      %11110 = vmatpush1.msra.mxu0 %v10984
      %11111 = vmatprep.subr.mxu0 0.0
      %11112 = vmatpush1.msra.mxu0 %v10983
      %11113 = vmatprep.subr.mxu0 0.0
      %11114 = vmatpush1.msra.mxu0 %v10982
      %11115 = vmatprep.subr.mxu0 0.0
      %11116 = vmatpush1.msra.mxu0 %v10981
      %11117 = vmatprep.subr.mxu0 0.0
      %11118 = vmatpush1.msra.mxu0 %v10980
      %11119 = vmatprep.subr.mxu0 0.0
      %11120 = vmatpush1.msra.mxu0 %v10979
      %11121 = vmatprep.subr.mxu0 0.0
      %11122 = vmatpush1.msra.mxu0 %v10978
      %11123 = vmatprep.subr.mxu0 0.0
      %11124 = vmatpush1.msra.mxu0 %v10977
      %11125 = vmatprep.subr.mxu0 0.0
      %11126 = vmatpush1.msra.mxu0 %v10976
      %11127 = vmatprep.subr.mxu0 0.0
      %11128 = vmatpush1.msra.mxu0 %v10975
      %11129 = vmatprep.subr.mxu0 0.0
      %11130 = vmatpush1.msra.mxu0 %v10974
      %11131 = vmatprep.subr.mxu0 0.0
      %11132 = vmatpush1.msra.mxu0 %v10973
      %11133 = vmatprep.subr.mxu0 0.0
      %11134 = vmatpush1.msra.mxu0 %v10972
      %11135 = vmatprep.subr.mxu0 0.0
      %11136 = vmatpush2.msra.mxu0 0.0
      %11137 = vmatprep.subr.mxu0 0.0
      %11138 = vmatpush2.msra.mxu0 0.0
      %11139 = vmatprep.subr.mxu0 0.0
      %11140 = vmatpush2.msra.mxu0 0.0
      %11141 = vmatprep.subr.mxu0 0.0
      %11142 = vmatpush2.msra.mxu0 0.0
      %11143 = vmatprep.subr.mxu0 0.0
      %11144 = vmatpush2.msra.mxu0 0.0
      %11145 = vmatprep.subr.mxu0 0.0
      %11146 = vmatpush2.msra.mxu0 %v10998
      %11147 = vmatprep.subr.mxu0 0.0
      %11148 = vmatpush2.msra.mxu0 %v10997
      %11149 = vmatprep.subr.mxu0 0.0
      %11150 = vmatpush2.msra.mxu0 %v10996
      %11151 = vmatprep.subr.mxu0 0.0
      %11152 = vmatpush2.msra.mxu0 %v10995
      %11153 = vmatprep.subr.mxu0 0.0
      %11154 = vmatpush2.msra.mxu0 %v10994
      %11155 = vmatprep.subr.mxu0 0.0
      %11156 = vmatpush2.msra.mxu0 %v10993
      %11157 = vmatprep.subr.mxu0 0.0
      %11158 = vmatpush2.msra.mxu0 %v10992
      %11159 = vmatprep.subr.mxu0 0.0
      %11160 = vmatpush2.msra.mxu0 %v10991
      %11161 = vmatprep.subr.mxu0 0.0
      %11162 = vmatpush2.msra.mxu0 %v10990
      %11163 = vmatprep.subr.mxu0 0.0
      %11164 = vmatpush2.msra.mxu0 %v10989
      %11165 = vmatprep.subr.mxu0 0.0
      %11166 = vmatpush2.msra.mxu0 %v10988
      %11167 = vmatprep.mubr.f32.mxu0 %v11008
      %11168 = vmatmul.mubr.f32.gmra.mxu0 %v6555
      %v11169 = vpop.f32.mrf.mxu0
      %v11170 = vadd.f32 %v11004, %v11169
      %v11171 = vpop.f32.mrf.mxu0
      %11172 = vmatprep.mubr.f32.mxu0 %v11011
      %11173 = vmatmul.mubr.f32.gmra.mxu0 %v6556
      %v11174 = vpop.f32.mrf.mxu0
      %v11175 = vadd.f32 %v11004, %v11174
      %v11176 = vpop.f32.mrf.mxu0
      %11177 = vmatprep.mubr.f32.mxu0 %v11014
      %11178 = vmatmul.mubr.f32.gmra.mxu0 %v6557
      %v11179 = vpop.f32.mrf.mxu0
      %v11180 = vadd.f32 %v11004, %v11179
      %v11181 = vpop.f32.mrf.mxu0
      %11182 = vmatprep.mubr.f32.mxu0 %v11017
      %11183 = vmatmul.mubr.f32.gmra.mxu0 %v6558
      %v11184 = vpop.f32.mrf.mxu0
      %v11185 = vadd.f32 %v11004, %v11184
      %v11186 = vpop.f32.mrf.mxu0
      %11187 = vmatprep.mubr.f32.mxu0 %v11020
      %11188 = vmatmul.mubr.f32.gmra.mxu0 %v6559
      %v11189 = vpop.f32.mrf.mxu0
      %v11190 = vadd.f32 %v11004, %v11189
      %v11191 = vpop.f32.mrf.mxu0
      %11192 = vmatprep.mubr.f32.mxu0 %v11023
      %11193 = vmatmul.mubr.f32.gmra.mxu0 %v6560
      %v11194 = vpop.f32.mrf.mxu0
      %v11195 = vadd.f32 %v11004, %v11194
      %v11196 = vpop.f32.mrf.mxu0
      %11197 = vmatprep.mubr.f32.mxu0 %v11026
      %11198 = vmatmul.mubr.f32.gmra.mxu0 %v6561
      %v11199 = vpop.f32.mrf.mxu0
      %v11200 = vadd.f32 %v11004, %v11199
      %v11201 = vpop.f32.mrf.mxu0
      %11202 = vmatprep.mubr.f32.mxu0 %v11029
      %11203 = vmatmul.mubr.f32.gmra.mxu0 %v6562
      %v11204 = vpop.f32.mrf.mxu0
      %v11205 = vadd.f32 %v11004, %v11204
      %v11206 = vpop.f32.mrf.mxu0
      %11207 = vmatprep.mubr.f32.mxu0 %v11032
      %11208 = vmatmul.mubr.f32.gmra.mxu0 %v6563
      %v11209 = vpop.f32.mrf.mxu0
      %v11210 = vadd.f32 %v11004, %v11209
      %v11211 = vpop.f32.mrf.mxu0
      %11212 = vmatprep.mubr.f32.mxu0 %v11035
      %11213 = vmatmul.mubr.f32.gmra.mxu0 %v6564
      %v11214 = vpop.f32.mrf.mxu0
      %v11215 = vadd.f32 %v11004, %v11214
      %v11216 = vpop.f32.mrf.mxu0
      %11217 = vmatprep.mubr.f32.mxu0 %v11038
      %11218 = vmatmul.mubr.f32.gmra.mxu0 %v6565
      %v11219 = vpop.f32.mrf.mxu0
      %v11220 = vadd.f32 %v11004, %v11219
      %v11221 = vpop.f32.mrf.mxu0
      %11222 = vmatprep.mubr.f32.mxu0 %v11041
      %11223 = vmatmul.mubr.f32.gmra.mxu0 %v6566
      %v11224 = vpop.f32.mrf.mxu0
      %v11225 = vadd.f32 %v11004, %v11224
      %v11226 = vpop.f32.mrf.mxu0
      %11227 = vmatprep.mubr.f32.mxu0 %v11044
      %11228 = vmatmul.mubr.f32.gmra.mxu0 %v6567
      %v11229 = vpop.f32.mrf.mxu0
      %v11230 = vadd.f32 %v11004, %v11229
      %v11231 = vpop.f32.mrf.mxu0
      %11232 = vmatprep.mubr.f32.mxu0 %v11047
      %11233 = vmatmul.mubr.f32.gmra.mxu0 %v6568
      %v11234 = vpop.f32.mrf.mxu0
      %v11235 = vadd.f32 %v11004, %v11234
      %v11236 = vpop.f32.mrf.mxu0
      %11237 = vmatprep.mubr.f32.mxu0 %v11050
      %11238 = vmatmul.mubr.f32.gmra.mxu0 %v6569
      %v11239 = vpop.f32.mrf.mxu0
      %v11240 = vadd.f32 %v11004, %v11239
      %v11241 = vpop.f32.mrf.mxu0
      %11242 = vmatprep.mubr.f32.mxu0 %v11053
      %11243 = vmatmul.mubr.f32.gmra.mxu0 %v6570
      %v11244 = vpop.f32.mrf.mxu0
      %v11245 = vadd.f32 %v11004, %v11244
      %v11246 = vpop.f32.mrf.mxu0
      %11247 = vmatprep.mubr.f32.mxu0 %v11056
      %11248 = vmatmul.mubr.f32.gmra.mxu0 %v6571
      %v11249 = vpop.f32.mrf.mxu0
      %v11250 = vadd.f32 %v11004, %v11249
      %v11251 = vpop.f32.mrf.mxu0
      %11252 = vmatprep.mubr.f32.mxu0 %v11059
      %11253 = vmatmul.mubr.f32.gmra.mxu0 %v6572
      %v11254 = vpop.f32.mrf.mxu0
      %v11255 = vadd.f32 %v11004, %v11254
      %v11256 = vpop.f32.mrf.mxu0
      %11257 = vmatprep.mubr.f32.mxu0 %v11062
      %11258 = vmatmul.mubr.f32.gmra.mxu0 %v6573
      %v11259 = vpop.f32.mrf.mxu0
      %v11260 = vadd.f32 %v11004, %v11259
      %v11261 = vpop.f32.mrf.mxu0
      %11262 = vmatprep.mubr.f32.mxu0 %v11065
      %11263 = vmatmul.mubr.f32.gmra.mxu0 %v6574
      %v11264 = vpop.f32.mrf.mxu0
      %v11265 = vadd.f32 %v11004, %v11264
      %v11266 = vpop.f32.mrf.mxu0
      %11267 = vmatprep.mubr.f32.mxu0 %v11068
      %11268 = vmatmul.mubr.f32.gmra.mxu0 %v6575
      %v11269 = vpop.f32.mrf.mxu0
      %v11270 = vadd.f32 %v11004, %v11269
      %v11271 = vpop.f32.mrf.mxu0
      %11272 = vmatprep.mubr.f32.mxu0 %v11071
      %11273 = vmatmul.mubr.f32.gmra.mxu0 %v6576
      %v11274 = vpop.f32.mrf.mxu0
      %v11275 = vadd.f32 %v11004, %v11274
      %v11276 = vpop.f32.mrf.mxu0
      %11277 = vmatprep.mubr.f32.mxu0 %v11074
      %11278 = vmatmul.mubr.f32.gmra.mxu0 %v6577
      %v11279 = vpop.f32.mrf.mxu0
      %v11280 = vadd.f32 %v11004, %v11279
      %v11281 = vpop.f32.mrf.mxu0
      %11282 = vmatprep.mubr.f32.mxu0 %v11077
      %11283 = vmatmul.mubr.f32.gmra.mxu0 %v6578
      %v11284 = vpop.f32.mrf.mxu0
      %v11285 = vadd.f32 %v11004, %v11284
      %v11286 = vpop.f32.mrf.mxu0
      %11287 = vmatprep.mubr.f32.mxu0 %v11080
      %11288 = vmatmul.mubr.f32.gmra.mxu0 %v6579
      %v11289 = vpop.f32.mrf.mxu0
      %v11290 = vadd.f32 %v11004, %v11289
      %v11291 = vpop.f32.mrf.mxu0
      %11292 = vmatprep.mubr.f32.mxu0 %v11083
      %11293 = vmatmul.mubr.f32.gmra.mxu0 %v6580
      %v11294 = vpop.f32.mrf.mxu0
      %v11295 = vadd.f32 %v11004, %v11294
      %v11296 = vpop.f32.mrf.mxu0
      %11297 = vmatprep.mubr.f32.mxu0 %v11086
      %11298 = vmatmul.mubr.f32.gmra.mxu0 %v6581
      %v11299 = vpop.f32.mrf.mxu0
      %v11300 = vadd.f32 %v11004, %v11299
      %v11301 = vpop.f32.mrf.mxu0
      %11302 = vmatprep.mubr.f32.mxu0 %v11089
      %11303 = vmatmul.mubr.f32.gmra.mxu0 %v6582
      %v11304 = vpop.f32.mrf.mxu0
      %v11305 = vadd.f32 %v11004, %v11304
      %v11306 = vpop.f32.mrf.mxu0
      %11307 = vmatprep.mubr.f32.mxu0 %v11092
      %11308 = vmatmul.mubr.f32.gmra.mxu0 %v6583
      %v11309 = vpop.f32.mrf.mxu0
      %v11310 = vadd.f32 %v11004, %v11309
      %v11311 = vpop.f32.mrf.mxu0
      %11312 = vmatprep.mubr.f32.mxu0 %v11095
      %11313 = vmatmul.mubr.f32.gmra.mxu0 %v6584
      %v11314 = vpop.f32.mrf.mxu0
      %v11315 = vadd.f32 %v11004, %v11314
      %v11316 = vpop.f32.mrf.mxu0
      %11317 = vmatprep.mubr.f32.mxu0 %v11098
      %11318 = vmatmul.mubr.f32.gmra.mxu0 %v6585
      %v11319 = vpop.f32.mrf.mxu0
      %v11320 = vadd.f32 %v11004, %v11319
      %v11321 = vpop.f32.mrf.mxu0
      %11322 = vmatprep.mubr.f32.mxu0 %v11101
      %11323 = vmatmul.mubr.f32.gmra.mxu0 %v6586
      %v11324 = vpop.f32.mrf.mxu0
      %v11325 = vadd.f32 %v11004, %v11324
      %v11326 = vpop.f32.mrf.mxu0
      %11327 = vdwg.mxu0
      %v11328 = vld [vmem:[%s701 + $0x1] sm:$0xff]
      %v11329 = vld [vmem:[%s701 + $0x9] sm:$0xff]
      %v11330 = vld [vmem:[%s701 + $0x19] sm:$0xff]
      %v11331 = vld [vmem:[%s701 + $0x21] sm:$0xff]
      %v11332 = vld [vmem:[%s701 + $0x31] sm:$0xff]
      %v11333 = vld [vmem:[%s701 + $0x39] sm:$0xff]
      %v11334 = vld [vmem:[%s701 + $0x49] sm:$0xff]
      %v11335 = vld [vmem:[%s701 + $0x51] sm:$0xff]
      %v11336 = vld [vmem:[%s701 + $0x61] sm:$0xff]
      %v11337 = vld [vmem:[%s701 + $0x69] sm:$0xff]
      %v11338 = vld [vmem:[%s701 + $0x79] sm:$0xff]
      %v11339 = vld [vmem:[%s701 + $0x81] sm:$0xff]
      %v11340 = vld [vmem:[%s701 + $0x91] sm:$0xff]
      %v11341 = vld [vmem:[%s701 + $0x99] sm:$0xff]
      %v11342 = vld [vmem:[%s701 + $0xa9] sm:$0xff]
      %v11343 = vld [vmem:[%s701 + $0xb1] sm:$0xff]
      %v11344 = vld [vmem:[%s701 + $0xc1] sm:$0xff]
      %v11345 = vld [vmem:[%s701 + $0xc9] sm:$0xff]
      %v11346 = vld [vmem:[%s701 + $0xd9] sm:$0xff]
      %v11347 = vld [vmem:[%s701 + $0xe1] sm:$0xff]
      %v11348 = vld [vmem:[%s701 + $0xf1] sm:$0xff]
      %v11349 = vld [vmem:[%s701 + $0xf9] sm:$0xff]
      %v11350 = vld [vmem:[%s701 + $0x109] sm:$0xff]
      %v11351 = vld [vmem:[%s701 + $0x111] sm:$0xff]
      %v11352 = vld [vmem:[%s701 + $0x121] sm:$0xff]
      %v11353 = vld [vmem:[%s701 + $0x129] sm:$0xff]
      %v11354 = vld [vmem:[%s701 + $0x139] sm:$0xff]
      %v11355 = vld [vmem:[%s701 + $0x141] sm:$0xff]
      %v11356 = vld [vmem:[%s701 + $0x151] sm:$0xff]
      %v11357 = vld [vmem:[%s701 + $0x159] sm:$0xff]
      %v11358 = vld [vmem:[%s701 + $0x169] sm:$0xff]
      %v11359 = vld [vmem:[%s701 + $0x171] sm:$0xff]
      %v11360 = vmul.f32 %v11170, 0.2
      %v11361 = vmul.f32 %v11175, 0.2
      %v11362 = vmul.f32 %v11180, 0.2
      %v11363 = vmul.f32 %v11185, 0.2
      %v11364 = vmul.f32 %v11190, 0.2
      %v11365 = vmul.f32 %v11195, 0.2
      %v11366 = vmul.f32 %v11200, 0.2
      %v11367 = vmul.f32 %v11205, 0.2
      %v11368 = vmul.f32 %v11210, 0.2
      %v11369 = vmul.f32 %v11215, 0.2
      %v11370 = vmul.f32 %v11220, 0.2
      %v11371 = vmul.f32 %v11225, 0.2
      %v11372 = vmul.f32 %v11230, 0.2
      %v11373 = vmul.f32 %v11235, 0.2
      %v11374 = vmul.f32 %v11240, 0.2
      %v11375 = vmul.f32 %v11245, 0.2
      %v11376 = vmul.f32 %v11250, 0.2
      %v11377 = vmul.f32 %v11255, 0.2
      %v11378 = vmul.f32 %v11260, 0.2
      %v11379 = vmul.f32 %v11265, 0.2
      %v11380 = vmul.f32 %v11270, 0.2
      %v11381 = vmul.f32 %v11275, 0.2
      %v11382 = vmul.f32 %v11280, 0.2
      %v11383 = vmul.f32 %v11285, 0.2
      %v11384 = vmul.f32 %v11290, 0.2
      %v11385 = vmul.f32 %v11295, 0.2
      %v11386 = vmul.f32 %v11300, 0.2
      %v11387 = vmul.f32 %v11305, 0.2
      %v11388 = vmul.f32 %v11310, 0.2
      %v11389 = vmul.f32 %v11315, 0.2
      %v11390 = vmul.f32 %v11320, 0.2
      %v11391 = vmul.f32 %v11325, 0.2
      %v11392 = vadd.f32 %v11360, %v11328
      %v11393 = vadd.f32 %v11361, %v11329
      %v11394 = vadd.f32 %v11362, %v11330
      %v11395 = vadd.f32 %v11363, %v11331
      %v11396 = vadd.f32 %v11364, %v11332
      %v11397 = vadd.f32 %v11365, %v11333
      %v11398 = vadd.f32 %v11366, %v11334
      %v11399 = vadd.f32 %v11367, %v11335
      %v11400 = vadd.f32 %v11368, %v11336
      %v11401 = vadd.f32 %v11369, %v11337
      %v11402 = vadd.f32 %v11370, %v11338
      %v11403 = vadd.f32 %v11371, %v11339
      %v11404 = vadd.f32 %v11372, %v11340
      %v11405 = vadd.f32 %v11373, %v11341
      %v11406 = vadd.f32 %v11374, %v11342
      %v11407 = vadd.f32 %v11375, %v11343
      %v11408 = vadd.f32 %v11376, %v11344
      %v11409 = vadd.f32 %v11377, %v11345
      %v11410 = vadd.f32 %v11378, %v11346
      %v11411 = vadd.f32 %v11379, %v11347
      %v11412 = vadd.f32 %v11380, %v11348
      %v11413 = vadd.f32 %v11381, %v11349
      %v11414 = vadd.f32 %v11382, %v11350
      %v11415 = vadd.f32 %v11383, %v11351
      %v11416 = vadd.f32 %v11384, %v11352
      %v11417 = vadd.f32 %v11385, %v11353
      %v11418 = vadd.f32 %v11386, %v11354
      %v11419 = vadd.f32 %v11387, %v11355
      %v11420 = vadd.f32 %v11388, %v11356
      %v11421 = vadd.f32 %v11389, %v11357
      %v11422 = vadd.f32 %v11390, %v11358
      %v11423 = vadd.f32 %v11391, %v11359
      %11424 = vst.msk [vmem:[%s386] sm:$0xff] %vm1919, %v11392
      %11425 = vst.msk [vmem:[%s386 + $0x8] sm:$0xff] %vm1919, %v11393
      %11426 = vst.msk [vmem:[%s386 + $0x10] sm:$0xff] %vm1919, %v11394
      %11427 = vst.msk [vmem:[%s386 + $0x18] sm:$0xff] %vm1919, %v11395
      %11428 = vst.msk [vmem:[%s386 + $0x20] sm:$0xff] %vm1919, %v11396
      %11429 = vst.msk [vmem:[%s386 + $0x28] sm:$0xff] %vm1919, %v11397
      %11430 = vst.msk [vmem:[%s386 + $0x30] sm:$0xff] %vm1919, %v11398
      %11431 = vst.msk [vmem:[%s386 + $0x38] sm:$0xff] %vm1919, %v11399
      %11432 = vst.msk [vmem:[%s386 + $0x40] sm:$0xff] %vm1919, %v11400
      %11433 = vst.msk [vmem:[%s386 + $0x48] sm:$0xff] %vm1919, %v11401
      %11434 = vst.msk [vmem:[%s386 + $0x50] sm:$0xff] %vm1919, %v11402
      %11435 = vst.msk [vmem:[%s386 + $0x58] sm:$0xff] %vm1919, %v11403
      %11436 = vst.msk [vmem:[%s386 + $0x60] sm:$0xff] %vm1919, %v11404
      %11437 = vst.msk [vmem:[%s386 + $0x68] sm:$0xff] %vm1919, %v11405
      %11438 = vst.msk [vmem:[%s386 + $0x70] sm:$0xff] %vm1919, %v11406
      %11439 = vst.msk [vmem:[%s386 + $0x78] sm:$0xff] %vm1919, %v11407
      %11440 = vst.msk [vmem:[%s386 + $0x80] sm:$0xff] %vm1919, %v11408
      %11441 = vst.msk [vmem:[%s386 + $0x88] sm:$0xff] %vm1919, %v11409
      %11442 = vst.msk [vmem:[%s386 + $0x90] sm:$0xff] %vm1919, %v11410
      %11443 = vst.msk [vmem:[%s386 + $0x98] sm:$0xff] %vm1919, %v11411
      %11444 = vst.msk [vmem:[%s386 + $0xa0] sm:$0xff] %vm1919, %v11412
      %11445 = vst.msk [vmem:[%s386 + $0xa8] sm:$0xff] %vm1919, %v11413
      %11446 = vst.msk [vmem:[%s386 + $0xb0] sm:$0xff] %vm1919, %v11414
      %11447 = vst.msk [vmem:[%s386 + $0xb8] sm:$0xff] %vm1919, %v11415
      %11448 = vst.msk [vmem:[%s386 + $0xc0] sm:$0xff] %vm1919, %v11416
      %11449 = vst.msk [vmem:[%s386 + $0xc8] sm:$0xff] %vm1919, %v11417
      %11450 = vst.msk [vmem:[%s386 + $0xd0] sm:$0xff] %vm1919, %v11418
      %11451 = vst.msk [vmem:[%s386 + $0xd8] sm:$0xff] %vm1919, %v11419
      %11452 = vst.msk [vmem:[%s386 + $0xe0] sm:$0xff] %vm1919, %v11420
      %11453 = vst.msk [vmem:[%s386 + $0xe8] sm:$0xff] %vm1919, %v11421
      %11454 = vst.msk [vmem:[%s386 + $0xf0] sm:$0xff] %vm1919, %v11422
      %11455 = vst.msk [vmem:[%s386 + $0xf8] sm:$0xff] %vm1919, %v11423
      %p11456 = scmp.lt.s32.totalorder %s22, 1
      %s11457 = scalar_select %p11456, %s22, 1
      %s11458 = smul.addr %s11457, 32
      %s11459 = smul.addr %s11458, 8
      %s11460 = scalar_lea.vmem %s11, %s11459
      // Predicated region
      $region65: #{tpu_custom_call.1} parent=63 // pred_check
        %p11461 = pneg %p276
      $region66: #{tpu_custom_call.1} parent=63 // pred_check_branch
        %11463 = sbr.rel (%p11461) target = $region68
      $region67: #{tpu_custom_call.1} parent=63 // pred_region
        _
      $region68: #{tpu_custom_call.1} parent=63 // pred_fallthru
        _
    $region64: #{tpu_custom_call.1} parent=5 // pred_fallthru
      _
    %p11464 = scmp.le.s32.totalorder 2, %s17
    // Predicated region
    $region69: #{tpu_custom_call.1} parent=5 // pred_check
      %p11465 = pneg %p11464
    $region70: #{tpu_custom_call.1} parent=5 // pred_check_branch
      %11467 = sbr.rel (%p11465) target = $region72
    $region71: #{tpu_custom_call.1} parent=5 // pred_region
      %s11468 = ssub.s32 %s17, 2
      // Predicated region
      $region73: #{tpu_custom_call.1} parent=71 // pred_check
        %p11469 = pneg %p282
      $region74: #{tpu_custom_call.1} parent=71 // pred_check_branch
        %11471 = sbr.rel (%p11469) target = $region76
      $region75: #{tpu_custom_call.1} parent=71 // pred_region
        %p11472 = scmp.lt.s32.totalorder %s23, 1
        %s11473 = scalar_select %p11472, %s23, 1
        %s11474 = smul.addr %s11473, 32
        %s11475 = smul.addr %s11474, 8
        %s11476 = scalar_lea.vmem %s11, %s11475
      $region76: #{tpu_custom_call.1} parent=71 // pred_fallthru
        _
    $region72: #{tpu_custom_call.1} parent=5 // pred_fallthru
      _
  $region6: #{tpu_custom_call.1} parent=0 // loop_footer
    %s21 = sadd.s32 1, %s17
  $region7: #{tpu_custom_call.1} parent=0 // loop_footer_branch
    %16 = sbr.rel target = $region3
  $region8: #{tpu_custom_call.1} parent=0 // loop_exit
    _

</llo_original>
